<compile_context>
chip_gen: v6e
topology: v6e:2x2x1
jax: 0.10.0
libtpu: 0.0.40
codegen_flags: <defaults>
</compile_context>

<pallas_src>
import functools
import math

import jax
import jax.numpy as jnp
from jax import lax
from jax.experimental import pallas as pl
from jax.experimental.pallas import tpu as pltpu

LANE = 128


def _round_up(x, m):
    return ((int(x) + m - 1) // m) * m


def _lane_pad(c):
    return _round_up(max(int(c), 1), LANE)


# -----------------------------------------------------------------------------
# Fused Pallas kernel: Conv(3x3,pad=1)+BN+ReLU -> Conv(3x3,pad=1)+BN+ReLU ->
# MaxPool(2x2).  One image per grid step, NHWC, bf16 MXU operands, f32 accum.
# -----------------------------------------------------------------------------
def _stage_kw_packed(dst_ref, y):
    """Stage y (H, W, C) into the kw-packed, row-haloed buffer dst_ref.

    dst[h, w, kw*C:(kw+1)*C] = x_pad[h, w + kw, :]  for kw in {0,1,2}, where
    x_pad is y zero-padded by one pixel on every side; dst row h indexes padded
    rows (0..H+1), dst col w indexes output columns (0..W-1).  Rows 0 and H+1
    are the zero halo.  Every store is full-width (lane-dense for the
    128-channel levels) and the whole buffer is rewritten every grid step, so
    scratch persistence across iterations is harmless.
    """
    H, W, C = y.shape
    zcol = jnp.zeros((H, 1, C), y.dtype)
    left = jnp.concatenate([zcol, y[:, :W - 1, :]], axis=1)    # y[h, w-1]
    right = jnp.concatenate([y[:, 1:, :], zcol], axis=1)       # y[h, w+1]
    dst_ref[1:H + 1, :, :] = jnp.concatenate([left, y, right], axis=2)
    zrow = jnp.zeros((1, W, 3 * C), y.dtype)
    dst_ref[0:1, :, :] = zrow
    dst_ref[H + 1:H + 2, :, :] = zrow


def _encoder_block_kernel(x_ref, w1_ref, s1_ref, w2_ref, s2_ref,
                          feat_ref, pool_ref, t1_ref, t2_ref, acc_ref):
    """One image per grid step.

    x_ref:    (1, H, W, C)        bf16  input activation
    w1_ref:   (3, 3*C, Kp)        bf16  conv1 BN-folded weights, rows = (kw, c)
    s1_ref:   (1, Kp)             f32   conv1 folded bias
    w2_ref:   (3, 3*Kp, Kp)       bf16  conv2 BN-folded weights
    s2_ref:   (1, Kp)             f32   conv2 folded bias
    feat_ref: (1, H, W, Kp)       bf16  pre-pool feature map (skip connection)
    pool_ref: (1, H//2, W//2, Kp) bf16  2x2 max-pooled output
    t1_ref:   (H+2, W, 3*C)       bf16  scratch: kw-packed conv1 input
    t2_ref:   (H+2, W, 3*Kp)      bf16  scratch: kw-packed conv2 input
    acc_ref:  (H*W, Kp)           f32   scratch: matmul accumulator
    """
    _, H, W, C = x_ref.shape
    Kp = feat_ref.shape[3]

    def conv(t_ref, w_ref, s_ref):
        # 3 MXU matmuls (one per kernel row kh), K = 3*channels, f32 VMEM acc.
        kdim = t_ref.shape[2]
        for kh in range(3):
            lhs = t_ref[kh:kh + H, :, :].reshape(H * W, kdim)
            d = jnp.dot(lhs, w_ref[kh], preferred_element_type=jnp.float32)
            if kh == 0:
                acc_ref[...] = d
            else:
                acc_ref[...] += d
        y = jnp.maximum(acc_ref[...] + s_ref[...], 0.0)       # folded BN + ReLU
        return y.astype(jnp.bfloat16).reshape(H, W, Kp)

    # Conv block 1 -- its output is fed straight into conv2's staging buffer
    # (never leaves VMEM).
    _stage_kw_packed(t1_ref, x_ref[0])
    y1 = conv(t1_ref, w1_ref, s1_ref)
    _stage_kw_packed(t2_ref, y1)

    # Conv block 2 + fused 2x2 max-pool epilogue.
    y2 = conv(t2_ref, w2_ref, s2_ref)
    feat_ref[0] = y2
    # Layout-friendly pool: fold the W pair into the lane dim (lane-aligned
    # slices), split the H pair off the leading dim.
    z = y2.reshape(H, W // 2, 2 * Kp)
    mw = jnp.maximum(z[:, :, :Kp], z[:, :, Kp:])
    m4 = mw.reshape(H // 2, 2, W // 2, Kp)
    pool_ref[0] = jnp.maximum(m4[:, 0, :, :], m4[:, 1, :, :])


def encoder_block_apply(x, p):
    """One EncoderBlock.  x: (B, H, W, C) bf16 NHWC ->
       (feat (B, H, W, Kp), pooled (B, H//2, W//2, Kp)) bf16, channel-padded."""
    B, H, W, C = x.shape
    assert H % 2 == 0 and W % 2 == 0
    Kp = p['w1'].shape[2]
    assert p['w1'].shape[1] == 3 * C and p['w2'].shape[1] == 3 * Kp

    return pl.pallas_call(
        _encoder_block_kernel,
        out_shape=(jax.ShapeDtypeStruct((B, H, W, Kp), jnp.bfloat16),
                   jax.ShapeDtypeStruct((B, H // 2, W // 2, Kp), jnp.bfloat16)),
        grid_spec=pltpu.PrefetchScalarGridSpec(
            num_scalar_prefetch=0,
            grid=(B,),
            in_specs=[
                pl.BlockSpec((1, H, W, C), lambda b: (b, 0, 0, 0)),
                pl.BlockSpec((3, 3 * C, Kp), lambda b: (0, 0, 0)),
                pl.BlockSpec((1, Kp), lambda b: (0, 0)),
                pl.BlockSpec((3, 3 * Kp, Kp), lambda b: (0, 0, 0)),
                pl.BlockSpec((1, Kp), lambda b: (0, 0)),
            ],
            out_specs=[
                pl.BlockSpec((1, H, W, Kp), lambda b: (b, 0, 0, 0)),
                pl.BlockSpec((1, H // 2, W // 2, Kp), lambda b: (b, 0, 0, 0)),
            ],
            scratch_shapes=[
                pltpu.VMEM((H + 2, W, 3 * C), jnp.bfloat16),   # conv1 staging
                pltpu.VMEM((H + 2, W, 3 * Kp), jnp.bfloat16),  # conv2 staging
                pltpu.VMEM((H * W, Kp), jnp.float32),          # f32 accumulator
            ],
        ),
        compiler_params=pltpu.CompilerParams(
            dimension_semantics=("parallel",)),
    )(x, p['w1'], p['s1'], p['w2'], p['s2'])


# -----------------------------------------------------------------------------
# One-time parameter preparation (hoisted out of the jitted forward path).
# -----------------------------------------------------------------------------
def _fold_conv_bn(p, in_ch, eps=1e-5):
    """Fold eval-mode BatchNorm into the conv and pack taps.

    Returns:
      w: (3, 3*in_ch, Kp) bf16; row (kw*in_ch + c) of slice kh holds
         W_torch[k, c, kh, kw] * gamma[k]/sqrt(var[k]+eps).
      s: (1, Kp) f32 folded bias.  Both are zero in padded rows/cols so padded
         channel lanes stay exactly 0 through ReLU / maxpool across levels.
    """
    cout, cin = p['w'].shape[0], p['w'].shape[1]
    assert p['w'].shape[2] == 3 and p['w'].shape[3] == 3
    kp = _lane_pad(cout)
    scale = p['gamma'] / jnp.sqrt(p['var'] + eps)
    shift = p['b'] * scale + p['beta'] - p['mean'] * scale
    w = (p['w'] * scale[:, None, None, None]).transpose(2, 3, 1, 0)  # (kh,kw,cin,cout)
    w = jnp.pad(w, ((0, 0), (0, 0), (0, in_ch - cin), (0, kp - cout)))
    w = w.reshape(3, 3 * in_ch, kp).astype(jnp.bfloat16)
    s = jnp.pad(shift, (0, kp - cout)).astype(jnp.float32)[None, :]
    return w, s


def prepare_encoder_params(params):
    """BN fold + tap packing + channel padding + bf16 cast, done once."""
    in_channels = params[0]['c1']['w'].shape[1]
    act_c = _round_up(in_channels, 8)          # true-ish width for level 0
    prepped, couts = [], []
    for p in params:
        cout = p['c1']['w'].shape[0]
        kp = _lane_pad(cout)
        w1, s1 = _fold_conv_bn(p['c1'], act_c)
        w2, s2 = _fold_conv_bn(p['c2'], kp)
        prepped.append(dict(w1=w1, s1=s1, w2=w2, s2=s2))
        couts.append(cout)
        act_c = kp                              # next level consumes lane-padded pooled output
    return prepped, tuple(couts)


# -----------------------------------------------------------------------------
# Forward (NCHW f32 in / out, matching the torch module contract)
# -----------------------------------------------------------------------------
def encoder_apply(prepped, x_nchw, couts):
    """UNetEncoder.forward: returns (pooled x, features[::-1]) in NCHW f32."""
    cin = x_nchw.shape[1]
    c0 = _round_up(cin, 8)
    # NCHW f32 -> NHWC bf16 once at the module boundary; channels rounded only
    # to 8 (not 128) so layer 1 does not contract over ~125 zero channels.
    x = jnp.transpose(x_nchw, (0, 2, 3, 1)).astype(jnp.bfloat16)
    x = jnp.pad(x, ((0, 0), (0, 0), (0, 0), (0, c0 - cin)))

    feats = []
    for p in prepped:
        ft, x = encoder_block_apply(x, p)      # lane-padded NHWC bf16
        feats.append(ft)

    def to_nchw(t, c):
        return jnp.transpose(t[..., :c].astype(jnp.float32), (0, 3, 1, 2))

    x_out = to_nchw(x, couts[-1])
    features = [to_nchw(f, c) for f, c in zip(feats, couts)][::-1]
    return x_out, features


# -----------------------------------------------------------------------------
# Pure-JAX f32 reference (torch semantics, eval-mode BN) for correctness check
# -----------------------------------------------------------------------------
def _ref_conv_block(x, p, eps=1e-5):
    y = lax.conv_general_dilated(
        x, p['w'], window_strides=(1, 1), padding=((1, 1), (1, 1)),
        dimension_numbers=('NCHW', 'OIHW', 'NCHW'))
    y = y + p['b'][None, :, None, None]
    scale = (p['gamma'] / jnp.sqrt(p['var'] + eps))[None, :, None, None]
    y = (y - p['mean'][None, :, None, None]) * scale + p['beta'][None, :, None, None]
    return jnp.maximum(y, 0.0)


def ref_encoder(params, x):
    feats = []
    for p in params:
        ft = _ref_conv_block(_ref_conv_block(x, p['c1']), p['c2'])
        feats.append(ft)
        B, C, H, W = ft.shape
        x = ft.reshape(B, C, H // 2, 2, W // 2, 2).max(axis=(3, 5))
    return x, feats[::-1]


# -----------------------------------------------------------------------------
# Deterministic synthetic parameters (matching the torch module's layer shapes)
# -----------------------------------------------------------------------------
def _init_conv_block(key, cin, cout, ksize=3):
    kw, kb = jax.random.split(key)
    fan_in = cin * ksize * ksize
    return dict(
        w=jax.random.normal(kw, (cout, cin, ksize, ksize), jnp.float32) / math.sqrt(fan_in),
        b=jax.random.normal(kb, (cout,), jnp.float32) * 0.01,
        gamma=jnp.ones((cout,), jnp.float32),
        beta=jnp.zeros((cout,), jnp.float32),
        mean=jnp.zeros((cout,), jnp.float32),
        var=jnp.ones((cout,), jnp.float32),
    )


def init_unet_encoder(key, in_channels, depth, first_channels):
    cins = [in_channels] + [first_channels * 2 ** i for i in range(depth - 1)]
    couts = [first_channels * 2 ** i for i in range(depth)]
    ks = jax.random.split(key, depth * 2)
    return [dict(c1=_init_conv_block(ks[2 * i], cins[i], couts[i]),
                 c2=_init_conv_block(ks[2 * i + 1], couts[i], couts[i]))
            for i in range(depth)]


# -----------------------------------------------------------------------------
if __name__ == "__main__":
    in_channels, depth, first_channels = 3, 2, 8
    B, H, W = 2, 16, 16

    key = jax.random.PRNGKey(0)
    kx, kparam = jax.random.split(key)
    x = jax.random.normal(kx, (B, in_channels, H, W), jnp.float32)
    params = init_unet_encoder(kparam, in_channels, depth, first_channels)

    # One-time weight preparation, hoisted out of the per-forward path.
    prepped, couts = prepare_encoder_params(params)
    forward = jax.jit(functools.partial(encoder_apply, couts=couts))

    out, features = forward(prepped, x)
    out = jax.block_until_ready(out)
    features = jax.block_until_ready(features)

    # Shape contract of UNetEncoder.forward.
    assert out.shape == (B, first_channels * 2 ** (depth - 1),
                         H // 2 ** depth, W // 2 ** depth), out.shape
    expected = [(B, first_channels * 2 ** i, H // 2 ** i, W // 2 ** i)
                for i in range(depth)][::-1]
    assert [f.shape for f in features] == expected, [f.shape for f in features]

    # Numerics vs. a pure-JAX f32 reference (bf16 MXU operands -> loose tol).
    ref_out, ref_feats = jax.jit(ref_encoder)(params, x)

    def _close(a, b):
        return bool(jnp.max(jnp.abs(a - b)) <= 0.05 + 0.05 * jnp.max(jnp.abs(b)))

    assert _close(out, ref_out)
    assert all(_close(f, rf) for f, rf in zip(features, ref_feats))
    assert bool(jnp.all(jnp.isfinite(out)))
    assert all(bool(jnp.all(jnp.isfinite(f))) for f in features)
    print("KERNEL_OK")
</pallas_src>

<mosaic_0001>
module attributes {stable_mosaic.version = 11 : i64} {
  func.func @_encoder_block_kernel(%arg0: i32, %arg1: memref<1x16x16x8xbf16, #tpu.memory_space<vmem>>, %arg2: memref<3x24x128xbf16, #tpu.memory_space<vmem>>, %arg3: memref<1x128xf32, #tpu.memory_space<vmem>>, %arg4: memref<3x384x128xbf16, #tpu.memory_space<vmem>>, %arg5: memref<1x128xf32, #tpu.memory_space<vmem>>, %arg6: memref<1x16x16x128xbf16, #tpu.memory_space<vmem>>, %arg7: memref<1x8x8x128xbf16, #tpu.memory_space<vmem>>, %arg8: memref<18x16x24xbf16, #tpu.memory_space<vmem>>, %arg9: memref<18x16x384xbf16, #tpu.memory_space<vmem>>, %arg10: memref<256x128xf32, #tpu.memory_space<vmem>>) attributes {dimension_semantics = [#tpu.dimension_semantics<parallel>], iteration_bounds = array<i64: 2>, scalar_prefetch = 0 : i64, scratch_operands = 3 : i64, tpu.core_type = #tpu.core_type<tc>, window_params = [{transform_indices = @transform_0, window_bounds = array<i64: 1, 16, 16, 8>}, {pipeline_mode = #tpu.pipeline_mode<synchronous>, transform_indices = @transform_1, window_bounds = array<i64: 3, 24, 128>}, {pipeline_mode = #tpu.pipeline_mode<synchronous>, transform_indices = @transform_2, window_bounds = array<i64: 1, 128>}, {pipeline_mode = #tpu.pipeline_mode<synchronous>, transform_indices = @transform_3, window_bounds = array<i64: 3, 384, 128>}, {pipeline_mode = #tpu.pipeline_mode<synchronous>, transform_indices = @transform_4, window_bounds = array<i64: 1, 128>}, {transform_indices = @transform_5, window_bounds = array<i64: 1, 16, 16, 128>}, {transform_indices = @transform_6, window_bounds = array<i64: 1, 8, 8, 128>}]} {
    %c0 = arith.constant 0 : index
    %c0_0 = arith.constant 0 : index
    %c0_1 = arith.constant 0 : index
    %c0_2 = arith.constant 0 : index
    %0 = vector.load %arg1[%c0, %c0_0, %c0_1, %c0_2] : memref<1x16x16x8xbf16, #tpu.memory_space<vmem>>, vector<1x16x16x8xbf16>
    %1 = vector.shape_cast %0 : vector<1x16x16x8xbf16> to vector<16x16x8xbf16>
    %cst = arith.constant 0.000000e+00 : bf16
    %2 = vector.broadcast %cst : bf16 to vector<16x1x8xbf16>
    %3 = vector.extract_strided_slice %1 {offsets = [0, 0, 0], sizes = [16, 15, 8], strides = [1, 1, 1]} : vector<16x16x8xbf16> to vector<16x15x8xbf16>
    %4 = tpu.concatenate %2, %3 in 1 : vector<16x1x8xbf16>, vector<16x15x8xbf16> -> vector<16x16x8xbf16>
    %5 = vector.extract_strided_slice %1 {offsets = [0, 1, 0], sizes = [16, 15, 8], strides = [1, 1, 1]} : vector<16x16x8xbf16> to vector<16x15x8xbf16>
    %6 = tpu.concatenate %5, %2 in 1 : vector<16x15x8xbf16>, vector<16x1x8xbf16> -> vector<16x16x8xbf16>
    %7 = tpu.concatenate %4, %1, %6 in 2 : vector<16x16x8xbf16>, vector<16x16x8xbf16>, vector<16x16x8xbf16> -> vector<16x16x24xbf16>
    %c1 = arith.constant 1 : index
    %c0_3 = arith.constant 0 : index
    %c0_4 = arith.constant 0 : index
    %8 = vector.load %arg8[%c1, %c0_3, %c0_4] : memref<18x16x24xbf16, #tpu.memory_space<vmem>>, vector<16x16x24xbf16>
    tpu.vector_store %arg8[%c1, %c0_3, %c0_4], %7 {strides = array<i32>} : memref<18x16x24xbf16, #tpu.memory_space<vmem>>, vector<16x16x24xbf16>,
    %cst_5 = arith.constant 0.000000e+00 : bf16
    %9 = vector.broadcast %cst_5 : bf16 to vector<1x16x24xbf16>
    %c0_6 = arith.constant 0 : index
    %c0_7 = arith.constant 0 : index
    %c0_8 = arith.constant 0 : index
    %10 = vector.load %arg8[%c0_6, %c0_7, %c0_8] : memref<18x16x24xbf16, #tpu.memory_space<vmem>>, vector<1x16x24xbf16>
    tpu.vector_store %arg8[%c0_6, %c0_7, %c0_8], %9 {strides = array<i32>} : memref<18x16x24xbf16, #tpu.memory_space<vmem>>, vector<1x16x24xbf16>,
    %c17 = arith.constant 17 : index
    %c0_9 = arith.constant 0 : index
    %c0_10 = arith.constant 0 : index
    %11 = vector.load %arg8[%c17, %c0_9, %c0_10] : memref<18x16x24xbf16, #tpu.memory_space<vmem>>, vector<1x16x24xbf16>
    tpu.vector_store %arg8[%c17, %c0_9, %c0_10], %9 {strides = array<i32>} : memref<18x16x24xbf16, #tpu.memory_space<vmem>>, vector<1x16x24xbf16>,
    %c0_11 = arith.constant 0 : index
    %c0_12 = arith.constant 0 : index
    %c0_13 = arith.constant 0 : index
    %12 = vector.load %arg8[%c0_11, %c0_12, %c0_13] : memref<18x16x24xbf16, #tpu.memory_space<vmem>>, vector<16x16x24xbf16>
    %13 = vector.shape_cast %12 : vector<16x16x24xbf16> to vector<256x24xbf16>
    %c0_14 = arith.constant 0 : index
    %c0_15 = arith.constant 0 : index
    %c0_16 = arith.constant 0 : index
    %14 = vector.load %arg2[%c0_14, %c0_15, %c0_16] : memref<3x24x128xbf16, #tpu.memory_space<vmem>>, vector<1x24x128xbf16>
    %15 = vector.shape_cast %14 : vector<1x24x128xbf16> to vector<24x128xbf16>
    %cst_17 = arith.constant dense<0.000000e+00> : vector<256x128xf32>
    %16 = tpu.matmul %13, %15, %cst_17 {dimension_numbers = #tpu.dot_dimension_numbers<[1], [0], [0], [1], [0, 0, 1, 1], [], []>} : vector<256x24xbf16>, vector<24x128xbf16>, vector<256x128xf32> -> vector<256x128xf32>
    %c0_18 = arith.constant 0 : index
    %c0_19 = arith.constant 0 : index
    %17 = vector.load %arg10[%c0_18, %c0_19] : memref<256x128xf32, #tpu.memory_space<vmem>>, vector<256x128xf32>
    tpu.vector_store %arg10[%c0_18, %c0_19], %16 {strides = array<i32>} : memref<256x128xf32, #tpu.memory_space<vmem>>, vector<256x128xf32>,
    %c1_20 = arith.constant 1 : index
    %c0_21 = arith.constant 0 : index
    %c0_22 = arith.constant 0 : index
    %18 = vector.load %arg8[%c1_20, %c0_21, %c0_22] : memref<18x16x24xbf16, #tpu.memory_space<vmem>>, vector<16x16x24xbf16>
    %19 = vector.shape_cast %18 : vector<16x16x24xbf16> to vector<256x24xbf16>
    %c1_23 = arith.constant 1 : index
    %c0_24 = arith.constant 0 : index
    %c0_25 = arith.constant 0 : index
    %20 = vector.load %arg2[%c1_23, %c0_24, %c0_25] : memref<3x24x128xbf16, #tpu.memory_space<vmem>>, vector<1x24x128xbf16>
    %21 = vector.shape_cast %20 : vector<1x24x128xbf16> to vector<24x128xbf16>
    %cst_26 = arith.constant dense<0.000000e+00> : vector<256x128xf32>
    %22 = tpu.matmul %19, %21, %cst_26 {dimension_numbers = #tpu.dot_dimension_numbers<[1], [0], [0], [1], [0, 0, 1, 1], [], []>} : vector<256x24xbf16>, vector<24x128xbf16>, vector<256x128xf32> -> vector<256x128xf32>
    %c0_27 = arith.constant 0 : index
    %c0_28 = arith.constant 0 : index
    %23 = vector.load %arg10[%c0_27, %c0_28] : memref<256x128xf32, #tpu.memory_space<vmem>>, vector<256x128xf32>
    %24 = arith.addf %23, %22 : vector<256x128xf32>
    %c0_29 = arith.constant 0 : index
    %c0_30 = arith.constant 0 : index
    %25 = vector.load %arg10[%c0_29, %c0_30] : memref<256x128xf32, #tpu.memory_space<vmem>>, vector<256x128xf32>
    tpu.vector_store %arg10[%c0_29, %c0_30], %24 {strides = array<i32>} : memref<256x128xf32, #tpu.memory_space<vmem>>, vector<256x128xf32>,
    %c2 = arith.constant 2 : index
    %c0_31 = arith.constant 0 : index
    %c0_32 = arith.constant 0 : index
    %26 = vector.load %arg8[%c2, %c0_31, %c0_32] : memref<18x16x24xbf16, #tpu.memory_space<vmem>>, vector<16x16x24xbf16>
    %27 = vector.shape_cast %26 : vector<16x16x24xbf16> to vector<256x24xbf16>
    %c2_33 = arith.constant 2 : index
    %c0_34 = arith.constant 0 : index
    %c0_35 = arith.constant 0 : index
    %28 = vector.load %arg2[%c2_33, %c0_34, %c0_35] : memref<3x24x128xbf16, #tpu.memory_space<vmem>>, vector<1x24x128xbf16>
    %29 = vector.shape_cast %28 : vector<1x24x128xbf16> to vector<24x128xbf16>
    %cst_36 = arith.constant dense<0.000000e+00> : vector<256x128xf32>
    %30 = tpu.matmul %27, %29, %cst_36 {dimension_numbers = #tpu.dot_dimension_numbers<[1], [0], [0], [1], [0, 0, 1, 1], [], []>} : vector<256x24xbf16>, vector<24x128xbf16>, vector<256x128xf32> -> vector<256x128xf32>
    %c0_37 = arith.constant 0 : index
    %c0_38 = arith.constant 0 : index
    %31 = vector.load %arg10[%c0_37, %c0_38] : memref<256x128xf32, #tpu.memory_space<vmem>>, vector<256x128xf32>
    %32 = arith.addf %31, %30 : vector<256x128xf32>
    %c0_39 = arith.constant 0 : index
    %c0_40 = arith.constant 0 : index
    %33 = vector.load %arg10[%c0_39, %c0_40] : memref<256x128xf32, #tpu.memory_space<vmem>>, vector<256x128xf32>
    tpu.vector_store %arg10[%c0_39, %c0_40], %32 {strides = array<i32>} : memref<256x128xf32, #tpu.memory_space<vmem>>, vector<256x128xf32>,
    %c0_41 = arith.constant 0 : index
    %c0_42 = arith.constant 0 : index
    %34 = vector.load %arg10[%c0_41, %c0_42] : memref<256x128xf32, #tpu.memory_space<vmem>>, vector<256x128xf32>
    %c0_43 = arith.constant 0 : index
    %c0_44 = arith.constant 0 : index
    %35 = vector.load %arg3[%c0_43, %c0_44] : memref<1x128xf32, #tpu.memory_space<vmem>>, vector<1x128xf32>
    %36 = vector.broadcast %35 : vector<1x128xf32> to vector<256x128xf32>
    %37 = arith.addf %34, %36 : vector<256x128xf32>
    %cst_45 = arith.constant 0.000000e+00 : f32
    %38 = vector.broadcast %cst_45 : f32 to vector<256x128xf32>
    %39 = arith.maximumf %37, %38 : vector<256x128xf32>
    %40 = arith.truncf %39 : vector<256x128xf32> to vector<256x128xbf16>
    %41 = vector.shape_cast %40 : vector<256x128xbf16> to vector<16x16x128xbf16>
    %cst_46 = arith.constant 0.000000e+00 : bf16
    %42 = vector.broadcast %cst_46 : bf16 to vector<16x1x128xbf16>
    %43 = vector.extract_strided_slice %41 {offsets = [0, 0, 0], sizes = [16, 15, 128], strides = [1, 1, 1]} : vector<16x16x128xbf16> to vector<16x15x128xbf16>
    %44 = tpu.concatenate %42, %43 in 1 : vector<16x1x128xbf16>, vector<16x15x128xbf16> -> vector<16x16x128xbf16>
    %45 = vector.extract_strided_slice %41 {offsets = [0, 1, 0], sizes = [16, 15, 128], strides = [1, 1, 1]} : vector<16x16x128xbf16> to vector<16x15x128xbf16>
    %46 = tpu.concatenate %45, %42 in 1 : vector<16x15x128xbf16>, vector<16x1x128xbf16> -> vector<16x16x128xbf16>
    %47 = tpu.concatenate %44, %41, %46 in 2 : vector<16x16x128xbf16>, vector<16x16x128xbf16>, vector<16x16x128xbf16> -> vector<16x16x384xbf16>
    %c1_47 = arith.constant 1 : index
    %c0_48 = arith.constant 0 : index
    %c0_49 = arith.constant 0 : index
    %48 = vector.load %arg9[%c1_47, %c0_48, %c0_49] : memref<18x16x384xbf16, #tpu.memory_space<vmem>>, vector<16x16x384xbf16>
    tpu.vector_store %arg9[%c1_47, %c0_48, %c0_49], %47 {strides = array<i32>} : memref<18x16x384xbf16, #tpu.memory_space<vmem>>, vector<16x16x384xbf16>,
    %cst_50 = arith.constant 0.000000e+00 : bf16
    %49 = vector.broadcast %cst_50 : bf16 to vector<1x16x384xbf16>
    %c0_51 = arith.constant 0 : index
    %c0_52 = arith.constant 0 : index
    %c0_53 = arith.constant 0 : index
    %50 = vector.load %arg9[%c0_51, %c0_52, %c0_53] : memref<18x16x384xbf16, #tpu.memory_space<vmem>>, vector<1x16x384xbf16>
    tpu.vector_store %arg9[%c0_51, %c0_52, %c0_53], %49 {strides = array<i32>} : memref<18x16x384xbf16, #tpu.memory_space<vmem>>, vector<1x16x384xbf16>,
    %c17_54 = arith.constant 17 : index
    %c0_55 = arith.constant 0 : index
    %c0_56 = arith.constant 0 : index
    %51 = vector.load %arg9[%c17_54, %c0_55, %c0_56] : memref<18x16x384xbf16, #tpu.memory_space<vmem>>, vector<1x16x384xbf16>
    tpu.vector_store %arg9[%c17_54, %c0_55, %c0_56], %49 {strides = array<i32>} : memref<18x16x384xbf16, #tpu.memory_space<vmem>>, vector<1x16x384xbf16>,
    %c0_57 = arith.constant 0 : index
    %c0_58 = arith.constant 0 : index
    %c0_59 = arith.constant 0 : index
    %52 = vector.load %arg9[%c0_57, %c0_58, %c0_59] : memref<18x16x384xbf16, #tpu.memory_space<vmem>>, vector<16x16x384xbf16>
    %53 = vector.shape_cast %52 : vector<16x16x384xbf16> to vector<256x384xbf16>
    %c0_60 = arith.constant 0 : index
    %c0_61 = arith.constant 0 : index
    %c0_62 = arith.constant 0 : index
    %54 = vector.load %arg4[%c0_60, %c0_61, %c0_62] : memref<3x384x128xbf16, #tpu.memory_space<vmem>>, vector<1x384x128xbf16>
    %55 = vector.shape_cast %54 : vector<1x384x128xbf16> to vector<384x128xbf16>
    %cst_63 = arith.constant dense<0.000000e+00> : vector<256x128xf32>
    %56 = tpu.matmul %53, %55, %cst_63 {dimension_numbers = #tpu.dot_dimension_numbers<[1], [0], [0], [1], [0, 0, 1, 1], [], []>} : vector<256x384xbf16>, vector<384x128xbf16>, vector<256x128xf32> -> vector<256x128xf32>
    %c0_64 = arith.constant 0 : index
    %c0_65 = arith.constant 0 : index
    %57 = vector.load %arg10[%c0_64, %c0_65] : memref<256x128xf32, #tpu.memory_space<vmem>>, vector<256x128xf32>
    tpu.vector_store %arg10[%c0_64, %c0_65], %56 {strides = array<i32>} : memref<256x128xf32, #tpu.memory_space<vmem>>, vector<256x128xf32>,
    %c1_66 = arith.constant 1 : index
    %c0_67 = arith.constant 0 : index
    %c0_68 = arith.constant 0 : index
    %58 = vector.load %arg9[%c1_66, %c0_67, %c0_68] : memref<18x16x384xbf16, #tpu.memory_space<vmem>>, vector<16x16x384xbf16>
    %59 = vector.shape_cast %58 : vector<16x16x384xbf16> to vector<256x384xbf16>
    %c1_69 = arith.constant 1 : index
    %c0_70 = arith.constant 0 : index
    %c0_71 = arith.constant 0 : index
    %60 = vector.load %arg4[%c1_69, %c0_70, %c0_71] : memref<3x384x128xbf16, #tpu.memory_space<vmem>>, vector<1x384x128xbf16>
    %61 = vector.shape_cast %60 : vector<1x384x128xbf16> to vector<384x128xbf16>
    %cst_72 = arith.constant dense<0.000000e+00> : vector<256x128xf32>
    %62 = tpu.matmul %59, %61, %cst_72 {dimension_numbers = #tpu.dot_dimension_numbers<[1], [0], [0], [1], [0, 0, 1, 1], [], []>} : vector<256x384xbf16>, vector<384x128xbf16>, vector<256x128xf32> -> vector<256x128xf32>
    %c0_73 = arith.constant 0 : index
    %c0_74 = arith.constant 0 : index
    %63 = vector.load %arg10[%c0_73, %c0_74] : memref<256x128xf32, #tpu.memory_space<vmem>>, vector<256x128xf32>
    %64 = arith.addf %63, %62 : vector<256x128xf32>
    %c0_75 = arith.constant 0 : index
    %c0_76 = arith.constant 0 : index
    %65 = vector.load %arg10[%c0_75, %c0_76] : memref<256x128xf32, #tpu.memory_space<vmem>>, vector<256x128xf32>
    tpu.vector_store %arg10[%c0_75, %c0_76], %64 {strides = array<i32>} : memref<256x128xf32, #tpu.memory_space<vmem>>, vector<256x128xf32>,
    %c2_77 = arith.constant 2 : index
    %c0_78 = arith.constant 0 : index
    %c0_79 = arith.constant 0 : index
    %66 = vector.load %arg9[%c2_77, %c0_78, %c0_79] : memref<18x16x384xbf16, #tpu.memory_space<vmem>>, vector<16x16x384xbf16>
    %67 = vector.shape_cast %66 : vector<16x16x384xbf16> to vector<256x384xbf16>
    %c2_80 = arith.constant 2 : index
    %c0_81 = arith.constant 0 : index
    %c0_82 = arith.constant 0 : index
    %68 = vector.load %arg4[%c2_80, %c0_81, %c0_82] : memref<3x384x128xbf16, #tpu.memory_space<vmem>>, vector<1x384x128xbf16>
    %69 = vector.shape_cast %68 : vector<1x384x128xbf16> to vector<384x128xbf16>
    %cst_83 = arith.constant dense<0.000000e+00> : vector<256x128xf32>
    %70 = tpu.matmul %67, %69, %cst_83 {dimension_numbers = #tpu.dot_dimension_numbers<[1], [0], [0], [1], [0, 0, 1, 1], [], []>} : vector<256x384xbf16>, vector<384x128xbf16>, vector<256x128xf32> -> vector<256x128xf32>
    %c0_84 = arith.constant 0 : index
    %c0_85 = arith.constant 0 : index
    %71 = vector.load %arg10[%c0_84, %c0_85] : memref<256x128xf32, #tpu.memory_space<vmem>>, vector<256x128xf32>
    %72 = arith.addf %71, %70 : vector<256x128xf32>
    %c0_86 = arith.constant 0 : index
    %c0_87 = arith.constant 0 : index
    %73 = vector.load %arg10[%c0_86, %c0_87] : memref<256x128xf32, #tpu.memory_space<vmem>>, vector<256x128xf32>
    tpu.vector_store %arg10[%c0_86, %c0_87], %72 {strides = array<i32>} : memref<256x128xf32, #tpu.memory_space<vmem>>, vector<256x128xf32>,
    %c0_88 = arith.constant 0 : index
    %c0_89 = arith.constant 0 : index
    %74 = vector.load %arg10[%c0_88, %c0_89] : memref<256x128xf32, #tpu.memory_space<vmem>>, vector<256x128xf32>
    %c0_90 = arith.constant 0 : index
    %c0_91 = arith.constant 0 : index
    %75 = vector.load %arg5[%c0_90, %c0_91] : memref<1x128xf32, #tpu.memory_space<vmem>>, vector<1x128xf32>
    %76 = vector.broadcast %75 : vector<1x128xf32> to vector<256x128xf32>
    %77 = arith.addf %74, %76 : vector<256x128xf32>
    %cst_92 = arith.constant 0.000000e+00 : f32
    %78 = vector.broadcast %cst_92 : f32 to vector<256x128xf32>
    %79 = arith.maximumf %77, %78 : vector<256x128xf32>
    %80 = arith.truncf %79 : vector<256x128xf32> to vector<256x128xbf16>
    %81 = vector.shape_cast %80 : vector<256x128xbf16> to vector<16x16x128xbf16>
    %c0_93 = arith.constant 0 : index
    %c0_94 = arith.constant 0 : index
    %c0_95 = arith.constant 0 : index
    %c0_96 = arith.constant 0 : index
    %82 = vector.load %arg6[%c0_93, %c0_94, %c0_95, %c0_96] : memref<1x16x16x128xbf16, #tpu.memory_space<vmem>>, vector<1x16x16x128xbf16>
    %83 = vector.shape_cast %82 : vector<1x16x16x128xbf16> to vector<16x16x128xbf16>
    %84 = vector.shape_cast %81 : vector<16x16x128xbf16> to vector<1x16x16x128xbf16>
    tpu.vector_store %arg6[%c0_93, %c0_94, %c0_95, %c0_96], %84 {strides = array<i32>} : memref<1x16x16x128xbf16, #tpu.memory_space<vmem>>, vector<1x16x16x128xbf16>,
    %85 = vector.shape_cast %81 : vector<16x16x128xbf16> to vector<16x8x256xbf16>
    %86 = vector.extract_strided_slice %85 {offsets = [0, 0, 0], sizes = [16, 8, 128], strides = [1, 1, 1]} : vector<16x8x256xbf16> to vector<16x8x128xbf16>
    %87 = vector.extract_strided_slice %85 {offsets = [0, 0, 128], sizes = [16, 8, 128], strides = [1, 1, 1]} : vector<16x8x256xbf16> to vector<16x8x128xbf16>
    %88 = arith.maximumf %86, %87 : vector<16x8x128xbf16>
    %89 = vector.shape_cast %88 : vector<16x8x128xbf16> to vector<8x2x8x128xbf16>
    %90 = vector.extract_strided_slice %89 {offsets = [0, 0, 0, 0], sizes = [8, 1, 8, 128], strides = [1, 1, 1, 1]} : vector<8x2x8x128xbf16> to vector<8x1x8x128xbf16>
    %91 = vector.shape_cast %90 : vector<8x1x8x128xbf16> to vector<8x8x128xbf16>
    %92 = vector.extract_strided_slice %89 {offsets = [0, 1, 0, 0], sizes = [8, 1, 8, 128], strides = [1, 1, 1, 1]} : vector<8x2x8x128xbf16> to vector<8x1x8x128xbf16>
    %93 = vector.shape_cast %92 : vector<8x1x8x128xbf16> to vector<8x8x128xbf16>
    %94 = arith.maximumf %91, %93 : vector<8x8x128xbf16>
    %c0_97 = arith.constant 0 : index
    %c0_98 = arith.constant 0 : index
    %c0_99 = arith.constant 0 : index
    %c0_100 = arith.constant 0 : index
    %95 = vector.load %arg7[%c0_97, %c0_98, %c0_99, %c0_100] : memref<1x8x8x128xbf16, #tpu.memory_space<vmem>>, vector<1x8x8x128xbf16>
    %96 = vector.shape_cast %95 : vector<1x8x8x128xbf16> to vector<8x8x128xbf16>
    %97 = vector.shape_cast %94 : vector<8x8x128xbf16> to vector<1x8x8x128xbf16>
    tpu.vector_store %arg7[%c0_97, %c0_98, %c0_99, %c0_100], %97 {strides = array<i32>} : memref<1x8x8x128xbf16, #tpu.memory_space<vmem>>, vector<1x8x8x128xbf16>,
    return
  }
  func.func @transform_0(%arg0: i32) -> (i32, i32, i32, i32) {
    %c0_i32 = arith.constant 0 : i32
    %c0_i32_0 = arith.constant 0 : i32
    %c0_i32_1 = arith.constant 0 : i32
    %c0_i32_2 = arith.constant 0 : i32
    return %arg0, %c0_i32, %c0_i32_0, %c0_i32_1 : i32, i32, i32, i32
  }
  func.func @transform_1(%arg0: i32) -> (i32, i32, i32) {
    %c0_i32 = arith.constant 0 : i32
    %c0_i32_0 = arith.constant 0 : i32
    %c0_i32_1 = arith.constant 0 : i32
    %c0_i32_2 = arith.constant 0 : i32
    return %c0_i32, %c0_i32_0, %c0_i32_1 : i32, i32, i32
  }
  func.func @transform_2(%arg0: i32) -> (i32, i32) {
    %c0_i32 = arith.constant 0 : i32
    %c0_i32_0 = arith.constant 0 : i32
    %c0_i32_1 = arith.constant 0 : i32
    return %c0_i32, %c0_i32_0 : i32, i32
  }
  func.func @transform_3(%arg0: i32) -> (i32, i32, i32) {
    %c0_i32 = arith.constant 0 : i32
    %c0_i32_0 = arith.constant 0 : i32
    %c0_i32_1 = arith.constant 0 : i32
    %c0_i32_2 = arith.constant 0 : i32
    return %c0_i32, %c0_i32_0, %c0_i32_1 : i32, i32, i32
  }
  func.func @transform_4(%arg0: i32) -> (i32, i32) {
    %c0_i32 = arith.constant 0 : i32
    %c0_i32_0 = arith.constant 0 : i32
    %c0_i32_1 = arith.constant 0 : i32
    return %c0_i32, %c0_i32_0 : i32, i32
  }
  func.func @transform_5(%arg0: i32) -> (i32, i32, i32, i32) {
    %c0_i32 = arith.constant 0 : i32
    %c0_i32_0 = arith.constant 0 : i32
    %c0_i32_1 = arith.constant 0 : i32
    %c0_i32_2 = arith.constant 0 : i32
    return %arg0, %c0_i32, %c0_i32_0, %c0_i32_1 : i32, i32, i32, i32
  }
  func.func @transform_6(%arg0: i32) -> (i32, i32, i32, i32) {
    %c0_i32 = arith.constant 0 : i32
    %c0_i32_0 = arith.constant 0 : i32
    %c0_i32_1 = arith.constant 0 : i32
    %c0_i32_2 = arith.constant 0 : i32
    return %arg0, %c0_i32, %c0_i32_0, %c0_i32_1 : i32, i32, i32, i32
  }
}

module attributes {stable_mosaic.version = 11 : i64} {
  func.func @_encoder_block_kernel(%arg0: i32, %arg1: memref<1x8x8x128xbf16, #tpu.memory_space<vmem>>, %arg2: memref<3x384x128xbf16, #tpu.memory_space<vmem>>, %arg3: memref<1x128xf32, #tpu.memory_space<vmem>>, %arg4: memref<3x384x128xbf16, #tpu.memory_space<vmem>>, %arg5: memref<1x128xf32, #tpu.memory_space<vmem>>, %arg6: memref<1x8x8x128xbf16, #tpu.memory_space<vmem>>, %arg7: memref<1x4x4x128xbf16, #tpu.memory_space<vmem>>, %arg8: memref<10x8x384xbf16, #tpu.memory_space<vmem>>, %arg9: memref<10x8x384xbf16, #tpu.memory_space<vmem>>, %arg10: memref<64x128xf32, #tpu.memory_space<vmem>>) attributes {dimension_semantics = [#tpu.dimension_semantics<parallel>], iteration_bounds = array<i64: 2>, scalar_prefetch = 0 : i64, scratch_operands = 3 : i64, tpu.core_type = #tpu.core_type<tc>, window_params = [{transform_indices = @transform_0, window_bounds = array<i64: 1, 8, 8, 128>}, {pipeline_mode = #tpu.pipeline_mode<synchronous>, transform_indices = @transform_1, window_bounds = array<i64: 3, 384, 128>}, {pipeline_mode = #tpu.pipeline_mode<synchronous>, transform_indices = @transform_2, window_bounds = array<i64: 1, 128>}, {pipeline_mode = #tpu.pipeline_mode<synchronous>, transform_indices = @transform_3, window_bounds = array<i64: 3, 384, 128>}, {pipeline_mode = #tpu.pipeline_mode<synchronous>, transform_indices = @transform_4, window_bounds = array<i64: 1, 128>}, {transform_indices = @transform_5, window_bounds = array<i64: 1, 8, 8, 128>}, {transform_indices = @transform_6, window_bounds = array<i64: 1, 4, 4, 128>}]} {
    %c0 = arith.constant 0 : index
    %c0_0 = arith.constant 0 : index
    %c0_1 = arith.constant 0 : index
    %c0_2 = arith.constant 0 : index
    %0 = vector.load %arg1[%c0, %c0_0, %c0_1, %c0_2] : memref<1x8x8x128xbf16, #tpu.memory_space<vmem>>, vector<1x8x8x128xbf16>
    %1 = vector.shape_cast %0 : vector<1x8x8x128xbf16> to vector<8x8x128xbf16>
    %cst = arith.constant 0.000000e+00 : bf16
    %2 = vector.broadcast %cst : bf16 to vector<8x1x128xbf16>
    %3 = vector.extract_strided_slice %1 {offsets = [0, 0, 0], sizes = [8, 7, 128], strides = [1, 1, 1]} : vector<8x8x128xbf16> to vector<8x7x128xbf16>
    %4 = tpu.concatenate %2, %3 in 1 : vector<8x1x128xbf16>, vector<8x7x128xbf16> -> vector<8x8x128xbf16>
    %5 = vector.extract_strided_slice %1 {offsets = [0, 1, 0], sizes = [8, 7, 128], strides = [1, 1, 1]} : vector<8x8x128xbf16> to vector<8x7x128xbf16>
    %6 = tpu.concatenate %5, %2 in 1 : vector<8x7x128xbf16>, vector<8x1x128xbf16> -> vector<8x8x128xbf16>
    %7 = tpu.concatenate %4, %1, %6 in 2 : vector<8x8x128xbf16>, vector<8x8x128xbf16>, vector<8x8x128xbf16> -> vector<8x8x384xbf16>
    %c1 = arith.constant 1 : index
    %c0_3 = arith.constant 0 : index
    %c0_4 = arith.constant 0 : index
    %8 = vector.load %arg8[%c1, %c0_3, %c0_4] : memref<10x8x384xbf16, #tpu.memory_space<vmem>>, vector<8x8x384xbf16>
    tpu.vector_store %arg8[%c1, %c0_3, %c0_4], %7 {strides = array<i32>} : memref<10x8x384xbf16, #tpu.memory_space<vmem>>, vector<8x8x384xbf16>,
    %cst_5 = arith.constant 0.000000e+00 : bf16
    %9 = vector.broadcast %cst_5 : bf16 to vector<1x8x384xbf16>
    %c0_6 = arith.constant 0 : index
    %c0_7 = arith.constant 0 : index
    %c0_8 = arith.constant 0 : index
    %10 = vector.load %arg8[%c0_6, %c0_7, %c0_8] : memref<10x8x384xbf16, #tpu.memory_space<vmem>>, vector<1x8x384xbf16>
    tpu.vector_store %arg8[%c0_6, %c0_7, %c0_8], %9 {strides = array<i32>} : memref<10x8x384xbf16, #tpu.memory_space<vmem>>, vector<1x8x384xbf16>,
    %c9 = arith.constant 9 : index
    %c0_9 = arith.constant 0 : index
    %c0_10 = arith.constant 0 : index
    %11 = vector.load %arg8[%c9, %c0_9, %c0_10] : memref<10x8x384xbf16, #tpu.memory_space<vmem>>, vector<1x8x384xbf16>
    tpu.vector_store %arg8[%c9, %c0_9, %c0_10], %9 {strides = array<i32>} : memref<10x8x384xbf16, #tpu.memory_space<vmem>>, vector<1x8x384xbf16>,
    %c0_11 = arith.constant 0 : index
    %c0_12 = arith.constant 0 : index
    %c0_13 = arith.constant 0 : index
    %12 = vector.load %arg8[%c0_11, %c0_12, %c0_13] : memref<10x8x384xbf16, #tpu.memory_space<vmem>>, vector<8x8x384xbf16>
    %13 = vector.shape_cast %12 : vector<8x8x384xbf16> to vector<64x384xbf16>
    %c0_14 = arith.constant 0 : index
    %c0_15 = arith.constant 0 : index
    %c0_16 = arith.constant 0 : index
    %14 = vector.load %arg2[%c0_14, %c0_15, %c0_16] : memref<3x384x128xbf16, #tpu.memory_space<vmem>>, vector<1x384x128xbf16>
    %15 = vector.shape_cast %14 : vector<1x384x128xbf16> to vector<384x128xbf16>
    %cst_17 = arith.constant dense<0.000000e+00> : vector<64x128xf32>
    %16 = tpu.matmul %13, %15, %cst_17 {dimension_numbers = #tpu.dot_dimension_numbers<[1], [0], [0], [1], [0, 0, 1, 1], [], []>} : vector<64x384xbf16>, vector<384x128xbf16>, vector<64x128xf32> -> vector<64x128xf32>
    %c0_18 = arith.constant 0 : index
    %c0_19 = arith.constant 0 : index
    %17 = vector.load %arg10[%c0_18, %c0_19] : memref<64x128xf32, #tpu.memory_space<vmem>>, vector<64x128xf32>
    tpu.vector_store %arg10[%c0_18, %c0_19], %16 {strides = array<i32>} : memref<64x128xf32, #tpu.memory_space<vmem>>, vector<64x128xf32>,
    %c1_20 = arith.constant 1 : index
    %c0_21 = arith.constant 0 : index
    %c0_22 = arith.constant 0 : index
    %18 = vector.load %arg8[%c1_20, %c0_21, %c0_22] : memref<10x8x384xbf16, #tpu.memory_space<vmem>>, vector<8x8x384xbf16>
    %19 = vector.shape_cast %18 : vector<8x8x384xbf16> to vector<64x384xbf16>
    %c1_23 = arith.constant 1 : index
    %c0_24 = arith.constant 0 : index
    %c0_25 = arith.constant 0 : index
    %20 = vector.load %arg2[%c1_23, %c0_24, %c0_25] : memref<3x384x128xbf16, #tpu.memory_space<vmem>>, vector<1x384x128xbf16>
    %21 = vector.shape_cast %20 : vector<1x384x128xbf16> to vector<384x128xbf16>
    %cst_26 = arith.constant dense<0.000000e+00> : vector<64x128xf32>
    %22 = tpu.matmul %19, %21, %cst_26 {dimension_numbers = #tpu.dot_dimension_numbers<[1], [0], [0], [1], [0, 0, 1, 1], [], []>} : vector<64x384xbf16>, vector<384x128xbf16>, vector<64x128xf32> -> vector<64x128xf32>
    %c0_27 = arith.constant 0 : index
    %c0_28 = arith.constant 0 : index
    %23 = vector.load %arg10[%c0_27, %c0_28] : memref<64x128xf32, #tpu.memory_space<vmem>>, vector<64x128xf32>
    %24 = arith.addf %23, %22 : vector<64x128xf32>
    %c0_29 = arith.constant 0 : index
    %c0_30 = arith.constant 0 : index
    %25 = vector.load %arg10[%c0_29, %c0_30] : memref<64x128xf32, #tpu.memory_space<vmem>>, vector<64x128xf32>
    tpu.vector_store %arg10[%c0_29, %c0_30], %24 {strides = array<i32>} : memref<64x128xf32, #tpu.memory_space<vmem>>, vector<64x128xf32>,
    %c2 = arith.constant 2 : index
    %c0_31 = arith.constant 0 : index
    %c0_32 = arith.constant 0 : index
    %26 = vector.load %arg8[%c2, %c0_31, %c0_32] : memref<10x8x384xbf16, #tpu.memory_space<vmem>>, vector<8x8x384xbf16>
    %27 = vector.shape_cast %26 : vector<8x8x384xbf16> to vector<64x384xbf16>
    %c2_33 = arith.constant 2 : index
    %c0_34 = arith.constant 0 : index
    %c0_35 = arith.constant 0 : index
    %28 = vector.load %arg2[%c2_33, %c0_34, %c0_35] : memref<3x384x128xbf16, #tpu.memory_space<vmem>>, vector<1x384x128xbf16>
    %29 = vector.shape_cast %28 : vector<1x384x128xbf16> to vector<384x128xbf16>
    %cst_36 = arith.constant dense<0.000000e+00> : vector<64x128xf32>
    %30 = tpu.matmul %27, %29, %cst_36 {dimension_numbers = #tpu.dot_dimension_numbers<[1], [0], [0], [1], [0, 0, 1, 1], [], []>} : vector<64x384xbf16>, vector<384x128xbf16>, vector<64x128xf32> -> vector<64x128xf32>
    %c0_37 = arith.constant 0 : index
    %c0_38 = arith.constant 0 : index
    %31 = vector.load %arg10[%c0_37, %c0_38] : memref<64x128xf32, #tpu.memory_space<vmem>>, vector<64x128xf32>
    %32 = arith.addf %31, %30 : vector<64x128xf32>
    %c0_39 = arith.constant 0 : index
    %c0_40 = arith.constant 0 : index
    %33 = vector.load %arg10[%c0_39, %c0_40] : memref<64x128xf32, #tpu.memory_space<vmem>>, vector<64x128xf32>
    tpu.vector_store %arg10[%c0_39, %c0_40], %32 {strides = array<i32>} : memref<64x128xf32, #tpu.memory_space<vmem>>, vector<64x128xf32>,
    %c0_41 = arith.constant 0 : index
    %c0_42 = arith.constant 0 : index
    %34 = vector.load %arg10[%c0_41, %c0_42] : memref<64x128xf32, #tpu.memory_space<vmem>>, vector<64x128xf32>
    %c0_43 = arith.constant 0 : index
    %c0_44 = arith.constant 0 : index
    %35 = vector.load %arg3[%c0_43, %c0_44] : memref<1x128xf32, #tpu.memory_space<vmem>>, vector<1x128xf32>
    %36 = vector.broadcast %35 : vector<1x128xf32> to vector<64x128xf32>
    %37 = arith.addf %34, %36 : vector<64x128xf32>
    %cst_45 = arith.constant 0.000000e+00 : f32
    %38 = vector.broadcast %cst_45 : f32 to vector<64x128xf32>
    %39 = arith.maximumf %37, %38 : vector<64x128xf32>
    %40 = arith.truncf %39 : vector<64x128xf32> to vector<64x128xbf16>
    %41 = vector.shape_cast %40 : vector<64x128xbf16> to vector<8x8x128xbf16>
    %cst_46 = arith.constant 0.000000e+00 : bf16
    %42 = vector.broadcast %cst_46 : bf16 to vector<8x1x128xbf16>
    %43 = vector.extract_strided_slice %41 {offsets = [0, 0, 0], sizes = [8, 7, 128], strides = [1, 1, 1]} : vector<8x8x128xbf16> to vector<8x7x128xbf16>
    %44 = tpu.concatenate %42, %43 in 1 : vector<8x1x128xbf16>, vector<8x7x128xbf16> -> vector<8x8x128xbf16>
    %45 = vector.extract_strided_slice %41 {offsets = [0, 1, 0], sizes = [8, 7, 128], strides = [1, 1, 1]} : vector<8x8x128xbf16> to vector<8x7x128xbf16>
    %46 = tpu.concatenate %45, %42 in 1 : vector<8x7x128xbf16>, vector<8x1x128xbf16> -> vector<8x8x128xbf16>
    %47 = tpu.concatenate %44, %41, %46 in 2 : vector<8x8x128xbf16>, vector<8x8x128xbf16>, vector<8x8x128xbf16> -> vector<8x8x384xbf16>
    %c1_47 = arith.constant 1 : index
    %c0_48 = arith.constant 0 : index
    %c0_49 = arith.constant 0 : index
    %48 = vector.load %arg9[%c1_47, %c0_48, %c0_49] : memref<10x8x384xbf16, #tpu.memory_space<vmem>>, vector<8x8x384xbf16>
    tpu.vector_store %arg9[%c1_47, %c0_48, %c0_49], %47 {strides = array<i32>} : memref<10x8x384xbf16, #tpu.memory_space<vmem>>, vector<8x8x384xbf16>,
    %cst_50 = arith.constant 0.000000e+00 : bf16
    %49 = vector.broadcast %cst_50 : bf16 to vector<1x8x384xbf16>
    %c0_51 = arith.constant 0 : index
    %c0_52 = arith.constant 0 : index
    %c0_53 = arith.constant 0 : index
    %50 = vector.load %arg9[%c0_51, %c0_52, %c0_53] : memref<10x8x384xbf16, #tpu.memory_space<vmem>>, vector<1x8x384xbf16>
    tpu.vector_store %arg9[%c0_51, %c0_52, %c0_53], %49 {strides = array<i32>} : memref<10x8x384xbf16, #tpu.memory_space<vmem>>, vector<1x8x384xbf16>,
    %c9_54 = arith.constant 9 : index
    %c0_55 = arith.constant 0 : index
    %c0_56 = arith.constant 0 : index
    %51 = vector.load %arg9[%c9_54, %c0_55, %c0_56] : memref<10x8x384xbf16, #tpu.memory_space<vmem>>, vector<1x8x384xbf16>
    tpu.vector_store %arg9[%c9_54, %c0_55, %c0_56], %49 {strides = array<i32>} : memref<10x8x384xbf16, #tpu.memory_space<vmem>>, vector<1x8x384xbf16>,
    %c0_57 = arith.constant 0 : index
    %c0_58 = arith.constant 0 : index
    %c0_59 = arith.constant 0 : index
    %52 = vector.load %arg9[%c0_57, %c0_58, %c0_59] : memref<10x8x384xbf16, #tpu.memory_space<vmem>>, vector<8x8x384xbf16>
    %53 = vector.shape_cast %52 : vector<8x8x384xbf16> to vector<64x384xbf16>
    %c0_60 = arith.constant 0 : index
    %c0_61 = arith.constant 0 : index
    %c0_62 = arith.constant 0 : index
    %54 = vector.load %arg4[%c0_60, %c0_61, %c0_62] : memref<3x384x128xbf16, #tpu.memory_space<vmem>>, vector<1x384x128xbf16>
    %55 = vector.shape_cast %54 : vector<1x384x128xbf16> to vector<384x128xbf16>
    %cst_63 = arith.constant dense<0.000000e+00> : vector<64x128xf32>
    %56 = tpu.matmul %53, %55, %cst_63 {dimension_numbers = #tpu.dot_dimension_numbers<[1], [0], [0], [1], [0, 0, 1, 1], [], []>} : vector<64x384xbf16>, vector<384x128xbf16>, vector<64x128xf32> -> vector<64x128xf32>
    %c0_64 = arith.constant 0 : index
    %c0_65 = arith.constant 0 : index
    %57 = vector.load %arg10[%c0_64, %c0_65] : memref<64x128xf32, #tpu.memory_space<vmem>>, vector<64x128xf32>
    tpu.vector_store %arg10[%c0_64, %c0_65], %56 {strides = array<i32>} : memref<64x128xf32, #tpu.memory_space<vmem>>, vector<64x128xf32>,
    %c1_66 = arith.constant 1 : index
    %c0_67 = arith.constant 0 : index
    %c0_68 = arith.constant 0 : index
    %58 = vector.load %arg9[%c1_66, %c0_67, %c0_68] : memref<10x8x384xbf16, #tpu.memory_space<vmem>>, vector<8x8x384xbf16>
    %59 = vector.shape_cast %58 : vector<8x8x384xbf16> to vector<64x384xbf16>
    %c1_69 = arith.constant 1 : index
    %c0_70 = arith.constant 0 : index
    %c0_71 = arith.constant 0 : index
    %60 = vector.load %arg4[%c1_69, %c0_70, %c0_71] : memref<3x384x128xbf16, #tpu.memory_space<vmem>>, vector<1x384x128xbf16>
    %61 = vector.shape_cast %60 : vector<1x384x128xbf16> to vector<384x128xbf16>
    %cst_72 = arith.constant dense<0.000000e+00> : vector<64x128xf32>
    %62 = tpu.matmul %59, %61, %cst_72 {dimension_numbers = #tpu.dot_dimension_numbers<[1], [0], [0], [1], [0, 0, 1, 1], [], []>} : vector<64x384xbf16>, vector<384x128xbf16>, vector<64x128xf32> -> vector<64x128xf32>
    %c0_73 = arith.constant 0 : index
    %c0_74 = arith.constant 0 : index
    %63 = vector.load %arg10[%c0_73, %c0_74] : memref<64x128xf32, #tpu.memory_space<vmem>>, vector<64x128xf32>
    %64 = arith.addf %63, %62 : vector<64x128xf32>
    %c0_75 = arith.constant 0 : index
    %c0_76 = arith.constant 0 : index
    %65 = vector.load %arg10[%c0_75, %c0_76] : memref<64x128xf32, #tpu.memory_space<vmem>>, vector<64x128xf32>
    tpu.vector_store %arg10[%c0_75, %c0_76], %64 {strides = array<i32>} : memref<64x128xf32, #tpu.memory_space<vmem>>, vector<64x128xf32>,
    %c2_77 = arith.constant 2 : index
    %c0_78 = arith.constant 0 : index
    %c0_79 = arith.constant 0 : index
    %66 = vector.load %arg9[%c2_77, %c0_78, %c0_79] : memref<10x8x384xbf16, #tpu.memory_space<vmem>>, vector<8x8x384xbf16>
    %67 = vector.shape_cast %66 : vector<8x8x384xbf16> to vector<64x384xbf16>
    %c2_80 = arith.constant 2 : index
    %c0_81 = arith.constant 0 : index
    %c0_82 = arith.constant 0 : index
    %68 = vector.load %arg4[%c2_80, %c0_81, %c0_82] : memref<3x384x128xbf16, #tpu.memory_space<vmem>>, vector<1x384x128xbf16>
    %69 = vector.shape_cast %68 : vector<1x384x128xbf16> to vector<384x128xbf16>
    %cst_83 = arith.constant dense<0.000000e+00> : vector<64x128xf32>
    %70 = tpu.matmul %67, %69, %cst_83 {dimension_numbers = #tpu.dot_dimension_numbers<[1], [0], [0], [1], [0, 0, 1, 1], [], []>} : vector<64x384xbf16>, vector<384x128xbf16>, vector<64x128xf32> -> vector<64x128xf32>
    %c0_84 = arith.constant 0 : index
    %c0_85 = arith.constant 0 : index
    %71 = vector.load %arg10[%c0_84, %c0_85] : memref<64x128xf32, #tpu.memory_space<vmem>>, vector<64x128xf32>
    %72 = arith.addf %71, %70 : vector<64x128xf32>
    %c0_86 = arith.constant 0 : index
    %c0_87 = arith.constant 0 : index
    %73 = vector.load %arg10[%c0_86, %c0_87] : memref<64x128xf32, #tpu.memory_space<vmem>>, vector<64x128xf32>
    tpu.vector_store %arg10[%c0_86, %c0_87], %72 {strides = array<i32>} : memref<64x128xf32, #tpu.memory_space<vmem>>, vector<64x128xf32>,
    %c0_88 = arith.constant 0 : index
    %c0_89 = arith.constant 0 : index
    %74 = vector.load %arg10[%c0_88, %c0_89] : memref<64x128xf32, #tpu.memory_space<vmem>>, vector<64x128xf32>
    %c0_90 = arith.constant 0 : index
    %c0_91 = arith.constant 0 : index
    %75 = vector.load %arg5[%c0_90, %c0_91] : memref<1x128xf32, #tpu.memory_space<vmem>>, vector<1x128xf32>
    %76 = vector.broadcast %75 : vector<1x128xf32> to vector<64x128xf32>
    %77 = arith.addf %74, %76 : vector<64x128xf32>
    %cst_92 = arith.constant 0.000000e+00 : f32
    %78 = vector.broadcast %cst_92 : f32 to vector<64x128xf32>
    %79 = arith.maximumf %77, %78 : vector<64x128xf32>
    %80 = arith.truncf %79 : vector<64x128xf32> to vector<64x128xbf16>
    %81 = vector.shape_cast %80 : vector<64x128xbf16> to vector<8x8x128xbf16>
    %c0_93 = arith.constant 0 : index
    %c0_94 = arith.constant 0 : index
    %c0_95 = arith.constant 0 : index
    %c0_96 = arith.constant 0 : index
    %82 = vector.load %arg6[%c0_93, %c0_94, %c0_95, %c0_96] : memref<1x8x8x128xbf16, #tpu.memory_space<vmem>>, vector<1x8x8x128xbf16>
    %83 = vector.shape_cast %82 : vector<1x8x8x128xbf16> to vector<8x8x128xbf16>
    %84 = vector.shape_cast %81 : vector<8x8x128xbf16> to vector<1x8x8x128xbf16>
    tpu.vector_store %arg6[%c0_93, %c0_94, %c0_95, %c0_96], %84 {strides = array<i32>} : memref<1x8x8x128xbf16, #tpu.memory_space<vmem>>, vector<1x8x8x128xbf16>,
    %85 = vector.shape_cast %81 : vector<8x8x128xbf16> to vector<8x4x256xbf16>
    %86 = vector.extract_strided_slice %85 {offsets = [0, 0, 0], sizes = [8, 4, 128], strides = [1, 1, 1]} : vector<8x4x256xbf16> to vector<8x4x128xbf16>
    %87 = vector.extract_strided_slice %85 {offsets = [0, 0, 128], sizes = [8, 4, 128], strides = [1, 1, 1]} : vector<8x4x256xbf16> to vector<8x4x128xbf16>
    %88 = arith.maximumf %86, %87 : vector<8x4x128xbf16>
    %89 = vector.shape_cast %88 : vector<8x4x128xbf16> to vector<4x2x4x128xbf16>
    %90 = vector.extract_strided_slice %89 {offsets = [0, 0, 0, 0], sizes = [4, 1, 4, 128], strides = [1, 1, 1, 1]} : vector<4x2x4x128xbf16> to vector<4x1x4x128xbf16>
    %91 = vector.shape_cast %90 : vector<4x1x4x128xbf16> to vector<4x4x128xbf16>
    %92 = vector.extract_strided_slice %89 {offsets = [0, 1, 0, 0], sizes = [4, 1, 4, 128], strides = [1, 1, 1, 1]} : vector<4x2x4x128xbf16> to vector<4x1x4x128xbf16>
    %93 = vector.shape_cast %92 : vector<4x1x4x128xbf16> to vector<4x4x128xbf16>
    %94 = arith.maximumf %91, %93 : vector<4x4x128xbf16>
    %c0_97 = arith.constant 0 : index
    %c0_98 = arith.constant 0 : index
    %c0_99 = arith.constant 0 : index
    %c0_100 = arith.constant 0 : index
    %95 = vector.load %arg7[%c0_97, %c0_98, %c0_99, %c0_100] : memref<1x4x4x128xbf16, #tpu.memory_space<vmem>>, vector<1x4x4x128xbf16>
    %96 = vector.shape_cast %95 : vector<1x4x4x128xbf16> to vector<4x4x128xbf16>
    %97 = vector.shape_cast %94 : vector<4x4x128xbf16> to vector<1x4x4x128xbf16>
    tpu.vector_store %arg7[%c0_97, %c0_98, %c0_99, %c0_100], %97 {strides = array<i32>} : memref<1x4x4x128xbf16, #tpu.memory_space<vmem>>, vector<1x4x4x128xbf16>,
    return
  }
  func.func @transform_0(%arg0: i32) -> (i32, i32, i32, i32) {
    %c0_i32 = arith.constant 0 : i32
    %c0_i32_0 = arith.constant 0 : i32
    %c0_i32_1 = arith.constant 0 : i32
    %c0_i32_2 = arith.constant 0 : i32
    return %arg0, %c0_i32, %c0_i32_0, %c0_i32_1 : i32, i32, i32, i32
  }
  func.func @transform_1(%arg0: i32) -> (i32, i32, i32) {
    %c0_i32 = arith.constant 0 : i32
    %c0_i32_0 = arith.constant 0 : i32
    %c0_i32_1 = arith.constant 0 : i32
    %c0_i32_2 = arith.constant 0 : i32
    return %c0_i32, %c0_i32_0, %c0_i32_1 : i32, i32, i32
  }
  func.func @transform_2(%arg0: i32) -> (i32, i32) {
    %c0_i32 = arith.constant 0 : i32
    %c0_i32_0 = arith.constant 0 : i32
    %c0_i32_1 = arith.constant 0 : i32
    return %c0_i32, %c0_i32_0 : i32, i32
  }
  func.func @transform_3(%arg0: i32) -> (i32, i32, i32) {
    %c0_i32 = arith.constant 0 : i32
    %c0_i32_0 = arith.constant 0 : i32
    %c0_i32_1 = arith.constant 0 : i32
    %c0_i32_2 = arith.constant 0 : i32
    return %c0_i32, %c0_i32_0, %c0_i32_1 : i32, i32, i32
  }
  func.func @transform_4(%arg0: i32) -> (i32, i32) {
    %c0_i32 = arith.constant 0 : i32
    %c0_i32_0 = arith.constant 0 : i32
    %c0_i32_1 = arith.constant 0 : i32
    return %c0_i32, %c0_i32_0 : i32, i32
  }
  func.func @transform_5(%arg0: i32) -> (i32, i32, i32, i32) {
    %c0_i32 = arith.constant 0 : i32
    %c0_i32_0 = arith.constant 0 : i32
    %c0_i32_1 = arith.constant 0 : i32
    %c0_i32_2 = arith.constant 0 : i32
    return %arg0, %c0_i32, %c0_i32_0, %c0_i32_1 : i32, i32, i32, i32
  }
  func.func @transform_6(%arg0: i32) -> (i32, i32, i32, i32) {
    %c0_i32 = arith.constant 0 : i32
    %c0_i32_0 = arith.constant 0 : i32
    %c0_i32_1 = arith.constant 0 : i32
    %c0_i32_2 = arith.constant 0 : i32
    return %arg0, %c0_i32, %c0_i32_0, %c0_i32_1 : i32, i32, i32, i32
  }
}

</mosaic_0001>

<llo_original>
// kernel: encoder_apply.3
$region0: #{encoder_apply.3}
  #allocation0 [shape = 'u32[]', space=smem, size = 0x4, offset = 0x4, fixed_abs, tag = 'smem constant byte address 0x4 - core index']
  #allocation1 [shape = 'u32[144,128]{1,0:T(1,128)}', space=vmem, size = 0x12000, scoped, tag = 'internal scratch']
  #allocation2 [shape = 'bf16[10,8,384]{2,1,0:T(8,128)(2,1)}', space=vmem, size = 0xf000, scoped, tag = 'scratch operand']
  #allocation3 [shape = 'bf16[10,8,384]{2,1,0:T(8,128)(2,1)}', space=vmem, size = 0xf000, scoped, tag = 'scratch operand']
  #allocation4 [shape = 'f32[64,128]{1,0:T(8,128)}', space=vmem, size = 0x8000, scoped, tag = 'scratch operand']
  %s0 = inlined_call_operand.vmem [shape: bf16[2,8,8,128], index: 0, kind: input, shape index: {}]
  %s1 = inlined_call_operand.vmem [shape: bf16[3,384,128], index: 1, kind: input, shape index: {}]
  %s2 = inlined_call_operand.vmem [shape: f32[1,128], index: 2, kind: input, shape index: {}]
  %s3 = inlined_call_operand.vmem [shape: bf16[3,384,128], index: 3, kind: input, shape index: {}]
  %s4 = inlined_call_operand.vmem [shape: f32[1,128], index: 4, kind: input, shape index: {}]
  %s5 = inlined_call_operand.vmem [shape: bf16[2,8,8,128], index: 5, kind: output, shape index: {0}]
  %s6 = inlined_call_operand.vmem [shape: bf16[2,4,4,128], index: 6, kind: output, shape index: {1}]
  %7 = xla_tuple %s5, %s6
  %s8 = sld [smem:[#allocation0]]
  $region61: #{encoder_apply.3} parent=0
    _
  %s10 = ssub.s32 1, %s8
  %s11 = scalar_select 0, %s10, %s8
  loop: start=0, step=1, limit=4
  $region2: #{encoder_apply.3} parent=0 // loop_pre_header
    _
  $region3: #{encoder_apply.3} parent=0 // loop_header
    %s13 = sphi 0, %s17
    %p14 = scmp.ge.s32.totalorder %s13, 4
    %s23 = sphi 0, %s25
    %s26 = sphi 0, %s23
    %s27 = sphi 0, %s26
    %s43 = sphi 0, %s27
    %s47 = sphi 0, %s47
    %s49 = sphi 0, %s47
    %s50 = sphi 0, %s49
    %s64 = sphi 0, %s50
    %s68 = sphi 0, %s68
    %s70 = sphi 0, %s68
    %s71 = sphi 0, %s70
    %s85 = sphi 0, %s71
    %s89 = sphi 0, %s89
    %s91 = sphi 0, %s89
    %s92 = sphi 0, %s91
    %s106 = sphi 0, %s92
    %s110 = sphi 0, %s110
    %s112 = sphi 0, %s110
    %s113 = sphi 0, %s112
    %s127 = sphi 0, %s113
    %s133 = sphi 0, %s135
    %s136 = sphi 0, %s133
    %s137 = sphi 0, %s136
    %s153 = sphi 0, %s137
    %s159 = sphi 0, %s161
    %s162 = sphi 0, %s159
    %s163 = sphi 0, %s162
    %s179 = sphi 0, %s163
  $region4: #{encoder_apply.3} parent=0 // loop_header_branch
    %16 = sbr.rel (%p14) target = $region8
  $region5: #{encoder_apply.3} parent=0 // loop_body
    %s18 = ssub.s32 %s13, 1
    %s19 = ssub.s32 %s13, 2
    %s20 = sadd.s32 %s13, 1
    %s21 = ssub.s32 %s13, %s20
    %p22 = scmp.eq.s32.totalorder %s21, 0
    %s24 = sadd.s32 %s23, 1
    %s25 = scalar_select %p22, %s23, %s24
    %p28 = pneg %p22
    %p29 = scmp.eq.s32.totalorder %s13, 1
    %p30 = por %p28, %p29
    %p31 = scmp.ne.s32.totalorder %s23, %s26
    %p32 = scmp.eq.s32.totalorder %s13, 0
    %p33 = por %p31, %p32
    %p34 = scmp.ne.s32.totalorder %s23, %s26
    %p35 = scmp.eq.s32.totalorder %s18, 1
    %p36 = por %p34, %p35
    %p37 = scmp.ne.s32.totalorder %s26, %s27
    %p38 = scmp.eq.s32.totalorder %s18, 0
    %p39 = por %p37, %p38
    %p40 = scmp.ne.s32.totalorder %s26, %s27
    %p41 = scmp.eq.s32.totalorder %s19, 1
    %p42 = por %p40, %p41
    %p44 = scmp.ne.s32.totalorder %s27, %s43
    %p45 = scmp.eq.s32.totalorder %s19, 0
    %p46 = por %p44, %p45
    %s48 = sadd.s32 %s47, 1
    %p51 = scmp.eq.s32.totalorder %s13, 1
    %p52 = scmp.ne.s32.totalorder %s47, %s49
    %p53 = scmp.eq.s32.totalorder %s13, 0
    %p54 = por %p52, %p53
    %p55 = scmp.ne.s32.totalorder %s47, %s49
    %p56 = scmp.eq.s32.totalorder %s18, 1
    %p57 = por %p55, %p56
    %p58 = scmp.ne.s32.totalorder %s49, %s50
    %p59 = scmp.eq.s32.totalorder %s18, 0
    %p60 = por %p58, %p59
    %p61 = scmp.ne.s32.totalorder %s49, %s50
    %p62 = scmp.eq.s32.totalorder %s19, 1
    %p63 = por %p61, %p62
    %p65 = scmp.ne.s32.totalorder %s50, %s64
    %p66 = scmp.eq.s32.totalorder %s19, 0
    %p67 = por %p65, %p66
    %s69 = sadd.s32 %s68, 1
    %p72 = scmp.eq.s32.totalorder %s13, 1
    %p73 = scmp.ne.s32.totalorder %s68, %s70
    %p74 = scmp.eq.s32.totalorder %s13, 0
    %p75 = por %p73, %p74
    %p76 = scmp.ne.s32.totalorder %s68, %s70
    %p77 = scmp.eq.s32.totalorder %s18, 1
    %p78 = por %p76, %p77
    %p79 = scmp.ne.s32.totalorder %s70, %s71
    %p80 = scmp.eq.s32.totalorder %s18, 0
    %p81 = por %p79, %p80
    %p82 = scmp.ne.s32.totalorder %s70, %s71
    %p83 = scmp.eq.s32.totalorder %s19, 1
    %p84 = por %p82, %p83
    %p86 = scmp.ne.s32.totalorder %s71, %s85
    %p87 = scmp.eq.s32.totalorder %s19, 0
    %p88 = por %p86, %p87
    %s90 = sadd.s32 %s89, 1
    %p93 = scmp.eq.s32.totalorder %s13, 1
    %p94 = scmp.ne.s32.totalorder %s89, %s91
    %p95 = scmp.eq.s32.totalorder %s13, 0
    %p96 = por %p94, %p95
    %p97 = scmp.ne.s32.totalorder %s89, %s91
    %p98 = scmp.eq.s32.totalorder %s18, 1
    %p99 = por %p97, %p98
    %p100 = scmp.ne.s32.totalorder %s91, %s92
    %p101 = scmp.eq.s32.totalorder %s18, 0
    %p102 = por %p100, %p101
    %p103 = scmp.ne.s32.totalorder %s91, %s92
    %p104 = scmp.eq.s32.totalorder %s19, 1
    %p105 = por %p103, %p104
    %p107 = scmp.ne.s32.totalorder %s92, %s106
    %p108 = scmp.eq.s32.totalorder %s19, 0
    %p109 = por %p107, %p108
    %s111 = sadd.s32 %s110, 1
    %p114 = scmp.eq.s32.totalorder %s13, 1
    %p115 = scmp.ne.s32.totalorder %s110, %s112
    %p116 = scmp.eq.s32.totalorder %s13, 0
    %p117 = por %p115, %p116
    %p118 = scmp.ne.s32.totalorder %s110, %s112
    %p119 = scmp.eq.s32.totalorder %s18, 1
    %p120 = por %p118, %p119
    %p121 = scmp.ne.s32.totalorder %s112, %s113
    %p122 = scmp.eq.s32.totalorder %s18, 0
    %p123 = por %p121, %p122
    %p124 = scmp.ne.s32.totalorder %s112, %s113
    %p125 = scmp.eq.s32.totalorder %s19, 1
    %p126 = por %p124, %p125
    %p128 = scmp.ne.s32.totalorder %s113, %s127
    %p129 = scmp.eq.s32.totalorder %s19, 0
    %p130 = por %p128, %p129
    %s131 = ssub.s32 %s13, %s20
    %p132 = scmp.eq.s32.totalorder %s131, 0
    %s134 = sadd.s32 %s133, 1
    %s135 = scalar_select %p132, %s133, %s134
    %p138 = pneg %p132
    %p139 = scmp.eq.s32.totalorder %s13, 1
    %p140 = por %p138, %p139
    %p141 = scmp.ne.s32.totalorder %s133, %s136
    %p142 = scmp.eq.s32.totalorder %s13, 0
    %p143 = por %p141, %p142
    %p144 = scmp.ne.s32.totalorder %s133, %s136
    %p145 = scmp.eq.s32.totalorder %s18, 1
    %p146 = por %p144, %p145
    %p147 = scmp.ne.s32.totalorder %s136, %s137
    %p148 = scmp.eq.s32.totalorder %s18, 0
    %p149 = por %p147, %p148
    %p150 = scmp.ne.s32.totalorder %s136, %s137
    %p151 = scmp.eq.s32.totalorder %s19, 1
    %p152 = por %p150, %p151
    %p154 = scmp.ne.s32.totalorder %s137, %s153
    %p155 = scmp.eq.s32.totalorder %s19, 0
    %p156 = por %p154, %p155
    %s157 = ssub.s32 %s13, %s20
    %p158 = scmp.eq.s32.totalorder %s157, 0
    %s160 = sadd.s32 %s159, 1
    %s161 = scalar_select %p158, %s159, %s160
    %p164 = pneg %p158
    %p165 = scmp.eq.s32.totalorder %s13, 1
    %p166 = por %p164, %p165
    %p167 = scmp.ne.s32.totalorder %s159, %s162
    %p168 = scmp.eq.s32.totalorder %s13, 0
    %p169 = por %p167, %p168
    %p170 = scmp.ne.s32.totalorder %s159, %s162
    %p171 = scmp.eq.s32.totalorder %s18, 1
    %p172 = por %p170, %p171
    %p173 = scmp.ne.s32.totalorder %s162, %s163
    %p174 = scmp.eq.s32.totalorder %s18, 0
    %p175 = por %p173, %p174
    %p176 = scmp.ne.s32.totalorder %s162, %s163
    %p177 = scmp.eq.s32.totalorder %s19, 1
    %p178 = por %p176, %p177
    %p180 = scmp.ne.s32.totalorder %s163, %s179
    %p181 = scmp.eq.s32.totalorder %s19, 0
    %p182 = por %p180, %p181
    %p183 = scmp.le.s32.totalorder 1, %s13
    %p184 = scmp.lt.s32.totalorder %s13, 3
    %p185 = pnand %p183, %p184
    %p186 = pneg %p185
    // Predicated region
    $region9: #{encoder_apply.3} parent=5 // pred_check
      _
    $region10: #{encoder_apply.3} parent=5 // pred_check_branch
      %188 = sbr.rel (%p185) target = $region12
    $region11: #{encoder_apply.3} parent=5 // pred_region
      %s189 = ssub.s32 %s13, 1
      // Predicated region
      $region13: #{encoder_apply.3} parent=11 // pred_check
        %p190 = pneg %p60
      $region14: #{encoder_apply.3} parent=11 // pred_check_branch
        %192 = sbr.rel (%p190) target = $region16
      $region15: #{encoder_apply.3} parent=11 // pred_region
        _
      $region16: #{encoder_apply.3} parent=11 // pred_fallthru
        _
      // Predicated region
      $region17: #{encoder_apply.3} parent=11 // pred_check
        %p193 = pneg %p81
      $region18: #{encoder_apply.3} parent=11 // pred_check_branch
        %195 = sbr.rel (%p193) target = $region20
      $region19: #{encoder_apply.3} parent=11 // pred_region
        _
      $region20: #{encoder_apply.3} parent=11 // pred_fallthru
        _
      // Predicated region
      $region21: #{encoder_apply.3} parent=11 // pred_check
        %p196 = pneg %p102
      $region22: #{encoder_apply.3} parent=11 // pred_check_branch
        %198 = sbr.rel (%p196) target = $region24
      $region23: #{encoder_apply.3} parent=11 // pred_region
        _
      $region24: #{encoder_apply.3} parent=11 // pred_fallthru
        _
      // Predicated region
      $region25: #{encoder_apply.3} parent=11 // pred_check
        %p199 = pneg %p123
      $region26: #{encoder_apply.3} parent=11 // pred_check_branch
        %201 = sbr.rel (%p199) target = $region28
      $region27: #{encoder_apply.3} parent=11 // pred_region
        _
      $region28: #{encoder_apply.3} parent=11 // pred_fallthru
        _
    $region12: #{encoder_apply.3} parent=5 // pred_fallthru
      _
    %p202 = scmp.lt.s32.totalorder %s13, 2
    // Predicated region
    $region29: #{encoder_apply.3} parent=5 // pred_check
      %p203 = pneg %p202
    $region30: #{encoder_apply.3} parent=5 // pred_check_branch
      %205 = sbr.rel (%p203) target = $region32
    $region31: #{encoder_apply.3} parent=5 // pred_region
      // Predicated region
      $region33: #{encoder_apply.3} parent=31 // pred_check
        %p206 = pneg %p33
      $region34: #{encoder_apply.3} parent=31 // pred_check_branch
        %208 = sbr.rel (%p206) target = $region36
      $region35: #{encoder_apply.3} parent=31 // pred_region
        %p209 = scmp.lt.s32.totalorder %s13, 1
        %s210 = scalar_select %p209, %s13, 1
        %s211 = smul.addr %s210, 8
        %s212 = smul.addr %s211, 4
        %s213 = scalar_lea.vmem %s0, %s212
      $region36: #{encoder_apply.3} parent=31 // pred_fallthru
        _
    $region32: #{encoder_apply.3} parent=5 // pred_fallthru
      _
    %p214 = scmp.le.s32.totalorder 1, %s13
    %p215 = scmp.lt.s32.totalorder %s13, 3
    %p216 = pnand %p214, %p215
    %p217 = pneg %p216
    // Predicated region
    $region37: #{encoder_apply.3} parent=5 // pred_check
      _
    $region38: #{encoder_apply.3} parent=5 // pred_check_branch
      %219 = sbr.rel (%p216) target = $region40
    $region39: #{encoder_apply.3} parent=5 // pred_region
      %s220 = ssub.s32 %s13, 1
      %p221 = scmp.lt.s32.totalorder %s18, 1
      %s222 = scalar_select %p221, %s18, 1
      %s223 = smul.addr %s222, 8
      %s224 = smul.addr %s223, 4
      %s225 = scalar_lea.vmem %s0, %s224
      %p226 = pneg %p39
      %p227 = pneg %p36
      %p228 = pneg %p60
      %p229 = pneg %p57
      %p230 = pneg %p81
      %p231 = pneg %p78
      %p232 = pneg %p102
      %p233 = pneg %p99
      %p234 = pneg %p123
      %p235 = pneg %p120
      %p236 = pneg %p149
      %p237 = pneg %p146
      %p238 = scmp.lt.s32.totalorder %s18, 1
      %s239 = scalar_select %p238, %s18, 1
      %s240 = smul.addr %s239, 8
      %s241 = smul.addr %s240, 4
      %s242 = scalar_lea.vmem %s5, %s241
      %p243 = pneg %p175
      %p244 = pneg %p172
      %p245 = scmp.lt.s32.totalorder %s18, 1
      %s246 = scalar_select %p245, %s18, 1
      %s247 = smul.addr %s246, 4
      %s248 = smul.addr %s247, 2
      %s249 = scalar_lea.vmem %s6, %s248
      %p250 = scmp.lt.s32.totalorder %s18, 1
      %s251 = scalar_select %p250, %s18, 1
      %s252 = smul.addr %s251, 8
      %s253 = smul.addr %s252, 4
      %s254 = scalar_lea.vmem %s0, %s253
      %p255 = scmp.lt.s32.totalorder %s18, 1
      %s256 = scalar_select %p255, %s18, 1
      %s257 = smul.addr %s256, 8
      %s258 = smul.addr %s257, 4
      %s259 = scalar_lea.vmem %s5, %s258
      %p260 = scmp.lt.s32.totalorder %s18, 1
      %s261 = scalar_select %p260, %s18, 1
      %s262 = smul.addr %s261, 4
      %s263 = smul.addr %s262, 2
      %s264 = scalar_lea.vmem %s6, %s263
      %v266 = vld [vmem:[%s254] sm:$0xf]
      %v267 = vld [vmem:[%s254 + $0x4] sm:$0xf]
      %v268 = vld [vmem:[%s254 + $0x8] sm:$0xf]
      %v269 = vld [vmem:[%s254 + $0xc] sm:$0xf]
      %v270 = vld [vmem:[%s254 + $0x10] sm:$0xf]
      %v271 = vld [vmem:[%s254 + $0x14] sm:$0xf]
      %v272 = vld [vmem:[%s254 + $0x18] sm:$0xf]
      %v273 = vld [vmem:[%s254 + $0x1c] sm:$0xf]
      %v282 = vunpack.c.l.b16 %v266
      %v283 = vunpack.c.l.b16 %v267
      %v284 = vunpack.c.l.b16 %v268
      %v285 = vunpack.c.l.b16 %v269
      %v286 = vunpack.c.l.b16 %v270
      %v287 = vunpack.c.l.b16 %v271
      %v288 = vunpack.c.l.b16 %v272
      %v289 = vunpack.c.l.b16 %v273
      %v290 = vpack.c.b16 %v282, %v282
      %v291 = vpack.c.b16 %v283, %v283
      %v292 = vpack.c.b16 %v284, %v284
      %v293 = vpack.c.b16 %v285, %v285
      %v294 = vpack.c.b16 %v286, %v286
      %v295 = vpack.c.b16 %v287, %v287
      %v296 = vpack.c.b16 %v288, %v288
      %v297 = vpack.c.b16 %v289, %v289
      %v299 = vshrl.u32 %v290, 16
      %v301 = vrot.slane %v299, 7
      %v302 = vshll.u32 %v290, 16
      %v304 = vor.u32 %v301, %v302
      %v306 = vshrl.u32 %v291, 16
      %v308 = vrot.slane %v306, 7
      %v309 = vshll.u32 %v291, 16
      %v311 = vor.u32 %v308, %v309
      %v313 = vshrl.u32 %v292, 16
      %v315 = vrot.slane %v313, 7
      %v316 = vshll.u32 %v292, 16
      %v318 = vor.u32 %v315, %v316
      %v320 = vshrl.u32 %v293, 16
      %v322 = vrot.slane %v320, 7
      %v323 = vshll.u32 %v293, 16
      %v325 = vor.u32 %v322, %v323
      %v327 = vshrl.u32 %v294, 16
      %v329 = vrot.slane %v327, 7
      %v330 = vshll.u32 %v294, 16
      %v332 = vor.u32 %v329, %v330
      %v334 = vshrl.u32 %v295, 16
      %v336 = vrot.slane %v334, 7
      %v337 = vshll.u32 %v295, 16
      %v339 = vor.u32 %v336, %v337
      %v341 = vshrl.u32 %v296, 16
      %v343 = vrot.slane %v341, 7
      %v344 = vshll.u32 %v296, 16
      %v346 = vor.u32 %v343, %v344
      %v348 = vshrl.u32 %v297, 16
      %v350 = vrot.slane %v348, 7
      %v351 = vshll.u32 %v297, 16
      %v353 = vor.u32 %v350, %v351
      %vm362 = vcmask 1040384
      %vm363 = vsmask.f32 256
      %vm364 = vmand %vm362, %vm363
      %v365 = vsel %vm364, 0, %v304
      %v366 = vsel %vm364, 0, %v311
      %v367 = vsel %vm364, 0, %v318
      %v368 = vsel %vm364, 0, %v325
      %v369 = vsel %vm364, 0, %v332
      %v370 = vsel %vm364, 0, %v339
      %v371 = vsel %vm364, 0, %v346
      %v372 = vsel %vm364, 0, %v353
      %v373 = vrot.slane %v302, 1
      %v374 = vor.u32 %v299, %v373
      %v375 = vrot.slane %v309, 1
      %v376 = vor.u32 %v306, %v375
      %v377 = vrot.slane %v316, 1
      %v378 = vor.u32 %v313, %v377
      %v379 = vrot.slane %v323, 1
      %v380 = vor.u32 %v320, %v379
      %v381 = vrot.slane %v330, 1
      %v382 = vor.u32 %v327, %v381
      %v383 = vrot.slane %v337, 1
      %v384 = vor.u32 %v334, %v383
      %v385 = vrot.slane %v344, 1
      %v386 = vor.u32 %v341, %v385
      %v387 = vrot.slane %v351, 1
      %v388 = vor.u32 %v348, %v387
      %vm397 = vcmask 1043456
      %vm398 = vsmask.f32 3328
      %vm399 = vmand %vm397, %vm398
      %v400 = vsel %vm399, %v374, 0
      %v401 = vsel %vm399, %v376, 0
      %v402 = vsel %vm399, %v378, 0
      %v403 = vsel %vm399, %v380, 0
      %v404 = vsel %vm399, %v382, 0
      %v405 = vsel %vm399, %v384, 0
      %v406 = vsel %vm399, %v386, 0
      %v407 = vsel %vm399, %v388, 0
      %v424 = vunpack.c.l.b16 %v365
      %v425 = vunpack.c.l.b16 %v400
      %v426 = vunpack.c.l.b16 %v366
      %v427 = vunpack.c.l.b16 %v401
      %v428 = vunpack.c.l.b16 %v367
      %v429 = vunpack.c.l.b16 %v402
      %v430 = vunpack.c.l.b16 %v368
      %v431 = vunpack.c.l.b16 %v403
      %v432 = vunpack.c.l.b16 %v369
      %v433 = vunpack.c.l.b16 %v404
      %v434 = vunpack.c.l.b16 %v370
      %v435 = vunpack.c.l.b16 %v405
      %v436 = vunpack.c.l.b16 %v371
      %v437 = vunpack.c.l.b16 %v406
      %v438 = vunpack.c.l.b16 %v372
      %v439 = vunpack.c.l.b16 %v407
      %v440 = vpack.c.b16 %v282, %v424
      %v441 = vpack.c.b16 %v425, %v425
      %v442 = vpack.c.b16 %v283, %v426
      %v443 = vpack.c.b16 %v427, %v427
      %v444 = vpack.c.b16 %v284, %v428
      %v445 = vpack.c.b16 %v429, %v429
      %v446 = vpack.c.b16 %v285, %v430
      %v447 = vpack.c.b16 %v431, %v431
      %v448 = vpack.c.b16 %v286, %v432
      %v449 = vpack.c.b16 %v433, %v433
      %v450 = vpack.c.b16 %v287, %v434
      %v451 = vpack.c.b16 %v435, %v435
      %v452 = vpack.c.b16 %v288, %v436
      %v453 = vpack.c.b16 %v437, %v437
      %v454 = vpack.c.b16 %v289, %v438
      %v455 = vpack.c.b16 %v439, %v439
      %s472 = scalar_lea.vmem [#allocation2], 12
      %473 = vst [vmem:[%s472] sm:$0xff] %v440
      %474 = vst [vmem:[%s472 + $0x8] sm:$0xf] %v441
      %475 = vst [vmem:[%s472 + $0xc] sm:$0xff] %v442
      %476 = vst [vmem:[%s472 + $0x14] sm:$0xf] %v443
      %477 = vst [vmem:[%s472 + $0x18] sm:$0xff] %v444
      %478 = vst [vmem:[%s472 + $0x20] sm:$0xf] %v445
      %479 = vst [vmem:[%s472 + $0x24] sm:$0xff] %v446
      %480 = vst [vmem:[%s472 + $0x2c] sm:$0xf] %v447
      %481 = vst [vmem:[%s472 + $0x30] sm:$0xff] %v448
      %482 = vst [vmem:[%s472 + $0x38] sm:$0xf] %v449
      %483 = vst [vmem:[%s472 + $0x3c] sm:$0xff] %v450
      %484 = vst [vmem:[%s472 + $0x44] sm:$0xf] %v451
      %485 = vst [vmem:[%s472 + $0x48] sm:$0xff] %v452
      %486 = vst [vmem:[%s472 + $0x50] sm:$0xf] %v453
      %487 = vst [vmem:[%s472 + $0x54] sm:$0xff] %v454
      %488 = vst [vmem:[%s472 + $0x5c] sm:$0xf] %v455
      %489 = vst [vmem:[#allocation2] sm:$0xff] 0
      %490 = vst [vmem:[#allocation2 + $0x8] sm:$0xf] 0
      %s491 = scalar_lea.vmem [#allocation2], 108
      %492 = vst [vmem:[%s491] sm:$0xff] 0
      %493 = vst [vmem:[%s491 + $0x8] sm:$0xf] 0
      %v494 = vld [vmem:[#allocation2] sm:$0xff]
      %v495 = vld [vmem:[#allocation2 + $0x8] sm:$0xf]
      %v496 = vld [vmem:[#allocation2 + $0xc] sm:$0xff]
      %v497 = vld [vmem:[#allocation2 + $0x14] sm:$0xf]
      %v498 = vld [vmem:[#allocation2 + $0x18] sm:$0xff]
      %v499 = vld [vmem:[#allocation2 + $0x20] sm:$0xf]
      %v500 = vld [vmem:[#allocation2 + $0x24] sm:$0xff]
      %v501 = vld [vmem:[#allocation2 + $0x2c] sm:$0xf]
      %v502 = vld [vmem:[#allocation2 + $0x30] sm:$0xff]
      %v503 = vld [vmem:[#allocation2 + $0x38] sm:$0xf]
      %v504 = vld [vmem:[#allocation2 + $0x3c] sm:$0xff]
      %v505 = vld [vmem:[#allocation2 + $0x44] sm:$0xf]
      %v506 = vld [vmem:[#allocation2 + $0x48] sm:$0xff]
      %v507 = vld [vmem:[#allocation2 + $0x50] sm:$0xf]
      %v508 = vld [vmem:[#allocation2 + $0x54] sm:$0xff]
      %v509 = vld [vmem:[#allocation2 + $0x5c] sm:$0xf]
      %v510 = vld [vmem:[%s1] sm:$0xf]
      %v511 = vld [vmem:[%s1 + $0x4] sm:$0xf]
      %v512 = vld [vmem:[%s1 + $0x8] sm:$0xf]
      %v513 = vld [vmem:[%s1 + $0xc] sm:$0xf]
      %v514 = vld [vmem:[%s1 + $0x10] sm:$0xf]
      %v515 = vld [vmem:[%s1 + $0x14] sm:$0xf]
      %v516 = vld [vmem:[%s1 + $0x18] sm:$0xf]
      %v517 = vld [vmem:[%s1 + $0x1c] sm:$0xf]
      %v518 = vld [vmem:[%s1 + $0x20] sm:$0xf]
      %v519 = vld [vmem:[%s1 + $0x24] sm:$0xf]
      %v520 = vld [vmem:[%s1 + $0x28] sm:$0xf]
      %v521 = vld [vmem:[%s1 + $0x2c] sm:$0xf]
      %v522 = vld [vmem:[%s1 + $0x30] sm:$0xf]
      %v523 = vld [vmem:[%s1 + $0x34] sm:$0xf]
      %v524 = vld [vmem:[%s1 + $0x38] sm:$0xf]
      %v525 = vld [vmem:[%s1 + $0x3c] sm:$0xf]
      %v526 = vld [vmem:[%s1 + $0x40] sm:$0xf]
      %v527 = vld [vmem:[%s1 + $0x44] sm:$0xf]
      %v528 = vld [vmem:[%s1 + $0x48] sm:$0xf]
      %v529 = vld [vmem:[%s1 + $0x4c] sm:$0xf]
      %v530 = vld [vmem:[%s1 + $0x50] sm:$0xf]
      %v531 = vld [vmem:[%s1 + $0x54] sm:$0xf]
      %v532 = vld [vmem:[%s1 + $0x58] sm:$0xf]
      %v533 = vld [vmem:[%s1 + $0x5c] sm:$0xf]
      %v534 = vld [vmem:[%s1 + $0x60] sm:$0xf]
      %v535 = vld [vmem:[%s1 + $0x64] sm:$0xf]
      %v536 = vld [vmem:[%s1 + $0x68] sm:$0xf]
      %v537 = vld [vmem:[%s1 + $0x6c] sm:$0xf]
      %v538 = vld [vmem:[%s1 + $0x70] sm:$0xf]
      %v539 = vld [vmem:[%s1 + $0x74] sm:$0xf]
      %v540 = vld [vmem:[%s1 + $0x78] sm:$0xf]
      %v541 = vld [vmem:[%s1 + $0x7c] sm:$0xf]
      %v542 = vld [vmem:[%s1 + $0x80] sm:$0xf]
      %v543 = vld [vmem:[%s1 + $0x84] sm:$0xf]
      %v544 = vld [vmem:[%s1 + $0x88] sm:$0xf]
      %v545 = vld [vmem:[%s1 + $0x8c] sm:$0xf]
      %v546 = vld [vmem:[%s1 + $0x90] sm:$0xf]
      %v547 = vld [vmem:[%s1 + $0x94] sm:$0xf]
      %v548 = vld [vmem:[%s1 + $0x98] sm:$0xf]
      %v549 = vld [vmem:[%s1 + $0x9c] sm:$0xf]
      %v550 = vld [vmem:[%s1 + $0xa0] sm:$0xf]
      %v551 = vld [vmem:[%s1 + $0xa4] sm:$0xf]
      %v552 = vld [vmem:[%s1 + $0xa8] sm:$0xf]
      %v553 = vld [vmem:[%s1 + $0xac] sm:$0xf]
      %v554 = vld [vmem:[%s1 + $0xb0] sm:$0xf]
      %v555 = vld [vmem:[%s1 + $0xb4] sm:$0xf]
      %v556 = vld [vmem:[%s1 + $0xb8] sm:$0xf]
      %v557 = vld [vmem:[%s1 + $0xbc] sm:$0xf]
      %v574 = vunpack.c.l.b16 %v494
      %v575 = vunpack.c.h.b16 %v494
      %v576 = vunpack.c.l.b16 %v495
      %v577 = vunpack.c.l.b16 %v496
      %v578 = vunpack.c.h.b16 %v496
      %v579 = vunpack.c.l.b16 %v497
      %v580 = vunpack.c.l.b16 %v498
      %v581 = vunpack.c.h.b16 %v498
      %v582 = vunpack.c.l.b16 %v499
      %v583 = vunpack.c.l.b16 %v500
      %v584 = vunpack.c.h.b16 %v500
      %v585 = vunpack.c.l.b16 %v501
      %v586 = vunpack.c.l.b16 %v502
      %v587 = vunpack.c.h.b16 %v502
      %v588 = vunpack.c.l.b16 %v503
      %v589 = vunpack.c.l.b16 %v504
      %v590 = vunpack.c.h.b16 %v504
      %v591 = vunpack.c.l.b16 %v505
      %v592 = vunpack.c.l.b16 %v506
      %v593 = vunpack.c.h.b16 %v506
      %v594 = vunpack.c.l.b16 %v507
      %v595 = vunpack.c.l.b16 %v508
      %v596 = vunpack.c.h.b16 %v508
      %v597 = vunpack.c.l.b16 %v509
      %v598 = vpack.c.b16 %v577, %v574
      %v599 = vpack.c.b16 %v578, %v575
      %v600 = vpack.c.b16 %v579, %v576
      %v601 = vpack.c.b16 %v583, %v580
      %v602 = vpack.c.b16 %v584, %v581
      %v603 = vpack.c.b16 %v585, %v582
      %v604 = vpack.c.b16 %v589, %v586
      %v605 = vpack.c.b16 %v590, %v587
      %v606 = vpack.c.b16 %v591, %v588
      %v607 = vpack.c.b16 %v595, %v592
      %v608 = vpack.c.b16 %v596, %v593
      %v609 = vpack.c.b16 %v597, %v594
      %v670 = vunpack.c.l.b16 %v510
      %v671 = vunpack.c.l.b16 %v511
      %v672 = vunpack.c.l.b16 %v512
      %v673 = vunpack.c.l.b16 %v513
      %v674 = vunpack.c.l.b16 %v514
      %v675 = vunpack.c.l.b16 %v515
      %v676 = vunpack.c.l.b16 %v516
      %v677 = vunpack.c.l.b16 %v517
      %v678 = vunpack.c.l.b16 %v518
      %v679 = vunpack.c.l.b16 %v519
      %v680 = vunpack.c.l.b16 %v520
      %v681 = vunpack.c.l.b16 %v521
      %v682 = vunpack.c.l.b16 %v522
      %v683 = vunpack.c.l.b16 %v523
      %v684 = vunpack.c.l.b16 %v524
      %v685 = vunpack.c.l.b16 %v525
      %v686 = vunpack.c.l.b16 %v526
      %v687 = vunpack.c.l.b16 %v527
      %v688 = vunpack.c.l.b16 %v528
      %v689 = vunpack.c.l.b16 %v529
      %v690 = vunpack.c.l.b16 %v530
      %v691 = vunpack.c.l.b16 %v531
      %v692 = vunpack.c.l.b16 %v532
      %v693 = vunpack.c.l.b16 %v533
      %v694 = vunpack.c.l.b16 %v534
      %v695 = vunpack.c.l.b16 %v535
      %v696 = vunpack.c.l.b16 %v536
      %v697 = vunpack.c.l.b16 %v537
      %v698 = vunpack.c.l.b16 %v538
      %v699 = vunpack.c.l.b16 %v539
      %v700 = vunpack.c.l.b16 %v540
      %v701 = vunpack.c.l.b16 %v541
      %v702 = vunpack.c.l.b16 %v542
      %v703 = vunpack.c.l.b16 %v543
      %v704 = vunpack.c.l.b16 %v544
      %v705 = vunpack.c.l.b16 %v545
      %v706 = vunpack.c.l.b16 %v546
      %v707 = vunpack.c.l.b16 %v547
      %v708 = vunpack.c.l.b16 %v548
      %v709 = vunpack.c.l.b16 %v549
      %v710 = vunpack.c.l.b16 %v550
      %v711 = vunpack.c.l.b16 %v551
      %v712 = vunpack.c.l.b16 %v552
      %v713 = vunpack.c.l.b16 %v553
      %v714 = vunpack.c.l.b16 %v554
      %v715 = vunpack.c.l.b16 %v555
      %v716 = vunpack.c.l.b16 %v556
      %v717 = vunpack.c.l.b16 %v557
      %v718 = vpack.c.b16 %v671, %v670
      %v719 = vpack.c.b16 %v673, %v672
      %v720 = vpack.c.b16 %v675, %v674
      %v721 = vpack.c.b16 %v677, %v676
      %v722 = vpack.c.b16 %v679, %v678
      %v723 = vpack.c.b16 %v681, %v680
      %v724 = vpack.c.b16 %v683, %v682
      %v725 = vpack.c.b16 %v685, %v684
      %v726 = vpack.c.b16 %v687, %v686
      %v727 = vpack.c.b16 %v689, %v688
      %v728 = vpack.c.b16 %v691, %v690
      %v729 = vpack.c.b16 %v693, %v692
      %v730 = vpack.c.b16 %v695, %v694
      %v731 = vpack.c.b16 %v697, %v696
      %v732 = vpack.c.b16 %v699, %v698
      %v733 = vpack.c.b16 %v701, %v700
      %v734 = vpack.c.b16 %v703, %v702
      %v735 = vpack.c.b16 %v705, %v704
      %v736 = vpack.c.b16 %v707, %v706
      %v737 = vpack.c.b16 %v709, %v708
      %v738 = vpack.c.b16 %v711, %v710
      %v739 = vpack.c.b16 %v713, %v712
      %v740 = vpack.c.b16 %v715, %v714
      %v741 = vpack.c.b16 %v717, %v716
      %766 = vmatprep.subr.bf16.mxu0 0
      %767 = vmatpush1.bf16.msra.mxu0 %v725
      %768 = vmatprep.subr.bf16.mxu0 0
      %769 = vmatpush1.bf16.msra.mxu0 %v724
      %770 = vmatprep.subr.bf16.mxu0 0
      %771 = vmatpush1.bf16.msra.mxu0 %v723
      %772 = vmatprep.subr.bf16.mxu0 0
      %773 = vmatpush1.bf16.msra.mxu0 %v722
      %774 = vmatprep.subr.bf16.mxu0 0
      %775 = vmatpush1.bf16.msra.mxu0 %v721
      %776 = vmatprep.subr.bf16.mxu0 0
      %777 = vmatpush1.bf16.msra.mxu0 %v720
      %778 = vmatprep.subr.bf16.mxu0 0
      %779 = vmatpush1.bf16.msra.mxu0 %v719
      %780 = vmatprep.subr.bf16.mxu0 0
      %781 = vmatpush1.bf16.msra.mxu0 %v718
      %782 = vmatprep.subr.bf16.mxu0 0
      %783 = vmatpush2.bf16.msra.mxu0 %v733
      %784 = vmatprep.subr.bf16.mxu0 0
      %785 = vmatpush2.bf16.msra.mxu0 %v732
      %786 = vmatprep.subr.bf16.mxu0 0
      %787 = vmatpush2.bf16.msra.mxu0 %v731
      %788 = vmatprep.subr.bf16.mxu0 0
      %789 = vmatpush2.bf16.msra.mxu0 %v730
      %790 = vmatprep.subr.bf16.mxu0 0
      %791 = vmatpush2.bf16.msra.mxu0 %v729
      %792 = vmatprep.subr.bf16.mxu0 0
      %793 = vmatpush2.bf16.msra.mxu0 %v728
      %794 = vmatprep.subr.bf16.mxu0 0
      %795 = vmatpush2.bf16.msra.mxu0 %v727
      %796 = vmatprep.subr.bf16.mxu0 0
      %797 = vmatpush2.bf16.msra.mxu0 %v726
      %798 = vmatprep.mubr.bf16.mxu0 %v599
      %799 = vmatmul.mubr.bf16.gmra.mxu0 %v598
      %v800 = vpop.f32.mrf.mxu0
      %v801 = vadd.f32 0.0, %v800
      %v802 = vpop.f32.mrf.mxu0
      %v803 = vpop.f32.mrf.mxu0
      %v804 = vadd.f32 0.0, %v803
      %v805 = vpop.f32.mrf.mxu0
      %806 = vmatprep.mubr.bf16.mxu0 %v602
      %807 = vmatmul.mubr.bf16.gmra.mxu0 %v601
      %v808 = vpop.f32.mrf.mxu0
      %v809 = vadd.f32 0.0, %v808
      %v810 = vpop.f32.mrf.mxu0
      %v811 = vpop.f32.mrf.mxu0
      %v812 = vadd.f32 0.0, %v811
      %v813 = vpop.f32.mrf.mxu0
      %814 = vmatprep.mubr.bf16.mxu0 %v605
      %815 = vmatmul.mubr.bf16.gmra.mxu0 %v604
      %v816 = vpop.f32.mrf.mxu0
      %v817 = vadd.f32 0.0, %v816
      %v818 = vpop.f32.mrf.mxu0
      %v819 = vpop.f32.mrf.mxu0
      %v820 = vadd.f32 0.0, %v819
      %v821 = vpop.f32.mrf.mxu0
      %822 = vmatprep.mubr.bf16.mxu0 %v608
      %823 = vmatmul.mubr.bf16.gmra.mxu0 %v607
      %v824 = vpop.f32.mrf.mxu0
      %v825 = vadd.f32 0.0, %v824
      %v826 = vpop.f32.mrf.mxu0
      %v827 = vpop.f32.mrf.mxu0
      %v828 = vadd.f32 0.0, %v827
      %v829 = vpop.f32.mrf.mxu0
      %830 = vdwg.mxu0
      %831 = vmatprep.subr.bf16.mxu0 0
      %832 = vmatpush1.bf16.msra.mxu0 %v741
      %833 = vmatprep.subr.bf16.mxu0 0
      %834 = vmatpush1.bf16.msra.mxu0 %v740
      %835 = vmatprep.subr.bf16.mxu0 0
      %836 = vmatpush1.bf16.msra.mxu0 %v739
      %837 = vmatprep.subr.bf16.mxu0 0
      %838 = vmatpush1.bf16.msra.mxu0 %v738
      %839 = vmatprep.subr.bf16.mxu0 0
      %840 = vmatpush1.bf16.msra.mxu0 %v737
      %841 = vmatprep.subr.bf16.mxu0 0
      %842 = vmatpush1.bf16.msra.mxu0 %v736
      %843 = vmatprep.subr.bf16.mxu0 0
      %844 = vmatpush1.bf16.msra.mxu0 %v735
      %845 = vmatprep.subr.bf16.mxu0 0
      %846 = vmatpush1.bf16.msra.mxu0 %v734
      %847 = vmatprep.subr.bf16.mxu0 0
      %848 = vmatpush2.bf16.msra.mxu0 0
      %849 = vmatprep.subr.bf16.mxu0 0
      %850 = vmatpush2.bf16.msra.mxu0 0
      %851 = vmatprep.subr.bf16.mxu0 0
      %852 = vmatpush2.bf16.msra.mxu0 0
      %853 = vmatprep.subr.bf16.mxu0 0
      %854 = vmatpush2.bf16.msra.mxu0 0
      %855 = vmatprep.subr.bf16.mxu0 0
      %856 = vmatpush2.bf16.msra.mxu0 0
      %857 = vmatprep.subr.bf16.mxu0 0
      %858 = vmatpush2.bf16.msra.mxu0 0
      %859 = vmatprep.subr.bf16.mxu0 0
      %860 = vmatpush2.bf16.msra.mxu0 0
      %861 = vmatprep.subr.bf16.mxu0 0
      %862 = vmatpush2.bf16.msra.mxu0 0
      %863 = vmatprep.mubr.bf16.mxu0 0
      %864 = vmatmul.mubr.bf16.gmra.mxu0 %v600
      %v865 = vpop.f32.mrf.mxu0
      %v866 = vadd.f32 %v801, %v865
      %v867 = vpop.f32.mrf.mxu0
      %v868 = vpop.f32.mrf.mxu0
      %v869 = vadd.f32 %v804, %v868
      %v870 = vpop.f32.mrf.mxu0
      %871 = vmatprep.mubr.bf16.mxu0 0
      %872 = vmatmul.mubr.bf16.gmra.mxu0 %v603
      %v873 = vpop.f32.mrf.mxu0
      %v874 = vadd.f32 %v809, %v873
      %v875 = vpop.f32.mrf.mxu0
      %v876 = vpop.f32.mrf.mxu0
      %v877 = vadd.f32 %v812, %v876
      %v878 = vpop.f32.mrf.mxu0
      %879 = vmatprep.mubr.bf16.mxu0 0
      %880 = vmatmul.mubr.bf16.gmra.mxu0 %v606
      %v881 = vpop.f32.mrf.mxu0
      %v882 = vadd.f32 %v817, %v881
      %v883 = vpop.f32.mrf.mxu0
      %v884 = vpop.f32.mrf.mxu0
      %v885 = vadd.f32 %v820, %v884
      %v886 = vpop.f32.mrf.mxu0
      %887 = vmatprep.mubr.bf16.mxu0 0
      %888 = vmatmul.mubr.bf16.gmra.mxu0 %v609
      %v889 = vpop.f32.mrf.mxu0
      %v890 = vadd.f32 %v825, %v889
      %v891 = vpop.f32.mrf.mxu0
      %v892 = vpop.f32.mrf.mxu0
      %v893 = vadd.f32 %v828, %v892
      %v894 = vpop.f32.mrf.mxu0
      %895 = vdwg.mxu0
      %896 = vst [vmem:[#allocation4] sm:$0xff] %v866
      %897 = vst [vmem:[#allocation4 + $0x8] sm:$0xff] %v869
      %898 = vst [vmem:[#allocation4 + $0x10] sm:$0xff] %v874
      %899 = vst [vmem:[#allocation4 + $0x18] sm:$0xff] %v877
      %900 = vst [vmem:[#allocation4 + $0x20] sm:$0xff] %v882
      %901 = vst [vmem:[#allocation4 + $0x28] sm:$0xff] %v885
      %902 = vst [vmem:[#allocation4 + $0x30] sm:$0xff] %v890
      %903 = vst [vmem:[#allocation4 + $0x38] sm:$0xff] %v893
      %v904 = vld [vmem:[%s472] sm:$0xff]
      %v905 = vld [vmem:[%s472 + $0x8] sm:$0xf]
      %v906 = vld [vmem:[%s472 + $0xc] sm:$0xff]
      %v907 = vld [vmem:[%s472 + $0x14] sm:$0xf]
      %v908 = vld [vmem:[%s472 + $0x18] sm:$0xff]
      %v909 = vld [vmem:[%s472 + $0x20] sm:$0xf]
      %v910 = vld [vmem:[%s472 + $0x24] sm:$0xff]
      %v911 = vld [vmem:[%s472 + $0x2c] sm:$0xf]
      %v912 = vld [vmem:[%s472 + $0x30] sm:$0xff]
      %v913 = vld [vmem:[%s472 + $0x38] sm:$0xf]
      %v914 = vld [vmem:[%s472 + $0x3c] sm:$0xff]
      %v915 = vld [vmem:[%s472 + $0x44] sm:$0xf]
      %v916 = vld [vmem:[%s472 + $0x48] sm:$0xff]
      %v917 = vld [vmem:[%s472 + $0x50] sm:$0xf]
      %v918 = vld [vmem:[%s472 + $0x54] sm:$0xff]
      %v919 = vld [vmem:[%s472 + $0x5c] sm:$0xf]
      %s920 = scalar_lea.vmem %s1, 192
      %v921 = vld [vmem:[%s920] sm:$0xf]
      %v922 = vld [vmem:[%s920 + $0x4] sm:$0xf]
      %v923 = vld [vmem:[%s920 + $0x8] sm:$0xf]
      %v924 = vld [vmem:[%s920 + $0xc] sm:$0xf]
      %v925 = vld [vmem:[%s920 + $0x10] sm:$0xf]
      %v926 = vld [vmem:[%s920 + $0x14] sm:$0xf]
      %v927 = vld [vmem:[%s920 + $0x18] sm:$0xf]
      %v928 = vld [vmem:[%s920 + $0x1c] sm:$0xf]
      %v929 = vld [vmem:[%s920 + $0x20] sm:$0xf]
      %v930 = vld [vmem:[%s920 + $0x24] sm:$0xf]
      %v931 = vld [vmem:[%s920 + $0x28] sm:$0xf]
      %v932 = vld [vmem:[%s920 + $0x2c] sm:$0xf]
      %v933 = vld [vmem:[%s920 + $0x30] sm:$0xf]
      %v934 = vld [vmem:[%s920 + $0x34] sm:$0xf]
      %v935 = vld [vmem:[%s920 + $0x38] sm:$0xf]
      %v936 = vld [vmem:[%s920 + $0x3c] sm:$0xf]
      %v937 = vld [vmem:[%s920 + $0x40] sm:$0xf]
      %v938 = vld [vmem:[%s920 + $0x44] sm:$0xf]
      %v939 = vld [vmem:[%s920 + $0x48] sm:$0xf]
      %v940 = vld [vmem:[%s920 + $0x4c] sm:$0xf]
      %v941 = vld [vmem:[%s920 + $0x50] sm:$0xf]
      %v942 = vld [vmem:[%s920 + $0x54] sm:$0xf]
      %v943 = vld [vmem:[%s920 + $0x58] sm:$0xf]
      %v944 = vld [vmem:[%s920 + $0x5c] sm:$0xf]
      %v945 = vld [vmem:[%s920 + $0x60] sm:$0xf]
      %v946 = vld [vmem:[%s920 + $0x64] sm:$0xf]
      %v947 = vld [vmem:[%s920 + $0x68] sm:$0xf]
      %v948 = vld [vmem:[%s920 + $0x6c] sm:$0xf]
      %v949 = vld [vmem:[%s920 + $0x70] sm:$0xf]
      %v950 = vld [vmem:[%s920 + $0x74] sm:$0xf]
      %v951 = vld [vmem:[%s920 + $0x78] sm:$0xf]
      %v952 = vld [vmem:[%s920 + $0x7c] sm:$0xf]
      %v953 = vld [vmem:[%s920 + $0x80] sm:$0xf]
      %v954 = vld [vmem:[%s920 + $0x84] sm:$0xf]
      %v955 = vld [vmem:[%s920 + $0x88] sm:$0xf]
      %v956 = vld [vmem:[%s920 + $0x8c] sm:$0xf]
      %v957 = vld [vmem:[%s920 + $0x90] sm:$0xf]
      %v958 = vld [vmem:[%s920 + $0x94] sm:$0xf]
      %v959 = vld [vmem:[%s920 + $0x98] sm:$0xf]
      %v960 = vld [vmem:[%s920 + $0x9c] sm:$0xf]
      %v961 = vld [vmem:[%s920 + $0xa0] sm:$0xf]
      %v962 = vld [vmem:[%s920 + $0xa4] sm:$0xf]
      %v963 = vld [vmem:[%s920 + $0xa8] sm:$0xf]
      %v964 = vld [vmem:[%s920 + $0xac] sm:$0xf]
      %v965 = vld [vmem:[%s920 + $0xb0] sm:$0xf]
      %v966 = vld [vmem:[%s920 + $0xb4] sm:$0xf]
      %v967 = vld [vmem:[%s920 + $0xb8] sm:$0xf]
      %v968 = vld [vmem:[%s920 + $0xbc] sm:$0xf]
      %v985 = vunpack.c.l.b16 %v904
      %v986 = vunpack.c.h.b16 %v904
      %v987 = vunpack.c.l.b16 %v905
      %v988 = vunpack.c.l.b16 %v906
      %v989 = vunpack.c.h.b16 %v906
      %v990 = vunpack.c.l.b16 %v907
      %v991 = vunpack.c.l.b16 %v908
      %v992 = vunpack.c.h.b16 %v908
      %v993 = vunpack.c.l.b16 %v909
      %v994 = vunpack.c.l.b16 %v910
      %v995 = vunpack.c.h.b16 %v910
      %v996 = vunpack.c.l.b16 %v911
      %v997 = vunpack.c.l.b16 %v912
      %v998 = vunpack.c.h.b16 %v912
      %v999 = vunpack.c.l.b16 %v913
      %v1000 = vunpack.c.l.b16 %v914
      %v1001 = vunpack.c.h.b16 %v914
      %v1002 = vunpack.c.l.b16 %v915
      %v1003 = vunpack.c.l.b16 %v916
      %v1004 = vunpack.c.h.b16 %v916
      %v1005 = vunpack.c.l.b16 %v917
      %v1006 = vunpack.c.l.b16 %v918
      %v1007 = vunpack.c.h.b16 %v918
      %v1008 = vunpack.c.l.b16 %v919
      %v1009 = vpack.c.b16 %v988, %v985
      %v1010 = vpack.c.b16 %v989, %v986
      %v1011 = vpack.c.b16 %v990, %v987
      %v1012 = vpack.c.b16 %v994, %v991
      %v1013 = vpack.c.b16 %v995, %v992
      %v1014 = vpack.c.b16 %v996, %v993
      %v1015 = vpack.c.b16 %v1000, %v997
      %v1016 = vpack.c.b16 %v1001, %v998
      %v1017 = vpack.c.b16 %v1002, %v999
      %v1018 = vpack.c.b16 %v1006, %v1003
      %v1019 = vpack.c.b16 %v1007, %v1004
      %v1020 = vpack.c.b16 %v1008, %v1005
      %v1081 = vunpack.c.l.b16 %v921
      %v1082 = vunpack.c.l.b16 %v922
      %v1083 = vunpack.c.l.b16 %v923
      %v1084 = vunpack.c.l.b16 %v924
      %v1085 = vunpack.c.l.b16 %v925
      %v1086 = vunpack.c.l.b16 %v926
      %v1087 = vunpack.c.l.b16 %v927
      %v1088 = vunpack.c.l.b16 %v928
      %v1089 = vunpack.c.l.b16 %v929
      %v1090 = vunpack.c.l.b16 %v930
      %v1091 = vunpack.c.l.b16 %v931
      %v1092 = vunpack.c.l.b16 %v932
      %v1093 = vunpack.c.l.b16 %v933
      %v1094 = vunpack.c.l.b16 %v934
      %v1095 = vunpack.c.l.b16 %v935
      %v1096 = vunpack.c.l.b16 %v936
      %v1097 = vunpack.c.l.b16 %v937
      %v1098 = vunpack.c.l.b16 %v938
      %v1099 = vunpack.c.l.b16 %v939
      %v1100 = vunpack.c.l.b16 %v940
      %v1101 = vunpack.c.l.b16 %v941
      %v1102 = vunpack.c.l.b16 %v942
      %v1103 = vunpack.c.l.b16 %v943
      %v1104 = vunpack.c.l.b16 %v944
      %v1105 = vunpack.c.l.b16 %v945
      %v1106 = vunpack.c.l.b16 %v946
      %v1107 = vunpack.c.l.b16 %v947
      %v1108 = vunpack.c.l.b16 %v948
      %v1109 = vunpack.c.l.b16 %v949
      %v1110 = vunpack.c.l.b16 %v950
      %v1111 = vunpack.c.l.b16 %v951
      %v1112 = vunpack.c.l.b16 %v952
      %v1113 = vunpack.c.l.b16 %v953
      %v1114 = vunpack.c.l.b16 %v954
      %v1115 = vunpack.c.l.b16 %v955
      %v1116 = vunpack.c.l.b16 %v956
      %v1117 = vunpack.c.l.b16 %v957
      %v1118 = vunpack.c.l.b16 %v958
      %v1119 = vunpack.c.l.b16 %v959
      %v1120 = vunpack.c.l.b16 %v960
      %v1121 = vunpack.c.l.b16 %v961
      %v1122 = vunpack.c.l.b16 %v962
      %v1123 = vunpack.c.l.b16 %v963
      %v1124 = vunpack.c.l.b16 %v964
      %v1125 = vunpack.c.l.b16 %v965
      %v1126 = vunpack.c.l.b16 %v966
      %v1127 = vunpack.c.l.b16 %v967
      %v1128 = vunpack.c.l.b16 %v968
      %v1129 = vpack.c.b16 %v1082, %v1081
      %v1130 = vpack.c.b16 %v1084, %v1083
      %v1131 = vpack.c.b16 %v1086, %v1085
      %v1132 = vpack.c.b16 %v1088, %v1087
      %v1133 = vpack.c.b16 %v1090, %v1089
      %v1134 = vpack.c.b16 %v1092, %v1091
      %v1135 = vpack.c.b16 %v1094, %v1093
      %v1136 = vpack.c.b16 %v1096, %v1095
      %v1137 = vpack.c.b16 %v1098, %v1097
      %v1138 = vpack.c.b16 %v1100, %v1099
      %v1139 = vpack.c.b16 %v1102, %v1101
      %v1140 = vpack.c.b16 %v1104, %v1103
      %v1141 = vpack.c.b16 %v1106, %v1105
      %v1142 = vpack.c.b16 %v1108, %v1107
      %v1143 = vpack.c.b16 %v1110, %v1109
      %v1144 = vpack.c.b16 %v1112, %v1111
      %v1145 = vpack.c.b16 %v1114, %v1113
      %v1146 = vpack.c.b16 %v1116, %v1115
      %v1147 = vpack.c.b16 %v1118, %v1117
      %v1148 = vpack.c.b16 %v1120, %v1119
      %v1149 = vpack.c.b16 %v1122, %v1121
      %v1150 = vpack.c.b16 %v1124, %v1123
      %v1151 = vpack.c.b16 %v1126, %v1125
      %v1152 = vpack.c.b16 %v1128, %v1127
      %1177 = vmatprep.subr.bf16.mxu0 0
      %1178 = vmatpush1.bf16.msra.mxu0 %v1136
      %1179 = vmatprep.subr.bf16.mxu0 0
      %1180 = vmatpush1.bf16.msra.mxu0 %v1135
      %1181 = vmatprep.subr.bf16.mxu0 0
      %1182 = vmatpush1.bf16.msra.mxu0 %v1134
      %1183 = vmatprep.subr.bf16.mxu0 0
      %1184 = vmatpush1.bf16.msra.mxu0 %v1133
      %1185 = vmatprep.subr.bf16.mxu0 0
      %1186 = vmatpush1.bf16.msra.mxu0 %v1132
      %1187 = vmatprep.subr.bf16.mxu0 0
      %1188 = vmatpush1.bf16.msra.mxu0 %v1131
      %1189 = vmatprep.subr.bf16.mxu0 0
      %1190 = vmatpush1.bf16.msra.mxu0 %v1130
      %1191 = vmatprep.subr.bf16.mxu0 0
      %1192 = vmatpush1.bf16.msra.mxu0 %v1129
      %1193 = vmatprep.subr.bf16.mxu0 0
      %1194 = vmatpush2.bf16.msra.mxu0 %v1144
      %1195 = vmatprep.subr.bf16.mxu0 0
      %1196 = vmatpush2.bf16.msra.mxu0 %v1143
      %1197 = vmatprep.subr.bf16.mxu0 0
      %1198 = vmatpush2.bf16.msra.mxu0 %v1142
      %1199 = vmatprep.subr.bf16.mxu0 0
      %1200 = vmatpush2.bf16.msra.mxu0 %v1141
      %1201 = vmatprep.subr.bf16.mxu0 0
      %1202 = vmatpush2.bf16.msra.mxu0 %v1140
      %1203 = vmatprep.subr.bf16.mxu0 0
      %1204 = vmatpush2.bf16.msra.mxu0 %v1139
      %1205 = vmatprep.subr.bf16.mxu0 0
      %1206 = vmatpush2.bf16.msra.mxu0 %v1138
      %1207 = vmatprep.subr.bf16.mxu0 0
      %1208 = vmatpush2.bf16.msra.mxu0 %v1137
      %1209 = vmatprep.mubr.bf16.mxu0 %v1010
      %1210 = vmatmul.mubr.bf16.gmra.mxu0 %v1009
      %v1211 = vpop.f32.mrf.mxu0
      %v1212 = vadd.f32 0.0, %v1211
      %v1213 = vpop.f32.mrf.mxu0
      %v1214 = vpop.f32.mrf.mxu0
      %v1215 = vadd.f32 0.0, %v1214
      %v1216 = vpop.f32.mrf.mxu0
      %1217 = vmatprep.mubr.bf16.mxu0 %v1013
      %1218 = vmatmul.mubr.bf16.gmra.mxu0 %v1012
      %v1219 = vpop.f32.mrf.mxu0
      %v1220 = vadd.f32 0.0, %v1219
      %v1221 = vpop.f32.mrf.mxu0
      %v1222 = vpop.f32.mrf.mxu0
      %v1223 = vadd.f32 0.0, %v1222
      %v1224 = vpop.f32.mrf.mxu0
      %1225 = vmatprep.mubr.bf16.mxu0 %v1016
      %1226 = vmatmul.mubr.bf16.gmra.mxu0 %v1015
      %v1227 = vpop.f32.mrf.mxu0
      %v1228 = vadd.f32 0.0, %v1227
      %v1229 = vpop.f32.mrf.mxu0
      %v1230 = vpop.f32.mrf.mxu0
      %v1231 = vadd.f32 0.0, %v1230
      %v1232 = vpop.f32.mrf.mxu0
      %1233 = vmatprep.mubr.bf16.mxu0 %v1019
      %1234 = vmatmul.mubr.bf16.gmra.mxu0 %v1018
      %v1235 = vpop.f32.mrf.mxu0
      %v1236 = vadd.f32 0.0, %v1235
      %v1237 = vpop.f32.mrf.mxu0
      %v1238 = vpop.f32.mrf.mxu0
      %v1239 = vadd.f32 0.0, %v1238
      %v1240 = vpop.f32.mrf.mxu0
      %1241 = vdwg.mxu0
      %1242 = vmatprep.subr.bf16.mxu0 0
      %1243 = vmatpush1.bf16.msra.mxu0 %v1152
      %1244 = vmatprep.subr.bf16.mxu0 0
      %1245 = vmatpush1.bf16.msra.mxu0 %v1151
      %1246 = vmatprep.subr.bf16.mxu0 0
      %1247 = vmatpush1.bf16.msra.mxu0 %v1150
      %1248 = vmatprep.subr.bf16.mxu0 0
      %1249 = vmatpush1.bf16.msra.mxu0 %v1149
      %1250 = vmatprep.subr.bf16.mxu0 0
      %1251 = vmatpush1.bf16.msra.mxu0 %v1148
      %1252 = vmatprep.subr.bf16.mxu0 0
      %1253 = vmatpush1.bf16.msra.mxu0 %v1147
      %1254 = vmatprep.subr.bf16.mxu0 0
      %1255 = vmatpush1.bf16.msra.mxu0 %v1146
      %1256 = vmatprep.subr.bf16.mxu0 0
      %1257 = vmatpush1.bf16.msra.mxu0 %v1145
      %1258 = vmatprep.subr.bf16.mxu0 0
      %1259 = vmatpush2.bf16.msra.mxu0 0
      %1260 = vmatprep.subr.bf16.mxu0 0
      %1261 = vmatpush2.bf16.msra.mxu0 0
      %1262 = vmatprep.subr.bf16.mxu0 0
      %1263 = vmatpush2.bf16.msra.mxu0 0
      %1264 = vmatprep.subr.bf16.mxu0 0
      %1265 = vmatpush2.bf16.msra.mxu0 0
      %1266 = vmatprep.subr.bf16.mxu0 0
      %1267 = vmatpush2.bf16.msra.mxu0 0
      %1268 = vmatprep.subr.bf16.mxu0 0
      %1269 = vmatpush2.bf16.msra.mxu0 0
      %1270 = vmatprep.subr.bf16.mxu0 0
      %1271 = vmatpush2.bf16.msra.mxu0 0
      %1272 = vmatprep.subr.bf16.mxu0 0
      %1273 = vmatpush2.bf16.msra.mxu0 0
      %1274 = vmatprep.mubr.bf16.mxu0 0
      %1275 = vmatmul.mubr.bf16.gmra.mxu0 %v1011
      %v1276 = vpop.f32.mrf.mxu0
      %v1277 = vadd.f32 %v1212, %v1276
      %v1278 = vpop.f32.mrf.mxu0
      %v1279 = vpop.f32.mrf.mxu0
      %v1280 = vadd.f32 %v1215, %v1279
      %v1281 = vpop.f32.mrf.mxu0
      %1282 = vmatprep.mubr.bf16.mxu0 0
      %1283 = vmatmul.mubr.bf16.gmra.mxu0 %v1014
      %v1284 = vpop.f32.mrf.mxu0
      %v1285 = vadd.f32 %v1220, %v1284
      %v1286 = vpop.f32.mrf.mxu0
      %v1287 = vpop.f32.mrf.mxu0
      %v1288 = vadd.f32 %v1223, %v1287
      %v1289 = vpop.f32.mrf.mxu0
      %1290 = vmatprep.mubr.bf16.mxu0 0
      %1291 = vmatmul.mubr.bf16.gmra.mxu0 %v1017
      %v1292 = vpop.f32.mrf.mxu0
      %v1293 = vadd.f32 %v1228, %v1292
      %v1294 = vpop.f32.mrf.mxu0
      %v1295 = vpop.f32.mrf.mxu0
      %v1296 = vadd.f32 %v1231, %v1295
      %v1297 = vpop.f32.mrf.mxu0
      %1298 = vmatprep.mubr.bf16.mxu0 0
      %1299 = vmatmul.mubr.bf16.gmra.mxu0 %v1020
      %v1300 = vpop.f32.mrf.mxu0
      %v1301 = vadd.f32 %v1236, %v1300
      %v1302 = vpop.f32.mrf.mxu0
      %v1303 = vpop.f32.mrf.mxu0
      %v1304 = vadd.f32 %v1239, %v1303
      %v1305 = vpop.f32.mrf.mxu0
      %1306 = vdwg.mxu0
      %v1307 = vld [vmem:[#allocation4] sm:$0xff]
      %v1308 = vld [vmem:[#allocation4 + $0x8] sm:$0xff]
      %v1309 = vld [vmem:[#allocation4 + $0x10] sm:$0xff]
      %v1310 = vld [vmem:[#allocation4 + $0x18] sm:$0xff]
      %v1311 = vld [vmem:[#allocation4 + $0x20] sm:$0xff]
      %v1312 = vld [vmem:[#allocation4 + $0x28] sm:$0xff]
      %v1313 = vld [vmem:[#allocation4 + $0x30] sm:$0xff]
      %v1314 = vld [vmem:[#allocation4 + $0x38] sm:$0xff]
      %v1315 = vadd.f32 %v1307, %v1277
      %v1316 = vadd.f32 %v1308, %v1280
      %v1317 = vadd.f32 %v1309, %v1285
      %v1318 = vadd.f32 %v1310, %v1288
      %v1319 = vadd.f32 %v1311, %v1293
      %v1320 = vadd.f32 %v1312, %v1296
      %v1321 = vadd.f32 %v1313, %v1301
      %v1322 = vadd.f32 %v1314, %v1304
      %1323 = vst [vmem:[#allocation4] sm:$0xff] %v1315
      %1324 = vst [vmem:[#allocation4 + $0x8] sm:$0xff] %v1316
      %1325 = vst [vmem:[#allocation4 + $0x10] sm:$0xff] %v1317
      %1326 = vst [vmem:[#allocation4 + $0x18] sm:$0xff] %v1318
      %1327 = vst [vmem:[#allocation4 + $0x20] sm:$0xff] %v1319
      %1328 = vst [vmem:[#allocation4 + $0x28] sm:$0xff] %v1320
      %1329 = vst [vmem:[#allocation4 + $0x30] sm:$0xff] %v1321
      %1330 = vst [vmem:[#allocation4 + $0x38] sm:$0xff] %v1322
      %s1331 = scalar_lea.vmem [#allocation2], 24
      %v1332 = vld [vmem:[%s1331] sm:$0xff]
      %v1333 = vld [vmem:[%s1331 + $0x8] sm:$0xf]
      %v1334 = vld [vmem:[%s1331 + $0xc] sm:$0xff]
      %v1335 = vld [vmem:[%s1331 + $0x14] sm:$0xf]
      %v1336 = vld [vmem:[%s1331 + $0x18] sm:$0xff]
      %v1337 = vld [vmem:[%s1331 + $0x20] sm:$0xf]
      %v1338 = vld [vmem:[%s1331 + $0x24] sm:$0xff]
      %v1339 = vld [vmem:[%s1331 + $0x2c] sm:$0xf]
      %v1340 = vld [vmem:[%s1331 + $0x30] sm:$0xff]
      %v1341 = vld [vmem:[%s1331 + $0x38] sm:$0xf]
      %v1342 = vld [vmem:[%s1331 + $0x3c] sm:$0xff]
      %v1343 = vld [vmem:[%s1331 + $0x44] sm:$0xf]
      %v1344 = vld [vmem:[%s1331 + $0x48] sm:$0xff]
      %v1345 = vld [vmem:[%s1331 + $0x50] sm:$0xf]
      %v1346 = vld [vmem:[%s1331 + $0x54] sm:$0xff]
      %v1347 = vld [vmem:[%s1331 + $0x5c] sm:$0xf]
      %s1348 = scalar_lea.vmem %s1, 384
      %v1349 = vld [vmem:[%s1348] sm:$0xf]
      %v1350 = vld [vmem:[%s1348 + $0x4] sm:$0xf]
      %v1351 = vld [vmem:[%s1348 + $0x8] sm:$0xf]
      %v1352 = vld [vmem:[%s1348 + $0xc] sm:$0xf]
      %v1353 = vld [vmem:[%s1348 + $0x10] sm:$0xf]
      %v1354 = vld [vmem:[%s1348 + $0x14] sm:$0xf]
      %v1355 = vld [vmem:[%s1348 + $0x18] sm:$0xf]
      %v1356 = vld [vmem:[%s1348 + $0x1c] sm:$0xf]
      %v1357 = vld [vmem:[%s1348 + $0x20] sm:$0xf]
      %v1358 = vld [vmem:[%s1348 + $0x24] sm:$0xf]
      %v1359 = vld [vmem:[%s1348 + $0x28] sm:$0xf]
      %v1360 = vld [vmem:[%s1348 + $0x2c] sm:$0xf]
      %v1361 = vld [vmem:[%s1348 + $0x30] sm:$0xf]
      %v1362 = vld [vmem:[%s1348 + $0x34] sm:$0xf]
      %v1363 = vld [vmem:[%s1348 + $0x38] sm:$0xf]
      %v1364 = vld [vmem:[%s1348 + $0x3c] sm:$0xf]
      %v1365 = vld [vmem:[%s1348 + $0x40] sm:$0xf]
      %v1366 = vld [vmem:[%s1348 + $0x44] sm:$0xf]
      %v1367 = vld [vmem:[%s1348 + $0x48] sm:$0xf]
      %v1368 = vld [vmem:[%s1348 + $0x4c] sm:$0xf]
      %v1369 = vld [vmem:[%s1348 + $0x50] sm:$0xf]
      %v1370 = vld [vmem:[%s1348 + $0x54] sm:$0xf]
      %v1371 = vld [vmem:[%s1348 + $0x58] sm:$0xf]
      %v1372 = vld [vmem:[%s1348 + $0x5c] sm:$0xf]
      %v1373 = vld [vmem:[%s1348 + $0x60] sm:$0xf]
      %v1374 = vld [vmem:[%s1348 + $0x64] sm:$0xf]
      %v1375 = vld [vmem:[%s1348 + $0x68] sm:$0xf]
      %v1376 = vld [vmem:[%s1348 + $0x6c] sm:$0xf]
      %v1377 = vld [vmem:[%s1348 + $0x70] sm:$0xf]
      %v1378 = vld [vmem:[%s1348 + $0x74] sm:$0xf]
      %v1379 = vld [vmem:[%s1348 + $0x78] sm:$0xf]
      %v1380 = vld [vmem:[%s1348 + $0x7c] sm:$0xf]
      %v1381 = vld [vmem:[%s1348 + $0x80] sm:$0xf]
      %v1382 = vld [vmem:[%s1348 + $0x84] sm:$0xf]
      %v1383 = vld [vmem:[%s1348 + $0x88] sm:$0xf]
      %v1384 = vld [vmem:[%s1348 + $0x8c] sm:$0xf]
      %v1385 = vld [vmem:[%s1348 + $0x90] sm:$0xf]
      %v1386 = vld [vmem:[%s1348 + $0x94] sm:$0xf]
      %v1387 = vld [vmem:[%s1348 + $0x98] sm:$0xf]
      %v1388 = vld [vmem:[%s1348 + $0x9c] sm:$0xf]
      %v1389 = vld [vmem:[%s1348 + $0xa0] sm:$0xf]
      %v1390 = vld [vmem:[%s1348 + $0xa4] sm:$0xf]
      %v1391 = vld [vmem:[%s1348 + $0xa8] sm:$0xf]
      %v1392 = vld [vmem:[%s1348 + $0xac] sm:$0xf]
      %v1393 = vld [vmem:[%s1348 + $0xb0] sm:$0xf]
      %v1394 = vld [vmem:[%s1348 + $0xb4] sm:$0xf]
      %v1395 = vld [vmem:[%s1348 + $0xb8] sm:$0xf]
      %v1396 = vld [vmem:[%s1348 + $0xbc] sm:$0xf]
      %v1413 = vunpack.c.l.b16 %v1332
      %v1414 = vunpack.c.h.b16 %v1332
      %v1415 = vunpack.c.l.b16 %v1333
      %v1416 = vunpack.c.l.b16 %v1334
      %v1417 = vunpack.c.h.b16 %v1334
      %v1418 = vunpack.c.l.b16 %v1335
      %v1419 = vunpack.c.l.b16 %v1336
      %v1420 = vunpack.c.h.b16 %v1336
      %v1421 = vunpack.c.l.b16 %v1337
      %v1422 = vunpack.c.l.b16 %v1338
      %v1423 = vunpack.c.h.b16 %v1338
      %v1424 = vunpack.c.l.b16 %v1339
      %v1425 = vunpack.c.l.b16 %v1340
      %v1426 = vunpack.c.h.b16 %v1340
      %v1427 = vunpack.c.l.b16 %v1341
      %v1428 = vunpack.c.l.b16 %v1342
      %v1429 = vunpack.c.h.b16 %v1342
      %v1430 = vunpack.c.l.b16 %v1343
      %v1431 = vunpack.c.l.b16 %v1344
      %v1432 = vunpack.c.h.b16 %v1344
      %v1433 = vunpack.c.l.b16 %v1345
      %v1434 = vunpack.c.l.b16 %v1346
      %v1435 = vunpack.c.h.b16 %v1346
      %v1436 = vunpack.c.l.b16 %v1347
      %v1437 = vpack.c.b16 %v1416, %v1413
      %v1438 = vpack.c.b16 %v1417, %v1414
      %v1439 = vpack.c.b16 %v1418, %v1415
      %v1440 = vpack.c.b16 %v1422, %v1419
      %v1441 = vpack.c.b16 %v1423, %v1420
      %v1442 = vpack.c.b16 %v1424, %v1421
      %v1443 = vpack.c.b16 %v1428, %v1425
      %v1444 = vpack.c.b16 %v1429, %v1426
      %v1445 = vpack.c.b16 %v1430, %v1427
      %v1446 = vpack.c.b16 %v1434, %v1431
      %v1447 = vpack.c.b16 %v1435, %v1432
      %v1448 = vpack.c.b16 %v1436, %v1433
      %v1509 = vunpack.c.l.b16 %v1349
      %v1510 = vunpack.c.l.b16 %v1350
      %v1511 = vunpack.c.l.b16 %v1351
      %v1512 = vunpack.c.l.b16 %v1352
      %v1513 = vunpack.c.l.b16 %v1353
      %v1514 = vunpack.c.l.b16 %v1354
      %v1515 = vunpack.c.l.b16 %v1355
      %v1516 = vunpack.c.l.b16 %v1356
      %v1517 = vunpack.c.l.b16 %v1357
      %v1518 = vunpack.c.l.b16 %v1358
      %v1519 = vunpack.c.l.b16 %v1359
      %v1520 = vunpack.c.l.b16 %v1360
      %v1521 = vunpack.c.l.b16 %v1361
      %v1522 = vunpack.c.l.b16 %v1362
      %v1523 = vunpack.c.l.b16 %v1363
      %v1524 = vunpack.c.l.b16 %v1364
      %v1525 = vunpack.c.l.b16 %v1365
      %v1526 = vunpack.c.l.b16 %v1366
      %v1527 = vunpack.c.l.b16 %v1367
      %v1528 = vunpack.c.l.b16 %v1368
      %v1529 = vunpack.c.l.b16 %v1369
      %v1530 = vunpack.c.l.b16 %v1370
      %v1531 = vunpack.c.l.b16 %v1371
      %v1532 = vunpack.c.l.b16 %v1372
      %v1533 = vunpack.c.l.b16 %v1373
      %v1534 = vunpack.c.l.b16 %v1374
      %v1535 = vunpack.c.l.b16 %v1375
      %v1536 = vunpack.c.l.b16 %v1376
      %v1537 = vunpack.c.l.b16 %v1377
      %v1538 = vunpack.c.l.b16 %v1378
      %v1539 = vunpack.c.l.b16 %v1379
      %v1540 = vunpack.c.l.b16 %v1380
      %v1541 = vunpack.c.l.b16 %v1381
      %v1542 = vunpack.c.l.b16 %v1382
      %v1543 = vunpack.c.l.b16 %v1383
      %v1544 = vunpack.c.l.b16 %v1384
      %v1545 = vunpack.c.l.b16 %v1385
      %v1546 = vunpack.c.l.b16 %v1386
      %v1547 = vunpack.c.l.b16 %v1387
      %v1548 = vunpack.c.l.b16 %v1388
      %v1549 = vunpack.c.l.b16 %v1389
      %v1550 = vunpack.c.l.b16 %v1390
      %v1551 = vunpack.c.l.b16 %v1391
      %v1552 = vunpack.c.l.b16 %v1392
      %v1553 = vunpack.c.l.b16 %v1393
      %v1554 = vunpack.c.l.b16 %v1394
      %v1555 = vunpack.c.l.b16 %v1395
      %v1556 = vunpack.c.l.b16 %v1396
      %v1557 = vpack.c.b16 %v1510, %v1509
      %v1558 = vpack.c.b16 %v1512, %v1511
      %v1559 = vpack.c.b16 %v1514, %v1513
      %v1560 = vpack.c.b16 %v1516, %v1515
      %v1561 = vpack.c.b16 %v1518, %v1517
      %v1562 = vpack.c.b16 %v1520, %v1519
      %v1563 = vpack.c.b16 %v1522, %v1521
      %v1564 = vpack.c.b16 %v1524, %v1523
      %v1565 = vpack.c.b16 %v1526, %v1525
      %v1566 = vpack.c.b16 %v1528, %v1527
      %v1567 = vpack.c.b16 %v1530, %v1529
      %v1568 = vpack.c.b16 %v1532, %v1531
      %v1569 = vpack.c.b16 %v1534, %v1533
      %v1570 = vpack.c.b16 %v1536, %v1535
      %v1571 = vpack.c.b16 %v1538, %v1537
      %v1572 = vpack.c.b16 %v1540, %v1539
      %v1573 = vpack.c.b16 %v1542, %v1541
      %v1574 = vpack.c.b16 %v1544, %v1543
      %v1575 = vpack.c.b16 %v1546, %v1545
      %v1576 = vpack.c.b16 %v1548, %v1547
      %v1577 = vpack.c.b16 %v1550, %v1549
      %v1578 = vpack.c.b16 %v1552, %v1551
      %v1579 = vpack.c.b16 %v1554, %v1553
      %v1580 = vpack.c.b16 %v1556, %v1555
      %1605 = vmatprep.subr.bf16.mxu0 0
      %1606 = vmatpush1.bf16.msra.mxu0 %v1564
      %1607 = vmatprep.subr.bf16.mxu0 0
      %1608 = vmatpush1.bf16.msra.mxu0 %v1563
      %1609 = vmatprep.subr.bf16.mxu0 0
      %1610 = vmatpush1.bf16.msra.mxu0 %v1562
      %1611 = vmatprep.subr.bf16.mxu0 0
      %1612 = vmatpush1.bf16.msra.mxu0 %v1561
      %1613 = vmatprep.subr.bf16.mxu0 0
      %1614 = vmatpush1.bf16.msra.mxu0 %v1560
      %1615 = vmatprep.subr.bf16.mxu0 0
      %1616 = vmatpush1.bf16.msra.mxu0 %v1559
      %1617 = vmatprep.subr.bf16.mxu0 0
      %1618 = vmatpush1.bf16.msra.mxu0 %v1558
      %1619 = vmatprep.subr.bf16.mxu0 0
      %1620 = vmatpush1.bf16.msra.mxu0 %v1557
      %1621 = vmatprep.subr.bf16.mxu0 0
      %1622 = vmatpush2.bf16.msra.mxu0 %v1572
      %1623 = vmatprep.subr.bf16.mxu0 0
      %1624 = vmatpush2.bf16.msra.mxu0 %v1571
      %1625 = vmatprep.subr.bf16.mxu0 0
      %1626 = vmatpush2.bf16.msra.mxu0 %v1570
      %1627 = vmatprep.subr.bf16.mxu0 0
      %1628 = vmatpush2.bf16.msra.mxu0 %v1569
      %1629 = vmatprep.subr.bf16.mxu0 0
      %1630 = vmatpush2.bf16.msra.mxu0 %v1568
      %1631 = vmatprep.subr.bf16.mxu0 0
      %1632 = vmatpush2.bf16.msra.mxu0 %v1567
      %1633 = vmatprep.subr.bf16.mxu0 0
      %1634 = vmatpush2.bf16.msra.mxu0 %v1566
      %1635 = vmatprep.subr.bf16.mxu0 0
      %1636 = vmatpush2.bf16.msra.mxu0 %v1565
      %1637 = vmatprep.mubr.bf16.mxu0 %v1438
      %1638 = vmatmul.mubr.bf16.gmra.mxu0 %v1437
      %v1639 = vpop.f32.mrf.mxu0
      %v1640 = vadd.f32 0.0, %v1639
      %v1641 = vpop.f32.mrf.mxu0
      %v1642 = vpop.f32.mrf.mxu0
      %v1643 = vadd.f32 0.0, %v1642
      %v1644 = vpop.f32.mrf.mxu0
      %1645 = vmatprep.mubr.bf16.mxu0 %v1441
      %1646 = vmatmul.mubr.bf16.gmra.mxu0 %v1440
      %v1647 = vpop.f32.mrf.mxu0
      %v1648 = vadd.f32 0.0, %v1647
      %v1649 = vpop.f32.mrf.mxu0
      %v1650 = vpop.f32.mrf.mxu0
      %v1651 = vadd.f32 0.0, %v1650
      %v1652 = vpop.f32.mrf.mxu0
      %1653 = vmatprep.mubr.bf16.mxu0 %v1444
      %1654 = vmatmul.mubr.bf16.gmra.mxu0 %v1443
      %v1655 = vpop.f32.mrf.mxu0
      %v1656 = vadd.f32 0.0, %v1655
      %v1657 = vpop.f32.mrf.mxu0
      %v1658 = vpop.f32.mrf.mxu0
      %v1659 = vadd.f32 0.0, %v1658
      %v1660 = vpop.f32.mrf.mxu0
      %1661 = vmatprep.mubr.bf16.mxu0 %v1447
      %1662 = vmatmul.mubr.bf16.gmra.mxu0 %v1446
      %v1663 = vpop.f32.mrf.mxu0
      %v1664 = vadd.f32 0.0, %v1663
      %v1665 = vpop.f32.mrf.mxu0
      %v1666 = vpop.f32.mrf.mxu0
      %v1667 = vadd.f32 0.0, %v1666
      %v1668 = vpop.f32.mrf.mxu0
      %1669 = vdwg.mxu0
      %1670 = vmatprep.subr.bf16.mxu0 0
      %1671 = vmatpush1.bf16.msra.mxu0 %v1580
      %1672 = vmatprep.subr.bf16.mxu0 0
      %1673 = vmatpush1.bf16.msra.mxu0 %v1579
      %1674 = vmatprep.subr.bf16.mxu0 0
      %1675 = vmatpush1.bf16.msra.mxu0 %v1578
      %1676 = vmatprep.subr.bf16.mxu0 0
      %1677 = vmatpush1.bf16.msra.mxu0 %v1577
      %1678 = vmatprep.subr.bf16.mxu0 0
      %1679 = vmatpush1.bf16.msra.mxu0 %v1576
      %1680 = vmatprep.subr.bf16.mxu0 0
      %1681 = vmatpush1.bf16.msra.mxu0 %v1575
      %1682 = vmatprep.subr.bf16.mxu0 0
      %1683 = vmatpush1.bf16.msra.mxu0 %v1574
      %1684 = vmatprep.subr.bf16.mxu0 0
      %1685 = vmatpush1.bf16.msra.mxu0 %v1573
      %1686 = vmatprep.subr.bf16.mxu0 0
      %1687 = vmatpush2.bf16.msra.mxu0 0
      %1688 = vmatprep.subr.bf16.mxu0 0
      %1689 = vmatpush2.bf16.msra.mxu0 0
      %1690 = vmatprep.subr.bf16.mxu0 0
      %1691 = vmatpush2.bf16.msra.mxu0 0
      %1692 = vmatprep.subr.bf16.mxu0 0
      %1693 = vmatpush2.bf16.msra.mxu0 0
      %1694 = vmatprep.subr.bf16.mxu0 0
      %1695 = vmatpush2.bf16.msra.mxu0 0
      %1696 = vmatprep.subr.bf16.mxu0 0
      %1697 = vmatpush2.bf16.msra.mxu0 0
      %1698 = vmatprep.subr.bf16.mxu0 0
      %1699 = vmatpush2.bf16.msra.mxu0 0
      %1700 = vmatprep.subr.bf16.mxu0 0
      %1701 = vmatpush2.bf16.msra.mxu0 0
      %1702 = vmatprep.mubr.bf16.mxu0 0
      %1703 = vmatmul.mubr.bf16.gmra.mxu0 %v1439
      %v1704 = vpop.f32.mrf.mxu0
      %v1705 = vadd.f32 %v1640, %v1704
      %v1706 = vpop.f32.mrf.mxu0
      %v1707 = vpop.f32.mrf.mxu0
      %v1708 = vadd.f32 %v1643, %v1707
      %v1709 = vpop.f32.mrf.mxu0
      %1710 = vmatprep.mubr.bf16.mxu0 0
      %1711 = vmatmul.mubr.bf16.gmra.mxu0 %v1442
      %v1712 = vpop.f32.mrf.mxu0
      %v1713 = vadd.f32 %v1648, %v1712
      %v1714 = vpop.f32.mrf.mxu0
      %v1715 = vpop.f32.mrf.mxu0
      %v1716 = vadd.f32 %v1651, %v1715
      %v1717 = vpop.f32.mrf.mxu0
      %1718 = vmatprep.mubr.bf16.mxu0 0
      %1719 = vmatmul.mubr.bf16.gmra.mxu0 %v1445
      %v1720 = vpop.f32.mrf.mxu0
      %v1721 = vadd.f32 %v1656, %v1720
      %v1722 = vpop.f32.mrf.mxu0
      %v1723 = vpop.f32.mrf.mxu0
      %v1724 = vadd.f32 %v1659, %v1723
      %v1725 = vpop.f32.mrf.mxu0
      %1726 = vmatprep.mubr.bf16.mxu0 0
      %1727 = vmatmul.mubr.bf16.gmra.mxu0 %v1448
      %v1728 = vpop.f32.mrf.mxu0
      %v1729 = vadd.f32 %v1664, %v1728
      %v1730 = vpop.f32.mrf.mxu0
      %v1731 = vpop.f32.mrf.mxu0
      %v1732 = vadd.f32 %v1667, %v1731
      %v1733 = vpop.f32.mrf.mxu0
      %1734 = vdwg.mxu0
      %v1735 = vld [vmem:[#allocation4] sm:$0xff]
      %v1736 = vld [vmem:[#allocation4 + $0x8] sm:$0xff]
      %v1737 = vld [vmem:[#allocation4 + $0x10] sm:$0xff]
      %v1738 = vld [vmem:[#allocation4 + $0x18] sm:$0xff]
      %v1739 = vld [vmem:[#allocation4 + $0x20] sm:$0xff]
      %v1740 = vld [vmem:[#allocation4 + $0x28] sm:$0xff]
      %v1741 = vld [vmem:[#allocation4 + $0x30] sm:$0xff]
      %v1742 = vld [vmem:[#allocation4 + $0x38] sm:$0xff]
      %v1743 = vadd.f32 %v1735, %v1705
      %v1744 = vadd.f32 %v1736, %v1708
      %v1745 = vadd.f32 %v1737, %v1713
      %v1746 = vadd.f32 %v1738, %v1716
      %v1747 = vadd.f32 %v1739, %v1721
      %v1748 = vadd.f32 %v1740, %v1724
      %v1749 = vadd.f32 %v1741, %v1729
      %v1750 = vadd.f32 %v1742, %v1732
      %1751 = vst [vmem:[#allocation4] sm:$0xff] %v1743
      %1752 = vst [vmem:[#allocation4 + $0x8] sm:$0xff] %v1744
      %1753 = vst [vmem:[#allocation4 + $0x10] sm:$0xff] %v1745
      %1754 = vst [vmem:[#allocation4 + $0x18] sm:$0xff] %v1746
      %1755 = vst [vmem:[#allocation4 + $0x20] sm:$0xff] %v1747
      %1756 = vst [vmem:[#allocation4 + $0x28] sm:$0xff] %v1748
      %1757 = vst [vmem:[#allocation4 + $0x30] sm:$0xff] %v1749
      %1758 = vst [vmem:[#allocation4 + $0x38] sm:$0xff] %v1750
      %v1759 = vld [vmem:[#allocation4] sm:$0xff]
      %v1760 = vld [vmem:[#allocation4 + $0x8] sm:$0xff]
      %v1761 = vld [vmem:[#allocation4 + $0x10] sm:$0xff]
      %v1762 = vld [vmem:[#allocation4 + $0x18] sm:$0xff]
      %v1763 = vld [vmem:[#allocation4 + $0x20] sm:$0xff]
      %v1764 = vld [vmem:[#allocation4 + $0x28] sm:$0xff]
      %v1765 = vld [vmem:[#allocation4 + $0x30] sm:$0xff]
      %v1766 = vld [vmem:[#allocation4 + $0x38] sm:$0xff]
      %v1767 = vld [vmem:[%s2] sm:$0x1]
      %v1769 = vlaneseq
      %v1770 = vshrl.u32 %v1769, 7
      %v1771 = vsub.s32 0, %v1770
      %v1772 = vrot.slane %v1767, %v1771
      %v1774 = vadd.f32 %v1759, %v1772
      %v1775 = vadd.f32 %v1760, %v1772
      %v1776 = vadd.f32 %v1761, %v1772
      %v1777 = vadd.f32 %v1762, %v1772
      %v1778 = vadd.f32 %v1763, %v1772
      %v1779 = vadd.f32 %v1764, %v1772
      %v1780 = vadd.f32 %v1765, %v1772
      %v1781 = vadd.f32 %v1766, %v1772
      %v1782 = vmax.f32 %v1774, 0.0
      %v1783 = vmax.f32 %v1775, 0.0
      %v1784 = vmax.f32 %v1776, 0.0
      %v1785 = vmax.f32 %v1777, 0.0
      %v1786 = vmax.f32 %v1778, 0.0
      %v1787 = vmax.f32 %v1779, 0.0
      %v1788 = vmax.f32 %v1780, 0.0
      %v1789 = vmax.f32 %v1781, 0.0
      %v1790 = vpack.c.bf16 %v1783, %v1782
      %v1791 = vpack.c.bf16 %v1785, %v1784
      %v1792 = vpack.c.bf16 %v1787, %v1786
      %v1793 = vpack.c.bf16 %v1789, %v1788
      %v1798 = vunpack.c.l.b16 %v1790
      %v1799 = vunpack.c.h.b16 %v1790
      %v1800 = vunpack.c.l.b16 %v1791
      %v1801 = vunpack.c.h.b16 %v1791
      %v1802 = vunpack.c.l.b16 %v1792
      %v1803 = vunpack.c.h.b16 %v1792
      %v1804 = vunpack.c.l.b16 %v1793
      %v1805 = vunpack.c.h.b16 %v1793
      %v1806 = vpack.c.b16 %v1798, %v1798
      %v1807 = vpack.c.b16 %v1799, %v1799
      %v1808 = vpack.c.b16 %v1800, %v1800
      %v1809 = vpack.c.b16 %v1801, %v1801
      %v1810 = vpack.c.b16 %v1802, %v1802
      %v1811 = vpack.c.b16 %v1803, %v1803
      %v1812 = vpack.c.b16 %v1804, %v1804
      %v1813 = vpack.c.b16 %v1805, %v1805
      %v1815 = vshrl.u32 %v1806, 16
      %v1817 = vrot.slane %v1815, 7
      %v1818 = vshll.u32 %v1806, 16
      %v1820 = vor.u32 %v1817, %v1818
      %v1822 = vshrl.u32 %v1807, 16
      %v1824 = vrot.slane %v1822, 7
      %v1825 = vshll.u32 %v1807, 16
      %v1827 = vor.u32 %v1824, %v1825
      %v1829 = vshrl.u32 %v1808, 16
      %v1831 = vrot.slane %v1829, 7
      %v1832 = vshll.u32 %v1808, 16
      %v1834 = vor.u32 %v1831, %v1832
      %v1836 = vshrl.u32 %v1809, 16
      %v1838 = vrot.slane %v1836, 7
      %v1839 = vshll.u32 %v1809, 16
      %v1841 = vor.u32 %v1838, %v1839
      %v1843 = vshrl.u32 %v1810, 16
      %v1845 = vrot.slane %v1843, 7
      %v1846 = vshll.u32 %v1810, 16
      %v1848 = vor.u32 %v1845, %v1846
      %v1850 = vshrl.u32 %v1811, 16
      %v1852 = vrot.slane %v1850, 7
      %v1853 = vshll.u32 %v1811, 16
      %v1855 = vor.u32 %v1852, %v1853
      %v1857 = vshrl.u32 %v1812, 16
      %v1859 = vrot.slane %v1857, 7
      %v1860 = vshll.u32 %v1812, 16
      %v1862 = vor.u32 %v1859, %v1860
      %v1864 = vshrl.u32 %v1813, 16
      %v1866 = vrot.slane %v1864, 7
      %v1867 = vshll.u32 %v1813, 16
      %v1869 = vor.u32 %v1866, %v1867
      %v1878 = vsel %vm364, 0, %v1820
      %v1879 = vsel %vm364, 0, %v1827
      %v1880 = vsel %vm364, 0, %v1834
      %v1881 = vsel %vm364, 0, %v1841
      %v1882 = vsel %vm364, 0, %v1848
      %v1883 = vsel %vm364, 0, %v1855
      %v1884 = vsel %vm364, 0, %v1862
      %v1885 = vsel %vm364, 0, %v1869
      %v1886 = vrot.slane %v1818, 1
      %v1887 = vor.u32 %v1815, %v1886
      %v1888 = vrot.slane %v1825, 1
      %v1889 = vor.u32 %v1822, %v1888
      %v1890 = vrot.slane %v1832, 1
      %v1891 = vor.u32 %v1829, %v1890
      %v1892 = vrot.slane %v1839, 1
      %v1893 = vor.u32 %v1836, %v1892
      %v1894 = vrot.slane %v1846, 1
      %v1895 = vor.u32 %v1843, %v1894
      %v1896 = vrot.slane %v1853, 1
      %v1897 = vor.u32 %v1850, %v1896
      %v1898 = vrot.slane %v1860, 1
      %v1899 = vor.u32 %v1857, %v1898
      %v1900 = vrot.slane %v1867, 1
      %v1901 = vor.u32 %v1864, %v1900
      %v1910 = vsel %vm399, %v1887, 0
      %v1911 = vsel %vm399, %v1889, 0
      %v1912 = vsel %vm399, %v1891, 0
      %v1913 = vsel %vm399, %v1893, 0
      %v1914 = vsel %vm399, %v1895, 0
      %v1915 = vsel %vm399, %v1897, 0
      %v1916 = vsel %vm399, %v1899, 0
      %v1917 = vsel %vm399, %v1901, 0
      %v1934 = vunpack.c.l.b16 %v1878
      %v1935 = vunpack.c.l.b16 %v1910
      %v1936 = vunpack.c.l.b16 %v1879
      %v1937 = vunpack.c.l.b16 %v1911
      %v1938 = vunpack.c.l.b16 %v1880
      %v1939 = vunpack.c.l.b16 %v1912
      %v1940 = vunpack.c.l.b16 %v1881
      %v1941 = vunpack.c.l.b16 %v1913
      %v1942 = vunpack.c.l.b16 %v1882
      %v1943 = vunpack.c.l.b16 %v1914
      %v1944 = vunpack.c.l.b16 %v1883
      %v1945 = vunpack.c.l.b16 %v1915
      %v1946 = vunpack.c.l.b16 %v1884
      %v1947 = vunpack.c.l.b16 %v1916
      %v1948 = vunpack.c.l.b16 %v1885
      %v1949 = vunpack.c.l.b16 %v1917
      %v1950 = vpack.c.b16 %v1798, %v1934
      %v1951 = vpack.c.b16 %v1935, %v1935
      %v1952 = vpack.c.b16 %v1799, %v1936
      %v1953 = vpack.c.b16 %v1937, %v1937
      %v1954 = vpack.c.b16 %v1800, %v1938
      %v1955 = vpack.c.b16 %v1939, %v1939
      %v1956 = vpack.c.b16 %v1801, %v1940
      %v1957 = vpack.c.b16 %v1941, %v1941
      %v1958 = vpack.c.b16 %v1802, %v1942
      %v1959 = vpack.c.b16 %v1943, %v1943
      %v1960 = vpack.c.b16 %v1803, %v1944
      %v1961 = vpack.c.b16 %v1945, %v1945
      %v1962 = vpack.c.b16 %v1804, %v1946
      %v1963 = vpack.c.b16 %v1947, %v1947
      %v1964 = vpack.c.b16 %v1805, %v1948
      %v1965 = vpack.c.b16 %v1949, %v1949
      %s1982 = scalar_lea.vmem [#allocation3], 12
      %1983 = vst [vmem:[%s1982] sm:$0xff] %v1950
      %1984 = vst [vmem:[%s1982 + $0x8] sm:$0xf] %v1951
      %1985 = vst [vmem:[%s1982 + $0xc] sm:$0xff] %v1952
      %1986 = vst [vmem:[%s1982 + $0x14] sm:$0xf] %v1953
      %1987 = vst [vmem:[%s1982 + $0x18] sm:$0xff] %v1954
      %1988 = vst [vmem:[%s1982 + $0x20] sm:$0xf] %v1955
      %1989 = vst [vmem:[%s1982 + $0x24] sm:$0xff] %v1956
      %1990 = vst [vmem:[%s1982 + $0x2c] sm:$0xf] %v1957
      %1991 = vst [vmem:[%s1982 + $0x30] sm:$0xff] %v1958
      %1992 = vst [vmem:[%s1982 + $0x38] sm:$0xf] %v1959
      %1993 = vst [vmem:[%s1982 + $0x3c] sm:$0xff] %v1960
      %1994 = vst [vmem:[%s1982 + $0x44] sm:$0xf] %v1961
      %1995 = vst [vmem:[%s1982 + $0x48] sm:$0xff] %v1962
      %1996 = vst [vmem:[%s1982 + $0x50] sm:$0xf] %v1963
      %1997 = vst [vmem:[%s1982 + $0x54] sm:$0xff] %v1964
      %1998 = vst [vmem:[%s1982 + $0x5c] sm:$0xf] %v1965
      %1999 = vst [vmem:[#allocation3] sm:$0xff] 0
      %2000 = vst [vmem:[#allocation3 + $0x8] sm:$0xf] 0
      %s2001 = scalar_lea.vmem [#allocation3], 108
      %2002 = vst [vmem:[%s2001] sm:$0xff] 0
      %2003 = vst [vmem:[%s2001 + $0x8] sm:$0xf] 0
      %v2004 = vld [vmem:[#allocation3] sm:$0xff]
      %v2005 = vld [vmem:[#allocation3 + $0x8] sm:$0xf]
      %v2006 = vld [vmem:[#allocation3 + $0xc] sm:$0xff]
      %v2007 = vld [vmem:[#allocation3 + $0x14] sm:$0xf]
      %v2008 = vld [vmem:[#allocation3 + $0x18] sm:$0xff]
      %v2009 = vld [vmem:[#allocation3 + $0x20] sm:$0xf]
      %v2010 = vld [vmem:[#allocation3 + $0x24] sm:$0xff]
      %v2011 = vld [vmem:[#allocation3 + $0x2c] sm:$0xf]
      %v2012 = vld [vmem:[#allocation3 + $0x30] sm:$0xff]
      %v2013 = vld [vmem:[#allocation3 + $0x38] sm:$0xf]
      %v2014 = vld [vmem:[#allocation3 + $0x3c] sm:$0xff]
      %v2015 = vld [vmem:[#allocation3 + $0x44] sm:$0xf]
      %v2016 = vld [vmem:[#allocation3 + $0x48] sm:$0xff]
      %v2017 = vld [vmem:[#allocation3 + $0x50] sm:$0xf]
      %v2018 = vld [vmem:[#allocation3 + $0x54] sm:$0xff]
      %v2019 = vld [vmem:[#allocation3 + $0x5c] sm:$0xf]
      %v2020 = vld [vmem:[%s3] sm:$0xf]
      %v2021 = vld [vmem:[%s3 + $0x4] sm:$0xf]
      %v2022 = vld [vmem:[%s3 + $0x8] sm:$0xf]
      %v2023 = vld [vmem:[%s3 + $0xc] sm:$0xf]
      %v2024 = vld [vmem:[%s3 + $0x10] sm:$0xf]
      %v2025 = vld [vmem:[%s3 + $0x14] sm:$0xf]
      %v2026 = vld [vmem:[%s3 + $0x18] sm:$0xf]
      %v2027 = vld [vmem:[%s3 + $0x1c] sm:$0xf]
      %v2028 = vld [vmem:[%s3 + $0x20] sm:$0xf]
      %v2029 = vld [vmem:[%s3 + $0x24] sm:$0xf]
      %v2030 = vld [vmem:[%s3 + $0x28] sm:$0xf]
      %v2031 = vld [vmem:[%s3 + $0x2c] sm:$0xf]
      %v2032 = vld [vmem:[%s3 + $0x30] sm:$0xf]
      %v2033 = vld [vmem:[%s3 + $0x34] sm:$0xf]
      %v2034 = vld [vmem:[%s3 + $0x38] sm:$0xf]
      %v2035 = vld [vmem:[%s3 + $0x3c] sm:$0xf]
      %v2036 = vld [vmem:[%s3 + $0x40] sm:$0xf]
      %v2037 = vld [vmem:[%s3 + $0x44] sm:$0xf]
      %v2038 = vld [vmem:[%s3 + $0x48] sm:$0xf]
      %v2039 = vld [vmem:[%s3 + $0x4c] sm:$0xf]
      %v2040 = vld [vmem:[%s3 + $0x50] sm:$0xf]
      %v2041 = vld [vmem:[%s3 + $0x54] sm:$0xf]
      %v2042 = vld [vmem:[%s3 + $0x58] sm:$0xf]
      %v2043 = vld [vmem:[%s3 + $0x5c] sm:$0xf]
      %v2044 = vld [vmem:[%s3 + $0x60] sm:$0xf]
      %v2045 = vld [vmem:[%s3 + $0x64] sm:$0xf]
      %v2046 = vld [vmem:[%s3 + $0x68] sm:$0xf]
      %v2047 = vld [vmem:[%s3 + $0x6c] sm:$0xf]
      %v2048 = vld [vmem:[%s3 + $0x70] sm:$0xf]
      %v2049 = vld [vmem:[%s3 + $0x74] sm:$0xf]
      %v2050 = vld [vmem:[%s3 + $0x78] sm:$0xf]
      %v2051 = vld [vmem:[%s3 + $0x7c] sm:$0xf]
      %v2052 = vld [vmem:[%s3 + $0x80] sm:$0xf]
      %v2053 = vld [vmem:[%s3 + $0x84] sm:$0xf]
      %v2054 = vld [vmem:[%s3 + $0x88] sm:$0xf]
      %v2055 = vld [vmem:[%s3 + $0x8c] sm:$0xf]
      %v2056 = vld [vmem:[%s3 + $0x90] sm:$0xf]
      %v2057 = vld [vmem:[%s3 + $0x94] sm:$0xf]
      %v2058 = vld [vmem:[%s3 + $0x98] sm:$0xf]
      %v2059 = vld [vmem:[%s3 + $0x9c] sm:$0xf]
      %v2060 = vld [vmem:[%s3 + $0xa0] sm:$0xf]
      %v2061 = vld [vmem:[%s3 + $0xa4] sm:$0xf]
      %v2062 = vld [vmem:[%s3 + $0xa8] sm:$0xf]
      %v2063 = vld [vmem:[%s3 + $0xac] sm:$0xf]
      %v2064 = vld [vmem:[%s3 + $0xb0] sm:$0xf]
      %v2065 = vld [vmem:[%s3 + $0xb4] sm:$0xf]
      %v2066 = vld [vmem:[%s3 + $0xb8] sm:$0xf]
      %v2067 = vld [vmem:[%s3 + $0xbc] sm:$0xf]
      %v2084 = vunpack.c.l.b16 %v2004
      %v2085 = vunpack.c.h.b16 %v2004
      %v2086 = vunpack.c.l.b16 %v2005
      %v2087 = vunpack.c.l.b16 %v2006
      %v2088 = vunpack.c.h.b16 %v2006
      %v2089 = vunpack.c.l.b16 %v2007
      %v2090 = vunpack.c.l.b16 %v2008
      %v2091 = vunpack.c.h.b16 %v2008
      %v2092 = vunpack.c.l.b16 %v2009
      %v2093 = vunpack.c.l.b16 %v2010
      %v2094 = vunpack.c.h.b16 %v2010
      %v2095 = vunpack.c.l.b16 %v2011
      %v2096 = vunpack.c.l.b16 %v2012
      %v2097 = vunpack.c.h.b16 %v2012
      %v2098 = vunpack.c.l.b16 %v2013
      %v2099 = vunpack.c.l.b16 %v2014
      %v2100 = vunpack.c.h.b16 %v2014
      %v2101 = vunpack.c.l.b16 %v2015
      %v2102 = vunpack.c.l.b16 %v2016
      %v2103 = vunpack.c.h.b16 %v2016
      %v2104 = vunpack.c.l.b16 %v2017
      %v2105 = vunpack.c.l.b16 %v2018
      %v2106 = vunpack.c.h.b16 %v2018
      %v2107 = vunpack.c.l.b16 %v2019
      %v2108 = vpack.c.b16 %v2087, %v2084
      %v2109 = vpack.c.b16 %v2088, %v2085
      %v2110 = vpack.c.b16 %v2089, %v2086
      %v2111 = vpack.c.b16 %v2093, %v2090
      %v2112 = vpack.c.b16 %v2094, %v2091
      %v2113 = vpack.c.b16 %v2095, %v2092
      %v2114 = vpack.c.b16 %v2099, %v2096
      %v2115 = vpack.c.b16 %v2100, %v2097
      %v2116 = vpack.c.b16 %v2101, %v2098
      %v2117 = vpack.c.b16 %v2105, %v2102
      %v2118 = vpack.c.b16 %v2106, %v2103
      %v2119 = vpack.c.b16 %v2107, %v2104
      %v2180 = vunpack.c.l.b16 %v2020
      %v2181 = vunpack.c.l.b16 %v2021
      %v2182 = vunpack.c.l.b16 %v2022
      %v2183 = vunpack.c.l.b16 %v2023
      %v2184 = vunpack.c.l.b16 %v2024
      %v2185 = vunpack.c.l.b16 %v2025
      %v2186 = vunpack.c.l.b16 %v2026
      %v2187 = vunpack.c.l.b16 %v2027
      %v2188 = vunpack.c.l.b16 %v2028
      %v2189 = vunpack.c.l.b16 %v2029
      %v2190 = vunpack.c.l.b16 %v2030
      %v2191 = vunpack.c.l.b16 %v2031
      %v2192 = vunpack.c.l.b16 %v2032
      %v2193 = vunpack.c.l.b16 %v2033
      %v2194 = vunpack.c.l.b16 %v2034
      %v2195 = vunpack.c.l.b16 %v2035
      %v2196 = vunpack.c.l.b16 %v2036
      %v2197 = vunpack.c.l.b16 %v2037
      %v2198 = vunpack.c.l.b16 %v2038
      %v2199 = vunpack.c.l.b16 %v2039
      %v2200 = vunpack.c.l.b16 %v2040
      %v2201 = vunpack.c.l.b16 %v2041
      %v2202 = vunpack.c.l.b16 %v2042
      %v2203 = vunpack.c.l.b16 %v2043
      %v2204 = vunpack.c.l.b16 %v2044
      %v2205 = vunpack.c.l.b16 %v2045
      %v2206 = vunpack.c.l.b16 %v2046
      %v2207 = vunpack.c.l.b16 %v2047
      %v2208 = vunpack.c.l.b16 %v2048
      %v2209 = vunpack.c.l.b16 %v2049
      %v2210 = vunpack.c.l.b16 %v2050
      %v2211 = vunpack.c.l.b16 %v2051
      %v2212 = vunpack.c.l.b16 %v2052
      %v2213 = vunpack.c.l.b16 %v2053
      %v2214 = vunpack.c.l.b16 %v2054
      %v2215 = vunpack.c.l.b16 %v2055
      %v2216 = vunpack.c.l.b16 %v2056
      %v2217 = vunpack.c.l.b16 %v2057
      %v2218 = vunpack.c.l.b16 %v2058
      %v2219 = vunpack.c.l.b16 %v2059
      %v2220 = vunpack.c.l.b16 %v2060
      %v2221 = vunpack.c.l.b16 %v2061
      %v2222 = vunpack.c.l.b16 %v2062
      %v2223 = vunpack.c.l.b16 %v2063
      %v2224 = vunpack.c.l.b16 %v2064
      %v2225 = vunpack.c.l.b16 %v2065
      %v2226 = vunpack.c.l.b16 %v2066
      %v2227 = vunpack.c.l.b16 %v2067
      %v2228 = vpack.c.b16 %v2181, %v2180
      %v2229 = vpack.c.b16 %v2183, %v2182
      %v2230 = vpack.c.b16 %v2185, %v2184
      %v2231 = vpack.c.b16 %v2187, %v2186
      %v2232 = vpack.c.b16 %v2189, %v2188
      %v2233 = vpack.c.b16 %v2191, %v2190
      %v2234 = vpack.c.b16 %v2193, %v2192
      %v2235 = vpack.c.b16 %v2195, %v2194
      %v2236 = vpack.c.b16 %v2197, %v2196
      %v2237 = vpack.c.b16 %v2199, %v2198
      %v2238 = vpack.c.b16 %v2201, %v2200
      %v2239 = vpack.c.b16 %v2203, %v2202
      %v2240 = vpack.c.b16 %v2205, %v2204
      %v2241 = vpack.c.b16 %v2207, %v2206
      %v2242 = vpack.c.b16 %v2209, %v2208
      %v2243 = vpack.c.b16 %v2211, %v2210
      %v2244 = vpack.c.b16 %v2213, %v2212
      %v2245 = vpack.c.b16 %v2215, %v2214
      %v2246 = vpack.c.b16 %v2217, %v2216
      %v2247 = vpack.c.b16 %v2219, %v2218
      %v2248 = vpack.c.b16 %v2221, %v2220
      %v2249 = vpack.c.b16 %v2223, %v2222
      %v2250 = vpack.c.b16 %v2225, %v2224
      %v2251 = vpack.c.b16 %v2227, %v2226
      %2276 = vmatprep.subr.bf16.mxu0 0
      %2277 = vmatpush1.bf16.msra.mxu0 %v2235
      %2278 = vmatprep.subr.bf16.mxu0 0
      %2279 = vmatpush1.bf16.msra.mxu0 %v2234
      %2280 = vmatprep.subr.bf16.mxu0 0
      %2281 = vmatpush1.bf16.msra.mxu0 %v2233
      %2282 = vmatprep.subr.bf16.mxu0 0
      %2283 = vmatpush1.bf16.msra.mxu0 %v2232
      %2284 = vmatprep.subr.bf16.mxu0 0
      %2285 = vmatpush1.bf16.msra.mxu0 %v2231
      %2286 = vmatprep.subr.bf16.mxu0 0
      %2287 = vmatpush1.bf16.msra.mxu0 %v2230
      %2288 = vmatprep.subr.bf16.mxu0 0
      %2289 = vmatpush1.bf16.msra.mxu0 %v2229
      %2290 = vmatprep.subr.bf16.mxu0 0
      %2291 = vmatpush1.bf16.msra.mxu0 %v2228
      %2292 = vmatprep.subr.bf16.mxu0 0
      %2293 = vmatpush2.bf16.msra.mxu0 %v2243
      %2294 = vmatprep.subr.bf16.mxu0 0
      %2295 = vmatpush2.bf16.msra.mxu0 %v2242
      %2296 = vmatprep.subr.bf16.mxu0 0
      %2297 = vmatpush2.bf16.msra.mxu0 %v2241
      %2298 = vmatprep.subr.bf16.mxu0 0
      %2299 = vmatpush2.bf16.msra.mxu0 %v2240
      %2300 = vmatprep.subr.bf16.mxu0 0
      %2301 = vmatpush2.bf16.msra.mxu0 %v2239
      %2302 = vmatprep.subr.bf16.mxu0 0
      %2303 = vmatpush2.bf16.msra.mxu0 %v2238
      %2304 = vmatprep.subr.bf16.mxu0 0
      %2305 = vmatpush2.bf16.msra.mxu0 %v2237
      %2306 = vmatprep.subr.bf16.mxu0 0
      %2307 = vmatpush2.bf16.msra.mxu0 %v2236
      %2308 = vmatprep.mubr.bf16.mxu0 %v2109
      %2309 = vmatmul.mubr.bf16.gmra.mxu0 %v2108
      %v2310 = vpop.f32.mrf.mxu0
      %v2311 = vadd.f32 0.0, %v2310
      %v2312 = vpop.f32.mrf.mxu0
      %v2313 = vpop.f32.mrf.mxu0
      %v2314 = vadd.f32 0.0, %v2313
      %v2315 = vpop.f32.mrf.mxu0
      %2316 = vmatprep.mubr.bf16.mxu0 %v2112
      %2317 = vmatmul.mubr.bf16.gmra.mxu0 %v2111
      %v2318 = vpop.f32.mrf.mxu0
      %v2319 = vadd.f32 0.0, %v2318
      %v2320 = vpop.f32.mrf.mxu0
      %v2321 = vpop.f32.mrf.mxu0
      %v2322 = vadd.f32 0.0, %v2321
      %v2323 = vpop.f32.mrf.mxu0
      %2324 = vmatprep.mubr.bf16.mxu0 %v2115
      %2325 = vmatmul.mubr.bf16.gmra.mxu0 %v2114
      %v2326 = vpop.f32.mrf.mxu0
      %v2327 = vadd.f32 0.0, %v2326
      %v2328 = vpop.f32.mrf.mxu0
      %v2329 = vpop.f32.mrf.mxu0
      %v2330 = vadd.f32 0.0, %v2329
      %v2331 = vpop.f32.mrf.mxu0
      %2332 = vmatprep.mubr.bf16.mxu0 %v2118
      %2333 = vmatmul.mubr.bf16.gmra.mxu0 %v2117
      %v2334 = vpop.f32.mrf.mxu0
      %v2335 = vadd.f32 0.0, %v2334
      %v2336 = vpop.f32.mrf.mxu0
      %v2337 = vpop.f32.mrf.mxu0
      %v2338 = vadd.f32 0.0, %v2337
      %v2339 = vpop.f32.mrf.mxu0
      %2340 = vdwg.mxu0
      %2341 = vmatprep.subr.bf16.mxu0 0
      %2342 = vmatpush1.bf16.msra.mxu0 %v2251
      %2343 = vmatprep.subr.bf16.mxu0 0
      %2344 = vmatpush1.bf16.msra.mxu0 %v2250
      %2345 = vmatprep.subr.bf16.mxu0 0
      %2346 = vmatpush1.bf16.msra.mxu0 %v2249
      %2347 = vmatprep.subr.bf16.mxu0 0
      %2348 = vmatpush1.bf16.msra.mxu0 %v2248
      %2349 = vmatprep.subr.bf16.mxu0 0
      %2350 = vmatpush1.bf16.msra.mxu0 %v2247
      %2351 = vmatprep.subr.bf16.mxu0 0
      %2352 = vmatpush1.bf16.msra.mxu0 %v2246
      %2353 = vmatprep.subr.bf16.mxu0 0
      %2354 = vmatpush1.bf16.msra.mxu0 %v2245
      %2355 = vmatprep.subr.bf16.mxu0 0
      %2356 = vmatpush1.bf16.msra.mxu0 %v2244
      %2357 = vmatprep.subr.bf16.mxu0 0
      %2358 = vmatpush2.bf16.msra.mxu0 0
      %2359 = vmatprep.subr.bf16.mxu0 0
      %2360 = vmatpush2.bf16.msra.mxu0 0
      %2361 = vmatprep.subr.bf16.mxu0 0
      %2362 = vmatpush2.bf16.msra.mxu0 0
      %2363 = vmatprep.subr.bf16.mxu0 0
      %2364 = vmatpush2.bf16.msra.mxu0 0
      %2365 = vmatprep.subr.bf16.mxu0 0
      %2366 = vmatpush2.bf16.msra.mxu0 0
      %2367 = vmatprep.subr.bf16.mxu0 0
      %2368 = vmatpush2.bf16.msra.mxu0 0
      %2369 = vmatprep.subr.bf16.mxu0 0
      %2370 = vmatpush2.bf16.msra.mxu0 0
      %2371 = vmatprep.subr.bf16.mxu0 0
      %2372 = vmatpush2.bf16.msra.mxu0 0
      %2373 = vmatprep.mubr.bf16.mxu0 0
      %2374 = vmatmul.mubr.bf16.gmra.mxu0 %v2110
      %v2375 = vpop.f32.mrf.mxu0
      %v2376 = vadd.f32 %v2311, %v2375
      %v2377 = vpop.f32.mrf.mxu0
      %v2378 = vpop.f32.mrf.mxu0
      %v2379 = vadd.f32 %v2314, %v2378
      %v2380 = vpop.f32.mrf.mxu0
      %2381 = vmatprep.mubr.bf16.mxu0 0
      %2382 = vmatmul.mubr.bf16.gmra.mxu0 %v2113
      %v2383 = vpop.f32.mrf.mxu0
      %v2384 = vadd.f32 %v2319, %v2383
      %v2385 = vpop.f32.mrf.mxu0
      %v2386 = vpop.f32.mrf.mxu0
      %v2387 = vadd.f32 %v2322, %v2386
      %v2388 = vpop.f32.mrf.mxu0
      %2389 = vmatprep.mubr.bf16.mxu0 0
      %2390 = vmatmul.mubr.bf16.gmra.mxu0 %v2116
      %v2391 = vpop.f32.mrf.mxu0
      %v2392 = vadd.f32 %v2327, %v2391
      %v2393 = vpop.f32.mrf.mxu0
      %v2394 = vpop.f32.mrf.mxu0
      %v2395 = vadd.f32 %v2330, %v2394
      %v2396 = vpop.f32.mrf.mxu0
      %2397 = vmatprep.mubr.bf16.mxu0 0
      %2398 = vmatmul.mubr.bf16.gmra.mxu0 %v2119
      %v2399 = vpop.f32.mrf.mxu0
      %v2400 = vadd.f32 %v2335, %v2399
      %v2401 = vpop.f32.mrf.mxu0
      %v2402 = vpop.f32.mrf.mxu0
      %v2403 = vadd.f32 %v2338, %v2402
      %v2404 = vpop.f32.mrf.mxu0
      %2405 = vdwg.mxu0
      %2406 = vst [vmem:[#allocation4] sm:$0xff] %v2376
      %2407 = vst [vmem:[#allocation4 + $0x8] sm:$0xff] %v2379
      %2408 = vst [vmem:[#allocation4 + $0x10] sm:$0xff] %v2384
      %2409 = vst [vmem:[#allocation4 + $0x18] sm:$0xff] %v2387
      %2410 = vst [vmem:[#allocation4 + $0x20] sm:$0xff] %v2392
      %2411 = vst [vmem:[#allocation4 + $0x28] sm:$0xff] %v2395
      %2412 = vst [vmem:[#allocation4 + $0x30] sm:$0xff] %v2400
      %2413 = vst [vmem:[#allocation4 + $0x38] sm:$0xff] %v2403
      %v2414 = vld [vmem:[%s1982] sm:$0xff]
      %v2415 = vld [vmem:[%s1982 + $0x8] sm:$0xf]
      %v2416 = vld [vmem:[%s1982 + $0xc] sm:$0xff]
      %v2417 = vld [vmem:[%s1982 + $0x14] sm:$0xf]
      %v2418 = vld [vmem:[%s1982 + $0x18] sm:$0xff]
      %v2419 = vld [vmem:[%s1982 + $0x20] sm:$0xf]
      %v2420 = vld [vmem:[%s1982 + $0x24] sm:$0xff]
      %v2421 = vld [vmem:[%s1982 + $0x2c] sm:$0xf]
      %v2422 = vld [vmem:[%s1982 + $0x30] sm:$0xff]
      %v2423 = vld [vmem:[%s1982 + $0x38] sm:$0xf]
      %v2424 = vld [vmem:[%s1982 + $0x3c] sm:$0xff]
      %v2425 = vld [vmem:[%s1982 + $0x44] sm:$0xf]
      %v2426 = vld [vmem:[%s1982 + $0x48] sm:$0xff]
      %v2427 = vld [vmem:[%s1982 + $0x50] sm:$0xf]
      %v2428 = vld [vmem:[%s1982 + $0x54] sm:$0xff]
      %v2429 = vld [vmem:[%s1982 + $0x5c] sm:$0xf]
      %s2430 = scalar_lea.vmem %s3, 192
      %v2431 = vld [vmem:[%s2430] sm:$0xf]
      %v2432 = vld [vmem:[%s2430 + $0x4] sm:$0xf]
      %v2433 = vld [vmem:[%s2430 + $0x8] sm:$0xf]
      %v2434 = vld [vmem:[%s2430 + $0xc] sm:$0xf]
      %v2435 = vld [vmem:[%s2430 + $0x10] sm:$0xf]
      %v2436 = vld [vmem:[%s2430 + $0x14] sm:$0xf]
      %v2437 = vld [vmem:[%s2430 + $0x18] sm:$0xf]
      %v2438 = vld [vmem:[%s2430 + $0x1c] sm:$0xf]
      %v2439 = vld [vmem:[%s2430 + $0x20] sm:$0xf]
      %v2440 = vld [vmem:[%s2430 + $0x24] sm:$0xf]
      %v2441 = vld [vmem:[%s2430 + $0x28] sm:$0xf]
      %v2442 = vld [vmem:[%s2430 + $0x2c] sm:$0xf]
      %v2443 = vld [vmem:[%s2430 + $0x30] sm:$0xf]
      %v2444 = vld [vmem:[%s2430 + $0x34] sm:$0xf]
      %v2445 = vld [vmem:[%s2430 + $0x38] sm:$0xf]
      %v2446 = vld [vmem:[%s2430 + $0x3c] sm:$0xf]
      %v2447 = vld [vmem:[%s2430 + $0x40] sm:$0xf]
      %v2448 = vld [vmem:[%s2430 + $0x44] sm:$0xf]
      %v2449 = vld [vmem:[%s2430 + $0x48] sm:$0xf]
      %v2450 = vld [vmem:[%s2430 + $0x4c] sm:$0xf]
      %v2451 = vld [vmem:[%s2430 + $0x50] sm:$0xf]
      %v2452 = vld [vmem:[%s2430 + $0x54] sm:$0xf]
      %v2453 = vld [vmem:[%s2430 + $0x58] sm:$0xf]
      %v2454 = vld [vmem:[%s2430 + $0x5c] sm:$0xf]
      %v2455 = vld [vmem:[%s2430 + $0x60] sm:$0xf]
      %v2456 = vld [vmem:[%s2430 + $0x64] sm:$0xf]
      %v2457 = vld [vmem:[%s2430 + $0x68] sm:$0xf]
      %v2458 = vld [vmem:[%s2430 + $0x6c] sm:$0xf]
      %v2459 = vld [vmem:[%s2430 + $0x70] sm:$0xf]
      %v2460 = vld [vmem:[%s2430 + $0x74] sm:$0xf]
      %v2461 = vld [vmem:[%s2430 + $0x78] sm:$0xf]
      %v2462 = vld [vmem:[%s2430 + $0x7c] sm:$0xf]
      %v2463 = vld [vmem:[%s2430 + $0x80] sm:$0xf]
      %v2464 = vld [vmem:[%s2430 + $0x84] sm:$0xf]
      %v2465 = vld [vmem:[%s2430 + $0x88] sm:$0xf]
      %v2466 = vld [vmem:[%s2430 + $0x8c] sm:$0xf]
      %v2467 = vld [vmem:[%s2430 + $0x90] sm:$0xf]
      %v2468 = vld [vmem:[%s2430 + $0x94] sm:$0xf]
      %v2469 = vld [vmem:[%s2430 + $0x98] sm:$0xf]
      %v2470 = vld [vmem:[%s2430 + $0x9c] sm:$0xf]
      %v2471 = vld [vmem:[%s2430 + $0xa0] sm:$0xf]
      %v2472 = vld [vmem:[%s2430 + $0xa4] sm:$0xf]
      %v2473 = vld [vmem:[%s2430 + $0xa8] sm:$0xf]
      %v2474 = vld [vmem:[%s2430 + $0xac] sm:$0xf]
      %v2475 = vld [vmem:[%s2430 + $0xb0] sm:$0xf]
      %v2476 = vld [vmem:[%s2430 + $0xb4] sm:$0xf]
      %v2477 = vld [vmem:[%s2430 + $0xb8] sm:$0xf]
      %v2478 = vld [vmem:[%s2430 + $0xbc] sm:$0xf]
      %v2495 = vunpack.c.l.b16 %v2414
      %v2496 = vunpack.c.h.b16 %v2414
      %v2497 = vunpack.c.l.b16 %v2415
      %v2498 = vunpack.c.l.b16 %v2416
      %v2499 = vunpack.c.h.b16 %v2416
      %v2500 = vunpack.c.l.b16 %v2417
      %v2501 = vunpack.c.l.b16 %v2418
      %v2502 = vunpack.c.h.b16 %v2418
      %v2503 = vunpack.c.l.b16 %v2419
      %v2504 = vunpack.c.l.b16 %v2420
      %v2505 = vunpack.c.h.b16 %v2420
      %v2506 = vunpack.c.l.b16 %v2421
      %v2507 = vunpack.c.l.b16 %v2422
      %v2508 = vunpack.c.h.b16 %v2422
      %v2509 = vunpack.c.l.b16 %v2423
      %v2510 = vunpack.c.l.b16 %v2424
      %v2511 = vunpack.c.h.b16 %v2424
      %v2512 = vunpack.c.l.b16 %v2425
      %v2513 = vunpack.c.l.b16 %v2426
      %v2514 = vunpack.c.h.b16 %v2426
      %v2515 = vunpack.c.l.b16 %v2427
      %v2516 = vunpack.c.l.b16 %v2428
      %v2517 = vunpack.c.h.b16 %v2428
      %v2518 = vunpack.c.l.b16 %v2429
      %v2519 = vpack.c.b16 %v2498, %v2495
      %v2520 = vpack.c.b16 %v2499, %v2496
      %v2521 = vpack.c.b16 %v2500, %v2497
      %v2522 = vpack.c.b16 %v2504, %v2501
      %v2523 = vpack.c.b16 %v2505, %v2502
      %v2524 = vpack.c.b16 %v2506, %v2503
      %v2525 = vpack.c.b16 %v2510, %v2507
      %v2526 = vpack.c.b16 %v2511, %v2508
      %v2527 = vpack.c.b16 %v2512, %v2509
      %v2528 = vpack.c.b16 %v2516, %v2513
      %v2529 = vpack.c.b16 %v2517, %v2514
      %v2530 = vpack.c.b16 %v2518, %v2515
      %v2591 = vunpack.c.l.b16 %v2431
      %v2592 = vunpack.c.l.b16 %v2432
      %v2593 = vunpack.c.l.b16 %v2433
      %v2594 = vunpack.c.l.b16 %v2434
      %v2595 = vunpack.c.l.b16 %v2435
      %v2596 = vunpack.c.l.b16 %v2436
      %v2597 = vunpack.c.l.b16 %v2437
      %v2598 = vunpack.c.l.b16 %v2438
      %v2599 = vunpack.c.l.b16 %v2439
      %v2600 = vunpack.c.l.b16 %v2440
      %v2601 = vunpack.c.l.b16 %v2441
      %v2602 = vunpack.c.l.b16 %v2442
      %v2603 = vunpack.c.l.b16 %v2443
      %v2604 = vunpack.c.l.b16 %v2444
      %v2605 = vunpack.c.l.b16 %v2445
      %v2606 = vunpack.c.l.b16 %v2446
      %v2607 = vunpack.c.l.b16 %v2447
      %v2608 = vunpack.c.l.b16 %v2448
      %v2609 = vunpack.c.l.b16 %v2449
      %v2610 = vunpack.c.l.b16 %v2450
      %v2611 = vunpack.c.l.b16 %v2451
      %v2612 = vunpack.c.l.b16 %v2452
      %v2613 = vunpack.c.l.b16 %v2453
      %v2614 = vunpack.c.l.b16 %v2454
      %v2615 = vunpack.c.l.b16 %v2455
      %v2616 = vunpack.c.l.b16 %v2456
      %v2617 = vunpack.c.l.b16 %v2457
      %v2618 = vunpack.c.l.b16 %v2458
      %v2619 = vunpack.c.l.b16 %v2459
      %v2620 = vunpack.c.l.b16 %v2460
      %v2621 = vunpack.c.l.b16 %v2461
      %v2622 = vunpack.c.l.b16 %v2462
      %v2623 = vunpack.c.l.b16 %v2463
      %v2624 = vunpack.c.l.b16 %v2464
      %v2625 = vunpack.c.l.b16 %v2465
      %v2626 = vunpack.c.l.b16 %v2466
      %v2627 = vunpack.c.l.b16 %v2467
      %v2628 = vunpack.c.l.b16 %v2468
      %v2629 = vunpack.c.l.b16 %v2469
      %v2630 = vunpack.c.l.b16 %v2470
      %v2631 = vunpack.c.l.b16 %v2471
      %v2632 = vunpack.c.l.b16 %v2472
      %v2633 = vunpack.c.l.b16 %v2473
      %v2634 = vunpack.c.l.b16 %v2474
      %v2635 = vunpack.c.l.b16 %v2475
      %v2636 = vunpack.c.l.b16 %v2476
      %v2637 = vunpack.c.l.b16 %v2477
      %v2638 = vunpack.c.l.b16 %v2478
      %v2639 = vpack.c.b16 %v2592, %v2591
      %v2640 = vpack.c.b16 %v2594, %v2593
      %v2641 = vpack.c.b16 %v2596, %v2595
      %v2642 = vpack.c.b16 %v2598, %v2597
      %v2643 = vpack.c.b16 %v2600, %v2599
      %v2644 = vpack.c.b16 %v2602, %v2601
      %v2645 = vpack.c.b16 %v2604, %v2603
      %v2646 = vpack.c.b16 %v2606, %v2605
      %v2647 = vpack.c.b16 %v2608, %v2607
      %v2648 = vpack.c.b16 %v2610, %v2609
      %v2649 = vpack.c.b16 %v2612, %v2611
      %v2650 = vpack.c.b16 %v2614, %v2613
      %v2651 = vpack.c.b16 %v2616, %v2615
      %v2652 = vpack.c.b16 %v2618, %v2617
      %v2653 = vpack.c.b16 %v2620, %v2619
      %v2654 = vpack.c.b16 %v2622, %v2621
      %v2655 = vpack.c.b16 %v2624, %v2623
      %v2656 = vpack.c.b16 %v2626, %v2625
      %v2657 = vpack.c.b16 %v2628, %v2627
      %v2658 = vpack.c.b16 %v2630, %v2629
      %v2659 = vpack.c.b16 %v2632, %v2631
      %v2660 = vpack.c.b16 %v2634, %v2633
      %v2661 = vpack.c.b16 %v2636, %v2635
      %v2662 = vpack.c.b16 %v2638, %v2637
      %2687 = vmatprep.subr.bf16.mxu0 0
      %2688 = vmatpush1.bf16.msra.mxu0 %v2646
      %2689 = vmatprep.subr.bf16.mxu0 0
      %2690 = vmatpush1.bf16.msra.mxu0 %v2645
      %2691 = vmatprep.subr.bf16.mxu0 0
      %2692 = vmatpush1.bf16.msra.mxu0 %v2644
      %2693 = vmatprep.subr.bf16.mxu0 0
      %2694 = vmatpush1.bf16.msra.mxu0 %v2643
      %2695 = vmatprep.subr.bf16.mxu0 0
      %2696 = vmatpush1.bf16.msra.mxu0 %v2642
      %2697 = vmatprep.subr.bf16.mxu0 0
      %2698 = vmatpush1.bf16.msra.mxu0 %v2641
      %2699 = vmatprep.subr.bf16.mxu0 0
      %2700 = vmatpush1.bf16.msra.mxu0 %v2640
      %2701 = vmatprep.subr.bf16.mxu0 0
      %2702 = vmatpush1.bf16.msra.mxu0 %v2639
      %2703 = vmatprep.subr.bf16.mxu0 0
      %2704 = vmatpush2.bf16.msra.mxu0 %v2654
      %2705 = vmatprep.subr.bf16.mxu0 0
      %2706 = vmatpush2.bf16.msra.mxu0 %v2653
      %2707 = vmatprep.subr.bf16.mxu0 0
      %2708 = vmatpush2.bf16.msra.mxu0 %v2652
      %2709 = vmatprep.subr.bf16.mxu0 0
      %2710 = vmatpush2.bf16.msra.mxu0 %v2651
      %2711 = vmatprep.subr.bf16.mxu0 0
      %2712 = vmatpush2.bf16.msra.mxu0 %v2650
      %2713 = vmatprep.subr.bf16.mxu0 0
      %2714 = vmatpush2.bf16.msra.mxu0 %v2649
      %2715 = vmatprep.subr.bf16.mxu0 0
      %2716 = vmatpush2.bf16.msra.mxu0 %v2648
      %2717 = vmatprep.subr.bf16.mxu0 0
      %2718 = vmatpush2.bf16.msra.mxu0 %v2647
      %2719 = vmatprep.mubr.bf16.mxu0 %v2520
      %2720 = vmatmul.mubr.bf16.gmra.mxu0 %v2519
      %v2721 = vpop.f32.mrf.mxu0
      %v2722 = vadd.f32 0.0, %v2721
      %v2723 = vpop.f32.mrf.mxu0
      %v2724 = vpop.f32.mrf.mxu0
      %v2725 = vadd.f32 0.0, %v2724
      %v2726 = vpop.f32.mrf.mxu0
      %2727 = vmatprep.mubr.bf16.mxu0 %v2523
      %2728 = vmatmul.mubr.bf16.gmra.mxu0 %v2522
      %v2729 = vpop.f32.mrf.mxu0
      %v2730 = vadd.f32 0.0, %v2729
      %v2731 = vpop.f32.mrf.mxu0
      %v2732 = vpop.f32.mrf.mxu0
      %v2733 = vadd.f32 0.0, %v2732
      %v2734 = vpop.f32.mrf.mxu0
      %2735 = vmatprep.mubr.bf16.mxu0 %v2526
      %2736 = vmatmul.mubr.bf16.gmra.mxu0 %v2525
      %v2737 = vpop.f32.mrf.mxu0
      %v2738 = vadd.f32 0.0, %v2737
      %v2739 = vpop.f32.mrf.mxu0
      %v2740 = vpop.f32.mrf.mxu0
      %v2741 = vadd.f32 0.0, %v2740
      %v2742 = vpop.f32.mrf.mxu0
      %2743 = vmatprep.mubr.bf16.mxu0 %v2529
      %2744 = vmatmul.mubr.bf16.gmra.mxu0 %v2528
      %v2745 = vpop.f32.mrf.mxu0
      %v2746 = vadd.f32 0.0, %v2745
      %v2747 = vpop.f32.mrf.mxu0
      %v2748 = vpop.f32.mrf.mxu0
      %v2749 = vadd.f32 0.0, %v2748
      %v2750 = vpop.f32.mrf.mxu0
      %2751 = vdwg.mxu0
      %2752 = vmatprep.subr.bf16.mxu0 0
      %2753 = vmatpush1.bf16.msra.mxu0 %v2662
      %2754 = vmatprep.subr.bf16.mxu0 0
      %2755 = vmatpush1.bf16.msra.mxu0 %v2661
      %2756 = vmatprep.subr.bf16.mxu0 0
      %2757 = vmatpush1.bf16.msra.mxu0 %v2660
      %2758 = vmatprep.subr.bf16.mxu0 0
      %2759 = vmatpush1.bf16.msra.mxu0 %v2659
      %2760 = vmatprep.subr.bf16.mxu0 0
      %2761 = vmatpush1.bf16.msra.mxu0 %v2658
      %2762 = vmatprep.subr.bf16.mxu0 0
      %2763 = vmatpush1.bf16.msra.mxu0 %v2657
      %2764 = vmatprep.subr.bf16.mxu0 0
      %2765 = vmatpush1.bf16.msra.mxu0 %v2656
      %2766 = vmatprep.subr.bf16.mxu0 0
      %2767 = vmatpush1.bf16.msra.mxu0 %v2655
      %2768 = vmatprep.subr.bf16.mxu0 0
      %2769 = vmatpush2.bf16.msra.mxu0 0
      %2770 = vmatprep.subr.bf16.mxu0 0
      %2771 = vmatpush2.bf16.msra.mxu0 0
      %2772 = vmatprep.subr.bf16.mxu0 0
      %2773 = vmatpush2.bf16.msra.mxu0 0
      %2774 = vmatprep.subr.bf16.mxu0 0
      %2775 = vmatpush2.bf16.msra.mxu0 0
      %2776 = vmatprep.subr.bf16.mxu0 0
      %2777 = vmatpush2.bf16.msra.mxu0 0
      %2778 = vmatprep.subr.bf16.mxu0 0
      %2779 = vmatpush2.bf16.msra.mxu0 0
      %2780 = vmatprep.subr.bf16.mxu0 0
      %2781 = vmatpush2.bf16.msra.mxu0 0
      %2782 = vmatprep.subr.bf16.mxu0 0
      %2783 = vmatpush2.bf16.msra.mxu0 0
      %2784 = vmatprep.mubr.bf16.mxu0 0
      %2785 = vmatmul.mubr.bf16.gmra.mxu0 %v2521
      %v2786 = vpop.f32.mrf.mxu0
      %v2787 = vadd.f32 %v2722, %v2786
      %v2788 = vpop.f32.mrf.mxu0
      %v2789 = vpop.f32.mrf.mxu0
      %v2790 = vadd.f32 %v2725, %v2789
      %v2791 = vpop.f32.mrf.mxu0
      %2792 = vmatprep.mubr.bf16.mxu0 0
      %2793 = vmatmul.mubr.bf16.gmra.mxu0 %v2524
      %v2794 = vpop.f32.mrf.mxu0
      %v2795 = vadd.f32 %v2730, %v2794
      %v2796 = vpop.f32.mrf.mxu0
      %v2797 = vpop.f32.mrf.mxu0
      %v2798 = vadd.f32 %v2733, %v2797
      %v2799 = vpop.f32.mrf.mxu0
      %2800 = vmatprep.mubr.bf16.mxu0 0
      %2801 = vmatmul.mubr.bf16.gmra.mxu0 %v2527
      %v2802 = vpop.f32.mrf.mxu0
      %v2803 = vadd.f32 %v2738, %v2802
      %v2804 = vpop.f32.mrf.mxu0
      %v2805 = vpop.f32.mrf.mxu0
      %v2806 = vadd.f32 %v2741, %v2805
      %v2807 = vpop.f32.mrf.mxu0
      %2808 = vmatprep.mubr.bf16.mxu0 0
      %2809 = vmatmul.mubr.bf16.gmra.mxu0 %v2530
      %v2810 = vpop.f32.mrf.mxu0
      %v2811 = vadd.f32 %v2746, %v2810
      %v2812 = vpop.f32.mrf.mxu0
      %v2813 = vpop.f32.mrf.mxu0
      %v2814 = vadd.f32 %v2749, %v2813
      %v2815 = vpop.f32.mrf.mxu0
      %2816 = vdwg.mxu0
      %v2817 = vld [vmem:[#allocation4] sm:$0xff]
      %v2818 = vld [vmem:[#allocation4 + $0x8] sm:$0xff]
      %v2819 = vld [vmem:[#allocation4 + $0x10] sm:$0xff]
      %v2820 = vld [vmem:[#allocation4 + $0x18] sm:$0xff]
      %v2821 = vld [vmem:[#allocation4 + $0x20] sm:$0xff]
      %v2822 = vld [vmem:[#allocation4 + $0x28] sm:$0xff]
      %v2823 = vld [vmem:[#allocation4 + $0x30] sm:$0xff]
      %v2824 = vld [vmem:[#allocation4 + $0x38] sm:$0xff]
      %v2825 = vadd.f32 %v2817, %v2787
      %v2826 = vadd.f32 %v2818, %v2790
      %v2827 = vadd.f32 %v2819, %v2795
      %v2828 = vadd.f32 %v2820, %v2798
      %v2829 = vadd.f32 %v2821, %v2803
      %v2830 = vadd.f32 %v2822, %v2806
      %v2831 = vadd.f32 %v2823, %v2811
      %v2832 = vadd.f32 %v2824, %v2814
      %2833 = vst [vmem:[#allocation4] sm:$0xff] %v2825
      %2834 = vst [vmem:[#allocation4 + $0x8] sm:$0xff] %v2826
      %2835 = vst [vmem:[#allocation4 + $0x10] sm:$0xff] %v2827
      %2836 = vst [vmem:[#allocation4 + $0x18] sm:$0xff] %v2828
      %2837 = vst [vmem:[#allocation4 + $0x20] sm:$0xff] %v2829
      %2838 = vst [vmem:[#allocation4 + $0x28] sm:$0xff] %v2830
      %2839 = vst [vmem:[#allocation4 + $0x30] sm:$0xff] %v2831
      %2840 = vst [vmem:[#allocation4 + $0x38] sm:$0xff] %v2832
      %s2841 = scalar_lea.vmem [#allocation3], 24
      %v2842 = vld [vmem:[%s2841] sm:$0xff]
      %v2843 = vld [vmem:[%s2841 + $0x8] sm:$0xf]
      %v2844 = vld [vmem:[%s2841 + $0xc] sm:$0xff]
      %v2845 = vld [vmem:[%s2841 + $0x14] sm:$0xf]
      %v2846 = vld [vmem:[%s2841 + $0x18] sm:$0xff]
      %v2847 = vld [vmem:[%s2841 + $0x20] sm:$0xf]
      %v2848 = vld [vmem:[%s2841 + $0x24] sm:$0xff]
      %v2849 = vld [vmem:[%s2841 + $0x2c] sm:$0xf]
      %v2850 = vld [vmem:[%s2841 + $0x30] sm:$0xff]
      %v2851 = vld [vmem:[%s2841 + $0x38] sm:$0xf]
      %v2852 = vld [vmem:[%s2841 + $0x3c] sm:$0xff]
      %v2853 = vld [vmem:[%s2841 + $0x44] sm:$0xf]
      %v2854 = vld [vmem:[%s2841 + $0x48] sm:$0xff]
      %v2855 = vld [vmem:[%s2841 + $0x50] sm:$0xf]
      %v2856 = vld [vmem:[%s2841 + $0x54] sm:$0xff]
      %v2857 = vld [vmem:[%s2841 + $0x5c] sm:$0xf]
      %s2858 = scalar_lea.vmem %s3, 384
      %v2859 = vld [vmem:[%s2858] sm:$0xf]
      %v2860 = vld [vmem:[%s2858 + $0x4] sm:$0xf]
      %v2861 = vld [vmem:[%s2858 + $0x8] sm:$0xf]
      %v2862 = vld [vmem:[%s2858 + $0xc] sm:$0xf]
      %v2863 = vld [vmem:[%s2858 + $0x10] sm:$0xf]
      %v2864 = vld [vmem:[%s2858 + $0x14] sm:$0xf]
      %v2865 = vld [vmem:[%s2858 + $0x18] sm:$0xf]
      %v2866 = vld [vmem:[%s2858 + $0x1c] sm:$0xf]
      %v2867 = vld [vmem:[%s2858 + $0x20] sm:$0xf]
      %v2868 = vld [vmem:[%s2858 + $0x24] sm:$0xf]
      %v2869 = vld [vmem:[%s2858 + $0x28] sm:$0xf]
      %v2870 = vld [vmem:[%s2858 + $0x2c] sm:$0xf]
      %v2871 = vld [vmem:[%s2858 + $0x30] sm:$0xf]
      %v2872 = vld [vmem:[%s2858 + $0x34] sm:$0xf]
      %v2873 = vld [vmem:[%s2858 + $0x38] sm:$0xf]
      %v2874 = vld [vmem:[%s2858 + $0x3c] sm:$0xf]
      %v2875 = vld [vmem:[%s2858 + $0x40] sm:$0xf]
      %v2876 = vld [vmem:[%s2858 + $0x44] sm:$0xf]
      %v2877 = vld [vmem:[%s2858 + $0x48] sm:$0xf]
      %v2878 = vld [vmem:[%s2858 + $0x4c] sm:$0xf]
      %v2879 = vld [vmem:[%s2858 + $0x50] sm:$0xf]
      %v2880 = vld [vmem:[%s2858 + $0x54] sm:$0xf]
      %v2881 = vld [vmem:[%s2858 + $0x58] sm:$0xf]
      %v2882 = vld [vmem:[%s2858 + $0x5c] sm:$0xf]
      %v2883 = vld [vmem:[%s2858 + $0x60] sm:$0xf]
      %v2884 = vld [vmem:[%s2858 + $0x64] sm:$0xf]
      %v2885 = vld [vmem:[%s2858 + $0x68] sm:$0xf]
      %v2886 = vld [vmem:[%s2858 + $0x6c] sm:$0xf]
      %v2887 = vld [vmem:[%s2858 + $0x70] sm:$0xf]
      %v2888 = vld [vmem:[%s2858 + $0x74] sm:$0xf]
      %v2889 = vld [vmem:[%s2858 + $0x78] sm:$0xf]
      %v2890 = vld [vmem:[%s2858 + $0x7c] sm:$0xf]
      %v2891 = vld [vmem:[%s2858 + $0x80] sm:$0xf]
      %v2892 = vld [vmem:[%s2858 + $0x84] sm:$0xf]
      %v2893 = vld [vmem:[%s2858 + $0x88] sm:$0xf]
      %v2894 = vld [vmem:[%s2858 + $0x8c] sm:$0xf]
      %v2895 = vld [vmem:[%s2858 + $0x90] sm:$0xf]
      %v2896 = vld [vmem:[%s2858 + $0x94] sm:$0xf]
      %v2897 = vld [vmem:[%s2858 + $0x98] sm:$0xf]
      %v2898 = vld [vmem:[%s2858 + $0x9c] sm:$0xf]
      %v2899 = vld [vmem:[%s2858 + $0xa0] sm:$0xf]
      %v2900 = vld [vmem:[%s2858 + $0xa4] sm:$0xf]
      %v2901 = vld [vmem:[%s2858 + $0xa8] sm:$0xf]
      %v2902 = vld [vmem:[%s2858 + $0xac] sm:$0xf]
      %v2903 = vld [vmem:[%s2858 + $0xb0] sm:$0xf]
      %v2904 = vld [vmem:[%s2858 + $0xb4] sm:$0xf]
      %v2905 = vld [vmem:[%s2858 + $0xb8] sm:$0xf]
      %v2906 = vld [vmem:[%s2858 + $0xbc] sm:$0xf]
      %v2923 = vunpack.c.l.b16 %v2842
      %v2924 = vunpack.c.h.b16 %v2842
      %v2925 = vunpack.c.l.b16 %v2843
      %v2926 = vunpack.c.l.b16 %v2844
      %v2927 = vunpack.c.h.b16 %v2844
      %v2928 = vunpack.c.l.b16 %v2845
      %v2929 = vunpack.c.l.b16 %v2846
      %v2930 = vunpack.c.h.b16 %v2846
      %v2931 = vunpack.c.l.b16 %v2847
      %v2932 = vunpack.c.l.b16 %v2848
      %v2933 = vunpack.c.h.b16 %v2848
      %v2934 = vunpack.c.l.b16 %v2849
      %v2935 = vunpack.c.l.b16 %v2850
      %v2936 = vunpack.c.h.b16 %v2850
      %v2937 = vunpack.c.l.b16 %v2851
      %v2938 = vunpack.c.l.b16 %v2852
      %v2939 = vunpack.c.h.b16 %v2852
      %v2940 = vunpack.c.l.b16 %v2853
      %v2941 = vunpack.c.l.b16 %v2854
      %v2942 = vunpack.c.h.b16 %v2854
      %v2943 = vunpack.c.l.b16 %v2855
      %v2944 = vunpack.c.l.b16 %v2856
      %v2945 = vunpack.c.h.b16 %v2856
      %v2946 = vunpack.c.l.b16 %v2857
      %v2947 = vpack.c.b16 %v2926, %v2923
      %v2948 = vpack.c.b16 %v2927, %v2924
      %v2949 = vpack.c.b16 %v2928, %v2925
      %v2950 = vpack.c.b16 %v2932, %v2929
      %v2951 = vpack.c.b16 %v2933, %v2930
      %v2952 = vpack.c.b16 %v2934, %v2931
      %v2953 = vpack.c.b16 %v2938, %v2935
      %v2954 = vpack.c.b16 %v2939, %v2936
      %v2955 = vpack.c.b16 %v2940, %v2937
      %v2956 = vpack.c.b16 %v2944, %v2941
      %v2957 = vpack.c.b16 %v2945, %v2942
      %v2958 = vpack.c.b16 %v2946, %v2943
      %v3019 = vunpack.c.l.b16 %v2859
      %v3020 = vunpack.c.l.b16 %v2860
      %v3021 = vunpack.c.l.b16 %v2861
      %v3022 = vunpack.c.l.b16 %v2862
      %v3023 = vunpack.c.l.b16 %v2863
      %v3024 = vunpack.c.l.b16 %v2864
      %v3025 = vunpack.c.l.b16 %v2865
      %v3026 = vunpack.c.l.b16 %v2866
      %v3027 = vunpack.c.l.b16 %v2867
      %v3028 = vunpack.c.l.b16 %v2868
      %v3029 = vunpack.c.l.b16 %v2869
      %v3030 = vunpack.c.l.b16 %v2870
      %v3031 = vunpack.c.l.b16 %v2871
      %v3032 = vunpack.c.l.b16 %v2872
      %v3033 = vunpack.c.l.b16 %v2873
      %v3034 = vunpack.c.l.b16 %v2874
      %v3035 = vunpack.c.l.b16 %v2875
      %v3036 = vunpack.c.l.b16 %v2876
      %v3037 = vunpack.c.l.b16 %v2877
      %v3038 = vunpack.c.l.b16 %v2878
      %v3039 = vunpack.c.l.b16 %v2879
      %v3040 = vunpack.c.l.b16 %v2880
      %v3041 = vunpack.c.l.b16 %v2881
      %v3042 = vunpack.c.l.b16 %v2882
      %v3043 = vunpack.c.l.b16 %v2883
      %v3044 = vunpack.c.l.b16 %v2884
      %v3045 = vunpack.c.l.b16 %v2885
      %v3046 = vunpack.c.l.b16 %v2886
      %v3047 = vunpack.c.l.b16 %v2887
      %v3048 = vunpack.c.l.b16 %v2888
      %v3049 = vunpack.c.l.b16 %v2889
      %v3050 = vunpack.c.l.b16 %v2890
      %v3051 = vunpack.c.l.b16 %v2891
      %v3052 = vunpack.c.l.b16 %v2892
      %v3053 = vunpack.c.l.b16 %v2893
      %v3054 = vunpack.c.l.b16 %v2894
      %v3055 = vunpack.c.l.b16 %v2895
      %v3056 = vunpack.c.l.b16 %v2896
      %v3057 = vunpack.c.l.b16 %v2897
      %v3058 = vunpack.c.l.b16 %v2898
      %v3059 = vunpack.c.l.b16 %v2899
      %v3060 = vunpack.c.l.b16 %v2900
      %v3061 = vunpack.c.l.b16 %v2901
      %v3062 = vunpack.c.l.b16 %v2902
      %v3063 = vunpack.c.l.b16 %v2903
      %v3064 = vunpack.c.l.b16 %v2904
      %v3065 = vunpack.c.l.b16 %v2905
      %v3066 = vunpack.c.l.b16 %v2906
      %v3067 = vpack.c.b16 %v3020, %v3019
      %v3068 = vpack.c.b16 %v3022, %v3021
      %v3069 = vpack.c.b16 %v3024, %v3023
      %v3070 = vpack.c.b16 %v3026, %v3025
      %v3071 = vpack.c.b16 %v3028, %v3027
      %v3072 = vpack.c.b16 %v3030, %v3029
      %v3073 = vpack.c.b16 %v3032, %v3031
      %v3074 = vpack.c.b16 %v3034, %v3033
      %v3075 = vpack.c.b16 %v3036, %v3035
      %v3076 = vpack.c.b16 %v3038, %v3037
      %v3077 = vpack.c.b16 %v3040, %v3039
      %v3078 = vpack.c.b16 %v3042, %v3041
      %v3079 = vpack.c.b16 %v3044, %v3043
      %v3080 = vpack.c.b16 %v3046, %v3045
      %v3081 = vpack.c.b16 %v3048, %v3047
      %v3082 = vpack.c.b16 %v3050, %v3049
      %v3083 = vpack.c.b16 %v3052, %v3051
      %v3084 = vpack.c.b16 %v3054, %v3053
      %v3085 = vpack.c.b16 %v3056, %v3055
      %v3086 = vpack.c.b16 %v3058, %v3057
      %v3087 = vpack.c.b16 %v3060, %v3059
      %v3088 = vpack.c.b16 %v3062, %v3061
      %v3089 = vpack.c.b16 %v3064, %v3063
      %v3090 = vpack.c.b16 %v3066, %v3065
      %3115 = vmatprep.subr.bf16.mxu0 0
      %3116 = vmatpush1.bf16.msra.mxu0 %v3074
      %3117 = vmatprep.subr.bf16.mxu0 0
      %3118 = vmatpush1.bf16.msra.mxu0 %v3073
      %3119 = vmatprep.subr.bf16.mxu0 0
      %3120 = vmatpush1.bf16.msra.mxu0 %v3072
      %3121 = vmatprep.subr.bf16.mxu0 0
      %3122 = vmatpush1.bf16.msra.mxu0 %v3071
      %3123 = vmatprep.subr.bf16.mxu0 0
      %3124 = vmatpush1.bf16.msra.mxu0 %v3070
      %3125 = vmatprep.subr.bf16.mxu0 0
      %3126 = vmatpush1.bf16.msra.mxu0 %v3069
      %3127 = vmatprep.subr.bf16.mxu0 0
      %3128 = vmatpush1.bf16.msra.mxu0 %v3068
      %3129 = vmatprep.subr.bf16.mxu0 0
      %3130 = vmatpush1.bf16.msra.mxu0 %v3067
      %3131 = vmatprep.subr.bf16.mxu0 0
      %3132 = vmatpush2.bf16.msra.mxu0 %v3082
      %3133 = vmatprep.subr.bf16.mxu0 0
      %3134 = vmatpush2.bf16.msra.mxu0 %v3081
      %3135 = vmatprep.subr.bf16.mxu0 0
      %3136 = vmatpush2.bf16.msra.mxu0 %v3080
      %3137 = vmatprep.subr.bf16.mxu0 0
      %3138 = vmatpush2.bf16.msra.mxu0 %v3079
      %3139 = vmatprep.subr.bf16.mxu0 0
      %3140 = vmatpush2.bf16.msra.mxu0 %v3078
      %3141 = vmatprep.subr.bf16.mxu0 0
      %3142 = vmatpush2.bf16.msra.mxu0 %v3077
      %3143 = vmatprep.subr.bf16.mxu0 0
      %3144 = vmatpush2.bf16.msra.mxu0 %v3076
      %3145 = vmatprep.subr.bf16.mxu0 0
      %3146 = vmatpush2.bf16.msra.mxu0 %v3075
      %3147 = vmatprep.mubr.bf16.mxu0 %v2948
      %3148 = vmatmul.mubr.bf16.gmra.mxu0 %v2947
      %v3149 = vpop.f32.mrf.mxu0
      %v3150 = vadd.f32 0.0, %v3149
      %v3151 = vpop.f32.mrf.mxu0
      %v3152 = vpop.f32.mrf.mxu0
      %v3153 = vadd.f32 0.0, %v3152
      %v3154 = vpop.f32.mrf.mxu0
      %3155 = vmatprep.mubr.bf16.mxu0 %v2951
      %3156 = vmatmul.mubr.bf16.gmra.mxu0 %v2950
      %v3157 = vpop.f32.mrf.mxu0
      %v3158 = vadd.f32 0.0, %v3157
      %v3159 = vpop.f32.mrf.mxu0
      %v3160 = vpop.f32.mrf.mxu0
      %v3161 = vadd.f32 0.0, %v3160
      %v3162 = vpop.f32.mrf.mxu0
      %3163 = vmatprep.mubr.bf16.mxu0 %v2954
      %3164 = vmatmul.mubr.bf16.gmra.mxu0 %v2953
      %v3165 = vpop.f32.mrf.mxu0
      %v3166 = vadd.f32 0.0, %v3165
      %v3167 = vpop.f32.mrf.mxu0
      %v3168 = vpop.f32.mrf.mxu0
      %v3169 = vadd.f32 0.0, %v3168
      %v3170 = vpop.f32.mrf.mxu0
      %3171 = vmatprep.mubr.bf16.mxu0 %v2957
      %3172 = vmatmul.mubr.bf16.gmra.mxu0 %v2956
      %v3173 = vpop.f32.mrf.mxu0
      %v3174 = vadd.f32 0.0, %v3173
      %v3175 = vpop.f32.mrf.mxu0
      %v3176 = vpop.f32.mrf.mxu0
      %v3177 = vadd.f32 0.0, %v3176
      %v3178 = vpop.f32.mrf.mxu0
      %3179 = vdwg.mxu0
      %3180 = vmatprep.subr.bf16.mxu0 0
      %3181 = vmatpush1.bf16.msra.mxu0 %v3090
      %3182 = vmatprep.subr.bf16.mxu0 0
      %3183 = vmatpush1.bf16.msra.mxu0 %v3089
      %3184 = vmatprep.subr.bf16.mxu0 0
      %3185 = vmatpush1.bf16.msra.mxu0 %v3088
      %3186 = vmatprep.subr.bf16.mxu0 0
      %3187 = vmatpush1.bf16.msra.mxu0 %v3087
      %3188 = vmatprep.subr.bf16.mxu0 0
      %3189 = vmatpush1.bf16.msra.mxu0 %v3086
      %3190 = vmatprep.subr.bf16.mxu0 0
      %3191 = vmatpush1.bf16.msra.mxu0 %v3085
      %3192 = vmatprep.subr.bf16.mxu0 0
      %3193 = vmatpush1.bf16.msra.mxu0 %v3084
      %3194 = vmatprep.subr.bf16.mxu0 0
      %3195 = vmatpush1.bf16.msra.mxu0 %v3083
      %3196 = vmatprep.subr.bf16.mxu0 0
      %3197 = vmatpush2.bf16.msra.mxu0 0
      %3198 = vmatprep.subr.bf16.mxu0 0
      %3199 = vmatpush2.bf16.msra.mxu0 0
      %3200 = vmatprep.subr.bf16.mxu0 0
      %3201 = vmatpush2.bf16.msra.mxu0 0
      %3202 = vmatprep.subr.bf16.mxu0 0
      %3203 = vmatpush2.bf16.msra.mxu0 0
      %3204 = vmatprep.subr.bf16.mxu0 0
      %3205 = vmatpush2.bf16.msra.mxu0 0
      %3206 = vmatprep.subr.bf16.mxu0 0
      %3207 = vmatpush2.bf16.msra.mxu0 0
      %3208 = vmatprep.subr.bf16.mxu0 0
      %3209 = vmatpush2.bf16.msra.mxu0 0
      %3210 = vmatprep.subr.bf16.mxu0 0
      %3211 = vmatpush2.bf16.msra.mxu0 0
      %3212 = vmatprep.mubr.bf16.mxu0 0
      %3213 = vmatmul.mubr.bf16.gmra.mxu0 %v2949
      %v3214 = vpop.f32.mrf.mxu0
      %v3215 = vadd.f32 %v3150, %v3214
      %v3216 = vpop.f32.mrf.mxu0
      %v3217 = vpop.f32.mrf.mxu0
      %v3218 = vadd.f32 %v3153, %v3217
      %v3219 = vpop.f32.mrf.mxu0
      %3220 = vmatprep.mubr.bf16.mxu0 0
      %3221 = vmatmul.mubr.bf16.gmra.mxu0 %v2952
      %v3222 = vpop.f32.mrf.mxu0
      %v3223 = vadd.f32 %v3158, %v3222
      %v3224 = vpop.f32.mrf.mxu0
      %v3225 = vpop.f32.mrf.mxu0
      %v3226 = vadd.f32 %v3161, %v3225
      %v3227 = vpop.f32.mrf.mxu0
      %3228 = vmatprep.mubr.bf16.mxu0 0
      %3229 = vmatmul.mubr.bf16.gmra.mxu0 %v2955
      %v3230 = vpop.f32.mrf.mxu0
      %v3231 = vadd.f32 %v3166, %v3230
      %v3232 = vpop.f32.mrf.mxu0
      %v3233 = vpop.f32.mrf.mxu0
      %v3234 = vadd.f32 %v3169, %v3233
      %v3235 = vpop.f32.mrf.mxu0
      %3236 = vmatprep.mubr.bf16.mxu0 0
      %3237 = vmatmul.mubr.bf16.gmra.mxu0 %v2958
      %v3238 = vpop.f32.mrf.mxu0
      %v3239 = vadd.f32 %v3174, %v3238
      %v3240 = vpop.f32.mrf.mxu0
      %v3241 = vpop.f32.mrf.mxu0
      %v3242 = vadd.f32 %v3177, %v3241
      %v3243 = vpop.f32.mrf.mxu0
      %3244 = vdwg.mxu0
      %v3245 = vld [vmem:[#allocation4] sm:$0xff]
      %v3246 = vld [vmem:[#allocation4 + $0x8] sm:$0xff]
      %v3247 = vld [vmem:[#allocation4 + $0x10] sm:$0xff]
      %v3248 = vld [vmem:[#allocation4 + $0x18] sm:$0xff]
      %v3249 = vld [vmem:[#allocation4 + $0x20] sm:$0xff]
      %v3250 = vld [vmem:[#allocation4 + $0x28] sm:$0xff]
      %v3251 = vld [vmem:[#allocation4 + $0x30] sm:$0xff]
      %v3252 = vld [vmem:[#allocation4 + $0x38] sm:$0xff]
      %v3253 = vadd.f32 %v3245, %v3215
      %v3254 = vadd.f32 %v3246, %v3218
      %v3255 = vadd.f32 %v3247, %v3223
      %v3256 = vadd.f32 %v3248, %v3226
      %v3257 = vadd.f32 %v3249, %v3231
      %v3258 = vadd.f32 %v3250, %v3234
      %v3259 = vadd.f32 %v3251, %v3239
      %v3260 = vadd.f32 %v3252, %v3242
      %3261 = vst [vmem:[#allocation4] sm:$0xff] %v3253
      %3262 = vst [vmem:[#allocation4 + $0x8] sm:$0xff] %v3254
      %3263 = vst [vmem:[#allocation4 + $0x10] sm:$0xff] %v3255
      %3264 = vst [vmem:[#allocation4 + $0x18] sm:$0xff] %v3256
      %3265 = vst [vmem:[#allocation4 + $0x20] sm:$0xff] %v3257
      %3266 = vst [vmem:[#allocation4 + $0x28] sm:$0xff] %v3258
      %3267 = vst [vmem:[#allocation4 + $0x30] sm:$0xff] %v3259
      %3268 = vst [vmem:[#allocation4 + $0x38] sm:$0xff] %v3260
      %v3269 = vld [vmem:[#allocation4] sm:$0xff]
      %v3270 = vld [vmem:[#allocation4 + $0x8] sm:$0xff]
      %v3271 = vld [vmem:[#allocation4 + $0x10] sm:$0xff]
      %v3272 = vld [vmem:[#allocation4 + $0x18] sm:$0xff]
      %v3273 = vld [vmem:[#allocation4 + $0x20] sm:$0xff]
      %v3274 = vld [vmem:[#allocation4 + $0x28] sm:$0xff]
      %v3275 = vld [vmem:[#allocation4 + $0x30] sm:$0xff]
      %v3276 = vld [vmem:[#allocation4 + $0x38] sm:$0xff]
      %v3277 = vld [vmem:[%s4] sm:$0x1]
      %v3279 = vlaneseq
      %v3280 = vshrl.u32 %v3279, 7
      %v3281 = vsub.s32 0, %v3280
      %v3282 = vrot.slane %v3277, %v3281
      %v3284 = vadd.f32 %v3269, %v3282
      %v3285 = vadd.f32 %v3270, %v3282
      %v3286 = vadd.f32 %v3271, %v3282
      %v3287 = vadd.f32 %v3272, %v3282
      %v3288 = vadd.f32 %v3273, %v3282
      %v3289 = vadd.f32 %v3274, %v3282
      %v3290 = vadd.f32 %v3275, %v3282
      %v3291 = vadd.f32 %v3276, %v3282
      %v3292 = vmax.f32 %v3284, 0.0
      %v3293 = vmax.f32 %v3285, 0.0
      %v3294 = vmax.f32 %v3286, 0.0
      %v3295 = vmax.f32 %v3287, 0.0
      %v3296 = vmax.f32 %v3288, 0.0
      %v3297 = vmax.f32 %v3289, 0.0
      %v3298 = vmax.f32 %v3290, 0.0
      %v3299 = vmax.f32 %v3291, 0.0
      %v3300 = vpack.c.bf16 %v3293, %v3292
      %v3301 = vpack.c.bf16 %v3295, %v3294
      %v3302 = vpack.c.bf16 %v3297, %v3296
      %v3303 = vpack.c.bf16 %v3299, %v3298
      %v3308 = vunpack.c.l.b16 %v3300
      %v3309 = vunpack.c.h.b16 %v3300
      %v3310 = vunpack.c.l.b16 %v3301
      %v3311 = vunpack.c.h.b16 %v3301
      %v3312 = vunpack.c.l.b16 %v3302
      %v3313 = vunpack.c.h.b16 %v3302
      %v3314 = vunpack.c.l.b16 %v3303
      %v3315 = vunpack.c.h.b16 %v3303
      %v3316 = vpack.c.b16 %v3308, %v3308
      %v3317 = vpack.c.b16 %v3309, %v3309
      %v3318 = vpack.c.b16 %v3310, %v3310
      %v3319 = vpack.c.b16 %v3311, %v3311
      %v3320 = vpack.c.b16 %v3312, %v3312
      %v3321 = vpack.c.b16 %v3313, %v3313
      %v3322 = vpack.c.b16 %v3314, %v3314
      %v3323 = vpack.c.b16 %v3315, %v3315
      %3332 = vst [vmem:[%s259] sm:$0xf] %v3316
      %3333 = vst [vmem:[%s259 + $0x4] sm:$0xf] %v3317
      %3334 = vst [vmem:[%s259 + $0x8] sm:$0xf] %v3318
      %3335 = vst [vmem:[%s259 + $0xc] sm:$0xf] %v3319
      %3336 = vst [vmem:[%s259 + $0x10] sm:$0xf] %v3320
      %3337 = vst [vmem:[%s259 + $0x14] sm:$0xf] %v3321
      %3338 = vst [vmem:[%s259 + $0x18] sm:$0xf] %v3322
      %3339 = vst [vmem:[%s259 + $0x1c] sm:$0xf] %v3323
      %v3340 = vsel %vm363, %v3300, 0
      %v3341 = vrot.slane %v3300, 1
      %v3343 = vshll.u32 %v3341, 16
      %vm3345 = vsmask.f32 770
      %v3346 = vsel %vm3345, %v3343, %v3340
      %vm3347 = vsmask.f32 1284
      %v3348 = vsel %vm3347, %v3341, %v3346
      %v3349 = vrot.slane %v3300, 2
      %v3351 = vshll.u32 %v3349, 16
      %vm3353 = vsmask.f32 1798
      %v3354 = vsel %vm3353, %v3351, %v3348
      %v3356 = vshrl.u32 %v3300, 16
      %v3358 = vsel %vm363, %v3356, 0
      %v3359 = vsel %vm3345, %v3341, %v3358
      %v3360 = vshrl.u32 %v3341, 16
      %v3362 = vsel %vm3347, %v3360, %v3359
      %v3363 = vsel %vm3353, %v3349, %v3362
      %v3364 = vrot.slane %v3300, 4
      %v3365 = vsel %vm363, %v3364, 0
      %v3366 = vrot.slane %v3300, 5
      %v3368 = vshll.u32 %v3366, 16
      %v3370 = vsel %vm3345, %v3368, %v3365
      %v3371 = vsel %vm3347, %v3366, %v3370
      %v3372 = vrot.slane %v3300, 6
      %v3374 = vshll.u32 %v3372, 16
      %v3376 = vsel %vm3353, %v3374, %v3371
      %v3378 = vshrl.u32 %v3364, 16
      %v3380 = vsel %vm363, %v3378, 0
      %v3381 = vsel %vm3345, %v3366, %v3380
      %v3382 = vshrl.u32 %v3366, 16
      %v3384 = vsel %vm3347, %v3382, %v3381
      %v3385 = vsel %vm3353, %v3372, %v3384
      %v3386 = vsel %vm363, %v3301, 0
      %v3387 = vrot.slane %v3301, 1
      %v3389 = vshll.u32 %v3387, 16
      %v3391 = vsel %vm3345, %v3389, %v3386
      %v3392 = vsel %vm3347, %v3387, %v3391
      %v3393 = vrot.slane %v3301, 2
      %v3395 = vshll.u32 %v3393, 16
      %v3397 = vsel %vm3353, %v3395, %v3392
      %v3399 = vshrl.u32 %v3301, 16
      %v3401 = vsel %vm363, %v3399, 0
      %v3402 = vsel %vm3345, %v3387, %v3401
      %v3403 = vshrl.u32 %v3387, 16
      %v3405 = vsel %vm3347, %v3403, %v3402
      %v3406 = vsel %vm3353, %v3393, %v3405
      %v3407 = vrot.slane %v3301, 4
      %v3408 = vsel %vm363, %v3407, 0
      %v3409 = vrot.slane %v3301, 5
      %v3411 = vshll.u32 %v3409, 16
      %v3413 = vsel %vm3345, %v3411, %v3408
      %v3414 = vsel %vm3347, %v3409, %v3413
      %v3415 = vrot.slane %v3301, 6
      %v3417 = vshll.u32 %v3415, 16
      %v3419 = vsel %vm3353, %v3417, %v3414
      %v3421 = vshrl.u32 %v3407, 16
      %v3423 = vsel %vm363, %v3421, 0
      %v3424 = vsel %vm3345, %v3409, %v3423
      %v3425 = vshrl.u32 %v3409, 16
      %v3427 = vsel %vm3347, %v3425, %v3424
      %v3428 = vsel %vm3353, %v3415, %v3427
      %v3429 = vsel %vm363, %v3302, 0
      %v3430 = vrot.slane %v3302, 1
      %v3432 = vshll.u32 %v3430, 16
      %v3434 = vsel %vm3345, %v3432, %v3429
      %v3435 = vsel %vm3347, %v3430, %v3434
      %v3436 = vrot.slane %v3302, 2
      %v3438 = vshll.u32 %v3436, 16
      %v3440 = vsel %vm3353, %v3438, %v3435
      %v3442 = vshrl.u32 %v3302, 16
      %v3444 = vsel %vm363, %v3442, 0
      %v3445 = vsel %vm3345, %v3430, %v3444
      %v3446 = vshrl.u32 %v3430, 16
      %v3448 = vsel %vm3347, %v3446, %v3445
      %v3449 = vsel %vm3353, %v3436, %v3448
      %v3450 = vrot.slane %v3302, 4
      %v3451 = vsel %vm363, %v3450, 0
      %v3452 = vrot.slane %v3302, 5
      %v3454 = vshll.u32 %v3452, 16
      %v3456 = vsel %vm3345, %v3454, %v3451
      %v3457 = vsel %vm3347, %v3452, %v3456
      %v3458 = vrot.slane %v3302, 6
      %v3460 = vshll.u32 %v3458, 16
      %v3462 = vsel %vm3353, %v3460, %v3457
      %v3464 = vshrl.u32 %v3450, 16
      %v3466 = vsel %vm363, %v3464, 0
      %v3467 = vsel %vm3345, %v3452, %v3466
      %v3468 = vshrl.u32 %v3452, 16
      %v3470 = vsel %vm3347, %v3468, %v3467
      %v3471 = vsel %vm3353, %v3458, %v3470
      %v3472 = vsel %vm363, %v3303, 0
      %v3473 = vrot.slane %v3303, 1
      %v3475 = vshll.u32 %v3473, 16
      %v3477 = vsel %vm3345, %v3475, %v3472
      %v3478 = vsel %vm3347, %v3473, %v3477
      %v3479 = vrot.slane %v3303, 2
      %v3481 = vshll.u32 %v3479, 16
      %v3483 = vsel %vm3353, %v3481, %v3478
      %v3485 = vshrl.u32 %v3303, 16
      %v3487 = vsel %vm363, %v3485, 0
      %v3488 = vsel %vm3345, %v3473, %v3487
      %v3489 = vshrl.u32 %v3473, 16
      %v3491 = vsel %vm3347, %v3489, %v3488
      %v3492 = vsel %vm3353, %v3479, %v3491
      %v3493 = vrot.slane %v3303, 4
      %v3494 = vsel %vm363, %v3493, 0
      %v3495 = vrot.slane %v3303, 5
      %v3497 = vshll.u32 %v3495, 16
      %v3499 = vsel %vm3345, %v3497, %v3494
      %v3500 = vsel %vm3347, %v3495, %v3499
      %v3501 = vrot.slane %v3303, 6
      %v3503 = vshll.u32 %v3501, 16
      %v3505 = vsel %vm3353, %v3503, %v3500
      %v3507 = vshrl.u32 %v3493, 16
      %v3509 = vsel %vm363, %v3507, 0
      %v3510 = vsel %vm3345, %v3495, %v3509
      %v3511 = vshrl.u32 %v3495, 16
      %v3513 = vsel %vm3347, %v3511, %v3510
      %v3514 = vsel %vm3353, %v3501, %v3513
      %v3515 = vmax.bf16 %v3354, %v3363
      %v3516 = vmax.bf16 %v3376, %v3385
      %v3517 = vmax.bf16 %v3397, %v3406
      %v3518 = vmax.bf16 %v3419, %v3428
      %v3519 = vmax.bf16 %v3440, %v3449
      %v3520 = vmax.bf16 %v3462, %v3471
      %v3521 = vmax.bf16 %v3483, %v3492
      %v3522 = vmax.bf16 %v3505, %v3514
      %v3523 = vmax.bf16 %v3515, %v3516
      %v3524 = vmax.bf16 %v3517, %v3518
      %v3525 = vmax.bf16 %v3519, %v3520
      %v3526 = vmax.bf16 %v3521, %v3522
      %3527 = vst [vmem:[%s264] sm:$0x3] %v3523
      %3528 = vst [vmem:[%s264 + $0x2] sm:$0x3] %v3524
      %3529 = vst [vmem:[%s264 + $0x4] sm:$0x3] %v3525
      %3530 = vst [vmem:[%s264 + $0x6] sm:$0x3] %v3526
      %p3531 = scmp.lt.s32.totalorder %s18, 1
      %s3532 = scalar_select %p3531, %s18, 1
      %s3533 = smul.addr %s3532, 8
      %s3534 = smul.addr %s3533, 4
      %s3535 = scalar_lea.vmem %s5, %s3534
      %p3536 = scmp.lt.s32.totalorder %s18, 1
      %s3537 = scalar_select %p3536, %s18, 1
      %s3538 = smul.addr %s3537, 4
      %s3539 = smul.addr %s3538, 2
      %s3540 = scalar_lea.vmem %s6, %s3539
      // Predicated region
      $region41: #{encoder_apply.3} parent=39 // pred_check
        %p3541 = pneg %p146
      $region42: #{encoder_apply.3} parent=39 // pred_check_branch
        %3543 = sbr.rel (%p3541) target = $region44
      $region43: #{encoder_apply.3} parent=39 // pred_region
        _
      $region44: #{encoder_apply.3} parent=39 // pred_fallthru
        _
      // Predicated region
      $region45: #{encoder_apply.3} parent=39 // pred_check
        %p3544 = pneg %p172
      $region46: #{encoder_apply.3} parent=39 // pred_check_branch
        %3546 = sbr.rel (%p3544) target = $region48
      $region47: #{encoder_apply.3} parent=39 // pred_region
        _
      $region48: #{encoder_apply.3} parent=39 // pred_fallthru
        _
    $region40: #{encoder_apply.3} parent=5 // pred_fallthru
      _
    %p3547 = scmp.le.s32.totalorder 2, %s13
    // Predicated region
    $region49: #{encoder_apply.3} parent=5 // pred_check
      %p3548 = pneg %p3547
    $region50: #{encoder_apply.3} parent=5 // pred_check_branch
      %3550 = sbr.rel (%p3548) target = $region52
    $region51: #{encoder_apply.3} parent=5 // pred_region
      %s3551 = ssub.s32 %s13, 2
      // Predicated region
      $region53: #{encoder_apply.3} parent=51 // pred_check
        %p3552 = pneg %p152
      $region54: #{encoder_apply.3} parent=51 // pred_check_branch
        %3554 = sbr.rel (%p3552) target = $region56
      $region55: #{encoder_apply.3} parent=51 // pred_region
        %p3555 = scmp.lt.s32.totalorder %s19, 1
        %s3556 = scalar_select %p3555, %s19, 1
        %s3557 = smul.addr %s3556, 8
        %s3558 = smul.addr %s3557, 4
        %s3559 = scalar_lea.vmem %s5, %s3558
      $region56: #{encoder_apply.3} parent=51 // pred_fallthru
        _
      // Predicated region
      $region57: #{encoder_apply.3} parent=51 // pred_check
        %p3560 = pneg %p178
      $region58: #{encoder_apply.3} parent=51 // pred_check_branch
        %3562 = sbr.rel (%p3560) target = $region60
      $region59: #{encoder_apply.3} parent=51 // pred_region
        %p3563 = scmp.lt.s32.totalorder %s19, 1
        %s3564 = scalar_select %p3563, %s19, 1
        %s3565 = smul.addr %s3564, 4
        %s3566 = smul.addr %s3565, 2
        %s3567 = scalar_lea.vmem %s6, %s3566
      $region60: #{encoder_apply.3} parent=51 // pred_fallthru
        _
    $region52: #{encoder_apply.3} parent=5 // pred_fallthru
      _
  $region6: #{encoder_apply.3} parent=0 // loop_footer
    %s17 = sadd.s32 1, %s13
  $region7: #{encoder_apply.3} parent=0 // loop_footer_branch
    %12 = sbr.rel target = $region3
  $region8: #{encoder_apply.3} parent=0 // loop_exit
    _

// kernel: encoder_apply.2
$region0: #{encoder_apply.2}
  #allocation0 [shape = 'u32[]', space=smem, size = 0x4, offset = 0x4, fixed_abs, tag = 'smem constant byte address 0x4 - core index']
  #allocation1 [shape = 'u32[144,128]{1,0:T(1,128)}', space=vmem, size = 0x12000, scoped, tag = 'internal scratch']
  #allocation2 [shape = 'bf16[18,16,24]{2,1,0:T(8,128)(2,1)}', space=vmem, size = 0x12000, scoped, tag = 'scratch operand']
  #allocation3 [shape = 'bf16[18,16,384]{2,1,0:T(8,128)(2,1)}', space=vmem, size = 0x36000, scoped, tag = 'scratch operand']
  #allocation4 [shape = 'f32[256,128]{1,0:T(8,128)}', space=vmem, size = 0x20000, scoped, tag = 'scratch operand']
  %s0 = inlined_call_operand.vmem [shape: bf16[2,16,16,8], index: 0, kind: input, shape index: {}]
  %s1 = inlined_call_operand.vmem [shape: bf16[3,24,128], index: 1, kind: input, shape index: {}]
  %s2 = inlined_call_operand.vmem [shape: f32[1,128], index: 2, kind: input, shape index: {}]
  %s3 = inlined_call_operand.vmem [shape: bf16[3,384,128], index: 3, kind: input, shape index: {}]
  %s4 = inlined_call_operand.vmem [shape: f32[1,128], index: 4, kind: input, shape index: {}]
  %s5 = inlined_call_operand.vmem [shape: bf16[2,16,16,128], index: 5, kind: output, shape index: {0}]
  %s6 = inlined_call_operand.vmem [shape: bf16[2,8,8,128], index: 6, kind: output, shape index: {1}]
  %7 = xla_tuple %s5, %s6
  %s8 = sld [smem:[#allocation0]]
  $region61: #{encoder_apply.2} parent=0
    _
  %s10 = ssub.s32 1, %s8
  %s11 = scalar_select 0, %s10, %s8
  loop: start=0, step=1, limit=4
  $region2: #{encoder_apply.2} parent=0 // loop_pre_header
    _
  $region3: #{encoder_apply.2} parent=0 // loop_header
    %s13 = sphi 0, %s17
    %p14 = scmp.ge.s32.totalorder %s13, 4
    %s23 = sphi 0, %s25
    %s26 = sphi 0, %s23
    %s27 = sphi 0, %s26
    %s43 = sphi 0, %s27
    %s47 = sphi 0, %s47
    %s49 = sphi 0, %s47
    %s50 = sphi 0, %s49
    %s64 = sphi 0, %s50
    %s68 = sphi 0, %s68
    %s70 = sphi 0, %s68
    %s71 = sphi 0, %s70
    %s85 = sphi 0, %s71
    %s89 = sphi 0, %s89
    %s91 = sphi 0, %s89
    %s92 = sphi 0, %s91
    %s106 = sphi 0, %s92
    %s110 = sphi 0, %s110
    %s112 = sphi 0, %s110
    %s113 = sphi 0, %s112
    %s127 = sphi 0, %s113
    %s133 = sphi 0, %s135
    %s136 = sphi 0, %s133
    %s137 = sphi 0, %s136
    %s153 = sphi 0, %s137
    %s159 = sphi 0, %s161
    %s162 = sphi 0, %s159
    %s163 = sphi 0, %s162
    %s179 = sphi 0, %s163
  $region4: #{encoder_apply.2} parent=0 // loop_header_branch
    %16 = sbr.rel (%p14) target = $region8
  $region5: #{encoder_apply.2} parent=0 // loop_body
    %s18 = ssub.s32 %s13, 1
    %s19 = ssub.s32 %s13, 2
    %s20 = sadd.s32 %s13, 1
    %s21 = ssub.s32 %s13, %s20
    %p22 = scmp.eq.s32.totalorder %s21, 0
    %s24 = sadd.s32 %s23, 1
    %s25 = scalar_select %p22, %s23, %s24
    %p28 = pneg %p22
    %p29 = scmp.eq.s32.totalorder %s13, 1
    %p30 = por %p28, %p29
    %p31 = scmp.ne.s32.totalorder %s23, %s26
    %p32 = scmp.eq.s32.totalorder %s13, 0
    %p33 = por %p31, %p32
    %p34 = scmp.ne.s32.totalorder %s23, %s26
    %p35 = scmp.eq.s32.totalorder %s18, 1
    %p36 = por %p34, %p35
    %p37 = scmp.ne.s32.totalorder %s26, %s27
    %p38 = scmp.eq.s32.totalorder %s18, 0
    %p39 = por %p37, %p38
    %p40 = scmp.ne.s32.totalorder %s26, %s27
    %p41 = scmp.eq.s32.totalorder %s19, 1
    %p42 = por %p40, %p41
    %p44 = scmp.ne.s32.totalorder %s27, %s43
    %p45 = scmp.eq.s32.totalorder %s19, 0
    %p46 = por %p44, %p45
    %s48 = sadd.s32 %s47, 1
    %p51 = scmp.eq.s32.totalorder %s13, 1
    %p52 = scmp.ne.s32.totalorder %s47, %s49
    %p53 = scmp.eq.s32.totalorder %s13, 0
    %p54 = por %p52, %p53
    %p55 = scmp.ne.s32.totalorder %s47, %s49
    %p56 = scmp.eq.s32.totalorder %s18, 1
    %p57 = por %p55, %p56
    %p58 = scmp.ne.s32.totalorder %s49, %s50
    %p59 = scmp.eq.s32.totalorder %s18, 0
    %p60 = por %p58, %p59
    %p61 = scmp.ne.s32.totalorder %s49, %s50
    %p62 = scmp.eq.s32.totalorder %s19, 1
    %p63 = por %p61, %p62
    %p65 = scmp.ne.s32.totalorder %s50, %s64
    %p66 = scmp.eq.s32.totalorder %s19, 0
    %p67 = por %p65, %p66
    %s69 = sadd.s32 %s68, 1
    %p72 = scmp.eq.s32.totalorder %s13, 1
    %p73 = scmp.ne.s32.totalorder %s68, %s70
    %p74 = scmp.eq.s32.totalorder %s13, 0
    %p75 = por %p73, %p74
    %p76 = scmp.ne.s32.totalorder %s68, %s70
    %p77 = scmp.eq.s32.totalorder %s18, 1
    %p78 = por %p76, %p77
    %p79 = scmp.ne.s32.totalorder %s70, %s71
    %p80 = scmp.eq.s32.totalorder %s18, 0
    %p81 = por %p79, %p80
    %p82 = scmp.ne.s32.totalorder %s70, %s71
    %p83 = scmp.eq.s32.totalorder %s19, 1
    %p84 = por %p82, %p83
    %p86 = scmp.ne.s32.totalorder %s71, %s85
    %p87 = scmp.eq.s32.totalorder %s19, 0
    %p88 = por %p86, %p87
    %s90 = sadd.s32 %s89, 1
    %p93 = scmp.eq.s32.totalorder %s13, 1
    %p94 = scmp.ne.s32.totalorder %s89, %s91
    %p95 = scmp.eq.s32.totalorder %s13, 0
    %p96 = por %p94, %p95
    %p97 = scmp.ne.s32.totalorder %s89, %s91
    %p98 = scmp.eq.s32.totalorder %s18, 1
    %p99 = por %p97, %p98
    %p100 = scmp.ne.s32.totalorder %s91, %s92
    %p101 = scmp.eq.s32.totalorder %s18, 0
    %p102 = por %p100, %p101
    %p103 = scmp.ne.s32.totalorder %s91, %s92
    %p104 = scmp.eq.s32.totalorder %s19, 1
    %p105 = por %p103, %p104
    %p107 = scmp.ne.s32.totalorder %s92, %s106
    %p108 = scmp.eq.s32.totalorder %s19, 0
    %p109 = por %p107, %p108
    %s111 = sadd.s32 %s110, 1
    %p114 = scmp.eq.s32.totalorder %s13, 1
    %p115 = scmp.ne.s32.totalorder %s110, %s112
    %p116 = scmp.eq.s32.totalorder %s13, 0
    %p117 = por %p115, %p116
    %p118 = scmp.ne.s32.totalorder %s110, %s112
    %p119 = scmp.eq.s32.totalorder %s18, 1
    %p120 = por %p118, %p119
    %p121 = scmp.ne.s32.totalorder %s112, %s113
    %p122 = scmp.eq.s32.totalorder %s18, 0
    %p123 = por %p121, %p122
    %p124 = scmp.ne.s32.totalorder %s112, %s113
    %p125 = scmp.eq.s32.totalorder %s19, 1
    %p126 = por %p124, %p125
    %p128 = scmp.ne.s32.totalorder %s113, %s127
    %p129 = scmp.eq.s32.totalorder %s19, 0
    %p130 = por %p128, %p129
    %s131 = ssub.s32 %s13, %s20
    %p132 = scmp.eq.s32.totalorder %s131, 0
    %s134 = sadd.s32 %s133, 1
    %s135 = scalar_select %p132, %s133, %s134
    %p138 = pneg %p132
    %p139 = scmp.eq.s32.totalorder %s13, 1
    %p140 = por %p138, %p139
    %p141 = scmp.ne.s32.totalorder %s133, %s136
    %p142 = scmp.eq.s32.totalorder %s13, 0
    %p143 = por %p141, %p142
    %p144 = scmp.ne.s32.totalorder %s133, %s136
    %p145 = scmp.eq.s32.totalorder %s18, 1
    %p146 = por %p144, %p145
    %p147 = scmp.ne.s32.totalorder %s136, %s137
    %p148 = scmp.eq.s32.totalorder %s18, 0
    %p149 = por %p147, %p148
    %p150 = scmp.ne.s32.totalorder %s136, %s137
    %p151 = scmp.eq.s32.totalorder %s19, 1
    %p152 = por %p150, %p151
    %p154 = scmp.ne.s32.totalorder %s137, %s153
    %p155 = scmp.eq.s32.totalorder %s19, 0
    %p156 = por %p154, %p155
    %s157 = ssub.s32 %s13, %s20
    %p158 = scmp.eq.s32.totalorder %s157, 0
    %s160 = sadd.s32 %s159, 1
    %s161 = scalar_select %p158, %s159, %s160
    %p164 = pneg %p158
    %p165 = scmp.eq.s32.totalorder %s13, 1
    %p166 = por %p164, %p165
    %p167 = scmp.ne.s32.totalorder %s159, %s162
    %p168 = scmp.eq.s32.totalorder %s13, 0
    %p169 = por %p167, %p168
    %p170 = scmp.ne.s32.totalorder %s159, %s162
    %p171 = scmp.eq.s32.totalorder %s18, 1
    %p172 = por %p170, %p171
    %p173 = scmp.ne.s32.totalorder %s162, %s163
    %p174 = scmp.eq.s32.totalorder %s18, 0
    %p175 = por %p173, %p174
    %p176 = scmp.ne.s32.totalorder %s162, %s163
    %p177 = scmp.eq.s32.totalorder %s19, 1
    %p178 = por %p176, %p177
    %p180 = scmp.ne.s32.totalorder %s163, %s179
    %p181 = scmp.eq.s32.totalorder %s19, 0
    %p182 = por %p180, %p181
    %p183 = scmp.le.s32.totalorder 1, %s13
    %p184 = scmp.lt.s32.totalorder %s13, 3
    %p185 = pnand %p183, %p184
    %p186 = pneg %p185
    // Predicated region
    $region9: #{encoder_apply.2} parent=5 // pred_check
      _
    $region10: #{encoder_apply.2} parent=5 // pred_check_branch
      %188 = sbr.rel (%p185) target = $region12
    $region11: #{encoder_apply.2} parent=5 // pred_region
      %s189 = ssub.s32 %s13, 1
      // Predicated region
      $region13: #{encoder_apply.2} parent=11 // pred_check
        %p190 = pneg %p60
      $region14: #{encoder_apply.2} parent=11 // pred_check_branch
        %192 = sbr.rel (%p190) target = $region16
      $region15: #{encoder_apply.2} parent=11 // pred_region
        _
      $region16: #{encoder_apply.2} parent=11 // pred_fallthru
        _
      // Predicated region
      $region17: #{encoder_apply.2} parent=11 // pred_check
        %p193 = pneg %p81
      $region18: #{encoder_apply.2} parent=11 // pred_check_branch
        %195 = sbr.rel (%p193) target = $region20
      $region19: #{encoder_apply.2} parent=11 // pred_region
        _
      $region20: #{encoder_apply.2} parent=11 // pred_fallthru
        _
      // Predicated region
      $region21: #{encoder_apply.2} parent=11 // pred_check
        %p196 = pneg %p102
      $region22: #{encoder_apply.2} parent=11 // pred_check_branch
        %198 = sbr.rel (%p196) target = $region24
      $region23: #{encoder_apply.2} parent=11 // pred_region
        _
      $region24: #{encoder_apply.2} parent=11 // pred_fallthru
        _
      // Predicated region
      $region25: #{encoder_apply.2} parent=11 // pred_check
        %p199 = pneg %p123
      $region26: #{encoder_apply.2} parent=11 // pred_check_branch
        %201 = sbr.rel (%p199) target = $region28
      $region27: #{encoder_apply.2} parent=11 // pred_region
        _
      $region28: #{encoder_apply.2} parent=11 // pred_fallthru
        _
    $region12: #{encoder_apply.2} parent=5 // pred_fallthru
      _
    %p202 = scmp.lt.s32.totalorder %s13, 2
    // Predicated region
    $region29: #{encoder_apply.2} parent=5 // pred_check
      %p203 = pneg %p202
    $region30: #{encoder_apply.2} parent=5 // pred_check_branch
      %205 = sbr.rel (%p203) target = $region32
    $region31: #{encoder_apply.2} parent=5 // pred_region
      // Predicated region
      $region33: #{encoder_apply.2} parent=31 // pred_check
        %p206 = pneg %p33
      $region34: #{encoder_apply.2} parent=31 // pred_check_branch
        %208 = sbr.rel (%p206) target = $region36
      $region35: #{encoder_apply.2} parent=31 // pred_region
        %p209 = scmp.lt.s32.totalorder %s13, 1
        %s210 = scalar_select %p209, %s13, 1
        %s211 = smul.addr %s210, 32
        %s212 = smul.addr %s211, 4
        %s213 = scalar_lea.vmem %s0, %s212
      $region36: #{encoder_apply.2} parent=31 // pred_fallthru
        _
    $region32: #{encoder_apply.2} parent=5 // pred_fallthru
      _
    %p214 = scmp.le.s32.totalorder 1, %s13
    %p215 = scmp.lt.s32.totalorder %s13, 3
    %p216 = pnand %p214, %p215
    %p217 = pneg %p216
    // Predicated region
    $region37: #{encoder_apply.2} parent=5 // pred_check
      _
    $region38: #{encoder_apply.2} parent=5 // pred_check_branch
      %219 = sbr.rel (%p216) target = $region40
    $region39: #{encoder_apply.2} parent=5 // pred_region
      %s220 = ssub.s32 %s13, 1
      %p221 = scmp.lt.s32.totalorder %s18, 1
      %s222 = scalar_select %p221, %s18, 1
      %s223 = smul.addr %s222, 32
      %s224 = smul.addr %s223, 4
      %s225 = scalar_lea.vmem %s0, %s224
      %p226 = pneg %p39
      %p227 = pneg %p36
      %p228 = pneg %p60
      %p229 = pneg %p57
      %p230 = pneg %p81
      %p231 = pneg %p78
      %p232 = pneg %p102
      %p233 = pneg %p99
      %p234 = pneg %p123
      %p235 = pneg %p120
      %p236 = pneg %p149
      %p237 = pneg %p146
      %p238 = scmp.lt.s32.totalorder %s18, 1
      %s239 = scalar_select %p238, %s18, 1
      %s240 = smul.addr %s239, 32
      %s241 = smul.addr %s240, 4
      %s242 = scalar_lea.vmem %s5, %s241
      %p243 = pneg %p175
      %p244 = pneg %p172
      %p245 = scmp.lt.s32.totalorder %s18, 1
      %s246 = scalar_select %p245, %s18, 1
      %s247 = smul.addr %s246, 8
      %s248 = smul.addr %s247, 4
      %s249 = scalar_lea.vmem %s6, %s248
      %p250 = scmp.lt.s32.totalorder %s18, 1
      %s251 = scalar_select %p250, %s18, 1
      %s252 = smul.addr %s251, 32
      %s253 = smul.addr %s252, 4
      %s254 = scalar_lea.vmem %s0, %s253
      %p255 = scmp.lt.s32.totalorder %s18, 1
      %s256 = scalar_select %p255, %s18, 1
      %s257 = smul.addr %s256, 32
      %s258 = smul.addr %s257, 4
      %s259 = scalar_lea.vmem %s5, %s258
      %p260 = scmp.lt.s32.totalorder %s18, 1
      %s261 = scalar_select %p260, %s18, 1
      %s262 = smul.addr %s261, 8
      %s263 = smul.addr %s262, 4
      %s264 = scalar_lea.vmem %s6, %s263
      %v266 = vld [vmem:[%s254] sm:$0xf]
      %v267 = vld [vmem:[%s254 + $0x4] sm:$0xf]
      %v268 = vld [vmem:[%s254 + $0x8] sm:$0xf]
      %v269 = vld [vmem:[%s254 + $0xc] sm:$0xf]
      %v270 = vld [vmem:[%s254 + $0x10] sm:$0xf]
      %v271 = vld [vmem:[%s254 + $0x14] sm:$0xf]
      %v272 = vld [vmem:[%s254 + $0x18] sm:$0xf]
      %v273 = vld [vmem:[%s254 + $0x1c] sm:$0xf]
      %v274 = vld [vmem:[%s254 + $0x20] sm:$0xf]
      %v275 = vld [vmem:[%s254 + $0x24] sm:$0xf]
      %v276 = vld [vmem:[%s254 + $0x28] sm:$0xf]
      %v277 = vld [vmem:[%s254 + $0x2c] sm:$0xf]
      %v278 = vld [vmem:[%s254 + $0x30] sm:$0xf]
      %v279 = vld [vmem:[%s254 + $0x34] sm:$0xf]
      %v280 = vld [vmem:[%s254 + $0x38] sm:$0xf]
      %v281 = vld [vmem:[%s254 + $0x3c] sm:$0xf]
      %v282 = vld [vmem:[%s254 + $0x40] sm:$0xf]
      %v283 = vld [vmem:[%s254 + $0x44] sm:$0xf]
      %v284 = vld [vmem:[%s254 + $0x48] sm:$0xf]
      %v285 = vld [vmem:[%s254 + $0x4c] sm:$0xf]
      %v286 = vld [vmem:[%s254 + $0x50] sm:$0xf]
      %v287 = vld [vmem:[%s254 + $0x54] sm:$0xf]
      %v288 = vld [vmem:[%s254 + $0x58] sm:$0xf]
      %v289 = vld [vmem:[%s254 + $0x5c] sm:$0xf]
      %v290 = vld [vmem:[%s254 + $0x60] sm:$0xf]
      %v291 = vld [vmem:[%s254 + $0x64] sm:$0xf]
      %v292 = vld [vmem:[%s254 + $0x68] sm:$0xf]
      %v293 = vld [vmem:[%s254 + $0x6c] sm:$0xf]
      %v294 = vld [vmem:[%s254 + $0x70] sm:$0xf]
      %v295 = vld [vmem:[%s254 + $0x74] sm:$0xf]
      %v296 = vld [vmem:[%s254 + $0x78] sm:$0xf]
      %v297 = vld [vmem:[%s254 + $0x7c] sm:$0xf]
      %v330 = vunpack.c.l.b16 %v266
      %v331 = vunpack.c.l.b16 %v267
      %v332 = vunpack.c.l.b16 %v268
      %v333 = vunpack.c.l.b16 %v269
      %v334 = vunpack.c.l.b16 %v270
      %v335 = vunpack.c.l.b16 %v271
      %v336 = vunpack.c.l.b16 %v272
      %v337 = vunpack.c.l.b16 %v273
      %v338 = vunpack.c.l.b16 %v274
      %v339 = vunpack.c.l.b16 %v275
      %v340 = vunpack.c.l.b16 %v276
      %v341 = vunpack.c.l.b16 %v277
      %v342 = vunpack.c.l.b16 %v278
      %v343 = vunpack.c.l.b16 %v279
      %v344 = vunpack.c.l.b16 %v280
      %v345 = vunpack.c.l.b16 %v281
      %v346 = vunpack.c.l.b16 %v282
      %v347 = vunpack.c.l.b16 %v283
      %v348 = vunpack.c.l.b16 %v284
      %v349 = vunpack.c.l.b16 %v285
      %v350 = vunpack.c.l.b16 %v286
      %v351 = vunpack.c.l.b16 %v287
      %v352 = vunpack.c.l.b16 %v288
      %v353 = vunpack.c.l.b16 %v289
      %v354 = vunpack.c.l.b16 %v290
      %v355 = vunpack.c.l.b16 %v291
      %v356 = vunpack.c.l.b16 %v292
      %v357 = vunpack.c.l.b16 %v293
      %v358 = vunpack.c.l.b16 %v294
      %v359 = vunpack.c.l.b16 %v295
      %v360 = vunpack.c.l.b16 %v296
      %v361 = vunpack.c.l.b16 %v297
      %v362 = vpack.c.b16 %v331, %v330
      %v363 = vpack.c.b16 %v333, %v332
      %v364 = vpack.c.b16 %v335, %v334
      %v365 = vpack.c.b16 %v337, %v336
      %v366 = vpack.c.b16 %v339, %v338
      %v367 = vpack.c.b16 %v341, %v340
      %v368 = vpack.c.b16 %v343, %v342
      %v369 = vpack.c.b16 %v345, %v344
      %v370 = vpack.c.b16 %v347, %v346
      %v371 = vpack.c.b16 %v349, %v348
      %v372 = vpack.c.b16 %v351, %v350
      %v373 = vpack.c.b16 %v353, %v352
      %v374 = vpack.c.b16 %v355, %v354
      %v375 = vpack.c.b16 %v357, %v356
      %v376 = vpack.c.b16 %v359, %v358
      %v377 = vpack.c.b16 %v361, %v360
      %v379 = vshrl.u32 %v362, 16
      %v381 = vrot.slane %v379, 7
      %v382 = vshll.u32 %v362, 16
      %v384 = vor.u32 %v381, %v382
      %v386 = vshrl.u32 %v363, 16
      %v388 = vrot.slane %v386, 7
      %v389 = vshll.u32 %v363, 16
      %v391 = vor.u32 %v388, %v389
      %v393 = vshrl.u32 %v364, 16
      %v395 = vrot.slane %v393, 7
      %v396 = vshll.u32 %v364, 16
      %v398 = vor.u32 %v395, %v396
      %v400 = vshrl.u32 %v365, 16
      %v402 = vrot.slane %v400, 7
      %v403 = vshll.u32 %v365, 16
      %v405 = vor.u32 %v402, %v403
      %v407 = vshrl.u32 %v366, 16
      %v409 = vrot.slane %v407, 7
      %v410 = vshll.u32 %v366, 16
      %v412 = vor.u32 %v409, %v410
      %v414 = vshrl.u32 %v367, 16
      %v416 = vrot.slane %v414, 7
      %v417 = vshll.u32 %v367, 16
      %v419 = vor.u32 %v416, %v417
      %v421 = vshrl.u32 %v368, 16
      %v423 = vrot.slane %v421, 7
      %v424 = vshll.u32 %v368, 16
      %v426 = vor.u32 %v423, %v424
      %v428 = vshrl.u32 %v369, 16
      %v430 = vrot.slane %v428, 7
      %v431 = vshll.u32 %v369, 16
      %v433 = vor.u32 %v430, %v431
      %v435 = vshrl.u32 %v370, 16
      %v437 = vrot.slane %v435, 7
      %v438 = vshll.u32 %v370, 16
      %v440 = vor.u32 %v437, %v438
      %v442 = vshrl.u32 %v371, 16
      %v444 = vrot.slane %v442, 7
      %v445 = vshll.u32 %v371, 16
      %v447 = vor.u32 %v444, %v445
      %v449 = vshrl.u32 %v372, 16
      %v451 = vrot.slane %v449, 7
      %v452 = vshll.u32 %v372, 16
      %v454 = vor.u32 %v451, %v452
      %v456 = vshrl.u32 %v373, 16
      %v458 = vrot.slane %v456, 7
      %v459 = vshll.u32 %v373, 16
      %v461 = vor.u32 %v458, %v459
      %v463 = vshrl.u32 %v374, 16
      %v465 = vrot.slane %v463, 7
      %v466 = vshll.u32 %v374, 16
      %v468 = vor.u32 %v465, %v466
      %v470 = vshrl.u32 %v375, 16
      %v472 = vrot.slane %v470, 7
      %v473 = vshll.u32 %v375, 16
      %v475 = vor.u32 %v472, %v473
      %v477 = vshrl.u32 %v376, 16
      %v479 = vrot.slane %v477, 7
      %v480 = vshll.u32 %v376, 16
      %v482 = vor.u32 %v479, %v480
      %v484 = vshrl.u32 %v377, 16
      %v486 = vrot.slane %v484, 7
      %v487 = vshll.u32 %v377, 16
      %v489 = vor.u32 %v486, %v487
      %vm506 = vcmask 1040384
      %vm507 = vsmask.f32 256
      %vm508 = vmand %vm506, %vm507
      %v509 = vsel %vm508, 0, %v384
      %v510 = vsel %vm508, 0, %v391
      %v511 = vsel %vm508, 0, %v398
      %v512 = vsel %vm508, 0, %v405
      %v513 = vsel %vm508, 0, %v412
      %v514 = vsel %vm508, 0, %v419
      %v515 = vsel %vm508, 0, %v426
      %v516 = vsel %vm508, 0, %v433
      %v517 = vsel %vm508, 0, %v440
      %v518 = vsel %vm508, 0, %v447
      %v519 = vsel %vm508, 0, %v454
      %v520 = vsel %vm508, 0, %v461
      %v521 = vsel %vm508, 0, %v468
      %v522 = vsel %vm508, 0, %v475
      %v523 = vsel %vm508, 0, %v482
      %v524 = vsel %vm508, 0, %v489
      %v525 = vrot.slane %v382, 1
      %v526 = vor.u32 %v379, %v525
      %v527 = vrot.slane %v389, 1
      %v528 = vor.u32 %v386, %v527
      %v529 = vrot.slane %v396, 1
      %v530 = vor.u32 %v393, %v529
      %v531 = vrot.slane %v403, 1
      %v532 = vor.u32 %v400, %v531
      %v533 = vrot.slane %v410, 1
      %v534 = vor.u32 %v407, %v533
      %v535 = vrot.slane %v417, 1
      %v536 = vor.u32 %v414, %v535
      %v537 = vrot.slane %v424, 1
      %v538 = vor.u32 %v421, %v537
      %v539 = vrot.slane %v431, 1
      %v540 = vor.u32 %v428, %v539
      %v541 = vrot.slane %v438, 1
      %v542 = vor.u32 %v435, %v541
      %v543 = vrot.slane %v445, 1
      %v544 = vor.u32 %v442, %v543
      %v545 = vrot.slane %v452, 1
      %v546 = vor.u32 %v449, %v545
      %v547 = vrot.slane %v459, 1
      %v548 = vor.u32 %v456, %v547
      %v549 = vrot.slane %v466, 1
      %v550 = vor.u32 %v463, %v549
      %v551 = vrot.slane %v473, 1
      %v552 = vor.u32 %v470, %v551
      %v553 = vrot.slane %v480, 1
      %v554 = vor.u32 %v477, %v553
      %v555 = vrot.slane %v487, 1
      %v556 = vor.u32 %v484, %v555
      %vm573 = vcmask 1047552
      %vm574 = vsmask.f32 7424
      %vm575 = vmand %vm573, %vm574
      %v576 = vsel %vm575, %v526, 0
      %v577 = vsel %vm575, %v528, 0
      %v578 = vsel %vm575, %v530, 0
      %v579 = vsel %vm575, %v532, 0
      %v580 = vsel %vm575, %v534, 0
      %v581 = vsel %vm575, %v536, 0
      %v582 = vsel %vm575, %v538, 0
      %v583 = vsel %vm575, %v540, 0
      %v584 = vsel %vm575, %v542, 0
      %v585 = vsel %vm575, %v544, 0
      %v586 = vsel %vm575, %v546, 0
      %v587 = vsel %vm575, %v548, 0
      %v588 = vsel %vm575, %v550, 0
      %v589 = vsel %vm575, %v552, 0
      %v590 = vsel %vm575, %v554, 0
      %v591 = vsel %vm575, %v556, 0
      %592 = vrot.lane.b32.xlu0 %v362, 8
      %v593 = vpop.permute.xlu0 %592
      %594 = vrot.lane.b32.xlu0 %v363, 8
      %v595 = vpop.permute.xlu0 %594
      %596 = vrot.lane.b32.xlu0 %v364, 8
      %v597 = vpop.permute.xlu0 %596
      %598 = vrot.lane.b32.xlu0 %v365, 8
      %v599 = vpop.permute.xlu0 %598
      %600 = vrot.lane.b32.xlu0 %v366, 8
      %v601 = vpop.permute.xlu0 %600
      %602 = vrot.lane.b32.xlu0 %v367, 8
      %v603 = vpop.permute.xlu0 %602
      %604 = vrot.lane.b32.xlu0 %v368, 8
      %v605 = vpop.permute.xlu0 %604
      %606 = vrot.lane.b32.xlu0 %v369, 8
      %v607 = vpop.permute.xlu0 %606
      %608 = vrot.lane.b32.xlu0 %v370, 8
      %v609 = vpop.permute.xlu0 %608
      %610 = vrot.lane.b32.xlu0 %v371, 8
      %v611 = vpop.permute.xlu0 %610
      %612 = vrot.lane.b32.xlu0 %v372, 8
      %v613 = vpop.permute.xlu0 %612
      %614 = vrot.lane.b32.xlu0 %v373, 8
      %v615 = vpop.permute.xlu0 %614
      %616 = vrot.lane.b32.xlu0 %v374, 8
      %v617 = vpop.permute.xlu0 %616
      %618 = vrot.lane.b32.xlu0 %v375, 8
      %v619 = vpop.permute.xlu0 %618
      %620 = vrot.lane.b32.xlu0 %v376, 8
      %v621 = vpop.permute.xlu0 %620
      %622 = vrot.lane.b32.xlu0 %v377, 8
      %v623 = vpop.permute.xlu0 %622
      %640 = vrot.lane.b32.xlu0 %v576, 16
      %v641 = vpop.permute.xlu0 %640
      %642 = vrot.lane.b32.xlu0 %v577, 16
      %v643 = vpop.permute.xlu0 %642
      %644 = vrot.lane.b32.xlu0 %v578, 16
      %v645 = vpop.permute.xlu0 %644
      %646 = vrot.lane.b32.xlu0 %v579, 16
      %v647 = vpop.permute.xlu0 %646
      %648 = vrot.lane.b32.xlu0 %v580, 16
      %v649 = vpop.permute.xlu0 %648
      %650 = vrot.lane.b32.xlu0 %v581, 16
      %v651 = vpop.permute.xlu0 %650
      %652 = vrot.lane.b32.xlu0 %v582, 16
      %v653 = vpop.permute.xlu0 %652
      %654 = vrot.lane.b32.xlu0 %v583, 16
      %v655 = vpop.permute.xlu0 %654
      %656 = vrot.lane.b32.xlu0 %v584, 16
      %v657 = vpop.permute.xlu0 %656
      %658 = vrot.lane.b32.xlu0 %v585, 16
      %v659 = vpop.permute.xlu0 %658
      %660 = vrot.lane.b32.xlu0 %v586, 16
      %v661 = vpop.permute.xlu0 %660
      %662 = vrot.lane.b32.xlu0 %v587, 16
      %v663 = vpop.permute.xlu0 %662
      %664 = vrot.lane.b32.xlu0 %v588, 16
      %v665 = vpop.permute.xlu0 %664
      %666 = vrot.lane.b32.xlu0 %v589, 16
      %v667 = vpop.permute.xlu0 %666
      %668 = vrot.lane.b32.xlu0 %v590, 16
      %v669 = vpop.permute.xlu0 %668
      %670 = vrot.lane.b32.xlu0 %v591, 16
      %v671 = vpop.permute.xlu0 %670
      %vm672 = vcmask 64512
      %v675 = vsel %vm672, %v509, %v593
      %v678 = vsel %vm672, %v510, %v595
      %v681 = vsel %vm672, %v511, %v597
      %v684 = vsel %vm672, %v512, %v599
      %v687 = vsel %vm672, %v513, %v601
      %v690 = vsel %vm672, %v514, %v603
      %v693 = vsel %vm672, %v515, %v605
      %v696 = vsel %vm672, %v516, %v607
      %v699 = vsel %vm672, %v517, %v609
      %v702 = vsel %vm672, %v518, %v611
      %v705 = vsel %vm672, %v519, %v613
      %v708 = vsel %vm672, %v520, %v615
      %v711 = vsel %vm672, %v521, %v617
      %v714 = vsel %vm672, %v522, %v619
      %v717 = vsel %vm672, %v523, %v621
      %v720 = vsel %vm672, %v524, %v623
      %vm721 = vcmask 130048
      %v723 = vsel %vm721, %v675, %v641
      %v725 = vsel %vm721, %v678, %v643
      %v727 = vsel %vm721, %v681, %v645
      %v729 = vsel %vm721, %v684, %v647
      %v731 = vsel %vm721, %v687, %v649
      %v733 = vsel %vm721, %v690, %v651
      %v735 = vsel %vm721, %v693, %v653
      %v737 = vsel %vm721, %v696, %v655
      %v739 = vsel %vm721, %v699, %v657
      %v741 = vsel %vm721, %v702, %v659
      %v743 = vsel %vm721, %v705, %v661
      %v745 = vsel %vm721, %v708, %v663
      %v747 = vsel %vm721, %v711, %v665
      %v749 = vsel %vm721, %v714, %v667
      %v751 = vsel %vm721, %v717, %v669
      %v753 = vsel %vm721, %v720, %v671
      %v770 = vunpack.c.l.b16 %v723
      %v771 = vunpack.c.h.b16 %v723
      %v772 = vunpack.c.l.b16 %v725
      %v773 = vunpack.c.h.b16 %v725
      %v774 = vunpack.c.l.b16 %v727
      %v775 = vunpack.c.h.b16 %v727
      %v776 = vunpack.c.l.b16 %v729
      %v777 = vunpack.c.h.b16 %v729
      %v778 = vunpack.c.l.b16 %v731
      %v779 = vunpack.c.h.b16 %v731
      %v780 = vunpack.c.l.b16 %v733
      %v781 = vunpack.c.h.b16 %v733
      %v782 = vunpack.c.l.b16 %v735
      %v783 = vunpack.c.h.b16 %v735
      %v784 = vunpack.c.l.b16 %v737
      %v785 = vunpack.c.h.b16 %v737
      %v786 = vunpack.c.l.b16 %v739
      %v787 = vunpack.c.h.b16 %v739
      %v788 = vunpack.c.l.b16 %v741
      %v789 = vunpack.c.h.b16 %v741
      %v790 = vunpack.c.l.b16 %v743
      %v791 = vunpack.c.h.b16 %v743
      %v792 = vunpack.c.l.b16 %v745
      %v793 = vunpack.c.h.b16 %v745
      %v794 = vunpack.c.l.b16 %v747
      %v795 = vunpack.c.h.b16 %v747
      %v796 = vunpack.c.l.b16 %v749
      %v797 = vunpack.c.h.b16 %v749
      %v798 = vunpack.c.l.b16 %v751
      %v799 = vunpack.c.h.b16 %v751
      %v800 = vunpack.c.l.b16 %v753
      %v801 = vunpack.c.h.b16 %v753
      %v802 = vpack.c.b16 %v770, %v770
      %v803 = vpack.c.b16 %v771, %v771
      %v804 = vpack.c.b16 %v772, %v772
      %v805 = vpack.c.b16 %v773, %v773
      %v806 = vpack.c.b16 %v774, %v774
      %v807 = vpack.c.b16 %v775, %v775
      %v808 = vpack.c.b16 %v776, %v776
      %v809 = vpack.c.b16 %v777, %v777
      %v810 = vpack.c.b16 %v778, %v778
      %v811 = vpack.c.b16 %v779, %v779
      %v812 = vpack.c.b16 %v780, %v780
      %v813 = vpack.c.b16 %v781, %v781
      %v814 = vpack.c.b16 %v782, %v782
      %v815 = vpack.c.b16 %v783, %v783
      %v816 = vpack.c.b16 %v784, %v784
      %v817 = vpack.c.b16 %v785, %v785
      %v818 = vpack.c.b16 %v786, %v786
      %v819 = vpack.c.b16 %v787, %v787
      %v820 = vpack.c.b16 %v788, %v788
      %v821 = vpack.c.b16 %v789, %v789
      %v822 = vpack.c.b16 %v790, %v790
      %v823 = vpack.c.b16 %v791, %v791
      %v824 = vpack.c.b16 %v792, %v792
      %v825 = vpack.c.b16 %v793, %v793
      %v826 = vpack.c.b16 %v794, %v794
      %v827 = vpack.c.b16 %v795, %v795
      %v828 = vpack.c.b16 %v796, %v796
      %v829 = vpack.c.b16 %v797, %v797
      %v830 = vpack.c.b16 %v798, %v798
      %v831 = vpack.c.b16 %v799, %v799
      %v832 = vpack.c.b16 %v800, %v800
      %v833 = vpack.c.b16 %v801, %v801
      %s866 = scalar_lea.vmem [#allocation2], 8
      %vm867 = vcmask 191488
      %868 = vst.msk [vmem:[%s866] sm:$0xf] %vm867, %v802
      %869 = vst.msk [vmem:[%s866 + $0x4] sm:$0xf] %vm867, %v803
      %870 = vst.msk [vmem:[%s866 + $0x8] sm:$0xf] %vm867, %v804
      %871 = vst.msk [vmem:[%s866 + $0xc] sm:$0xf] %vm867, %v805
      %872 = vst.msk [vmem:[%s866 + $0x10] sm:$0xf] %vm867, %v806
      %873 = vst.msk [vmem:[%s866 + $0x14] sm:$0xf] %vm867, %v807
      %874 = vst.msk [vmem:[%s866 + $0x18] sm:$0xf] %vm867, %v808
      %875 = vst.msk [vmem:[%s866 + $0x1c] sm:$0xf] %vm867, %v809
      %876 = vst.msk [vmem:[%s866 + $0x20] sm:$0xf] %vm867, %v810
      %877 = vst.msk [vmem:[%s866 + $0x24] sm:$0xf] %vm867, %v811
      %878 = vst.msk [vmem:[%s866 + $0x28] sm:$0xf] %vm867, %v812
      %879 = vst.msk [vmem:[%s866 + $0x2c] sm:$0xf] %vm867, %v813
      %880 = vst.msk [vmem:[%s866 + $0x30] sm:$0xf] %vm867, %v814
      %881 = vst.msk [vmem:[%s866 + $0x34] sm:$0xf] %vm867, %v815
      %882 = vst.msk [vmem:[%s866 + $0x38] sm:$0xf] %vm867, %v816
      %883 = vst.msk [vmem:[%s866 + $0x3c] sm:$0xf] %vm867, %v817
      %884 = vst.msk [vmem:[%s866 + $0x40] sm:$0xf] %vm867, %v818
      %885 = vst.msk [vmem:[%s866 + $0x44] sm:$0xf] %vm867, %v819
      %886 = vst.msk [vmem:[%s866 + $0x48] sm:$0xf] %vm867, %v820
      %887 = vst.msk [vmem:[%s866 + $0x4c] sm:$0xf] %vm867, %v821
      %888 = vst.msk [vmem:[%s866 + $0x50] sm:$0xf] %vm867, %v822
      %889 = vst.msk [vmem:[%s866 + $0x54] sm:$0xf] %vm867, %v823
      %890 = vst.msk [vmem:[%s866 + $0x58] sm:$0xf] %vm867, %v824
      %891 = vst.msk [vmem:[%s866 + $0x5c] sm:$0xf] %vm867, %v825
      %892 = vst.msk [vmem:[%s866 + $0x60] sm:$0xf] %vm867, %v826
      %893 = vst.msk [vmem:[%s866 + $0x64] sm:$0xf] %vm867, %v827
      %894 = vst.msk [vmem:[%s866 + $0x68] sm:$0xf] %vm867, %v828
      %895 = vst.msk [vmem:[%s866 + $0x6c] sm:$0xf] %vm867, %v829
      %896 = vst.msk [vmem:[%s866 + $0x70] sm:$0xf] %vm867, %v830
      %897 = vst.msk [vmem:[%s866 + $0x74] sm:$0xf] %vm867, %v831
      %898 = vst.msk [vmem:[%s866 + $0x78] sm:$0xf] %vm867, %v832
      %899 = vst.msk [vmem:[%s866 + $0x7c] sm:$0xf] %vm867, %v833
      %900 = vst.msk [vmem:[#allocation2] sm:$0xf] %vm867, 0
      %901 = vst.msk [vmem:[#allocation2 + $0x4] sm:$0xf] %vm867, 0
      %s902 = scalar_lea.vmem [#allocation2], 136
      %903 = vst.msk [vmem:[%s902] sm:$0xf] %vm867, 0
      %904 = vst.msk [vmem:[%s902 + $0x4] sm:$0xf] %vm867, 0
      %v905 = vld [vmem:[#allocation2] sm:$0xf]
      %v906 = vld [vmem:[#allocation2 + $0x4] sm:$0xf]
      %v907 = vld [vmem:[#allocation2 + $0x8] sm:$0xf]
      %v908 = vld [vmem:[#allocation2 + $0xc] sm:$0xf]
      %v909 = vld [vmem:[#allocation2 + $0x10] sm:$0xf]
      %v910 = vld [vmem:[#allocation2 + $0x14] sm:$0xf]
      %v911 = vld [vmem:[#allocation2 + $0x18] sm:$0xf]
      %v912 = vld [vmem:[#allocation2 + $0x1c] sm:$0xf]
      %v913 = vld [vmem:[#allocation2 + $0x20] sm:$0xf]
      %v914 = vld [vmem:[#allocation2 + $0x24] sm:$0xf]
      %v915 = vld [vmem:[#allocation2 + $0x28] sm:$0xf]
      %v916 = vld [vmem:[#allocation2 + $0x2c] sm:$0xf]
      %v917 = vld [vmem:[#allocation2 + $0x30] sm:$0xf]
      %v918 = vld [vmem:[#allocation2 + $0x34] sm:$0xf]
      %v919 = vld [vmem:[#allocation2 + $0x38] sm:$0xf]
      %v920 = vld [vmem:[#allocation2 + $0x3c] sm:$0xf]
      %v921 = vld [vmem:[#allocation2 + $0x40] sm:$0xf]
      %v922 = vld [vmem:[#allocation2 + $0x44] sm:$0xf]
      %v923 = vld [vmem:[#allocation2 + $0x48] sm:$0xf]
      %v924 = vld [vmem:[#allocation2 + $0x4c] sm:$0xf]
      %v925 = vld [vmem:[#allocation2 + $0x50] sm:$0xf]
      %v926 = vld [vmem:[#allocation2 + $0x54] sm:$0xf]
      %v927 = vld [vmem:[#allocation2 + $0x58] sm:$0xf]
      %v928 = vld [vmem:[#allocation2 + $0x5c] sm:$0xf]
      %v929 = vld [vmem:[#allocation2 + $0x60] sm:$0xf]
      %v930 = vld [vmem:[#allocation2 + $0x64] sm:$0xf]
      %v931 = vld [vmem:[#allocation2 + $0x68] sm:$0xf]
      %v932 = vld [vmem:[#allocation2 + $0x6c] sm:$0xf]
      %v933 = vld [vmem:[#allocation2 + $0x70] sm:$0xf]
      %v934 = vld [vmem:[#allocation2 + $0x74] sm:$0xf]
      %v935 = vld [vmem:[#allocation2 + $0x78] sm:$0xf]
      %v936 = vld [vmem:[#allocation2 + $0x7c] sm:$0xf]
      %v937 = vld [vmem:[%s1] sm:$0xf]
      %v938 = vld [vmem:[%s1 + $0x4] sm:$0xf]
      %v939 = vld [vmem:[%s1 + $0x8] sm:$0xf]
      %v972 = vunpack.c.l.b16 %v905
      %v973 = vunpack.c.l.b16 %v906
      %v974 = vunpack.c.l.b16 %v907
      %v975 = vunpack.c.l.b16 %v908
      %v976 = vunpack.c.l.b16 %v909
      %v977 = vunpack.c.l.b16 %v910
      %v978 = vunpack.c.l.b16 %v911
      %v979 = vunpack.c.l.b16 %v912
      %v980 = vunpack.c.l.b16 %v913
      %v981 = vunpack.c.l.b16 %v914
      %v982 = vunpack.c.l.b16 %v915
      %v983 = vunpack.c.l.b16 %v916
      %v984 = vunpack.c.l.b16 %v917
      %v985 = vunpack.c.l.b16 %v918
      %v986 = vunpack.c.l.b16 %v919
      %v987 = vunpack.c.l.b16 %v920
      %v988 = vunpack.c.l.b16 %v921
      %v989 = vunpack.c.l.b16 %v922
      %v990 = vunpack.c.l.b16 %v923
      %v991 = vunpack.c.l.b16 %v924
      %v992 = vunpack.c.l.b16 %v925
      %v993 = vunpack.c.l.b16 %v926
      %v994 = vunpack.c.l.b16 %v927
      %v995 = vunpack.c.l.b16 %v928
      %v996 = vunpack.c.l.b16 %v929
      %v997 = vunpack.c.l.b16 %v930
      %v998 = vunpack.c.l.b16 %v931
      %v999 = vunpack.c.l.b16 %v932
      %v1000 = vunpack.c.l.b16 %v933
      %v1001 = vunpack.c.l.b16 %v934
      %v1002 = vunpack.c.l.b16 %v935
      %v1003 = vunpack.c.l.b16 %v936
      %v1004 = vpack.c.b16 %v973, %v972
      %v1005 = vpack.c.b16 %v975, %v974
      %v1006 = vpack.c.b16 %v977, %v976
      %v1007 = vpack.c.b16 %v979, %v978
      %v1008 = vpack.c.b16 %v981, %v980
      %v1009 = vpack.c.b16 %v983, %v982
      %v1010 = vpack.c.b16 %v985, %v984
      %v1011 = vpack.c.b16 %v987, %v986
      %v1012 = vpack.c.b16 %v989, %v988
      %v1013 = vpack.c.b16 %v991, %v990
      %v1014 = vpack.c.b16 %v993, %v992
      %v1015 = vpack.c.b16 %v995, %v994
      %v1016 = vpack.c.b16 %v997, %v996
      %v1017 = vpack.c.b16 %v999, %v998
      %v1018 = vpack.c.b16 %v1001, %v1000
      %v1019 = vpack.c.b16 %v1003, %v1002
      %v1023 = vunpack.c.l.b16 %v937
      %v1024 = vunpack.c.l.b16 %v938
      %v1025 = vunpack.c.l.b16 %v939
      %v1026 = vpack.c.b16 %v1024, %v1023
      %v1027 = vpack.c.b16 %v1025, %v1025
      %vm1029 = vcmask 195584
      %v1031 = vsel %vm1029, %v1004, 0
      %v1034 = vsel %vm1029, %v1005, 0
      %v1037 = vsel %vm1029, %v1006, 0
      %v1040 = vsel %vm1029, %v1007, 0
      %v1043 = vsel %vm1029, %v1008, 0
      %v1046 = vsel %vm1029, %v1009, 0
      %v1049 = vsel %vm1029, %v1010, 0
      %v1052 = vsel %vm1029, %v1011, 0
      %v1055 = vsel %vm1029, %v1012, 0
      %v1058 = vsel %vm1029, %v1013, 0
      %v1061 = vsel %vm1029, %v1014, 0
      %v1064 = vsel %vm1029, %v1015, 0
      %v1067 = vsel %vm1029, %v1016, 0
      %v1070 = vsel %vm1029, %v1017, 0
      %v1073 = vsel %vm1029, %v1018, 0
      %v1076 = vsel %vm1029, %v1019, 0
      %vm1078 = vcmask 1043456
      %v1080 = vsel %vm1078, %v1027, 0
      %1082 = vmatprep.subr.bf16.mxu0 0
      %1083 = vmatpush1.bf16.msra.mxu0 0
      %1084 = vmatprep.subr.bf16.mxu0 0
      %1085 = vmatpush1.bf16.msra.mxu0 0
      %1086 = vmatprep.subr.bf16.mxu0 0
      %1087 = vmatpush1.bf16.msra.mxu0 0
      %1088 = vmatprep.subr.bf16.mxu0 0
      %1089 = vmatpush1.bf16.msra.mxu0 0
      %1090 = vmatprep.subr.bf16.mxu0 0
      %1091 = vmatpush1.bf16.msra.mxu0 0
      %1092 = vmatprep.subr.bf16.mxu0 0
      %1093 = vmatpush1.bf16.msra.mxu0 0
      %1094 = vmatprep.subr.bf16.mxu0 0
      %1095 = vmatpush1.bf16.msra.mxu0 %v1080
      %1096 = vmatprep.subr.bf16.mxu0 0
      %1097 = vmatpush1.bf16.msra.mxu0 %v1026
      %1098 = vmatprep.subr.bf16.mxu0 0
      %1099 = vmatpush2.bf16.msra.mxu0 0
      %1100 = vmatprep.subr.bf16.mxu0 0
      %1101 = vmatpush2.bf16.msra.mxu0 0
      %1102 = vmatprep.subr.bf16.mxu0 0
      %1103 = vmatpush2.bf16.msra.mxu0 0
      %1104 = vmatprep.subr.bf16.mxu0 0
      %1105 = vmatpush2.bf16.msra.mxu0 0
      %1106 = vmatprep.subr.bf16.mxu0 0
      %1107 = vmatpush2.bf16.msra.mxu0 0
      %1108 = vmatprep.subr.bf16.mxu0 0
      %1109 = vmatpush2.bf16.msra.mxu0 0
      %1110 = vmatprep.subr.bf16.mxu0 0
      %1111 = vmatpush2.bf16.msra.mxu0 0
      %1112 = vmatprep.subr.bf16.mxu0 0
      %1113 = vmatpush2.bf16.msra.mxu0 0
      %1114 = vmatprep.mubr.bf16.mxu0 0
      %1115 = vmatmul.mubr.bf16.gmra.mxu0 %v1031
      %v1116 = vpop.f32.mrf.mxu0
      %v1117 = vadd.f32 0.0, %v1116
      %v1118 = vpop.f32.mrf.mxu0
      %v1119 = vpop.f32.mrf.mxu0
      %v1120 = vadd.f32 0.0, %v1119
      %v1121 = vpop.f32.mrf.mxu0
      %1122 = vmatprep.mubr.bf16.mxu0 0
      %1123 = vmatmul.mubr.bf16.gmra.mxu0 %v1034
      %v1124 = vpop.f32.mrf.mxu0
      %v1125 = vadd.f32 0.0, %v1124
      %v1126 = vpop.f32.mrf.mxu0
      %v1127 = vpop.f32.mrf.mxu0
      %v1128 = vadd.f32 0.0, %v1127
      %v1129 = vpop.f32.mrf.mxu0
      %1130 = vmatprep.mubr.bf16.mxu0 0
      %1131 = vmatmul.mubr.bf16.gmra.mxu0 %v1037
      %v1132 = vpop.f32.mrf.mxu0
      %v1133 = vadd.f32 0.0, %v1132
      %v1134 = vpop.f32.mrf.mxu0
      %v1135 = vpop.f32.mrf.mxu0
      %v1136 = vadd.f32 0.0, %v1135
      %v1137 = vpop.f32.mrf.mxu0
      %1138 = vmatprep.mubr.bf16.mxu0 0
      %1139 = vmatmul.mubr.bf16.gmra.mxu0 %v1040
      %v1140 = vpop.f32.mrf.mxu0
      %v1141 = vadd.f32 0.0, %v1140
      %v1142 = vpop.f32.mrf.mxu0
      %v1143 = vpop.f32.mrf.mxu0
      %v1144 = vadd.f32 0.0, %v1143
      %v1145 = vpop.f32.mrf.mxu0
      %1146 = vmatprep.mubr.bf16.mxu0 0
      %1147 = vmatmul.mubr.bf16.gmra.mxu0 %v1043
      %v1148 = vpop.f32.mrf.mxu0
      %v1149 = vadd.f32 0.0, %v1148
      %v1150 = vpop.f32.mrf.mxu0
      %v1151 = vpop.f32.mrf.mxu0
      %v1152 = vadd.f32 0.0, %v1151
      %v1153 = vpop.f32.mrf.mxu0
      %1154 = vmatprep.mubr.bf16.mxu0 0
      %1155 = vmatmul.mubr.bf16.gmra.mxu0 %v1046
      %v1156 = vpop.f32.mrf.mxu0
      %v1157 = vadd.f32 0.0, %v1156
      %v1158 = vpop.f32.mrf.mxu0
      %v1159 = vpop.f32.mrf.mxu0
      %v1160 = vadd.f32 0.0, %v1159
      %v1161 = vpop.f32.mrf.mxu0
      %1162 = vmatprep.mubr.bf16.mxu0 0
      %1163 = vmatmul.mubr.bf16.gmra.mxu0 %v1049
      %v1164 = vpop.f32.mrf.mxu0
      %v1165 = vadd.f32 0.0, %v1164
      %v1166 = vpop.f32.mrf.mxu0
      %v1167 = vpop.f32.mrf.mxu0
      %v1168 = vadd.f32 0.0, %v1167
      %v1169 = vpop.f32.mrf.mxu0
      %1170 = vmatprep.mubr.bf16.mxu0 0
      %1171 = vmatmul.mubr.bf16.gmra.mxu0 %v1052
      %v1172 = vpop.f32.mrf.mxu0
      %v1173 = vadd.f32 0.0, %v1172
      %v1174 = vpop.f32.mrf.mxu0
      %v1175 = vpop.f32.mrf.mxu0
      %v1176 = vadd.f32 0.0, %v1175
      %v1177 = vpop.f32.mrf.mxu0
      %1178 = vmatprep.mubr.bf16.mxu0 0
      %1179 = vmatmul.mubr.bf16.gmra.mxu0 %v1055
      %v1180 = vpop.f32.mrf.mxu0
      %v1181 = vadd.f32 0.0, %v1180
      %v1182 = vpop.f32.mrf.mxu0
      %v1183 = vpop.f32.mrf.mxu0
      %v1184 = vadd.f32 0.0, %v1183
      %v1185 = vpop.f32.mrf.mxu0
      %1186 = vmatprep.mubr.bf16.mxu0 0
      %1187 = vmatmul.mubr.bf16.gmra.mxu0 %v1058
      %v1188 = vpop.f32.mrf.mxu0
      %v1189 = vadd.f32 0.0, %v1188
      %v1190 = vpop.f32.mrf.mxu0
      %v1191 = vpop.f32.mrf.mxu0
      %v1192 = vadd.f32 0.0, %v1191
      %v1193 = vpop.f32.mrf.mxu0
      %1194 = vmatprep.mubr.bf16.mxu0 0
      %1195 = vmatmul.mubr.bf16.gmra.mxu0 %v1061
      %v1196 = vpop.f32.mrf.mxu0
      %v1197 = vadd.f32 0.0, %v1196
      %v1198 = vpop.f32.mrf.mxu0
      %v1199 = vpop.f32.mrf.mxu0
      %v1200 = vadd.f32 0.0, %v1199
      %v1201 = vpop.f32.mrf.mxu0
      %1202 = vmatprep.mubr.bf16.mxu0 0
      %1203 = vmatmul.mubr.bf16.gmra.mxu0 %v1064
      %v1204 = vpop.f32.mrf.mxu0
      %v1205 = vadd.f32 0.0, %v1204
      %v1206 = vpop.f32.mrf.mxu0
      %v1207 = vpop.f32.mrf.mxu0
      %v1208 = vadd.f32 0.0, %v1207
      %v1209 = vpop.f32.mrf.mxu0
      %1210 = vmatprep.mubr.bf16.mxu0 0
      %1211 = vmatmul.mubr.bf16.gmra.mxu0 %v1067
      %v1212 = vpop.f32.mrf.mxu0
      %v1213 = vadd.f32 0.0, %v1212
      %v1214 = vpop.f32.mrf.mxu0
      %v1215 = vpop.f32.mrf.mxu0
      %v1216 = vadd.f32 0.0, %v1215
      %v1217 = vpop.f32.mrf.mxu0
      %1218 = vmatprep.mubr.bf16.mxu0 0
      %1219 = vmatmul.mubr.bf16.gmra.mxu0 %v1070
      %v1220 = vpop.f32.mrf.mxu0
      %v1221 = vadd.f32 0.0, %v1220
      %v1222 = vpop.f32.mrf.mxu0
      %v1223 = vpop.f32.mrf.mxu0
      %v1224 = vadd.f32 0.0, %v1223
      %v1225 = vpop.f32.mrf.mxu0
      %1226 = vmatprep.mubr.bf16.mxu0 0
      %1227 = vmatmul.mubr.bf16.gmra.mxu0 %v1073
      %v1228 = vpop.f32.mrf.mxu0
      %v1229 = vadd.f32 0.0, %v1228
      %v1230 = vpop.f32.mrf.mxu0
      %v1231 = vpop.f32.mrf.mxu0
      %v1232 = vadd.f32 0.0, %v1231
      %v1233 = vpop.f32.mrf.mxu0
      %1234 = vmatprep.mubr.bf16.mxu0 0
      %1235 = vmatmul.mubr.bf16.gmra.mxu0 %v1076
      %v1236 = vpop.f32.mrf.mxu0
      %v1237 = vadd.f32 0.0, %v1236
      %v1238 = vpop.f32.mrf.mxu0
      %v1239 = vpop.f32.mrf.mxu0
      %v1240 = vadd.f32 0.0, %v1239
      %v1241 = vpop.f32.mrf.mxu0
      %1242 = vdwg.mxu0
      %1243 = vst [vmem:[#allocation4] sm:$0xff] %v1117
      %1244 = vst [vmem:[#allocation4 + $0x8] sm:$0xff] %v1120
      %1245 = vst [vmem:[#allocation4 + $0x10] sm:$0xff] %v1125
      %1246 = vst [vmem:[#allocation4 + $0x18] sm:$0xff] %v1128
      %1247 = vst [vmem:[#allocation4 + $0x20] sm:$0xff] %v1133
      %1248 = vst [vmem:[#allocation4 + $0x28] sm:$0xff] %v1136
      %1249 = vst [vmem:[#allocation4 + $0x30] sm:$0xff] %v1141
      %1250 = vst [vmem:[#allocation4 + $0x38] sm:$0xff] %v1144
      %1251 = vst [vmem:[#allocation4 + $0x40] sm:$0xff] %v1149
      %1252 = vst [vmem:[#allocation4 + $0x48] sm:$0xff] %v1152
      %1253 = vst [vmem:[#allocation4 + $0x50] sm:$0xff] %v1157
      %1254 = vst [vmem:[#allocation4 + $0x58] sm:$0xff] %v1160
      %1255 = vst [vmem:[#allocation4 + $0x60] sm:$0xff] %v1165
      %1256 = vst [vmem:[#allocation4 + $0x68] sm:$0xff] %v1168
      %1257 = vst [vmem:[#allocation4 + $0x70] sm:$0xff] %v1173
      %1258 = vst [vmem:[#allocation4 + $0x78] sm:$0xff] %v1176
      %1259 = vst [vmem:[#allocation4 + $0x80] sm:$0xff] %v1181
      %1260 = vst [vmem:[#allocation4 + $0x88] sm:$0xff] %v1184
      %1261 = vst [vmem:[#allocation4 + $0x90] sm:$0xff] %v1189
      %1262 = vst [vmem:[#allocation4 + $0x98] sm:$0xff] %v1192
      %1263 = vst [vmem:[#allocation4 + $0xa0] sm:$0xff] %v1197
      %1264 = vst [vmem:[#allocation4 + $0xa8] sm:$0xff] %v1200
      %1265 = vst [vmem:[#allocation4 + $0xb0] sm:$0xff] %v1205
      %1266 = vst [vmem:[#allocation4 + $0xb8] sm:$0xff] %v1208
      %1267 = vst [vmem:[#allocation4 + $0xc0] sm:$0xff] %v1213
      %1268 = vst [vmem:[#allocation4 + $0xc8] sm:$0xff] %v1216
      %1269 = vst [vmem:[#allocation4 + $0xd0] sm:$0xff] %v1221
      %1270 = vst [vmem:[#allocation4 + $0xd8] sm:$0xff] %v1224
      %1271 = vst [vmem:[#allocation4 + $0xe0] sm:$0xff] %v1229
      %1272 = vst [vmem:[#allocation4 + $0xe8] sm:$0xff] %v1232
      %1273 = vst [vmem:[#allocation4 + $0xf0] sm:$0xff] %v1237
      %1274 = vst [vmem:[#allocation4 + $0xf8] sm:$0xff] %v1240
      %v1275 = vld [vmem:[%s866] sm:$0xf]
      %v1276 = vld [vmem:[%s866 + $0x4] sm:$0xf]
      %v1277 = vld [vmem:[%s866 + $0x8] sm:$0xf]
      %v1278 = vld [vmem:[%s866 + $0xc] sm:$0xf]
      %v1279 = vld [vmem:[%s866 + $0x10] sm:$0xf]
      %v1280 = vld [vmem:[%s866 + $0x14] sm:$0xf]
      %v1281 = vld [vmem:[%s866 + $0x18] sm:$0xf]
      %v1282 = vld [vmem:[%s866 + $0x1c] sm:$0xf]
      %v1283 = vld [vmem:[%s866 + $0x20] sm:$0xf]
      %v1284 = vld [vmem:[%s866 + $0x24] sm:$0xf]
      %v1285 = vld [vmem:[%s866 + $0x28] sm:$0xf]
      %v1286 = vld [vmem:[%s866 + $0x2c] sm:$0xf]
      %v1287 = vld [vmem:[%s866 + $0x30] sm:$0xf]
      %v1288 = vld [vmem:[%s866 + $0x34] sm:$0xf]
      %v1289 = vld [vmem:[%s866 + $0x38] sm:$0xf]
      %v1290 = vld [vmem:[%s866 + $0x3c] sm:$0xf]
      %v1291 = vld [vmem:[%s866 + $0x40] sm:$0xf]
      %v1292 = vld [vmem:[%s866 + $0x44] sm:$0xf]
      %v1293 = vld [vmem:[%s866 + $0x48] sm:$0xf]
      %v1294 = vld [vmem:[%s866 + $0x4c] sm:$0xf]
      %v1295 = vld [vmem:[%s866 + $0x50] sm:$0xf]
      %v1296 = vld [vmem:[%s866 + $0x54] sm:$0xf]
      %v1297 = vld [vmem:[%s866 + $0x58] sm:$0xf]
      %v1298 = vld [vmem:[%s866 + $0x5c] sm:$0xf]
      %v1299 = vld [vmem:[%s866 + $0x60] sm:$0xf]
      %v1300 = vld [vmem:[%s866 + $0x64] sm:$0xf]
      %v1301 = vld [vmem:[%s866 + $0x68] sm:$0xf]
      %v1302 = vld [vmem:[%s866 + $0x6c] sm:$0xf]
      %v1303 = vld [vmem:[%s866 + $0x70] sm:$0xf]
      %v1304 = vld [vmem:[%s866 + $0x74] sm:$0xf]
      %v1305 = vld [vmem:[%s866 + $0x78] sm:$0xf]
      %v1306 = vld [vmem:[%s866 + $0x7c] sm:$0xf]
      %s1307 = scalar_lea.vmem %s1, 12
      %v1308 = vld [vmem:[%s1307] sm:$0xf]
      %v1309 = vld [vmem:[%s1307 + $0x4] sm:$0xf]
      %v1310 = vld [vmem:[%s1307 + $0x8] sm:$0xf]
      %v1343 = vunpack.c.l.b16 %v1275
      %v1344 = vunpack.c.l.b16 %v1276
      %v1345 = vunpack.c.l.b16 %v1277
      %v1346 = vunpack.c.l.b16 %v1278
      %v1347 = vunpack.c.l.b16 %v1279
      %v1348 = vunpack.c.l.b16 %v1280
      %v1349 = vunpack.c.l.b16 %v1281
      %v1350 = vunpack.c.l.b16 %v1282
      %v1351 = vunpack.c.l.b16 %v1283
      %v1352 = vunpack.c.l.b16 %v1284
      %v1353 = vunpack.c.l.b16 %v1285
      %v1354 = vunpack.c.l.b16 %v1286
      %v1355 = vunpack.c.l.b16 %v1287
      %v1356 = vunpack.c.l.b16 %v1288
      %v1357 = vunpack.c.l.b16 %v1289
      %v1358 = vunpack.c.l.b16 %v1290
      %v1359 = vunpack.c.l.b16 %v1291
      %v1360 = vunpack.c.l.b16 %v1292
      %v1361 = vunpack.c.l.b16 %v1293
      %v1362 = vunpack.c.l.b16 %v1294
      %v1363 = vunpack.c.l.b16 %v1295
      %v1364 = vunpack.c.l.b16 %v1296
      %v1365 = vunpack.c.l.b16 %v1297
      %v1366 = vunpack.c.l.b16 %v1298
      %v1367 = vunpack.c.l.b16 %v1299
      %v1368 = vunpack.c.l.b16 %v1300
      %v1369 = vunpack.c.l.b16 %v1301
      %v1370 = vunpack.c.l.b16 %v1302
      %v1371 = vunpack.c.l.b16 %v1303
      %v1372 = vunpack.c.l.b16 %v1304
      %v1373 = vunpack.c.l.b16 %v1305
      %v1374 = vunpack.c.l.b16 %v1306
      %v1375 = vpack.c.b16 %v1344, %v1343
      %v1376 = vpack.c.b16 %v1346, %v1345
      %v1377 = vpack.c.b16 %v1348, %v1347
      %v1378 = vpack.c.b16 %v1350, %v1349
      %v1379 = vpack.c.b16 %v1352, %v1351
      %v1380 = vpack.c.b16 %v1354, %v1353
      %v1381 = vpack.c.b16 %v1356, %v1355
      %v1382 = vpack.c.b16 %v1358, %v1357
      %v1383 = vpack.c.b16 %v1360, %v1359
      %v1384 = vpack.c.b16 %v1362, %v1361
      %v1385 = vpack.c.b16 %v1364, %v1363
      %v1386 = vpack.c.b16 %v1366, %v1365
      %v1387 = vpack.c.b16 %v1368, %v1367
      %v1388 = vpack.c.b16 %v1370, %v1369
      %v1389 = vpack.c.b16 %v1372, %v1371
      %v1390 = vpack.c.b16 %v1374, %v1373
      %v1394 = vunpack.c.l.b16 %v1308
      %v1395 = vunpack.c.l.b16 %v1309
      %v1396 = vunpack.c.l.b16 %v1310
      %v1397 = vpack.c.b16 %v1395, %v1394
      %v1398 = vpack.c.b16 %v1396, %v1396
      %v1401 = vsel %vm1029, %v1375, 0
      %v1404 = vsel %vm1029, %v1376, 0
      %v1407 = vsel %vm1029, %v1377, 0
      %v1410 = vsel %vm1029, %v1378, 0
      %v1413 = vsel %vm1029, %v1379, 0
      %v1416 = vsel %vm1029, %v1380, 0
      %v1419 = vsel %vm1029, %v1381, 0
      %v1422 = vsel %vm1029, %v1382, 0
      %v1425 = vsel %vm1029, %v1383, 0
      %v1428 = vsel %vm1029, %v1384, 0
      %v1431 = vsel %vm1029, %v1385, 0
      %v1434 = vsel %vm1029, %v1386, 0
      %v1437 = vsel %vm1029, %v1387, 0
      %v1440 = vsel %vm1029, %v1388, 0
      %v1443 = vsel %vm1029, %v1389, 0
      %v1446 = vsel %vm1029, %v1390, 0
      %v1449 = vsel %vm1078, %v1398, 0
      %1451 = vmatprep.subr.bf16.mxu0 0
      %1452 = vmatpush1.bf16.msra.mxu0 0
      %1453 = vmatprep.subr.bf16.mxu0 0
      %1454 = vmatpush1.bf16.msra.mxu0 0
      %1455 = vmatprep.subr.bf16.mxu0 0
      %1456 = vmatpush1.bf16.msra.mxu0 0
      %1457 = vmatprep.subr.bf16.mxu0 0
      %1458 = vmatpush1.bf16.msra.mxu0 0
      %1459 = vmatprep.subr.bf16.mxu0 0
      %1460 = vmatpush1.bf16.msra.mxu0 0
      %1461 = vmatprep.subr.bf16.mxu0 0
      %1462 = vmatpush1.bf16.msra.mxu0 0
      %1463 = vmatprep.subr.bf16.mxu0 0
      %1464 = vmatpush1.bf16.msra.mxu0 %v1449
      %1465 = vmatprep.subr.bf16.mxu0 0
      %1466 = vmatpush1.bf16.msra.mxu0 %v1397
      %1467 = vmatprep.subr.bf16.mxu0 0
      %1468 = vmatpush2.bf16.msra.mxu0 0
      %1469 = vmatprep.subr.bf16.mxu0 0
      %1470 = vmatpush2.bf16.msra.mxu0 0
      %1471 = vmatprep.subr.bf16.mxu0 0
      %1472 = vmatpush2.bf16.msra.mxu0 0
      %1473 = vmatprep.subr.bf16.mxu0 0
      %1474 = vmatpush2.bf16.msra.mxu0 0
      %1475 = vmatprep.subr.bf16.mxu0 0
      %1476 = vmatpush2.bf16.msra.mxu0 0
      %1477 = vmatprep.subr.bf16.mxu0 0
      %1478 = vmatpush2.bf16.msra.mxu0 0
      %1479 = vmatprep.subr.bf16.mxu0 0
      %1480 = vmatpush2.bf16.msra.mxu0 0
      %1481 = vmatprep.subr.bf16.mxu0 0
      %1482 = vmatpush2.bf16.msra.mxu0 0
      %1483 = vmatprep.mubr.bf16.mxu0 0
      %1484 = vmatmul.mubr.bf16.gmra.mxu0 %v1401
      %v1485 = vpop.f32.mrf.mxu0
      %v1486 = vadd.f32 0.0, %v1485
      %v1487 = vpop.f32.mrf.mxu0
      %v1488 = vpop.f32.mrf.mxu0
      %v1489 = vadd.f32 0.0, %v1488
      %v1490 = vpop.f32.mrf.mxu0
      %1491 = vmatprep.mubr.bf16.mxu0 0
      %1492 = vmatmul.mubr.bf16.gmra.mxu0 %v1404
      %v1493 = vpop.f32.mrf.mxu0
      %v1494 = vadd.f32 0.0, %v1493
      %v1495 = vpop.f32.mrf.mxu0
      %v1496 = vpop.f32.mrf.mxu0
      %v1497 = vadd.f32 0.0, %v1496
      %v1498 = vpop.f32.mrf.mxu0
      %1499 = vmatprep.mubr.bf16.mxu0 0
      %1500 = vmatmul.mubr.bf16.gmra.mxu0 %v1407
      %v1501 = vpop.f32.mrf.mxu0
      %v1502 = vadd.f32 0.0, %v1501
      %v1503 = vpop.f32.mrf.mxu0
      %v1504 = vpop.f32.mrf.mxu0
      %v1505 = vadd.f32 0.0, %v1504
      %v1506 = vpop.f32.mrf.mxu0
      %1507 = vmatprep.mubr.bf16.mxu0 0
      %1508 = vmatmul.mubr.bf16.gmra.mxu0 %v1410
      %v1509 = vpop.f32.mrf.mxu0
      %v1510 = vadd.f32 0.0, %v1509
      %v1511 = vpop.f32.mrf.mxu0
      %v1512 = vpop.f32.mrf.mxu0
      %v1513 = vadd.f32 0.0, %v1512
      %v1514 = vpop.f32.mrf.mxu0
      %1515 = vmatprep.mubr.bf16.mxu0 0
      %1516 = vmatmul.mubr.bf16.gmra.mxu0 %v1413
      %v1517 = vpop.f32.mrf.mxu0
      %v1518 = vadd.f32 0.0, %v1517
      %v1519 = vpop.f32.mrf.mxu0
      %v1520 = vpop.f32.mrf.mxu0
      %v1521 = vadd.f32 0.0, %v1520
      %v1522 = vpop.f32.mrf.mxu0
      %1523 = vmatprep.mubr.bf16.mxu0 0
      %1524 = vmatmul.mubr.bf16.gmra.mxu0 %v1416
      %v1525 = vpop.f32.mrf.mxu0
      %v1526 = vadd.f32 0.0, %v1525
      %v1527 = vpop.f32.mrf.mxu0
      %v1528 = vpop.f32.mrf.mxu0
      %v1529 = vadd.f32 0.0, %v1528
      %v1530 = vpop.f32.mrf.mxu0
      %1531 = vmatprep.mubr.bf16.mxu0 0
      %1532 = vmatmul.mubr.bf16.gmra.mxu0 %v1419
      %v1533 = vpop.f32.mrf.mxu0
      %v1534 = vadd.f32 0.0, %v1533
      %v1535 = vpop.f32.mrf.mxu0
      %v1536 = vpop.f32.mrf.mxu0
      %v1537 = vadd.f32 0.0, %v1536
      %v1538 = vpop.f32.mrf.mxu0
      %1539 = vmatprep.mubr.bf16.mxu0 0
      %1540 = vmatmul.mubr.bf16.gmra.mxu0 %v1422
      %v1541 = vpop.f32.mrf.mxu0
      %v1542 = vadd.f32 0.0, %v1541
      %v1543 = vpop.f32.mrf.mxu0
      %v1544 = vpop.f32.mrf.mxu0
      %v1545 = vadd.f32 0.0, %v1544
      %v1546 = vpop.f32.mrf.mxu0
      %1547 = vmatprep.mubr.bf16.mxu0 0
      %1548 = vmatmul.mubr.bf16.gmra.mxu0 %v1425
      %v1549 = vpop.f32.mrf.mxu0
      %v1550 = vadd.f32 0.0, %v1549
      %v1551 = vpop.f32.mrf.mxu0
      %v1552 = vpop.f32.mrf.mxu0
      %v1553 = vadd.f32 0.0, %v1552
      %v1554 = vpop.f32.mrf.mxu0
      %1555 = vmatprep.mubr.bf16.mxu0 0
      %1556 = vmatmul.mubr.bf16.gmra.mxu0 %v1428
      %v1557 = vpop.f32.mrf.mxu0
      %v1558 = vadd.f32 0.0, %v1557
      %v1559 = vpop.f32.mrf.mxu0
      %v1560 = vpop.f32.mrf.mxu0
      %v1561 = vadd.f32 0.0, %v1560
      %v1562 = vpop.f32.mrf.mxu0
      %1563 = vmatprep.mubr.bf16.mxu0 0
      %1564 = vmatmul.mubr.bf16.gmra.mxu0 %v1431
      %v1565 = vpop.f32.mrf.mxu0
      %v1566 = vadd.f32 0.0, %v1565
      %v1567 = vpop.f32.mrf.mxu0
      %v1568 = vpop.f32.mrf.mxu0
      %v1569 = vadd.f32 0.0, %v1568
      %v1570 = vpop.f32.mrf.mxu0
      %1571 = vmatprep.mubr.bf16.mxu0 0
      %1572 = vmatmul.mubr.bf16.gmra.mxu0 %v1434
      %v1573 = vpop.f32.mrf.mxu0
      %v1574 = vadd.f32 0.0, %v1573
      %v1575 = vpop.f32.mrf.mxu0
      %v1576 = vpop.f32.mrf.mxu0
      %v1577 = vadd.f32 0.0, %v1576
      %v1578 = vpop.f32.mrf.mxu0
      %1579 = vmatprep.mubr.bf16.mxu0 0
      %1580 = vmatmul.mubr.bf16.gmra.mxu0 %v1437
      %v1581 = vpop.f32.mrf.mxu0
      %v1582 = vadd.f32 0.0, %v1581
      %v1583 = vpop.f32.mrf.mxu0
      %v1584 = vpop.f32.mrf.mxu0
      %v1585 = vadd.f32 0.0, %v1584
      %v1586 = vpop.f32.mrf.mxu0
      %1587 = vmatprep.mubr.bf16.mxu0 0
      %1588 = vmatmul.mubr.bf16.gmra.mxu0 %v1440
      %v1589 = vpop.f32.mrf.mxu0
      %v1590 = vadd.f32 0.0, %v1589
      %v1591 = vpop.f32.mrf.mxu0
      %v1592 = vpop.f32.mrf.mxu0
      %v1593 = vadd.f32 0.0, %v1592
      %v1594 = vpop.f32.mrf.mxu0
      %1595 = vmatprep.mubr.bf16.mxu0 0
      %1596 = vmatmul.mubr.bf16.gmra.mxu0 %v1443
      %v1597 = vpop.f32.mrf.mxu0
      %v1598 = vadd.f32 0.0, %v1597
      %v1599 = vpop.f32.mrf.mxu0
      %v1600 = vpop.f32.mrf.mxu0
      %v1601 = vadd.f32 0.0, %v1600
      %v1602 = vpop.f32.mrf.mxu0
      %1603 = vmatprep.mubr.bf16.mxu0 0
      %1604 = vmatmul.mubr.bf16.gmra.mxu0 %v1446
      %v1605 = vpop.f32.mrf.mxu0
      %v1606 = vadd.f32 0.0, %v1605
      %v1607 = vpop.f32.mrf.mxu0
      %v1608 = vpop.f32.mrf.mxu0
      %v1609 = vadd.f32 0.0, %v1608
      %v1610 = vpop.f32.mrf.mxu0
      %1611 = vdwg.mxu0
      %v1612 = vld [vmem:[#allocation4] sm:$0xff]
      %v1613 = vld [vmem:[#allocation4 + $0x8] sm:$0xff]
      %v1614 = vld [vmem:[#allocation4 + $0x10] sm:$0xff]
      %v1615 = vld [vmem:[#allocation4 + $0x18] sm:$0xff]
      %v1616 = vld [vmem:[#allocation4 + $0x20] sm:$0xff]
      %v1617 = vld [vmem:[#allocation4 + $0x28] sm:$0xff]
      %v1618 = vld [vmem:[#allocation4 + $0x30] sm:$0xff]
      %v1619 = vld [vmem:[#allocation4 + $0x38] sm:$0xff]
      %v1620 = vld [vmem:[#allocation4 + $0x40] sm:$0xff]
      %v1621 = vld [vmem:[#allocation4 + $0x48] sm:$0xff]
      %v1622 = vld [vmem:[#allocation4 + $0x50] sm:$0xff]
      %v1623 = vld [vmem:[#allocation4 + $0x58] sm:$0xff]
      %v1624 = vld [vmem:[#allocation4 + $0x60] sm:$0xff]
      %v1625 = vld [vmem:[#allocation4 + $0x68] sm:$0xff]
      %v1626 = vld [vmem:[#allocation4 + $0x70] sm:$0xff]
      %v1627 = vld [vmem:[#allocation4 + $0x78] sm:$0xff]
      %v1628 = vld [vmem:[#allocation4 + $0x80] sm:$0xff]
      %v1629 = vld [vmem:[#allocation4 + $0x88] sm:$0xff]
      %v1630 = vld [vmem:[#allocation4 + $0x90] sm:$0xff]
      %v1631 = vld [vmem:[#allocation4 + $0x98] sm:$0xff]
      %v1632 = vld [vmem:[#allocation4 + $0xa0] sm:$0xff]
      %v1633 = vld [vmem:[#allocation4 + $0xa8] sm:$0xff]
      %v1634 = vld [vmem:[#allocation4 + $0xb0] sm:$0xff]
      %v1635 = vld [vmem:[#allocation4 + $0xb8] sm:$0xff]
      %v1636 = vld [vmem:[#allocation4 + $0xc0] sm:$0xff]
      %v1637 = vld [vmem:[#allocation4 + $0xc8] sm:$0xff]
      %v1638 = vld [vmem:[#allocation4 + $0xd0] sm:$0xff]
      %v1639 = vld [vmem:[#allocation4 + $0xd8] sm:$0xff]
      %v1640 = vld [vmem:[#allocation4 + $0xe0] sm:$0xff]
      %v1641 = vld [vmem:[#allocation4 + $0xe8] sm:$0xff]
      %v1642 = vld [vmem:[#allocation4 + $0xf0] sm:$0xff]
      %v1643 = vld [vmem:[#allocation4 + $0xf8] sm:$0xff]
      %v1644 = vadd.f32 %v1612, %v1486
      %v1645 = vadd.f32 %v1613, %v1489
      %v1646 = vadd.f32 %v1614, %v1494
      %v1647 = vadd.f32 %v1615, %v1497
      %v1648 = vadd.f32 %v1616, %v1502
      %v1649 = vadd.f32 %v1617, %v1505
      %v1650 = vadd.f32 %v1618, %v1510
      %v1651 = vadd.f32 %v1619, %v1513
      %v1652 = vadd.f32 %v1620, %v1518
      %v1653 = vadd.f32 %v1621, %v1521
      %v1654 = vadd.f32 %v1622, %v1526
      %v1655 = vadd.f32 %v1623, %v1529
      %v1656 = vadd.f32 %v1624, %v1534
      %v1657 = vadd.f32 %v1625, %v1537
      %v1658 = vadd.f32 %v1626, %v1542
      %v1659 = vadd.f32 %v1627, %v1545
      %v1660 = vadd.f32 %v1628, %v1550
      %v1661 = vadd.f32 %v1629, %v1553
      %v1662 = vadd.f32 %v1630, %v1558
      %v1663 = vadd.f32 %v1631, %v1561
      %v1664 = vadd.f32 %v1632, %v1566
      %v1665 = vadd.f32 %v1633, %v1569
      %v1666 = vadd.f32 %v1634, %v1574
      %v1667 = vadd.f32 %v1635, %v1577
      %v1668 = vadd.f32 %v1636, %v1582
      %v1669 = vadd.f32 %v1637, %v1585
      %v1670 = vadd.f32 %v1638, %v1590
      %v1671 = vadd.f32 %v1639, %v1593
      %v1672 = vadd.f32 %v1640, %v1598
      %v1673 = vadd.f32 %v1641, %v1601
      %v1674 = vadd.f32 %v1642, %v1606
      %v1675 = vadd.f32 %v1643, %v1609
      %1676 = vst [vmem:[#allocation4] sm:$0xff] %v1644
      %1677 = vst [vmem:[#allocation4 + $0x8] sm:$0xff] %v1645
      %1678 = vst [vmem:[#allocation4 + $0x10] sm:$0xff] %v1646
      %1679 = vst [vmem:[#allocation4 + $0x18] sm:$0xff] %v1647
      %1680 = vst [vmem:[#allocation4 + $0x20] sm:$0xff] %v1648
      %1681 = vst [vmem:[#allocation4 + $0x28] sm:$0xff] %v1649
      %1682 = vst [vmem:[#allocation4 + $0x30] sm:$0xff] %v1650
      %1683 = vst [vmem:[#allocation4 + $0x38] sm:$0xff] %v1651
      %1684 = vst [vmem:[#allocation4 + $0x40] sm:$0xff] %v1652
      %1685 = vst [vmem:[#allocation4 + $0x48] sm:$0xff] %v1653
      %1686 = vst [vmem:[#allocation4 + $0x50] sm:$0xff] %v1654
      %1687 = vst [vmem:[#allocation4 + $0x58] sm:$0xff] %v1655
      %1688 = vst [vmem:[#allocation4 + $0x60] sm:$0xff] %v1656
      %1689 = vst [vmem:[#allocation4 + $0x68] sm:$0xff] %v1657
      %1690 = vst [vmem:[#allocation4 + $0x70] sm:$0xff] %v1658
      %1691 = vst [vmem:[#allocation4 + $0x78] sm:$0xff] %v1659
      %1692 = vst [vmem:[#allocation4 + $0x80] sm:$0xff] %v1660
      %1693 = vst [vmem:[#allocation4 + $0x88] sm:$0xff] %v1661
      %1694 = vst [vmem:[#allocation4 + $0x90] sm:$0xff] %v1662
      %1695 = vst [vmem:[#allocation4 + $0x98] sm:$0xff] %v1663
      %1696 = vst [vmem:[#allocation4 + $0xa0] sm:$0xff] %v1664
      %1697 = vst [vmem:[#allocation4 + $0xa8] sm:$0xff] %v1665
      %1698 = vst [vmem:[#allocation4 + $0xb0] sm:$0xff] %v1666
      %1699 = vst [vmem:[#allocation4 + $0xb8] sm:$0xff] %v1667
      %1700 = vst [vmem:[#allocation4 + $0xc0] sm:$0xff] %v1668
      %1701 = vst [vmem:[#allocation4 + $0xc8] sm:$0xff] %v1669
      %1702 = vst [vmem:[#allocation4 + $0xd0] sm:$0xff] %v1670
      %1703 = vst [vmem:[#allocation4 + $0xd8] sm:$0xff] %v1671
      %1704 = vst [vmem:[#allocation4 + $0xe0] sm:$0xff] %v1672
      %1705 = vst [vmem:[#allocation4 + $0xe8] sm:$0xff] %v1673
      %1706 = vst [vmem:[#allocation4 + $0xf0] sm:$0xff] %v1674
      %1707 = vst [vmem:[#allocation4 + $0xf8] sm:$0xff] %v1675
      %s1708 = scalar_lea.vmem [#allocation2], 16
      %v1709 = vld [vmem:[%s1708] sm:$0xf]
      %v1710 = vld [vmem:[%s1708 + $0x4] sm:$0xf]
      %v1711 = vld [vmem:[%s1708 + $0x8] sm:$0xf]
      %v1712 = vld [vmem:[%s1708 + $0xc] sm:$0xf]
      %v1713 = vld [vmem:[%s1708 + $0x10] sm:$0xf]
      %v1714 = vld [vmem:[%s1708 + $0x14] sm:$0xf]
      %v1715 = vld [vmem:[%s1708 + $0x18] sm:$0xf]
      %v1716 = vld [vmem:[%s1708 + $0x1c] sm:$0xf]
      %v1717 = vld [vmem:[%s1708 + $0x20] sm:$0xf]
      %v1718 = vld [vmem:[%s1708 + $0x24] sm:$0xf]
      %v1719 = vld [vmem:[%s1708 + $0x28] sm:$0xf]
      %v1720 = vld [vmem:[%s1708 + $0x2c] sm:$0xf]
      %v1721 = vld [vmem:[%s1708 + $0x30] sm:$0xf]
      %v1722 = vld [vmem:[%s1708 + $0x34] sm:$0xf]
      %v1723 = vld [vmem:[%s1708 + $0x38] sm:$0xf]
      %v1724 = vld [vmem:[%s1708 + $0x3c] sm:$0xf]
      %v1725 = vld [vmem:[%s1708 + $0x40] sm:$0xf]
      %v1726 = vld [vmem:[%s1708 + $0x44] sm:$0xf]
      %v1727 = vld [vmem:[%s1708 + $0x48] sm:$0xf]
      %v1728 = vld [vmem:[%s1708 + $0x4c] sm:$0xf]
      %v1729 = vld [vmem:[%s1708 + $0x50] sm:$0xf]
      %v1730 = vld [vmem:[%s1708 + $0x54] sm:$0xf]
      %v1731 = vld [vmem:[%s1708 + $0x58] sm:$0xf]
      %v1732 = vld [vmem:[%s1708 + $0x5c] sm:$0xf]
      %v1733 = vld [vmem:[%s1708 + $0x60] sm:$0xf]
      %v1734 = vld [vmem:[%s1708 + $0x64] sm:$0xf]
      %v1735 = vld [vmem:[%s1708 + $0x68] sm:$0xf]
      %v1736 = vld [vmem:[%s1708 + $0x6c] sm:$0xf]
      %v1737 = vld [vmem:[%s1708 + $0x70] sm:$0xf]
      %v1738 = vld [vmem:[%s1708 + $0x74] sm:$0xf]
      %v1739 = vld [vmem:[%s1708 + $0x78] sm:$0xf]
      %v1740 = vld [vmem:[%s1708 + $0x7c] sm:$0xf]
      %s1741 = scalar_lea.vmem %s1, 24
      %v1742 = vld [vmem:[%s1741] sm:$0xf]
      %v1743 = vld [vmem:[%s1741 + $0x4] sm:$0xf]
      %v1744 = vld [vmem:[%s1741 + $0x8] sm:$0xf]
      %v1777 = vunpack.c.l.b16 %v1709
      %v1778 = vunpack.c.l.b16 %v1710
      %v1779 = vunpack.c.l.b16 %v1711
      %v1780 = vunpack.c.l.b16 %v1712
      %v1781 = vunpack.c.l.b16 %v1713
      %v1782 = vunpack.c.l.b16 %v1714
      %v1783 = vunpack.c.l.b16 %v1715
      %v1784 = vunpack.c.l.b16 %v1716
      %v1785 = vunpack.c.l.b16 %v1717
      %v1786 = vunpack.c.l.b16 %v1718
      %v1787 = vunpack.c.l.b16 %v1719
      %v1788 = vunpack.c.l.b16 %v1720
      %v1789 = vunpack.c.l.b16 %v1721
      %v1790 = vunpack.c.l.b16 %v1722
      %v1791 = vunpack.c.l.b16 %v1723
      %v1792 = vunpack.c.l.b16 %v1724
      %v1793 = vunpack.c.l.b16 %v1725
      %v1794 = vunpack.c.l.b16 %v1726
      %v1795 = vunpack.c.l.b16 %v1727
      %v1796 = vunpack.c.l.b16 %v1728
      %v1797 = vunpack.c.l.b16 %v1729
      %v1798 = vunpack.c.l.b16 %v1730
      %v1799 = vunpack.c.l.b16 %v1731
      %v1800 = vunpack.c.l.b16 %v1732
      %v1801 = vunpack.c.l.b16 %v1733
      %v1802 = vunpack.c.l.b16 %v1734
      %v1803 = vunpack.c.l.b16 %v1735
      %v1804 = vunpack.c.l.b16 %v1736
      %v1805 = vunpack.c.l.b16 %v1737
      %v1806 = vunpack.c.l.b16 %v1738
      %v1807 = vunpack.c.l.b16 %v1739
      %v1808 = vunpack.c.l.b16 %v1740
      %v1809 = vpack.c.b16 %v1778, %v1777
      %v1810 = vpack.c.b16 %v1780, %v1779
      %v1811 = vpack.c.b16 %v1782, %v1781
      %v1812 = vpack.c.b16 %v1784, %v1783
      %v1813 = vpack.c.b16 %v1786, %v1785
      %v1814 = vpack.c.b16 %v1788, %v1787
      %v1815 = vpack.c.b16 %v1790, %v1789
      %v1816 = vpack.c.b16 %v1792, %v1791
      %v1817 = vpack.c.b16 %v1794, %v1793
      %v1818 = vpack.c.b16 %v1796, %v1795
      %v1819 = vpack.c.b16 %v1798, %v1797
      %v1820 = vpack.c.b16 %v1800, %v1799
      %v1821 = vpack.c.b16 %v1802, %v1801
      %v1822 = vpack.c.b16 %v1804, %v1803
      %v1823 = vpack.c.b16 %v1806, %v1805
      %v1824 = vpack.c.b16 %v1808, %v1807
      %v1828 = vunpack.c.l.b16 %v1742
      %v1829 = vunpack.c.l.b16 %v1743
      %v1830 = vunpack.c.l.b16 %v1744
      %v1831 = vpack.c.b16 %v1829, %v1828
      %v1832 = vpack.c.b16 %v1830, %v1830
      %v1835 = vsel %vm1029, %v1809, 0
      %v1838 = vsel %vm1029, %v1810, 0
      %v1841 = vsel %vm1029, %v1811, 0
      %v1844 = vsel %vm1029, %v1812, 0
      %v1847 = vsel %vm1029, %v1813, 0
      %v1850 = vsel %vm1029, %v1814, 0
      %v1853 = vsel %vm1029, %v1815, 0
      %v1856 = vsel %vm1029, %v1816, 0
      %v1859 = vsel %vm1029, %v1817, 0
      %v1862 = vsel %vm1029, %v1818, 0
      %v1865 = vsel %vm1029, %v1819, 0
      %v1868 = vsel %vm1029, %v1820, 0
      %v1871 = vsel %vm1029, %v1821, 0
      %v1874 = vsel %vm1029, %v1822, 0
      %v1877 = vsel %vm1029, %v1823, 0
      %v1880 = vsel %vm1029, %v1824, 0
      %v1883 = vsel %vm1078, %v1832, 0
      %1885 = vmatprep.subr.bf16.mxu0 0
      %1886 = vmatpush1.bf16.msra.mxu0 0
      %1887 = vmatprep.subr.bf16.mxu0 0
      %1888 = vmatpush1.bf16.msra.mxu0 0
      %1889 = vmatprep.subr.bf16.mxu0 0
      %1890 = vmatpush1.bf16.msra.mxu0 0
      %1891 = vmatprep.subr.bf16.mxu0 0
      %1892 = vmatpush1.bf16.msra.mxu0 0
      %1893 = vmatprep.subr.bf16.mxu0 0
      %1894 = vmatpush1.bf16.msra.mxu0 0
      %1895 = vmatprep.subr.bf16.mxu0 0
      %1896 = vmatpush1.bf16.msra.mxu0 0
      %1897 = vmatprep.subr.bf16.mxu0 0
      %1898 = vmatpush1.bf16.msra.mxu0 %v1883
      %1899 = vmatprep.subr.bf16.mxu0 0
      %1900 = vmatpush1.bf16.msra.mxu0 %v1831
      %1901 = vmatprep.subr.bf16.mxu0 0
      %1902 = vmatpush2.bf16.msra.mxu0 0
      %1903 = vmatprep.subr.bf16.mxu0 0
      %1904 = vmatpush2.bf16.msra.mxu0 0
      %1905 = vmatprep.subr.bf16.mxu0 0
      %1906 = vmatpush2.bf16.msra.mxu0 0
      %1907 = vmatprep.subr.bf16.mxu0 0
      %1908 = vmatpush2.bf16.msra.mxu0 0
      %1909 = vmatprep.subr.bf16.mxu0 0
      %1910 = vmatpush2.bf16.msra.mxu0 0
      %1911 = vmatprep.subr.bf16.mxu0 0
      %1912 = vmatpush2.bf16.msra.mxu0 0
      %1913 = vmatprep.subr.bf16.mxu0 0
      %1914 = vmatpush2.bf16.msra.mxu0 0
      %1915 = vmatprep.subr.bf16.mxu0 0
      %1916 = vmatpush2.bf16.msra.mxu0 0
      %1917 = vmatprep.mubr.bf16.mxu0 0
      %1918 = vmatmul.mubr.bf16.gmra.mxu0 %v1835
      %v1919 = vpop.f32.mrf.mxu0
      %v1920 = vadd.f32 0.0, %v1919
      %v1921 = vpop.f32.mrf.mxu0
      %v1922 = vpop.f32.mrf.mxu0
      %v1923 = vadd.f32 0.0, %v1922
      %v1924 = vpop.f32.mrf.mxu0
      %1925 = vmatprep.mubr.bf16.mxu0 0
      %1926 = vmatmul.mubr.bf16.gmra.mxu0 %v1838
      %v1927 = vpop.f32.mrf.mxu0
      %v1928 = vadd.f32 0.0, %v1927
      %v1929 = vpop.f32.mrf.mxu0
      %v1930 = vpop.f32.mrf.mxu0
      %v1931 = vadd.f32 0.0, %v1930
      %v1932 = vpop.f32.mrf.mxu0
      %1933 = vmatprep.mubr.bf16.mxu0 0
      %1934 = vmatmul.mubr.bf16.gmra.mxu0 %v1841
      %v1935 = vpop.f32.mrf.mxu0
      %v1936 = vadd.f32 0.0, %v1935
      %v1937 = vpop.f32.mrf.mxu0
      %v1938 = vpop.f32.mrf.mxu0
      %v1939 = vadd.f32 0.0, %v1938
      %v1940 = vpop.f32.mrf.mxu0
      %1941 = vmatprep.mubr.bf16.mxu0 0
      %1942 = vmatmul.mubr.bf16.gmra.mxu0 %v1844
      %v1943 = vpop.f32.mrf.mxu0
      %v1944 = vadd.f32 0.0, %v1943
      %v1945 = vpop.f32.mrf.mxu0
      %v1946 = vpop.f32.mrf.mxu0
      %v1947 = vadd.f32 0.0, %v1946
      %v1948 = vpop.f32.mrf.mxu0
      %1949 = vmatprep.mubr.bf16.mxu0 0
      %1950 = vmatmul.mubr.bf16.gmra.mxu0 %v1847
      %v1951 = vpop.f32.mrf.mxu0
      %v1952 = vadd.f32 0.0, %v1951
      %v1953 = vpop.f32.mrf.mxu0
      %v1954 = vpop.f32.mrf.mxu0
      %v1955 = vadd.f32 0.0, %v1954
      %v1956 = vpop.f32.mrf.mxu0
      %1957 = vmatprep.mubr.bf16.mxu0 0
      %1958 = vmatmul.mubr.bf16.gmra.mxu0 %v1850
      %v1959 = vpop.f32.mrf.mxu0
      %v1960 = vadd.f32 0.0, %v1959
      %v1961 = vpop.f32.mrf.mxu0
      %v1962 = vpop.f32.mrf.mxu0
      %v1963 = vadd.f32 0.0, %v1962
      %v1964 = vpop.f32.mrf.mxu0
      %1965 = vmatprep.mubr.bf16.mxu0 0
      %1966 = vmatmul.mubr.bf16.gmra.mxu0 %v1853
      %v1967 = vpop.f32.mrf.mxu0
      %v1968 = vadd.f32 0.0, %v1967
      %v1969 = vpop.f32.mrf.mxu0
      %v1970 = vpop.f32.mrf.mxu0
      %v1971 = vadd.f32 0.0, %v1970
      %v1972 = vpop.f32.mrf.mxu0
      %1973 = vmatprep.mubr.bf16.mxu0 0
      %1974 = vmatmul.mubr.bf16.gmra.mxu0 %v1856
      %v1975 = vpop.f32.mrf.mxu0
      %v1976 = vadd.f32 0.0, %v1975
      %v1977 = vpop.f32.mrf.mxu0
      %v1978 = vpop.f32.mrf.mxu0
      %v1979 = vadd.f32 0.0, %v1978
      %v1980 = vpop.f32.mrf.mxu0
      %1981 = vmatprep.mubr.bf16.mxu0 0
      %1982 = vmatmul.mubr.bf16.gmra.mxu0 %v1859
      %v1983 = vpop.f32.mrf.mxu0
      %v1984 = vadd.f32 0.0, %v1983
      %v1985 = vpop.f32.mrf.mxu0
      %v1986 = vpop.f32.mrf.mxu0
      %v1987 = vadd.f32 0.0, %v1986
      %v1988 = vpop.f32.mrf.mxu0
      %1989 = vmatprep.mubr.bf16.mxu0 0
      %1990 = vmatmul.mubr.bf16.gmra.mxu0 %v1862
      %v1991 = vpop.f32.mrf.mxu0
      %v1992 = vadd.f32 0.0, %v1991
      %v1993 = vpop.f32.mrf.mxu0
      %v1994 = vpop.f32.mrf.mxu0
      %v1995 = vadd.f32 0.0, %v1994
      %v1996 = vpop.f32.mrf.mxu0
      %1997 = vmatprep.mubr.bf16.mxu0 0
      %1998 = vmatmul.mubr.bf16.gmra.mxu0 %v1865
      %v1999 = vpop.f32.mrf.mxu0
      %v2000 = vadd.f32 0.0, %v1999
      %v2001 = vpop.f32.mrf.mxu0
      %v2002 = vpop.f32.mrf.mxu0
      %v2003 = vadd.f32 0.0, %v2002
      %v2004 = vpop.f32.mrf.mxu0
      %2005 = vmatprep.mubr.bf16.mxu0 0
      %2006 = vmatmul.mubr.bf16.gmra.mxu0 %v1868
      %v2007 = vpop.f32.mrf.mxu0
      %v2008 = vadd.f32 0.0, %v2007
      %v2009 = vpop.f32.mrf.mxu0
      %v2010 = vpop.f32.mrf.mxu0
      %v2011 = vadd.f32 0.0, %v2010
      %v2012 = vpop.f32.mrf.mxu0
      %2013 = vmatprep.mubr.bf16.mxu0 0
      %2014 = vmatmul.mubr.bf16.gmra.mxu0 %v1871
      %v2015 = vpop.f32.mrf.mxu0
      %v2016 = vadd.f32 0.0, %v2015
      %v2017 = vpop.f32.mrf.mxu0
      %v2018 = vpop.f32.mrf.mxu0
      %v2019 = vadd.f32 0.0, %v2018
      %v2020 = vpop.f32.mrf.mxu0
      %2021 = vmatprep.mubr.bf16.mxu0 0
      %2022 = vmatmul.mubr.bf16.gmra.mxu0 %v1874
      %v2023 = vpop.f32.mrf.mxu0
      %v2024 = vadd.f32 0.0, %v2023
      %v2025 = vpop.f32.mrf.mxu0
      %v2026 = vpop.f32.mrf.mxu0
      %v2027 = vadd.f32 0.0, %v2026
      %v2028 = vpop.f32.mrf.mxu0
      %2029 = vmatprep.mubr.bf16.mxu0 0
      %2030 = vmatmul.mubr.bf16.gmra.mxu0 %v1877
      %v2031 = vpop.f32.mrf.mxu0
      %v2032 = vadd.f32 0.0, %v2031
      %v2033 = vpop.f32.mrf.mxu0
      %v2034 = vpop.f32.mrf.mxu0
      %v2035 = vadd.f32 0.0, %v2034
      %v2036 = vpop.f32.mrf.mxu0
      %2037 = vmatprep.mubr.bf16.mxu0 0
      %2038 = vmatmul.mubr.bf16.gmra.mxu0 %v1880
      %v2039 = vpop.f32.mrf.mxu0
      %v2040 = vadd.f32 0.0, %v2039
      %v2041 = vpop.f32.mrf.mxu0
      %v2042 = vpop.f32.mrf.mxu0
      %v2043 = vadd.f32 0.0, %v2042
      %v2044 = vpop.f32.mrf.mxu0
      %2045 = vdwg.mxu0
      %v2046 = vld [vmem:[#allocation4] sm:$0xff]
      %v2047 = vld [vmem:[#allocation4 + $0x8] sm:$0xff]
      %v2048 = vld [vmem:[#allocation4 + $0x10] sm:$0xff]
      %v2049 = vld [vmem:[#allocation4 + $0x18] sm:$0xff]
      %v2050 = vld [vmem:[#allocation4 + $0x20] sm:$0xff]
      %v2051 = vld [vmem:[#allocation4 + $0x28] sm:$0xff]
      %v2052 = vld [vmem:[#allocation4 + $0x30] sm:$0xff]
      %v2053 = vld [vmem:[#allocation4 + $0x38] sm:$0xff]
      %v2054 = vld [vmem:[#allocation4 + $0x40] sm:$0xff]
      %v2055 = vld [vmem:[#allocation4 + $0x48] sm:$0xff]
      %v2056 = vld [vmem:[#allocation4 + $0x50] sm:$0xff]
      %v2057 = vld [vmem:[#allocation4 + $0x58] sm:$0xff]
      %v2058 = vld [vmem:[#allocation4 + $0x60] sm:$0xff]
      %v2059 = vld [vmem:[#allocation4 + $0x68] sm:$0xff]
      %v2060 = vld [vmem:[#allocation4 + $0x70] sm:$0xff]
      %v2061 = vld [vmem:[#allocation4 + $0x78] sm:$0xff]
      %v2062 = vld [vmem:[#allocation4 + $0x80] sm:$0xff]
      %v2063 = vld [vmem:[#allocation4 + $0x88] sm:$0xff]
      %v2064 = vld [vmem:[#allocation4 + $0x90] sm:$0xff]
      %v2065 = vld [vmem:[#allocation4 + $0x98] sm:$0xff]
      %v2066 = vld [vmem:[#allocation4 + $0xa0] sm:$0xff]
      %v2067 = vld [vmem:[#allocation4 + $0xa8] sm:$0xff]
      %v2068 = vld [vmem:[#allocation4 + $0xb0] sm:$0xff]
      %v2069 = vld [vmem:[#allocation4 + $0xb8] sm:$0xff]
      %v2070 = vld [vmem:[#allocation4 + $0xc0] sm:$0xff]
      %v2071 = vld [vmem:[#allocation4 + $0xc8] sm:$0xff]
      %v2072 = vld [vmem:[#allocation4 + $0xd0] sm:$0xff]
      %v2073 = vld [vmem:[#allocation4 + $0xd8] sm:$0xff]
      %v2074 = vld [vmem:[#allocation4 + $0xe0] sm:$0xff]
      %v2075 = vld [vmem:[#allocation4 + $0xe8] sm:$0xff]
      %v2076 = vld [vmem:[#allocation4 + $0xf0] sm:$0xff]
      %v2077 = vld [vmem:[#allocation4 + $0xf8] sm:$0xff]
      %v2078 = vadd.f32 %v2046, %v1920
      %v2079 = vadd.f32 %v2047, %v1923
      %v2080 = vadd.f32 %v2048, %v1928
      %v2081 = vadd.f32 %v2049, %v1931
      %v2082 = vadd.f32 %v2050, %v1936
      %v2083 = vadd.f32 %v2051, %v1939
      %v2084 = vadd.f32 %v2052, %v1944
      %v2085 = vadd.f32 %v2053, %v1947
      %v2086 = vadd.f32 %v2054, %v1952
      %v2087 = vadd.f32 %v2055, %v1955
      %v2088 = vadd.f32 %v2056, %v1960
      %v2089 = vadd.f32 %v2057, %v1963
      %v2090 = vadd.f32 %v2058, %v1968
      %v2091 = vadd.f32 %v2059, %v1971
      %v2092 = vadd.f32 %v2060, %v1976
      %v2093 = vadd.f32 %v2061, %v1979
      %v2094 = vadd.f32 %v2062, %v1984
      %v2095 = vadd.f32 %v2063, %v1987
      %v2096 = vadd.f32 %v2064, %v1992
      %v2097 = vadd.f32 %v2065, %v1995
      %v2098 = vadd.f32 %v2066, %v2000
      %v2099 = vadd.f32 %v2067, %v2003
      %v2100 = vadd.f32 %v2068, %v2008
      %v2101 = vadd.f32 %v2069, %v2011
      %v2102 = vadd.f32 %v2070, %v2016
      %v2103 = vadd.f32 %v2071, %v2019
      %v2104 = vadd.f32 %v2072, %v2024
      %v2105 = vadd.f32 %v2073, %v2027
      %v2106 = vadd.f32 %v2074, %v2032
      %v2107 = vadd.f32 %v2075, %v2035
      %v2108 = vadd.f32 %v2076, %v2040
      %v2109 = vadd.f32 %v2077, %v2043
      %2110 = vst [vmem:[#allocation4] sm:$0xff] %v2078
      %2111 = vst [vmem:[#allocation4 + $0x8] sm:$0xff] %v2079
      %2112 = vst [vmem:[#allocation4 + $0x10] sm:$0xff] %v2080
      %2113 = vst [vmem:[#allocation4 + $0x18] sm:$0xff] %v2081
      %2114 = vst [vmem:[#allocation4 + $0x20] sm:$0xff] %v2082
      %2115 = vst [vmem:[#allocation4 + $0x28] sm:$0xff] %v2083
      %2116 = vst [vmem:[#allocation4 + $0x30] sm:$0xff] %v2084
      %2117 = vst [vmem:[#allocation4 + $0x38] sm:$0xff] %v2085
      %2118 = vst [vmem:[#allocation4 + $0x40] sm:$0xff] %v2086
      %2119 = vst [vmem:[#allocation4 + $0x48] sm:$0xff] %v2087
      %2120 = vst [vmem:[#allocation4 + $0x50] sm:$0xff] %v2088
      %2121 = vst [vmem:[#allocation4 + $0x58] sm:$0xff] %v2089
      %2122 = vst [vmem:[#allocation4 + $0x60] sm:$0xff] %v2090
      %2123 = vst [vmem:[#allocation4 + $0x68] sm:$0xff] %v2091
      %2124 = vst [vmem:[#allocation4 + $0x70] sm:$0xff] %v2092
      %2125 = vst [vmem:[#allocation4 + $0x78] sm:$0xff] %v2093
      %2126 = vst [vmem:[#allocation4 + $0x80] sm:$0xff] %v2094
      %2127 = vst [vmem:[#allocation4 + $0x88] sm:$0xff] %v2095
      %2128 = vst [vmem:[#allocation4 + $0x90] sm:$0xff] %v2096
      %2129 = vst [vmem:[#allocation4 + $0x98] sm:$0xff] %v2097
      %2130 = vst [vmem:[#allocation4 + $0xa0] sm:$0xff] %v2098
      %2131 = vst [vmem:[#allocation4 + $0xa8] sm:$0xff] %v2099
      %2132 = vst [vmem:[#allocation4 + $0xb0] sm:$0xff] %v2100
      %2133 = vst [vmem:[#allocation4 + $0xb8] sm:$0xff] %v2101
      %2134 = vst [vmem:[#allocation4 + $0xc0] sm:$0xff] %v2102
      %2135 = vst [vmem:[#allocation4 + $0xc8] sm:$0xff] %v2103
      %2136 = vst [vmem:[#allocation4 + $0xd0] sm:$0xff] %v2104
      %2137 = vst [vmem:[#allocation4 + $0xd8] sm:$0xff] %v2105
      %2138 = vst [vmem:[#allocation4 + $0xe0] sm:$0xff] %v2106
      %2139 = vst [vmem:[#allocation4 + $0xe8] sm:$0xff] %v2107
      %2140 = vst [vmem:[#allocation4 + $0xf0] sm:$0xff] %v2108
      %2141 = vst [vmem:[#allocation4 + $0xf8] sm:$0xff] %v2109
      %v2142 = vld [vmem:[#allocation4] sm:$0xff]
      %v2143 = vld [vmem:[#allocation4 + $0x8] sm:$0xff]
      %v2144 = vld [vmem:[#allocation4 + $0x10] sm:$0xff]
      %v2145 = vld [vmem:[#allocation4 + $0x18] sm:$0xff]
      %v2146 = vld [vmem:[#allocation4 + $0x20] sm:$0xff]
      %v2147 = vld [vmem:[#allocation4 + $0x28] sm:$0xff]
      %v2148 = vld [vmem:[#allocation4 + $0x30] sm:$0xff]
      %v2149 = vld [vmem:[#allocation4 + $0x38] sm:$0xff]
      %v2150 = vld [vmem:[#allocation4 + $0x40] sm:$0xff]
      %v2151 = vld [vmem:[#allocation4 + $0x48] sm:$0xff]
      %v2152 = vld [vmem:[#allocation4 + $0x50] sm:$0xff]
      %v2153 = vld [vmem:[#allocation4 + $0x58] sm:$0xff]
      %v2154 = vld [vmem:[#allocation4 + $0x60] sm:$0xff]
      %v2155 = vld [vmem:[#allocation4 + $0x68] sm:$0xff]
      %v2156 = vld [vmem:[#allocation4 + $0x70] sm:$0xff]
      %v2157 = vld [vmem:[#allocation4 + $0x78] sm:$0xff]
      %v2158 = vld [vmem:[#allocation4 + $0x80] sm:$0xff]
      %v2159 = vld [vmem:[#allocation4 + $0x88] sm:$0xff]
      %v2160 = vld [vmem:[#allocation4 + $0x90] sm:$0xff]
      %v2161 = vld [vmem:[#allocation4 + $0x98] sm:$0xff]
      %v2162 = vld [vmem:[#allocation4 + $0xa0] sm:$0xff]
      %v2163 = vld [vmem:[#allocation4 + $0xa8] sm:$0xff]
      %v2164 = vld [vmem:[#allocation4 + $0xb0] sm:$0xff]
      %v2165 = vld [vmem:[#allocation4 + $0xb8] sm:$0xff]
      %v2166 = vld [vmem:[#allocation4 + $0xc0] sm:$0xff]
      %v2167 = vld [vmem:[#allocation4 + $0xc8] sm:$0xff]
      %v2168 = vld [vmem:[#allocation4 + $0xd0] sm:$0xff]
      %v2169 = vld [vmem:[#allocation4 + $0xd8] sm:$0xff]
      %v2170 = vld [vmem:[#allocation4 + $0xe0] sm:$0xff]
      %v2171 = vld [vmem:[#allocation4 + $0xe8] sm:$0xff]
      %v2172 = vld [vmem:[#allocation4 + $0xf0] sm:$0xff]
      %v2173 = vld [vmem:[#allocation4 + $0xf8] sm:$0xff]
      %v2174 = vld [vmem:[%s2] sm:$0x1]
      %v2176 = vlaneseq
      %v2177 = vshrl.u32 %v2176, 7
      %v2178 = vsub.s32 0, %v2177
      %v2179 = vrot.slane %v2174, %v2178
      %v2181 = vadd.f32 %v2142, %v2179
      %v2182 = vadd.f32 %v2143, %v2179
      %v2183 = vadd.f32 %v2144, %v2179
      %v2184 = vadd.f32 %v2145, %v2179
      %v2185 = vadd.f32 %v2146, %v2179
      %v2186 = vadd.f32 %v2147, %v2179
      %v2187 = vadd.f32 %v2148, %v2179
      %v2188 = vadd.f32 %v2149, %v2179
      %v2189 = vadd.f32 %v2150, %v2179
      %v2190 = vadd.f32 %v2151, %v2179
      %v2191 = vadd.f32 %v2152, %v2179
      %v2192 = vadd.f32 %v2153, %v2179
      %v2193 = vadd.f32 %v2154, %v2179
      %v2194 = vadd.f32 %v2155, %v2179
      %v2195 = vadd.f32 %v2156, %v2179
      %v2196 = vadd.f32 %v2157, %v2179
      %v2197 = vadd.f32 %v2158, %v2179
      %v2198 = vadd.f32 %v2159, %v2179
      %v2199 = vadd.f32 %v2160, %v2179
      %v2200 = vadd.f32 %v2161, %v2179
      %v2201 = vadd.f32 %v2162, %v2179
      %v2202 = vadd.f32 %v2163, %v2179
      %v2203 = vadd.f32 %v2164, %v2179
      %v2204 = vadd.f32 %v2165, %v2179
      %v2205 = vadd.f32 %v2166, %v2179
      %v2206 = vadd.f32 %v2167, %v2179
      %v2207 = vadd.f32 %v2168, %v2179
      %v2208 = vadd.f32 %v2169, %v2179
      %v2209 = vadd.f32 %v2170, %v2179
      %v2210 = vadd.f32 %v2171, %v2179
      %v2211 = vadd.f32 %v2172, %v2179
      %v2212 = vadd.f32 %v2173, %v2179
      %v2213 = vmax.f32 %v2181, 0.0
      %v2214 = vmax.f32 %v2182, 0.0
      %v2215 = vmax.f32 %v2183, 0.0
      %v2216 = vmax.f32 %v2184, 0.0
      %v2217 = vmax.f32 %v2185, 0.0
      %v2218 = vmax.f32 %v2186, 0.0
      %v2219 = vmax.f32 %v2187, 0.0
      %v2220 = vmax.f32 %v2188, 0.0
      %v2221 = vmax.f32 %v2189, 0.0
      %v2222 = vmax.f32 %v2190, 0.0
      %v2223 = vmax.f32 %v2191, 0.0
      %v2224 = vmax.f32 %v2192, 0.0
      %v2225 = vmax.f32 %v2193, 0.0
      %v2226 = vmax.f32 %v2194, 0.0
      %v2227 = vmax.f32 %v2195, 0.0
      %v2228 = vmax.f32 %v2196, 0.0
      %v2229 = vmax.f32 %v2197, 0.0
      %v2230 = vmax.f32 %v2198, 0.0
      %v2231 = vmax.f32 %v2199, 0.0
      %v2232 = vmax.f32 %v2200, 0.0
      %v2233 = vmax.f32 %v2201, 0.0
      %v2234 = vmax.f32 %v2202, 0.0
      %v2235 = vmax.f32 %v2203, 0.0
      %v2236 = vmax.f32 %v2204, 0.0
      %v2237 = vmax.f32 %v2205, 0.0
      %v2238 = vmax.f32 %v2206, 0.0
      %v2239 = vmax.f32 %v2207, 0.0
      %v2240 = vmax.f32 %v2208, 0.0
      %v2241 = vmax.f32 %v2209, 0.0
      %v2242 = vmax.f32 %v2210, 0.0
      %v2243 = vmax.f32 %v2211, 0.0
      %v2244 = vmax.f32 %v2212, 0.0
      %v2245 = vpack.c.bf16 %v2214, %v2213
      %v2246 = vpack.c.bf16 %v2216, %v2215
      %v2247 = vpack.c.bf16 %v2218, %v2217
      %v2248 = vpack.c.bf16 %v2220, %v2219
      %v2249 = vpack.c.bf16 %v2222, %v2221
      %v2250 = vpack.c.bf16 %v2224, %v2223
      %v2251 = vpack.c.bf16 %v2226, %v2225
      %v2252 = vpack.c.bf16 %v2228, %v2227
      %v2253 = vpack.c.bf16 %v2230, %v2229
      %v2254 = vpack.c.bf16 %v2232, %v2231
      %v2255 = vpack.c.bf16 %v2234, %v2233
      %v2256 = vpack.c.bf16 %v2236, %v2235
      %v2257 = vpack.c.bf16 %v2238, %v2237
      %v2258 = vpack.c.bf16 %v2240, %v2239
      %v2259 = vpack.c.bf16 %v2242, %v2241
      %v2260 = vpack.c.bf16 %v2244, %v2243
      %v2262 = vshrl.u32 %v2245, 16
      %v2264 = vrot.slane %v2262, 7
      %v2265 = vshll.u32 %v2245, 16
      %v2267 = vor.u32 %v2264, %v2265
      %v2269 = vshrl.u32 %v2246, 16
      %v2271 = vrot.slane %v2269, 7
      %v2272 = vshll.u32 %v2246, 16
      %v2274 = vor.u32 %v2271, %v2272
      %v2276 = vshrl.u32 %v2247, 16
      %v2278 = vrot.slane %v2276, 7
      %v2279 = vshll.u32 %v2247, 16
      %v2281 = vor.u32 %v2278, %v2279
      %v2283 = vshrl.u32 %v2248, 16
      %v2285 = vrot.slane %v2283, 7
      %v2286 = vshll.u32 %v2248, 16
      %v2288 = vor.u32 %v2285, %v2286
      %v2290 = vshrl.u32 %v2249, 16
      %v2292 = vrot.slane %v2290, 7
      %v2293 = vshll.u32 %v2249, 16
      %v2295 = vor.u32 %v2292, %v2293
      %v2297 = vshrl.u32 %v2250, 16
      %v2299 = vrot.slane %v2297, 7
      %v2300 = vshll.u32 %v2250, 16
      %v2302 = vor.u32 %v2299, %v2300
      %v2304 = vshrl.u32 %v2251, 16
      %v2306 = vrot.slane %v2304, 7
      %v2307 = vshll.u32 %v2251, 16
      %v2309 = vor.u32 %v2306, %v2307
      %v2311 = vshrl.u32 %v2252, 16
      %v2313 = vrot.slane %v2311, 7
      %v2314 = vshll.u32 %v2252, 16
      %v2316 = vor.u32 %v2313, %v2314
      %v2318 = vshrl.u32 %v2253, 16
      %v2320 = vrot.slane %v2318, 7
      %v2321 = vshll.u32 %v2253, 16
      %v2323 = vor.u32 %v2320, %v2321
      %v2325 = vshrl.u32 %v2254, 16
      %v2327 = vrot.slane %v2325, 7
      %v2328 = vshll.u32 %v2254, 16
      %v2330 = vor.u32 %v2327, %v2328
      %v2332 = vshrl.u32 %v2255, 16
      %v2334 = vrot.slane %v2332, 7
      %v2335 = vshll.u32 %v2255, 16
      %v2337 = vor.u32 %v2334, %v2335
      %v2339 = vshrl.u32 %v2256, 16
      %v2341 = vrot.slane %v2339, 7
      %v2342 = vshll.u32 %v2256, 16
      %v2344 = vor.u32 %v2341, %v2342
      %v2346 = vshrl.u32 %v2257, 16
      %v2348 = vrot.slane %v2346, 7
      %v2349 = vshll.u32 %v2257, 16
      %v2351 = vor.u32 %v2348, %v2349
      %v2353 = vshrl.u32 %v2258, 16
      %v2355 = vrot.slane %v2353, 7
      %v2356 = vshll.u32 %v2258, 16
      %v2358 = vor.u32 %v2355, %v2356
      %v2360 = vshrl.u32 %v2259, 16
      %v2362 = vrot.slane %v2360, 7
      %v2363 = vshll.u32 %v2259, 16
      %v2365 = vor.u32 %v2362, %v2363
      %v2367 = vshrl.u32 %v2260, 16
      %v2369 = vrot.slane %v2367, 7
      %v2370 = vshll.u32 %v2260, 16
      %v2372 = vor.u32 %v2369, %v2370
      %v2389 = vsel %vm508, 0, %v2267
      %v2390 = vsel %vm508, 0, %v2274
      %v2391 = vsel %vm508, 0, %v2281
      %v2392 = vsel %vm508, 0, %v2288
      %v2393 = vsel %vm508, 0, %v2295
      %v2394 = vsel %vm508, 0, %v2302
      %v2395 = vsel %vm508, 0, %v2309
      %v2396 = vsel %vm508, 0, %v2316
      %v2397 = vsel %vm508, 0, %v2323
      %v2398 = vsel %vm508, 0, %v2330
      %v2399 = vsel %vm508, 0, %v2337
      %v2400 = vsel %vm508, 0, %v2344
      %v2401 = vsel %vm508, 0, %v2351
      %v2402 = vsel %vm508, 0, %v2358
      %v2403 = vsel %vm508, 0, %v2365
      %v2404 = vsel %vm508, 0, %v2372
      %v2405 = vrot.slane %v2265, 1
      %v2406 = vor.u32 %v2262, %v2405
      %v2407 = vrot.slane %v2272, 1
      %v2408 = vor.u32 %v2269, %v2407
      %v2409 = vrot.slane %v2279, 1
      %v2410 = vor.u32 %v2276, %v2409
      %v2411 = vrot.slane %v2286, 1
      %v2412 = vor.u32 %v2283, %v2411
      %v2413 = vrot.slane %v2293, 1
      %v2414 = vor.u32 %v2290, %v2413
      %v2415 = vrot.slane %v2300, 1
      %v2416 = vor.u32 %v2297, %v2415
      %v2417 = vrot.slane %v2307, 1
      %v2418 = vor.u32 %v2304, %v2417
      %v2419 = vrot.slane %v2314, 1
      %v2420 = vor.u32 %v2311, %v2419
      %v2421 = vrot.slane %v2321, 1
      %v2422 = vor.u32 %v2318, %v2421
      %v2423 = vrot.slane %v2328, 1
      %v2424 = vor.u32 %v2325, %v2423
      %v2425 = vrot.slane %v2335, 1
      %v2426 = vor.u32 %v2332, %v2425
      %v2427 = vrot.slane %v2342, 1
      %v2428 = vor.u32 %v2339, %v2427
      %v2429 = vrot.slane %v2349, 1
      %v2430 = vor.u32 %v2346, %v2429
      %v2431 = vrot.slane %v2356, 1
      %v2432 = vor.u32 %v2353, %v2431
      %v2433 = vrot.slane %v2363, 1
      %v2434 = vor.u32 %v2360, %v2433
      %v2435 = vrot.slane %v2370, 1
      %v2436 = vor.u32 %v2367, %v2435
      %v2453 = vsel %vm575, %v2406, 0
      %v2454 = vsel %vm575, %v2408, 0
      %v2455 = vsel %vm575, %v2410, 0
      %v2456 = vsel %vm575, %v2412, 0
      %v2457 = vsel %vm575, %v2414, 0
      %v2458 = vsel %vm575, %v2416, 0
      %v2459 = vsel %vm575, %v2418, 0
      %v2460 = vsel %vm575, %v2420, 0
      %v2461 = vsel %vm575, %v2422, 0
      %v2462 = vsel %vm575, %v2424, 0
      %v2463 = vsel %vm575, %v2426, 0
      %v2464 = vsel %vm575, %v2428, 0
      %v2465 = vsel %vm575, %v2430, 0
      %v2466 = vsel %vm575, %v2432, 0
      %v2467 = vsel %vm575, %v2434, 0
      %v2468 = vsel %vm575, %v2436, 0
      %v2517 = vunpack.c.l.b16 %v2389
      %v2518 = vunpack.c.l.b16 %v2245
      %v2519 = vunpack.c.l.b16 %v2453
      %v2520 = vunpack.c.h.b16 %v2389
      %v2521 = vunpack.c.h.b16 %v2245
      %v2522 = vunpack.c.h.b16 %v2453
      %v2523 = vunpack.c.l.b16 %v2390
      %v2524 = vunpack.c.l.b16 %v2246
      %v2525 = vunpack.c.l.b16 %v2454
      %v2526 = vunpack.c.h.b16 %v2390
      %v2527 = vunpack.c.h.b16 %v2246
      %v2528 = vunpack.c.h.b16 %v2454
      %v2529 = vunpack.c.l.b16 %v2391
      %v2530 = vunpack.c.l.b16 %v2247
      %v2531 = vunpack.c.l.b16 %v2455
      %v2532 = vunpack.c.h.b16 %v2391
      %v2533 = vunpack.c.h.b16 %v2247
      %v2534 = vunpack.c.h.b16 %v2455
      %v2535 = vunpack.c.l.b16 %v2392
      %v2536 = vunpack.c.l.b16 %v2248
      %v2537 = vunpack.c.l.b16 %v2456
      %v2538 = vunpack.c.h.b16 %v2392
      %v2539 = vunpack.c.h.b16 %v2248
      %v2540 = vunpack.c.h.b16 %v2456
      %v2541 = vunpack.c.l.b16 %v2393
      %v2542 = vunpack.c.l.b16 %v2249
      %v2543 = vunpack.c.l.b16 %v2457
      %v2544 = vunpack.c.h.b16 %v2393
      %v2545 = vunpack.c.h.b16 %v2249
      %v2546 = vunpack.c.h.b16 %v2457
      %v2547 = vunpack.c.l.b16 %v2394
      %v2548 = vunpack.c.l.b16 %v2250
      %v2549 = vunpack.c.l.b16 %v2458
      %v2550 = vunpack.c.h.b16 %v2394
      %v2551 = vunpack.c.h.b16 %v2250
      %v2552 = vunpack.c.h.b16 %v2458
      %v2553 = vunpack.c.l.b16 %v2395
      %v2554 = vunpack.c.l.b16 %v2251
      %v2555 = vunpack.c.l.b16 %v2459
      %v2556 = vunpack.c.h.b16 %v2395
      %v2557 = vunpack.c.h.b16 %v2251
      %v2558 = vunpack.c.h.b16 %v2459
      %v2559 = vunpack.c.l.b16 %v2396
      %v2560 = vunpack.c.l.b16 %v2252
      %v2561 = vunpack.c.l.b16 %v2460
      %v2562 = vunpack.c.h.b16 %v2396
      %v2563 = vunpack.c.h.b16 %v2252
      %v2564 = vunpack.c.h.b16 %v2460
      %v2565 = vunpack.c.l.b16 %v2397
      %v2566 = vunpack.c.l.b16 %v2253
      %v2567 = vunpack.c.l.b16 %v2461
      %v2568 = vunpack.c.h.b16 %v2397
      %v2569 = vunpack.c.h.b16 %v2253
      %v2570 = vunpack.c.h.b16 %v2461
      %v2571 = vunpack.c.l.b16 %v2398
      %v2572 = vunpack.c.l.b16 %v2254
      %v2573 = vunpack.c.l.b16 %v2462
      %v2574 = vunpack.c.h.b16 %v2398
      %v2575 = vunpack.c.h.b16 %v2254
      %v2576 = vunpack.c.h.b16 %v2462
      %v2577 = vunpack.c.l.b16 %v2399
      %v2578 = vunpack.c.l.b16 %v2255
      %v2579 = vunpack.c.l.b16 %v2463
      %v2580 = vunpack.c.h.b16 %v2399
      %v2581 = vunpack.c.h.b16 %v2255
      %v2582 = vunpack.c.h.b16 %v2463
      %v2583 = vunpack.c.l.b16 %v2400
      %v2584 = vunpack.c.l.b16 %v2256
      %v2585 = vunpack.c.l.b16 %v2464
      %v2586 = vunpack.c.h.b16 %v2400
      %v2587 = vunpack.c.h.b16 %v2256
      %v2588 = vunpack.c.h.b16 %v2464
      %v2589 = vunpack.c.l.b16 %v2401
      %v2590 = vunpack.c.l.b16 %v2257
      %v2591 = vunpack.c.l.b16 %v2465
      %v2592 = vunpack.c.h.b16 %v2401
      %v2593 = vunpack.c.h.b16 %v2257
      %v2594 = vunpack.c.h.b16 %v2465
      %v2595 = vunpack.c.l.b16 %v2402
      %v2596 = vunpack.c.l.b16 %v2258
      %v2597 = vunpack.c.l.b16 %v2466
      %v2598 = vunpack.c.h.b16 %v2402
      %v2599 = vunpack.c.h.b16 %v2258
      %v2600 = vunpack.c.h.b16 %v2466
      %v2601 = vunpack.c.l.b16 %v2403
      %v2602 = vunpack.c.l.b16 %v2259
      %v2603 = vunpack.c.l.b16 %v2467
      %v2604 = vunpack.c.h.b16 %v2403
      %v2605 = vunpack.c.h.b16 %v2259
      %v2606 = vunpack.c.h.b16 %v2467
      %v2607 = vunpack.c.l.b16 %v2404
      %v2608 = vunpack.c.l.b16 %v2260
      %v2609 = vunpack.c.l.b16 %v2468
      %v2610 = vunpack.c.h.b16 %v2404
      %v2611 = vunpack.c.h.b16 %v2260
      %v2612 = vunpack.c.h.b16 %v2468
      %v2613 = vpack.c.b16 %v2518, %v2517
      %v2614 = vpack.c.b16 %v2519, %v2519
      %v2615 = vpack.c.b16 %v2521, %v2520
      %v2616 = vpack.c.b16 %v2522, %v2522
      %v2617 = vpack.c.b16 %v2524, %v2523
      %v2618 = vpack.c.b16 %v2525, %v2525
      %v2619 = vpack.c.b16 %v2527, %v2526
      %v2620 = vpack.c.b16 %v2528, %v2528
      %v2621 = vpack.c.b16 %v2530, %v2529
      %v2622 = vpack.c.b16 %v2531, %v2531
      %v2623 = vpack.c.b16 %v2533, %v2532
      %v2624 = vpack.c.b16 %v2534, %v2534
      %v2625 = vpack.c.b16 %v2536, %v2535
      %v2626 = vpack.c.b16 %v2537, %v2537
      %v2627 = vpack.c.b16 %v2539, %v2538
      %v2628 = vpack.c.b16 %v2540, %v2540
      %v2629 = vpack.c.b16 %v2542, %v2541
      %v2630 = vpack.c.b16 %v2543, %v2543
      %v2631 = vpack.c.b16 %v2545, %v2544
      %v2632 = vpack.c.b16 %v2546, %v2546
      %v2633 = vpack.c.b16 %v2548, %v2547
      %v2634 = vpack.c.b16 %v2549, %v2549
      %v2635 = vpack.c.b16 %v2551, %v2550
      %v2636 = vpack.c.b16 %v2552, %v2552
      %v2637 = vpack.c.b16 %v2554, %v2553
      %v2638 = vpack.c.b16 %v2555, %v2555
      %v2639 = vpack.c.b16 %v2557, %v2556
      %v2640 = vpack.c.b16 %v2558, %v2558
      %v2641 = vpack.c.b16 %v2560, %v2559
      %v2642 = vpack.c.b16 %v2561, %v2561
      %v2643 = vpack.c.b16 %v2563, %v2562
      %v2644 = vpack.c.b16 %v2564, %v2564
      %v2645 = vpack.c.b16 %v2566, %v2565
      %v2646 = vpack.c.b16 %v2567, %v2567
      %v2647 = vpack.c.b16 %v2569, %v2568
      %v2648 = vpack.c.b16 %v2570, %v2570
      %v2649 = vpack.c.b16 %v2572, %v2571
      %v2650 = vpack.c.b16 %v2573, %v2573
      %v2651 = vpack.c.b16 %v2575, %v2574
      %v2652 = vpack.c.b16 %v2576, %v2576
      %v2653 = vpack.c.b16 %v2578, %v2577
      %v2654 = vpack.c.b16 %v2579, %v2579
      %v2655 = vpack.c.b16 %v2581, %v2580
      %v2656 = vpack.c.b16 %v2582, %v2582
      %v2657 = vpack.c.b16 %v2584, %v2583
      %v2658 = vpack.c.b16 %v2585, %v2585
      %v2659 = vpack.c.b16 %v2587, %v2586
      %v2660 = vpack.c.b16 %v2588, %v2588
      %v2661 = vpack.c.b16 %v2590, %v2589
      %v2662 = vpack.c.b16 %v2591, %v2591
      %v2663 = vpack.c.b16 %v2593, %v2592
      %v2664 = vpack.c.b16 %v2594, %v2594
      %v2665 = vpack.c.b16 %v2596, %v2595
      %v2666 = vpack.c.b16 %v2597, %v2597
      %v2667 = vpack.c.b16 %v2599, %v2598
      %v2668 = vpack.c.b16 %v2600, %v2600
      %v2669 = vpack.c.b16 %v2602, %v2601
      %v2670 = vpack.c.b16 %v2603, %v2603
      %v2671 = vpack.c.b16 %v2605, %v2604
      %v2672 = vpack.c.b16 %v2606, %v2606
      %v2673 = vpack.c.b16 %v2608, %v2607
      %v2674 = vpack.c.b16 %v2609, %v2609
      %v2675 = vpack.c.b16 %v2611, %v2610
      %v2676 = vpack.c.b16 %v2612, %v2612
      %s2741 = scalar_lea.vmem [#allocation3], 24
      %2742 = vst [vmem:[%s2741] sm:$0xff] %v2613
      %2743 = vst [vmem:[%s2741 + $0x8] sm:$0xf] %v2614
      %2744 = vst [vmem:[%s2741 + $0xc] sm:$0xff] %v2615
      %2745 = vst [vmem:[%s2741 + $0x14] sm:$0xf] %v2616
      %2746 = vst [vmem:[%s2741 + $0x18] sm:$0xff] %v2617
      %2747 = vst [vmem:[%s2741 + $0x20] sm:$0xf] %v2618
      %2748 = vst [vmem:[%s2741 + $0x24] sm:$0xff] %v2619
      %2749 = vst [vmem:[%s2741 + $0x2c] sm:$0xf] %v2620
      %2750 = vst [vmem:[%s2741 + $0x30] sm:$0xff] %v2621
      %2751 = vst [vmem:[%s2741 + $0x38] sm:$0xf] %v2622
      %2752 = vst [vmem:[%s2741 + $0x3c] sm:$0xff] %v2623
      %2753 = vst [vmem:[%s2741 + $0x44] sm:$0xf] %v2624
      %2754 = vst [vmem:[%s2741 + $0x48] sm:$0xff] %v2625
      %2755 = vst [vmem:[%s2741 + $0x50] sm:$0xf] %v2626
      %2756 = vst [vmem:[%s2741 + $0x54] sm:$0xff] %v2627
      %2757 = vst [vmem:[%s2741 + $0x5c] sm:$0xf] %v2628
      %2758 = vst [vmem:[%s2741 + $0x60] sm:$0xff] %v2629
      %2759 = vst [vmem:[%s2741 + $0x68] sm:$0xf] %v2630
      %2760 = vst [vmem:[%s2741 + $0x6c] sm:$0xff] %v2631
      %2761 = vst [vmem:[%s2741 + $0x74] sm:$0xf] %v2632
      %2762 = vst [vmem:[%s2741 + $0x78] sm:$0xff] %v2633
      %2763 = vst [vmem:[%s2741 + $0x80] sm:$0xf] %v2634
      %2764 = vst [vmem:[%s2741 + $0x84] sm:$0xff] %v2635
      %2765 = vst [vmem:[%s2741 + $0x8c] sm:$0xf] %v2636
      %2766 = vst [vmem:[%s2741 + $0x90] sm:$0xff] %v2637
      %2767 = vst [vmem:[%s2741 + $0x98] sm:$0xf] %v2638
      %2768 = vst [vmem:[%s2741 + $0x9c] sm:$0xff] %v2639
      %2769 = vst [vmem:[%s2741 + $0xa4] sm:$0xf] %v2640
      %2770 = vst [vmem:[%s2741 + $0xa8] sm:$0xff] %v2641
      %2771 = vst [vmem:[%s2741 + $0xb0] sm:$0xf] %v2642
      %2772 = vst [vmem:[%s2741 + $0xb4] sm:$0xff] %v2643
      %2773 = vst [vmem:[%s2741 + $0xbc] sm:$0xf] %v2644
      %2774 = vst [vmem:[%s2741 + $0xc0] sm:$0xff] %v2645
      %2775 = vst [vmem:[%s2741 + $0xc8] sm:$0xf] %v2646
      %2776 = vst [vmem:[%s2741 + $0xcc] sm:$0xff] %v2647
      %2777 = vst [vmem:[%s2741 + $0xd4] sm:$0xf] %v2648
      %2778 = vst [vmem:[%s2741 + $0xd8] sm:$0xff] %v2649
      %2779 = vst [vmem:[%s2741 + $0xe0] sm:$0xf] %v2650
      %2780 = vst [vmem:[%s2741 + $0xe4] sm:$0xff] %v2651
      %2781 = vst [vmem:[%s2741 + $0xec] sm:$0xf] %v2652
      %2782 = vst [vmem:[%s2741 + $0xf0] sm:$0xff] %v2653
      %2783 = vst [vmem:[%s2741 + $0xf8] sm:$0xf] %v2654
      %2784 = vst [vmem:[%s2741 + $0xfc] sm:$0xff] %v2655
      %2785 = vst [vmem:[%s2741 + $0x104] sm:$0xf] %v2656
      %2786 = vst [vmem:[%s2741 + $0x108] sm:$0xff] %v2657
      %2787 = vst [vmem:[%s2741 + $0x110] sm:$0xf] %v2658
      %2788 = vst [vmem:[%s2741 + $0x114] sm:$0xff] %v2659
      %2789 = vst [vmem:[%s2741 + $0x11c] sm:$0xf] %v2660
      %2790 = vst [vmem:[%s2741 + $0x120] sm:$0xff] %v2661
      %2791 = vst [vmem:[%s2741 + $0x128] sm:$0xf] %v2662
      %2792 = vst [vmem:[%s2741 + $0x12c] sm:$0xff] %v2663
      %2793 = vst [vmem:[%s2741 + $0x134] sm:$0xf] %v2664
      %2794 = vst [vmem:[%s2741 + $0x138] sm:$0xff] %v2665
      %2795 = vst [vmem:[%s2741 + $0x140] sm:$0xf] %v2666
      %2796 = vst [vmem:[%s2741 + $0x144] sm:$0xff] %v2667
      %2797 = vst [vmem:[%s2741 + $0x14c] sm:$0xf] %v2668
      %2798 = vst [vmem:[%s2741 + $0x150] sm:$0xff] %v2669
      %2799 = vst [vmem:[%s2741 + $0x158] sm:$0xf] %v2670
      %2800 = vst [vmem:[%s2741 + $0x15c] sm:$0xff] %v2671
      %2801 = vst [vmem:[%s2741 + $0x164] sm:$0xf] %v2672
      %2802 = vst [vmem:[%s2741 + $0x168] sm:$0xff] %v2673
      %2803 = vst [vmem:[%s2741 + $0x170] sm:$0xf] %v2674
      %2804 = vst [vmem:[%s2741 + $0x174] sm:$0xff] %v2675
      %2805 = vst [vmem:[%s2741 + $0x17c] sm:$0xf] %v2676
      %2806 = vst [vmem:[#allocation3] sm:$0xff] 0
      %2807 = vst [vmem:[#allocation3 + $0x8] sm:$0xf] 0
      %2808 = vst [vmem:[#allocation3 + $0xc] sm:$0xff] 0
      %2809 = vst [vmem:[#allocation3 + $0x14] sm:$0xf] 0
      %s2810 = scalar_lea.vmem [#allocation3], 408
      %2811 = vst [vmem:[%s2810] sm:$0xff] 0
      %2812 = vst [vmem:[%s2810 + $0x8] sm:$0xf] 0
      %2813 = vst [vmem:[%s2810 + $0xc] sm:$0xff] 0
      %2814 = vst [vmem:[%s2810 + $0x14] sm:$0xf] 0
      %v2815 = vld [vmem:[#allocation3] sm:$0xff]
      %v2816 = vld [vmem:[#allocation3 + $0x8] sm:$0xf]
      %v2817 = vld [vmem:[#allocation3 + $0xc] sm:$0xff]
      %v2818 = vld [vmem:[#allocation3 + $0x14] sm:$0xf]
      %v2819 = vld [vmem:[#allocation3 + $0x18] sm:$0xff]
      %v2820 = vld [vmem:[#allocation3 + $0x20] sm:$0xf]
      %v2821 = vld [vmem:[#allocation3 + $0x24] sm:$0xff]
      %v2822 = vld [vmem:[#allocation3 + $0x2c] sm:$0xf]
      %v2823 = vld [vmem:[#allocation3 + $0x30] sm:$0xff]
      %v2824 = vld [vmem:[#allocation3 + $0x38] sm:$0xf]
      %v2825 = vld [vmem:[#allocation3 + $0x3c] sm:$0xff]
      %v2826 = vld [vmem:[#allocation3 + $0x44] sm:$0xf]
      %v2827 = vld [vmem:[#allocation3 + $0x48] sm:$0xff]
      %v2828 = vld [vmem:[#allocation3 + $0x50] sm:$0xf]
      %v2829 = vld [vmem:[#allocation3 + $0x54] sm:$0xff]
      %v2830 = vld [vmem:[#allocation3 + $0x5c] sm:$0xf]
      %v2831 = vld [vmem:[#allocation3 + $0x60] sm:$0xff]
      %v2832 = vld [vmem:[#allocation3 + $0x68] sm:$0xf]
      %v2833 = vld [vmem:[#allocation3 + $0x6c] sm:$0xff]
      %v2834 = vld [vmem:[#allocation3 + $0x74] sm:$0xf]
      %v2835 = vld [vmem:[#allocation3 + $0x78] sm:$0xff]
      %v2836 = vld [vmem:[#allocation3 + $0x80] sm:$0xf]
      %v2837 = vld [vmem:[#allocation3 + $0x84] sm:$0xff]
      %v2838 = vld [vmem:[#allocation3 + $0x8c] sm:$0xf]
      %v2839 = vld [vmem:[#allocation3 + $0x90] sm:$0xff]
      %v2840 = vld [vmem:[#allocation3 + $0x98] sm:$0xf]
      %v2841 = vld [vmem:[#allocation3 + $0x9c] sm:$0xff]
      %v2842 = vld [vmem:[#allocation3 + $0xa4] sm:$0xf]
      %v2843 = vld [vmem:[#allocation3 + $0xa8] sm:$0xff]
      %v2844 = vld [vmem:[#allocation3 + $0xb0] sm:$0xf]
      %v2845 = vld [vmem:[#allocation3 + $0xb4] sm:$0xff]
      %v2846 = vld [vmem:[#allocation3 + $0xbc] sm:$0xf]
      %v2847 = vld [vmem:[#allocation3 + $0xc0] sm:$0xff]
      %v2848 = vld [vmem:[#allocation3 + $0xc8] sm:$0xf]
      %v2849 = vld [vmem:[#allocation3 + $0xcc] sm:$0xff]
      %v2850 = vld [vmem:[#allocation3 + $0xd4] sm:$0xf]
      %v2851 = vld [vmem:[#allocation3 + $0xd8] sm:$0xff]
      %v2852 = vld [vmem:[#allocation3 + $0xe0] sm:$0xf]
      %v2853 = vld [vmem:[#allocation3 + $0xe4] sm:$0xff]
      %v2854 = vld [vmem:[#allocation3 + $0xec] sm:$0xf]
      %v2855 = vld [vmem:[#allocation3 + $0xf0] sm:$0xff]
      %v2856 = vld [vmem:[#allocation3 + $0xf8] sm:$0xf]
      %v2857 = vld [vmem:[#allocation3 + $0xfc] sm:$0xff]
      %v2858 = vld [vmem:[#allocation3 + $0x104] sm:$0xf]
      %v2859 = vld [vmem:[#allocation3 + $0x108] sm:$0xff]
      %v2860 = vld [vmem:[#allocation3 + $0x110] sm:$0xf]
      %v2861 = vld [vmem:[#allocation3 + $0x114] sm:$0xff]
      %v2862 = vld [vmem:[#allocation3 + $0x11c] sm:$0xf]
      %v2863 = vld [vmem:[#allocation3 + $0x120] sm:$0xff]
      %v2864 = vld [vmem:[#allocation3 + $0x128] sm:$0xf]
      %v2865 = vld [vmem:[#allocation3 + $0x12c] sm:$0xff]
      %v2866 = vld [vmem:[#allocation3 + $0x134] sm:$0xf]
      %v2867 = vld [vmem:[#allocation3 + $0x138] sm:$0xff]
      %v2868 = vld [vmem:[#allocation3 + $0x140] sm:$0xf]
      %v2869 = vld [vmem:[#allocation3 + $0x144] sm:$0xff]
      %v2870 = vld [vmem:[#allocation3 + $0x14c] sm:$0xf]
      %v2871 = vld [vmem:[#allocation3 + $0x150] sm:$0xff]
      %v2872 = vld [vmem:[#allocation3 + $0x158] sm:$0xf]
      %v2873 = vld [vmem:[#allocation3 + $0x15c] sm:$0xff]
      %v2874 = vld [vmem:[#allocation3 + $0x164] sm:$0xf]
      %v2875 = vld [vmem:[#allocation3 + $0x168] sm:$0xff]
      %v2876 = vld [vmem:[#allocation3 + $0x170] sm:$0xf]
      %v2877 = vld [vmem:[#allocation3 + $0x174] sm:$0xff]
      %v2878 = vld [vmem:[#allocation3 + $0x17c] sm:$0xf]
      %v2879 = vld [vmem:[%s3] sm:$0xf]
      %v2880 = vld [vmem:[%s3 + $0x4] sm:$0xf]
      %v2881 = vld [vmem:[%s3 + $0x8] sm:$0xf]
      %v2882 = vld [vmem:[%s3 + $0xc] sm:$0xf]
      %v2883 = vld [vmem:[%s3 + $0x10] sm:$0xf]
      %v2884 = vld [vmem:[%s3 + $0x14] sm:$0xf]
      %v2885 = vld [vmem:[%s3 + $0x18] sm:$0xf]
      %v2886 = vld [vmem:[%s3 + $0x1c] sm:$0xf]
      %v2887 = vld [vmem:[%s3 + $0x20] sm:$0xf]
      %v2888 = vld [vmem:[%s3 + $0x24] sm:$0xf]
      %v2889 = vld [vmem:[%s3 + $0x28] sm:$0xf]
      %v2890 = vld [vmem:[%s3 + $0x2c] sm:$0xf]
      %v2891 = vld [vmem:[%s3 + $0x30] sm:$0xf]
      %v2892 = vld [vmem:[%s3 + $0x34] sm:$0xf]
      %v2893 = vld [vmem:[%s3 + $0x38] sm:$0xf]
      %v2894 = vld [vmem:[%s3 + $0x3c] sm:$0xf]
      %v2895 = vld [vmem:[%s3 + $0x40] sm:$0xf]
      %v2896 = vld [vmem:[%s3 + $0x44] sm:$0xf]
      %v2897 = vld [vmem:[%s3 + $0x48] sm:$0xf]
      %v2898 = vld [vmem:[%s3 + $0x4c] sm:$0xf]
      %v2899 = vld [vmem:[%s3 + $0x50] sm:$0xf]
      %v2900 = vld [vmem:[%s3 + $0x54] sm:$0xf]
      %v2901 = vld [vmem:[%s3 + $0x58] sm:$0xf]
      %v2902 = vld [vmem:[%s3 + $0x5c] sm:$0xf]
      %v2903 = vld [vmem:[%s3 + $0x60] sm:$0xf]
      %v2904 = vld [vmem:[%s3 + $0x64] sm:$0xf]
      %v2905 = vld [vmem:[%s3 + $0x68] sm:$0xf]
      %v2906 = vld [vmem:[%s3 + $0x6c] sm:$0xf]
      %v2907 = vld [vmem:[%s3 + $0x70] sm:$0xf]
      %v2908 = vld [vmem:[%s3 + $0x74] sm:$0xf]
      %v2909 = vld [vmem:[%s3 + $0x78] sm:$0xf]
      %v2910 = vld [vmem:[%s3 + $0x7c] sm:$0xf]
      %v2911 = vld [vmem:[%s3 + $0x80] sm:$0xf]
      %v2912 = vld [vmem:[%s3 + $0x84] sm:$0xf]
      %v2913 = vld [vmem:[%s3 + $0x88] sm:$0xf]
      %v2914 = vld [vmem:[%s3 + $0x8c] sm:$0xf]
      %v2915 = vld [vmem:[%s3 + $0x90] sm:$0xf]
      %v2916 = vld [vmem:[%s3 + $0x94] sm:$0xf]
      %v2917 = vld [vmem:[%s3 + $0x98] sm:$0xf]
      %v2918 = vld [vmem:[%s3 + $0x9c] sm:$0xf]
      %v2919 = vld [vmem:[%s3 + $0xa0] sm:$0xf]
      %v2920 = vld [vmem:[%s3 + $0xa4] sm:$0xf]
      %v2921 = vld [vmem:[%s3 + $0xa8] sm:$0xf]
      %v2922 = vld [vmem:[%s3 + $0xac] sm:$0xf]
      %v2923 = vld [vmem:[%s3 + $0xb0] sm:$0xf]
      %v2924 = vld [vmem:[%s3 + $0xb4] sm:$0xf]
      %v2925 = vld [vmem:[%s3 + $0xb8] sm:$0xf]
      %v2926 = vld [vmem:[%s3 + $0xbc] sm:$0xf]
      %v2991 = vunpack.c.l.b16 %v2815
      %v2992 = vunpack.c.h.b16 %v2815
      %v2993 = vunpack.c.l.b16 %v2816
      %v2994 = vunpack.c.l.b16 %v2817
      %v2995 = vunpack.c.h.b16 %v2817
      %v2996 = vunpack.c.l.b16 %v2818
      %v2997 = vunpack.c.l.b16 %v2819
      %v2998 = vunpack.c.h.b16 %v2819
      %v2999 = vunpack.c.l.b16 %v2820
      %v3000 = vunpack.c.l.b16 %v2821
      %v3001 = vunpack.c.h.b16 %v2821
      %v3002 = vunpack.c.l.b16 %v2822
      %v3003 = vunpack.c.l.b16 %v2823
      %v3004 = vunpack.c.h.b16 %v2823
      %v3005 = vunpack.c.l.b16 %v2824
      %v3006 = vunpack.c.l.b16 %v2825
      %v3007 = vunpack.c.h.b16 %v2825
      %v3008 = vunpack.c.l.b16 %v2826
      %v3009 = vunpack.c.l.b16 %v2827
      %v3010 = vunpack.c.h.b16 %v2827
      %v3011 = vunpack.c.l.b16 %v2828
      %v3012 = vunpack.c.l.b16 %v2829
      %v3013 = vunpack.c.h.b16 %v2829
      %v3014 = vunpack.c.l.b16 %v2830
      %v3015 = vunpack.c.l.b16 %v2831
      %v3016 = vunpack.c.h.b16 %v2831
      %v3017 = vunpack.c.l.b16 %v2832
      %v3018 = vunpack.c.l.b16 %v2833
      %v3019 = vunpack.c.h.b16 %v2833
      %v3020 = vunpack.c.l.b16 %v2834
      %v3021 = vunpack.c.l.b16 %v2835
      %v3022 = vunpack.c.h.b16 %v2835
      %v3023 = vunpack.c.l.b16 %v2836
      %v3024 = vunpack.c.l.b16 %v2837
      %v3025 = vunpack.c.h.b16 %v2837
      %v3026 = vunpack.c.l.b16 %v2838
      %v3027 = vunpack.c.l.b16 %v2839
      %v3028 = vunpack.c.h.b16 %v2839
      %v3029 = vunpack.c.l.b16 %v2840
      %v3030 = vunpack.c.l.b16 %v2841
      %v3031 = vunpack.c.h.b16 %v2841
      %v3032 = vunpack.c.l.b16 %v2842
      %v3033 = vunpack.c.l.b16 %v2843
      %v3034 = vunpack.c.h.b16 %v2843
      %v3035 = vunpack.c.l.b16 %v2844
      %v3036 = vunpack.c.l.b16 %v2845
      %v3037 = vunpack.c.h.b16 %v2845
      %v3038 = vunpack.c.l.b16 %v2846
      %v3039 = vunpack.c.l.b16 %v2847
      %v3040 = vunpack.c.h.b16 %v2847
      %v3041 = vunpack.c.l.b16 %v2848
      %v3042 = vunpack.c.l.b16 %v2849
      %v3043 = vunpack.c.h.b16 %v2849
      %v3044 = vunpack.c.l.b16 %v2850
      %v3045 = vunpack.c.l.b16 %v2851
      %v3046 = vunpack.c.h.b16 %v2851
      %v3047 = vunpack.c.l.b16 %v2852
      %v3048 = vunpack.c.l.b16 %v2853
      %v3049 = vunpack.c.h.b16 %v2853
      %v3050 = vunpack.c.l.b16 %v2854
      %v3051 = vunpack.c.l.b16 %v2855
      %v3052 = vunpack.c.h.b16 %v2855
      %v3053 = vunpack.c.l.b16 %v2856
      %v3054 = vunpack.c.l.b16 %v2857
      %v3055 = vunpack.c.h.b16 %v2857
      %v3056 = vunpack.c.l.b16 %v2858
      %v3057 = vunpack.c.l.b16 %v2859
      %v3058 = vunpack.c.h.b16 %v2859
      %v3059 = vunpack.c.l.b16 %v2860
      %v3060 = vunpack.c.l.b16 %v2861
      %v3061 = vunpack.c.h.b16 %v2861
      %v3062 = vunpack.c.l.b16 %v2862
      %v3063 = vunpack.c.l.b16 %v2863
      %v3064 = vunpack.c.h.b16 %v2863
      %v3065 = vunpack.c.l.b16 %v2864
      %v3066 = vunpack.c.l.b16 %v2865
      %v3067 = vunpack.c.h.b16 %v2865
      %v3068 = vunpack.c.l.b16 %v2866
      %v3069 = vunpack.c.l.b16 %v2867
      %v3070 = vunpack.c.h.b16 %v2867
      %v3071 = vunpack.c.l.b16 %v2868
      %v3072 = vunpack.c.l.b16 %v2869
      %v3073 = vunpack.c.h.b16 %v2869
      %v3074 = vunpack.c.l.b16 %v2870
      %v3075 = vunpack.c.l.b16 %v2871
      %v3076 = vunpack.c.h.b16 %v2871
      %v3077 = vunpack.c.l.b16 %v2872
      %v3078 = vunpack.c.l.b16 %v2873
      %v3079 = vunpack.c.h.b16 %v2873
      %v3080 = vunpack.c.l.b16 %v2874
      %v3081 = vunpack.c.l.b16 %v2875
      %v3082 = vunpack.c.h.b16 %v2875
      %v3083 = vunpack.c.l.b16 %v2876
      %v3084 = vunpack.c.l.b16 %v2877
      %v3085 = vunpack.c.h.b16 %v2877
      %v3086 = vunpack.c.l.b16 %v2878
      %v3087 = vpack.c.b16 %v2994, %v2991
      %v3088 = vpack.c.b16 %v2995, %v2992
      %v3089 = vpack.c.b16 %v2996, %v2993
      %v3090 = vpack.c.b16 %v3000, %v2997
      %v3091 = vpack.c.b16 %v3001, %v2998
      %v3092 = vpack.c.b16 %v3002, %v2999
      %v3093 = vpack.c.b16 %v3006, %v3003
      %v3094 = vpack.c.b16 %v3007, %v3004
      %v3095 = vpack.c.b16 %v3008, %v3005
      %v3096 = vpack.c.b16 %v3012, %v3009
      %v3097 = vpack.c.b16 %v3013, %v3010
      %v3098 = vpack.c.b16 %v3014, %v3011
      %v3099 = vpack.c.b16 %v3018, %v3015
      %v3100 = vpack.c.b16 %v3019, %v3016
      %v3101 = vpack.c.b16 %v3020, %v3017
      %v3102 = vpack.c.b16 %v3024, %v3021
      %v3103 = vpack.c.b16 %v3025, %v3022
      %v3104 = vpack.c.b16 %v3026, %v3023
      %v3105 = vpack.c.b16 %v3030, %v3027
      %v3106 = vpack.c.b16 %v3031, %v3028
      %v3107 = vpack.c.b16 %v3032, %v3029
      %v3108 = vpack.c.b16 %v3036, %v3033
      %v3109 = vpack.c.b16 %v3037, %v3034
      %v3110 = vpack.c.b16 %v3038, %v3035
      %v3111 = vpack.c.b16 %v3042, %v3039
      %v3112 = vpack.c.b16 %v3043, %v3040
      %v3113 = vpack.c.b16 %v3044, %v3041
      %v3114 = vpack.c.b16 %v3048, %v3045
      %v3115 = vpack.c.b16 %v3049, %v3046
      %v3116 = vpack.c.b16 %v3050, %v3047
      %v3117 = vpack.c.b16 %v3054, %v3051
      %v3118 = vpack.c.b16 %v3055, %v3052
      %v3119 = vpack.c.b16 %v3056, %v3053
      %v3120 = vpack.c.b16 %v3060, %v3057
      %v3121 = vpack.c.b16 %v3061, %v3058
      %v3122 = vpack.c.b16 %v3062, %v3059
      %v3123 = vpack.c.b16 %v3066, %v3063
      %v3124 = vpack.c.b16 %v3067, %v3064
      %v3125 = vpack.c.b16 %v3068, %v3065
      %v3126 = vpack.c.b16 %v3072, %v3069
      %v3127 = vpack.c.b16 %v3073, %v3070
      %v3128 = vpack.c.b16 %v3074, %v3071
      %v3129 = vpack.c.b16 %v3078, %v3075
      %v3130 = vpack.c.b16 %v3079, %v3076
      %v3131 = vpack.c.b16 %v3080, %v3077
      %v3132 = vpack.c.b16 %v3084, %v3081
      %v3133 = vpack.c.b16 %v3085, %v3082
      %v3134 = vpack.c.b16 %v3086, %v3083
      %v3231 = vunpack.c.l.b16 %v2879
      %v3232 = vunpack.c.l.b16 %v2880
      %v3233 = vunpack.c.l.b16 %v2881
      %v3234 = vunpack.c.l.b16 %v2882
      %v3235 = vunpack.c.l.b16 %v2883
      %v3236 = vunpack.c.l.b16 %v2884
      %v3237 = vunpack.c.l.b16 %v2885
      %v3238 = vunpack.c.l.b16 %v2886
      %v3239 = vunpack.c.l.b16 %v2887
      %v3240 = vunpack.c.l.b16 %v2888
      %v3241 = vunpack.c.l.b16 %v2889
      %v3242 = vunpack.c.l.b16 %v2890
      %v3243 = vunpack.c.l.b16 %v2891
      %v3244 = vunpack.c.l.b16 %v2892
      %v3245 = vunpack.c.l.b16 %v2893
      %v3246 = vunpack.c.l.b16 %v2894
      %v3247 = vunpack.c.l.b16 %v2895
      %v3248 = vunpack.c.l.b16 %v2896
      %v3249 = vunpack.c.l.b16 %v2897
      %v3250 = vunpack.c.l.b16 %v2898
      %v3251 = vunpack.c.l.b16 %v2899
      %v3252 = vunpack.c.l.b16 %v2900
      %v3253 = vunpack.c.l.b16 %v2901
      %v3254 = vunpack.c.l.b16 %v2902
      %v3255 = vunpack.c.l.b16 %v2903
      %v3256 = vunpack.c.l.b16 %v2904
      %v3257 = vunpack.c.l.b16 %v2905
      %v3258 = vunpack.c.l.b16 %v2906
      %v3259 = vunpack.c.l.b16 %v2907
      %v3260 = vunpack.c.l.b16 %v2908
      %v3261 = vunpack.c.l.b16 %v2909
      %v3262 = vunpack.c.l.b16 %v2910
      %v3263 = vunpack.c.l.b16 %v2911
      %v3264 = vunpack.c.l.b16 %v2912
      %v3265 = vunpack.c.l.b16 %v2913
      %v3266 = vunpack.c.l.b16 %v2914
      %v3267 = vunpack.c.l.b16 %v2915
      %v3268 = vunpack.c.l.b16 %v2916
      %v3269 = vunpack.c.l.b16 %v2917
      %v3270 = vunpack.c.l.b16 %v2918
      %v3271 = vunpack.c.l.b16 %v2919
      %v3272 = vunpack.c.l.b16 %v2920
      %v3273 = vunpack.c.l.b16 %v2921
      %v3274 = vunpack.c.l.b16 %v2922
      %v3275 = vunpack.c.l.b16 %v2923
      %v3276 = vunpack.c.l.b16 %v2924
      %v3277 = vunpack.c.l.b16 %v2925
      %v3278 = vunpack.c.l.b16 %v2926
      %v3279 = vpack.c.b16 %v3232, %v3231
      %v3280 = vpack.c.b16 %v3234, %v3233
      %v3281 = vpack.c.b16 %v3236, %v3235
      %v3282 = vpack.c.b16 %v3238, %v3237
      %v3283 = vpack.c.b16 %v3240, %v3239
      %v3284 = vpack.c.b16 %v3242, %v3241
      %v3285 = vpack.c.b16 %v3244, %v3243
      %v3286 = vpack.c.b16 %v3246, %v3245
      %v3287 = vpack.c.b16 %v3248, %v3247
      %v3288 = vpack.c.b16 %v3250, %v3249
      %v3289 = vpack.c.b16 %v3252, %v3251
      %v3290 = vpack.c.b16 %v3254, %v3253
      %v3291 = vpack.c.b16 %v3256, %v3255
      %v3292 = vpack.c.b16 %v3258, %v3257
      %v3293 = vpack.c.b16 %v3260, %v3259
      %v3294 = vpack.c.b16 %v3262, %v3261
      %v3295 = vpack.c.b16 %v3264, %v3263
      %v3296 = vpack.c.b16 %v3266, %v3265
      %v3297 = vpack.c.b16 %v3268, %v3267
      %v3298 = vpack.c.b16 %v3270, %v3269
      %v3299 = vpack.c.b16 %v3272, %v3271
      %v3300 = vpack.c.b16 %v3274, %v3273
      %v3301 = vpack.c.b16 %v3276, %v3275
      %v3302 = vpack.c.b16 %v3278, %v3277
      %3327 = vmatprep.subr.bf16.mxu0 0
      %3328 = vmatpush1.bf16.msra.mxu0 %v3286
      %3329 = vmatprep.subr.bf16.mxu0 0
      %3330 = vmatpush1.bf16.msra.mxu0 %v3285
      %3331 = vmatprep.subr.bf16.mxu0 0
      %3332 = vmatpush1.bf16.msra.mxu0 %v3284
      %3333 = vmatprep.subr.bf16.mxu0 0
      %3334 = vmatpush1.bf16.msra.mxu0 %v3283
      %3335 = vmatprep.subr.bf16.mxu0 0
      %3336 = vmatpush1.bf16.msra.mxu0 %v3282
      %3337 = vmatprep.subr.bf16.mxu0 0
      %3338 = vmatpush1.bf16.msra.mxu0 %v3281
      %3339 = vmatprep.subr.bf16.mxu0 0
      %3340 = vmatpush1.bf16.msra.mxu0 %v3280
      %3341 = vmatprep.subr.bf16.mxu0 0
      %3342 = vmatpush1.bf16.msra.mxu0 %v3279
      %3343 = vmatprep.subr.bf16.mxu0 0
      %3344 = vmatpush2.bf16.msra.mxu0 %v3294
      %3345 = vmatprep.subr.bf16.mxu0 0
      %3346 = vmatpush2.bf16.msra.mxu0 %v3293
      %3347 = vmatprep.subr.bf16.mxu0 0
      %3348 = vmatpush2.bf16.msra.mxu0 %v3292
      %3349 = vmatprep.subr.bf16.mxu0 0
      %3350 = vmatpush2.bf16.msra.mxu0 %v3291
      %3351 = vmatprep.subr.bf16.mxu0 0
      %3352 = vmatpush2.bf16.msra.mxu0 %v3290
      %3353 = vmatprep.subr.bf16.mxu0 0
      %3354 = vmatpush2.bf16.msra.mxu0 %v3289
      %3355 = vmatprep.subr.bf16.mxu0 0
      %3356 = vmatpush2.bf16.msra.mxu0 %v3288
      %3357 = vmatprep.subr.bf16.mxu0 0
      %3358 = vmatpush2.bf16.msra.mxu0 %v3287
      %3359 = vmatprep.mubr.bf16.mxu0 %v3088
      %3360 = vmatmul.mubr.bf16.gmra.mxu0 %v3087
      %v3361 = vpop.f32.mrf.mxu0
      %v3362 = vadd.f32 0.0, %v3361
      %v3363 = vpop.f32.mrf.mxu0
      %v3364 = vpop.f32.mrf.mxu0
      %v3365 = vadd.f32 0.0, %v3364
      %v3366 = vpop.f32.mrf.mxu0
      %3367 = vmatprep.mubr.bf16.mxu0 %v3091
      %3368 = vmatmul.mubr.bf16.gmra.mxu0 %v3090
      %v3369 = vpop.f32.mrf.mxu0
      %v3370 = vadd.f32 0.0, %v3369
      %v3371 = vpop.f32.mrf.mxu0
      %v3372 = vpop.f32.mrf.mxu0
      %v3373 = vadd.f32 0.0, %v3372
      %v3374 = vpop.f32.mrf.mxu0
      %3375 = vmatprep.mubr.bf16.mxu0 %v3094
      %3376 = vmatmul.mubr.bf16.gmra.mxu0 %v3093
      %v3377 = vpop.f32.mrf.mxu0
      %v3378 = vadd.f32 0.0, %v3377
      %v3379 = vpop.f32.mrf.mxu0
      %v3380 = vpop.f32.mrf.mxu0
      %v3381 = vadd.f32 0.0, %v3380
      %v3382 = vpop.f32.mrf.mxu0
      %3383 = vmatprep.mubr.bf16.mxu0 %v3097
      %3384 = vmatmul.mubr.bf16.gmra.mxu0 %v3096
      %v3385 = vpop.f32.mrf.mxu0
      %v3386 = vadd.f32 0.0, %v3385
      %v3387 = vpop.f32.mrf.mxu0
      %v3388 = vpop.f32.mrf.mxu0
      %v3389 = vadd.f32 0.0, %v3388
      %v3390 = vpop.f32.mrf.mxu0
      %3391 = vmatprep.mubr.bf16.mxu0 %v3100
      %3392 = vmatmul.mubr.bf16.gmra.mxu0 %v3099
      %v3393 = vpop.f32.mrf.mxu0
      %v3394 = vadd.f32 0.0, %v3393
      %v3395 = vpop.f32.mrf.mxu0
      %v3396 = vpop.f32.mrf.mxu0
      %v3397 = vadd.f32 0.0, %v3396
      %v3398 = vpop.f32.mrf.mxu0
      %3399 = vmatprep.mubr.bf16.mxu0 %v3103
      %3400 = vmatmul.mubr.bf16.gmra.mxu0 %v3102
      %v3401 = vpop.f32.mrf.mxu0
      %v3402 = vadd.f32 0.0, %v3401
      %v3403 = vpop.f32.mrf.mxu0
      %v3404 = vpop.f32.mrf.mxu0
      %v3405 = vadd.f32 0.0, %v3404
      %v3406 = vpop.f32.mrf.mxu0
      %3407 = vmatprep.mubr.bf16.mxu0 %v3106
      %3408 = vmatmul.mubr.bf16.gmra.mxu0 %v3105
      %v3409 = vpop.f32.mrf.mxu0
      %v3410 = vadd.f32 0.0, %v3409
      %v3411 = vpop.f32.mrf.mxu0
      %v3412 = vpop.f32.mrf.mxu0
      %v3413 = vadd.f32 0.0, %v3412
      %v3414 = vpop.f32.mrf.mxu0
      %3415 = vmatprep.mubr.bf16.mxu0 %v3109
      %3416 = vmatmul.mubr.bf16.gmra.mxu0 %v3108
      %v3417 = vpop.f32.mrf.mxu0
      %v3418 = vadd.f32 0.0, %v3417
      %v3419 = vpop.f32.mrf.mxu0
      %v3420 = vpop.f32.mrf.mxu0
      %v3421 = vadd.f32 0.0, %v3420
      %v3422 = vpop.f32.mrf.mxu0
      %3423 = vmatprep.mubr.bf16.mxu0 %v3112
      %3424 = vmatmul.mubr.bf16.gmra.mxu0 %v3111
      %v3425 = vpop.f32.mrf.mxu0
      %v3426 = vadd.f32 0.0, %v3425
      %v3427 = vpop.f32.mrf.mxu0
      %v3428 = vpop.f32.mrf.mxu0
      %v3429 = vadd.f32 0.0, %v3428
      %v3430 = vpop.f32.mrf.mxu0
      %3431 = vmatprep.mubr.bf16.mxu0 %v3115
      %3432 = vmatmul.mubr.bf16.gmra.mxu0 %v3114
      %v3433 = vpop.f32.mrf.mxu0
      %v3434 = vadd.f32 0.0, %v3433
      %v3435 = vpop.f32.mrf.mxu0
      %v3436 = vpop.f32.mrf.mxu0
      %v3437 = vadd.f32 0.0, %v3436
      %v3438 = vpop.f32.mrf.mxu0
      %3439 = vmatprep.mubr.bf16.mxu0 %v3118
      %3440 = vmatmul.mubr.bf16.gmra.mxu0 %v3117
      %v3441 = vpop.f32.mrf.mxu0
      %v3442 = vadd.f32 0.0, %v3441
      %v3443 = vpop.f32.mrf.mxu0
      %v3444 = vpop.f32.mrf.mxu0
      %v3445 = vadd.f32 0.0, %v3444
      %v3446 = vpop.f32.mrf.mxu0
      %3447 = vmatprep.mubr.bf16.mxu0 %v3121
      %3448 = vmatmul.mubr.bf16.gmra.mxu0 %v3120
      %v3449 = vpop.f32.mrf.mxu0
      %v3450 = vadd.f32 0.0, %v3449
      %v3451 = vpop.f32.mrf.mxu0
      %v3452 = vpop.f32.mrf.mxu0
      %v3453 = vadd.f32 0.0, %v3452
      %v3454 = vpop.f32.mrf.mxu0
      %3455 = vmatprep.mubr.bf16.mxu0 %v3124
      %3456 = vmatmul.mubr.bf16.gmra.mxu0 %v3123
      %v3457 = vpop.f32.mrf.mxu0
      %v3458 = vadd.f32 0.0, %v3457
      %v3459 = vpop.f32.mrf.mxu0
      %v3460 = vpop.f32.mrf.mxu0
      %v3461 = vadd.f32 0.0, %v3460
      %v3462 = vpop.f32.mrf.mxu0
      %3463 = vmatprep.mubr.bf16.mxu0 %v3127
      %3464 = vmatmul.mubr.bf16.gmra.mxu0 %v3126
      %v3465 = vpop.f32.mrf.mxu0
      %v3466 = vadd.f32 0.0, %v3465
      %v3467 = vpop.f32.mrf.mxu0
      %v3468 = vpop.f32.mrf.mxu0
      %v3469 = vadd.f32 0.0, %v3468
      %v3470 = vpop.f32.mrf.mxu0
      %3471 = vmatprep.mubr.bf16.mxu0 %v3130
      %3472 = vmatmul.mubr.bf16.gmra.mxu0 %v3129
      %v3473 = vpop.f32.mrf.mxu0
      %v3474 = vadd.f32 0.0, %v3473
      %v3475 = vpop.f32.mrf.mxu0
      %v3476 = vpop.f32.mrf.mxu0
      %v3477 = vadd.f32 0.0, %v3476
      %v3478 = vpop.f32.mrf.mxu0
      %3479 = vmatprep.mubr.bf16.mxu0 %v3133
      %3480 = vmatmul.mubr.bf16.gmra.mxu0 %v3132
      %v3481 = vpop.f32.mrf.mxu0
      %v3482 = vadd.f32 0.0, %v3481
      %v3483 = vpop.f32.mrf.mxu0
      %v3484 = vpop.f32.mrf.mxu0
      %v3485 = vadd.f32 0.0, %v3484
      %v3486 = vpop.f32.mrf.mxu0
      %3487 = vdwg.mxu0
      %3488 = vmatprep.subr.bf16.mxu0 0
      %3489 = vmatpush1.bf16.msra.mxu0 %v3302
      %3490 = vmatprep.subr.bf16.mxu0 0
      %3491 = vmatpush1.bf16.msra.mxu0 %v3301
      %3492 = vmatprep.subr.bf16.mxu0 0
      %3493 = vmatpush1.bf16.msra.mxu0 %v3300
      %3494 = vmatprep.subr.bf16.mxu0 0
      %3495 = vmatpush1.bf16.msra.mxu0 %v3299
      %3496 = vmatprep.subr.bf16.mxu0 0
      %3497 = vmatpush1.bf16.msra.mxu0 %v3298
      %3498 = vmatprep.subr.bf16.mxu0 0
      %3499 = vmatpush1.bf16.msra.mxu0 %v3297
      %3500 = vmatprep.subr.bf16.mxu0 0
      %3501 = vmatpush1.bf16.msra.mxu0 %v3296
      %3502 = vmatprep.subr.bf16.mxu0 0
      %3503 = vmatpush1.bf16.msra.mxu0 %v3295
      %3504 = vmatprep.subr.bf16.mxu0 0
      %3505 = vmatpush2.bf16.msra.mxu0 0
      %3506 = vmatprep.subr.bf16.mxu0 0
      %3507 = vmatpush2.bf16.msra.mxu0 0
      %3508 = vmatprep.subr.bf16.mxu0 0
      %3509 = vmatpush2.bf16.msra.mxu0 0
      %3510 = vmatprep.subr.bf16.mxu0 0
      %3511 = vmatpush2.bf16.msra.mxu0 0
      %3512 = vmatprep.subr.bf16.mxu0 0
      %3513 = vmatpush2.bf16.msra.mxu0 0
      %3514 = vmatprep.subr.bf16.mxu0 0
      %3515 = vmatpush2.bf16.msra.mxu0 0
      %3516 = vmatprep.subr.bf16.mxu0 0
      %3517 = vmatpush2.bf16.msra.mxu0 0
      %3518 = vmatprep.subr.bf16.mxu0 0
      %3519 = vmatpush2.bf16.msra.mxu0 0
      %3520 = vmatprep.mubr.bf16.mxu0 0
      %3521 = vmatmul.mubr.bf16.gmra.mxu0 %v3089
      %v3522 = vpop.f32.mrf.mxu0
      %v3523 = vadd.f32 %v3362, %v3522
      %v3524 = vpop.f32.mrf.mxu0
      %v3525 = vpop.f32.mrf.mxu0
      %v3526 = vadd.f32 %v3365, %v3525
      %v3527 = vpop.f32.mrf.mxu0
      %3528 = vmatprep.mubr.bf16.mxu0 0
      %3529 = vmatmul.mubr.bf16.gmra.mxu0 %v3092
      %v3530 = vpop.f32.mrf.mxu0
      %v3531 = vadd.f32 %v3370, %v3530
      %v3532 = vpop.f32.mrf.mxu0
      %v3533 = vpop.f32.mrf.mxu0
      %v3534 = vadd.f32 %v3373, %v3533
      %v3535 = vpop.f32.mrf.mxu0
      %3536 = vmatprep.mubr.bf16.mxu0 0
      %3537 = vmatmul.mubr.bf16.gmra.mxu0 %v3095
      %v3538 = vpop.f32.mrf.mxu0
      %v3539 = vadd.f32 %v3378, %v3538
      %v3540 = vpop.f32.mrf.mxu0
      %v3541 = vpop.f32.mrf.mxu0
      %v3542 = vadd.f32 %v3381, %v3541
      %v3543 = vpop.f32.mrf.mxu0
      %3544 = vmatprep.mubr.bf16.mxu0 0
      %3545 = vmatmul.mubr.bf16.gmra.mxu0 %v3098
      %v3546 = vpop.f32.mrf.mxu0
      %v3547 = vadd.f32 %v3386, %v3546
      %v3548 = vpop.f32.mrf.mxu0
      %v3549 = vpop.f32.mrf.mxu0
      %v3550 = vadd.f32 %v3389, %v3549
      %v3551 = vpop.f32.mrf.mxu0
      %3552 = vmatprep.mubr.bf16.mxu0 0
      %3553 = vmatmul.mubr.bf16.gmra.mxu0 %v3101
      %v3554 = vpop.f32.mrf.mxu0
      %v3555 = vadd.f32 %v3394, %v3554
      %v3556 = vpop.f32.mrf.mxu0
      %v3557 = vpop.f32.mrf.mxu0
      %v3558 = vadd.f32 %v3397, %v3557
      %v3559 = vpop.f32.mrf.mxu0
      %3560 = vmatprep.mubr.bf16.mxu0 0
      %3561 = vmatmul.mubr.bf16.gmra.mxu0 %v3104
      %v3562 = vpop.f32.mrf.mxu0
      %v3563 = vadd.f32 %v3402, %v3562
      %v3564 = vpop.f32.mrf.mxu0
      %v3565 = vpop.f32.mrf.mxu0
      %v3566 = vadd.f32 %v3405, %v3565
      %v3567 = vpop.f32.mrf.mxu0
      %3568 = vmatprep.mubr.bf16.mxu0 0
      %3569 = vmatmul.mubr.bf16.gmra.mxu0 %v3107
      %v3570 = vpop.f32.mrf.mxu0
      %v3571 = vadd.f32 %v3410, %v3570
      %v3572 = vpop.f32.mrf.mxu0
      %v3573 = vpop.f32.mrf.mxu0
      %v3574 = vadd.f32 %v3413, %v3573
      %v3575 = vpop.f32.mrf.mxu0
      %3576 = vmatprep.mubr.bf16.mxu0 0
      %3577 = vmatmul.mubr.bf16.gmra.mxu0 %v3110
      %v3578 = vpop.f32.mrf.mxu0
      %v3579 = vadd.f32 %v3418, %v3578
      %v3580 = vpop.f32.mrf.mxu0
      %v3581 = vpop.f32.mrf.mxu0
      %v3582 = vadd.f32 %v3421, %v3581
      %v3583 = vpop.f32.mrf.mxu0
      %3584 = vmatprep.mubr.bf16.mxu0 0
      %3585 = vmatmul.mubr.bf16.gmra.mxu0 %v3113
      %v3586 = vpop.f32.mrf.mxu0
      %v3587 = vadd.f32 %v3426, %v3586
      %v3588 = vpop.f32.mrf.mxu0
      %v3589 = vpop.f32.mrf.mxu0
      %v3590 = vadd.f32 %v3429, %v3589
      %v3591 = vpop.f32.mrf.mxu0
      %3592 = vmatprep.mubr.bf16.mxu0 0
      %3593 = vmatmul.mubr.bf16.gmra.mxu0 %v3116
      %v3594 = vpop.f32.mrf.mxu0
      %v3595 = vadd.f32 %v3434, %v3594
      %v3596 = vpop.f32.mrf.mxu0
      %v3597 = vpop.f32.mrf.mxu0
      %v3598 = vadd.f32 %v3437, %v3597
      %v3599 = vpop.f32.mrf.mxu0
      %3600 = vmatprep.mubr.bf16.mxu0 0
      %3601 = vmatmul.mubr.bf16.gmra.mxu0 %v3119
      %v3602 = vpop.f32.mrf.mxu0
      %v3603 = vadd.f32 %v3442, %v3602
      %v3604 = vpop.f32.mrf.mxu0
      %v3605 = vpop.f32.mrf.mxu0
      %v3606 = vadd.f32 %v3445, %v3605
      %v3607 = vpop.f32.mrf.mxu0
      %3608 = vmatprep.mubr.bf16.mxu0 0
      %3609 = vmatmul.mubr.bf16.gmra.mxu0 %v3122
      %v3610 = vpop.f32.mrf.mxu0
      %v3611 = vadd.f32 %v3450, %v3610
      %v3612 = vpop.f32.mrf.mxu0
      %v3613 = vpop.f32.mrf.mxu0
      %v3614 = vadd.f32 %v3453, %v3613
      %v3615 = vpop.f32.mrf.mxu0
      %3616 = vmatprep.mubr.bf16.mxu0 0
      %3617 = vmatmul.mubr.bf16.gmra.mxu0 %v3125
      %v3618 = vpop.f32.mrf.mxu0
      %v3619 = vadd.f32 %v3458, %v3618
      %v3620 = vpop.f32.mrf.mxu0
      %v3621 = vpop.f32.mrf.mxu0
      %v3622 = vadd.f32 %v3461, %v3621
      %v3623 = vpop.f32.mrf.mxu0
      %3624 = vmatprep.mubr.bf16.mxu0 0
      %3625 = vmatmul.mubr.bf16.gmra.mxu0 %v3128
      %v3626 = vpop.f32.mrf.mxu0
      %v3627 = vadd.f32 %v3466, %v3626
      %v3628 = vpop.f32.mrf.mxu0
      %v3629 = vpop.f32.mrf.mxu0
      %v3630 = vadd.f32 %v3469, %v3629
      %v3631 = vpop.f32.mrf.mxu0
      %3632 = vmatprep.mubr.bf16.mxu0 0
      %3633 = vmatmul.mubr.bf16.gmra.mxu0 %v3131
      %v3634 = vpop.f32.mrf.mxu0
      %v3635 = vadd.f32 %v3474, %v3634
      %v3636 = vpop.f32.mrf.mxu0
      %v3637 = vpop.f32.mrf.mxu0
      %v3638 = vadd.f32 %v3477, %v3637
      %v3639 = vpop.f32.mrf.mxu0
      %3640 = vmatprep.mubr.bf16.mxu0 0
      %3641 = vmatmul.mubr.bf16.gmra.mxu0 %v3134
      %v3642 = vpop.f32.mrf.mxu0
      %v3643 = vadd.f32 %v3482, %v3642
      %v3644 = vpop.f32.mrf.mxu0
      %v3645 = vpop.f32.mrf.mxu0
      %v3646 = vadd.f32 %v3485, %v3645
      %v3647 = vpop.f32.mrf.mxu0
      %3648 = vdwg.mxu0
      %3649 = vst [vmem:[#allocation4] sm:$0xff] %v3523
      %3650 = vst [vmem:[#allocation4 + $0x8] sm:$0xff] %v3526
      %3651 = vst [vmem:[#allocation4 + $0x10] sm:$0xff] %v3531
      %3652 = vst [vmem:[#allocation4 + $0x18] sm:$0xff] %v3534
      %3653 = vst [vmem:[#allocation4 + $0x20] sm:$0xff] %v3539
      %3654 = vst [vmem:[#allocation4 + $0x28] sm:$0xff] %v3542
      %3655 = vst [vmem:[#allocation4 + $0x30] sm:$0xff] %v3547
      %3656 = vst [vmem:[#allocation4 + $0x38] sm:$0xff] %v3550
      %3657 = vst [vmem:[#allocation4 + $0x40] sm:$0xff] %v3555
      %3658 = vst [vmem:[#allocation4 + $0x48] sm:$0xff] %v3558
      %3659 = vst [vmem:[#allocation4 + $0x50] sm:$0xff] %v3563
      %3660 = vst [vmem:[#allocation4 + $0x58] sm:$0xff] %v3566
      %3661 = vst [vmem:[#allocation4 + $0x60] sm:$0xff] %v3571
      %3662 = vst [vmem:[#allocation4 + $0x68] sm:$0xff] %v3574
      %3663 = vst [vmem:[#allocation4 + $0x70] sm:$0xff] %v3579
      %3664 = vst [vmem:[#allocation4 + $0x78] sm:$0xff] %v3582
      %3665 = vst [vmem:[#allocation4 + $0x80] sm:$0xff] %v3587
      %3666 = vst [vmem:[#allocation4 + $0x88] sm:$0xff] %v3590
      %3667 = vst [vmem:[#allocation4 + $0x90] sm:$0xff] %v3595
      %3668 = vst [vmem:[#allocation4 + $0x98] sm:$0xff] %v3598
      %3669 = vst [vmem:[#allocation4 + $0xa0] sm:$0xff] %v3603
      %3670 = vst [vmem:[#allocation4 + $0xa8] sm:$0xff] %v3606
      %3671 = vst [vmem:[#allocation4 + $0xb0] sm:$0xff] %v3611
      %3672 = vst [vmem:[#allocation4 + $0xb8] sm:$0xff] %v3614
      %3673 = vst [vmem:[#allocation4 + $0xc0] sm:$0xff] %v3619
      %3674 = vst [vmem:[#allocation4 + $0xc8] sm:$0xff] %v3622
      %3675 = vst [vmem:[#allocation4 + $0xd0] sm:$0xff] %v3627
      %3676 = vst [vmem:[#allocation4 + $0xd8] sm:$0xff] %v3630
      %3677 = vst [vmem:[#allocation4 + $0xe0] sm:$0xff] %v3635
      %3678 = vst [vmem:[#allocation4 + $0xe8] sm:$0xff] %v3638
      %3679 = vst [vmem:[#allocation4 + $0xf0] sm:$0xff] %v3643
      %3680 = vst [vmem:[#allocation4 + $0xf8] sm:$0xff] %v3646
      %v3681 = vld [vmem:[%s2741] sm:$0xff]
      %v3682 = vld [vmem:[%s2741 + $0x8] sm:$0xf]
      %v3683 = vld [vmem:[%s2741 + $0xc] sm:$0xff]
      %v3684 = vld [vmem:[%s2741 + $0x14] sm:$0xf]
      %v3685 = vld [vmem:[%s2741 + $0x18] sm:$0xff]
      %v3686 = vld [vmem:[%s2741 + $0x20] sm:$0xf]
      %v3687 = vld [vmem:[%s2741 + $0x24] sm:$0xff]
      %v3688 = vld [vmem:[%s2741 + $0x2c] sm:$0xf]
      %v3689 = vld [vmem:[%s2741 + $0x30] sm:$0xff]
      %v3690 = vld [vmem:[%s2741 + $0x38] sm:$0xf]
      %v3691 = vld [vmem:[%s2741 + $0x3c] sm:$0xff]
      %v3692 = vld [vmem:[%s2741 + $0x44] sm:$0xf]
      %v3693 = vld [vmem:[%s2741 + $0x48] sm:$0xff]
      %v3694 = vld [vmem:[%s2741 + $0x50] sm:$0xf]
      %v3695 = vld [vmem:[%s2741 + $0x54] sm:$0xff]
      %v3696 = vld [vmem:[%s2741 + $0x5c] sm:$0xf]
      %v3697 = vld [vmem:[%s2741 + $0x60] sm:$0xff]
      %v3698 = vld [vmem:[%s2741 + $0x68] sm:$0xf]
      %v3699 = vld [vmem:[%s2741 + $0x6c] sm:$0xff]
      %v3700 = vld [vmem:[%s2741 + $0x74] sm:$0xf]
      %v3701 = vld [vmem:[%s2741 + $0x78] sm:$0xff]
      %v3702 = vld [vmem:[%s2741 + $0x80] sm:$0xf]
      %v3703 = vld [vmem:[%s2741 + $0x84] sm:$0xff]
      %v3704 = vld [vmem:[%s2741 + $0x8c] sm:$0xf]
      %v3705 = vld [vmem:[%s2741 + $0x90] sm:$0xff]
      %v3706 = vld [vmem:[%s2741 + $0x98] sm:$0xf]
      %v3707 = vld [vmem:[%s2741 + $0x9c] sm:$0xff]
      %v3708 = vld [vmem:[%s2741 + $0xa4] sm:$0xf]
      %v3709 = vld [vmem:[%s2741 + $0xa8] sm:$0xff]
      %v3710 = vld [vmem:[%s2741 + $0xb0] sm:$0xf]
      %v3711 = vld [vmem:[%s2741 + $0xb4] sm:$0xff]
      %v3712 = vld [vmem:[%s2741 + $0xbc] sm:$0xf]
      %v3713 = vld [vmem:[%s2741 + $0xc0] sm:$0xff]
      %v3714 = vld [vmem:[%s2741 + $0xc8] sm:$0xf]
      %v3715 = vld [vmem:[%s2741 + $0xcc] sm:$0xff]
      %v3716 = vld [vmem:[%s2741 + $0xd4] sm:$0xf]
      %v3717 = vld [vmem:[%s2741 + $0xd8] sm:$0xff]
      %v3718 = vld [vmem:[%s2741 + $0xe0] sm:$0xf]
      %v3719 = vld [vmem:[%s2741 + $0xe4] sm:$0xff]
      %v3720 = vld [vmem:[%s2741 + $0xec] sm:$0xf]
      %v3721 = vld [vmem:[%s2741 + $0xf0] sm:$0xff]
      %v3722 = vld [vmem:[%s2741 + $0xf8] sm:$0xf]
      %v3723 = vld [vmem:[%s2741 + $0xfc] sm:$0xff]
      %v3724 = vld [vmem:[%s2741 + $0x104] sm:$0xf]
      %v3725 = vld [vmem:[%s2741 + $0x108] sm:$0xff]
      %v3726 = vld [vmem:[%s2741 + $0x110] sm:$0xf]
      %v3727 = vld [vmem:[%s2741 + $0x114] sm:$0xff]
      %v3728 = vld [vmem:[%s2741 + $0x11c] sm:$0xf]
      %v3729 = vld [vmem:[%s2741 + $0x120] sm:$0xff]
      %v3730 = vld [vmem:[%s2741 + $0x128] sm:$0xf]
      %v3731 = vld [vmem:[%s2741 + $0x12c] sm:$0xff]
      %v3732 = vld [vmem:[%s2741 + $0x134] sm:$0xf]
      %v3733 = vld [vmem:[%s2741 + $0x138] sm:$0xff]
      %v3734 = vld [vmem:[%s2741 + $0x140] sm:$0xf]
      %v3735 = vld [vmem:[%s2741 + $0x144] sm:$0xff]
      %v3736 = vld [vmem:[%s2741 + $0x14c] sm:$0xf]
      %v3737 = vld [vmem:[%s2741 + $0x150] sm:$0xff]
      %v3738 = vld [vmem:[%s2741 + $0x158] sm:$0xf]
      %v3739 = vld [vmem:[%s2741 + $0x15c] sm:$0xff]
      %v3740 = vld [vmem:[%s2741 + $0x164] sm:$0xf]
      %v3741 = vld [vmem:[%s2741 + $0x168] sm:$0xff]
      %v3742 = vld [vmem:[%s2741 + $0x170] sm:$0xf]
      %v3743 = vld [vmem:[%s2741 + $0x174] sm:$0xff]
      %v3744 = vld [vmem:[%s2741 + $0x17c] sm:$0xf]
      %s3745 = scalar_lea.vmem %s3, 192
      %v3746 = vld [vmem:[%s3745] sm:$0xf]
      %v3747 = vld [vmem:[%s3745 + $0x4] sm:$0xf]
      %v3748 = vld [vmem:[%s3745 + $0x8] sm:$0xf]
      %v3749 = vld [vmem:[%s3745 + $0xc] sm:$0xf]
      %v3750 = vld [vmem:[%s3745 + $0x10] sm:$0xf]
      %v3751 = vld [vmem:[%s3745 + $0x14] sm:$0xf]
      %v3752 = vld [vmem:[%s3745 + $0x18] sm:$0xf]
      %v3753 = vld [vmem:[%s3745 + $0x1c] sm:$0xf]
      %v3754 = vld [vmem:[%s3745 + $0x20] sm:$0xf]
      %v3755 = vld [vmem:[%s3745 + $0x24] sm:$0xf]
      %v3756 = vld [vmem:[%s3745 + $0x28] sm:$0xf]
      %v3757 = vld [vmem:[%s3745 + $0x2c] sm:$0xf]
      %v3758 = vld [vmem:[%s3745 + $0x30] sm:$0xf]
      %v3759 = vld [vmem:[%s3745 + $0x34] sm:$0xf]
      %v3760 = vld [vmem:[%s3745 + $0x38] sm:$0xf]
      %v3761 = vld [vmem:[%s3745 + $0x3c] sm:$0xf]
      %v3762 = vld [vmem:[%s3745 + $0x40] sm:$0xf]
      %v3763 = vld [vmem:[%s3745 + $0x44] sm:$0xf]
      %v3764 = vld [vmem:[%s3745 + $0x48] sm:$0xf]
      %v3765 = vld [vmem:[%s3745 + $0x4c] sm:$0xf]
      %v3766 = vld [vmem:[%s3745 + $0x50] sm:$0xf]
      %v3767 = vld [vmem:[%s3745 + $0x54] sm:$0xf]
      %v3768 = vld [vmem:[%s3745 + $0x58] sm:$0xf]
      %v3769 = vld [vmem:[%s3745 + $0x5c] sm:$0xf]
      %v3770 = vld [vmem:[%s3745 + $0x60] sm:$0xf]
      %v3771 = vld [vmem:[%s3745 + $0x64] sm:$0xf]
      %v3772 = vld [vmem:[%s3745 + $0x68] sm:$0xf]
      %v3773 = vld [vmem:[%s3745 + $0x6c] sm:$0xf]
      %v3774 = vld [vmem:[%s3745 + $0x70] sm:$0xf]
      %v3775 = vld [vmem:[%s3745 + $0x74] sm:$0xf]
      %v3776 = vld [vmem:[%s3745 + $0x78] sm:$0xf]
      %v3777 = vld [vmem:[%s3745 + $0x7c] sm:$0xf]
      %v3778 = vld [vmem:[%s3745 + $0x80] sm:$0xf]
      %v3779 = vld [vmem:[%s3745 + $0x84] sm:$0xf]
      %v3780 = vld [vmem:[%s3745 + $0x88] sm:$0xf]
      %v3781 = vld [vmem:[%s3745 + $0x8c] sm:$0xf]
      %v3782 = vld [vmem:[%s3745 + $0x90] sm:$0xf]
      %v3783 = vld [vmem:[%s3745 + $0x94] sm:$0xf]
      %v3784 = vld [vmem:[%s3745 + $0x98] sm:$0xf]
      %v3785 = vld [vmem:[%s3745 + $0x9c] sm:$0xf]
      %v3786 = vld [vmem:[%s3745 + $0xa0] sm:$0xf]
      %v3787 = vld [vmem:[%s3745 + $0xa4] sm:$0xf]
      %v3788 = vld [vmem:[%s3745 + $0xa8] sm:$0xf]
      %v3789 = vld [vmem:[%s3745 + $0xac] sm:$0xf]
      %v3790 = vld [vmem:[%s3745 + $0xb0] sm:$0xf]
      %v3791 = vld [vmem:[%s3745 + $0xb4] sm:$0xf]
      %v3792 = vld [vmem:[%s3745 + $0xb8] sm:$0xf]
      %v3793 = vld [vmem:[%s3745 + $0xbc] sm:$0xf]
      %v3858 = vunpack.c.l.b16 %v3681
      %v3859 = vunpack.c.h.b16 %v3681
      %v3860 = vunpack.c.l.b16 %v3682
      %v3861 = vunpack.c.l.b16 %v3683
      %v3862 = vunpack.c.h.b16 %v3683
      %v3863 = vunpack.c.l.b16 %v3684
      %v3864 = vunpack.c.l.b16 %v3685
      %v3865 = vunpack.c.h.b16 %v3685
      %v3866 = vunpack.c.l.b16 %v3686
      %v3867 = vunpack.c.l.b16 %v3687
      %v3868 = vunpack.c.h.b16 %v3687
      %v3869 = vunpack.c.l.b16 %v3688
      %v3870 = vunpack.c.l.b16 %v3689
      %v3871 = vunpack.c.h.b16 %v3689
      %v3872 = vunpack.c.l.b16 %v3690
      %v3873 = vunpack.c.l.b16 %v3691
      %v3874 = vunpack.c.h.b16 %v3691
      %v3875 = vunpack.c.l.b16 %v3692
      %v3876 = vunpack.c.l.b16 %v3693
      %v3877 = vunpack.c.h.b16 %v3693
      %v3878 = vunpack.c.l.b16 %v3694
      %v3879 = vunpack.c.l.b16 %v3695
      %v3880 = vunpack.c.h.b16 %v3695
      %v3881 = vunpack.c.l.b16 %v3696
      %v3882 = vunpack.c.l.b16 %v3697
      %v3883 = vunpack.c.h.b16 %v3697
      %v3884 = vunpack.c.l.b16 %v3698
      %v3885 = vunpack.c.l.b16 %v3699
      %v3886 = vunpack.c.h.b16 %v3699
      %v3887 = vunpack.c.l.b16 %v3700
      %v3888 = vunpack.c.l.b16 %v3701
      %v3889 = vunpack.c.h.b16 %v3701
      %v3890 = vunpack.c.l.b16 %v3702
      %v3891 = vunpack.c.l.b16 %v3703
      %v3892 = vunpack.c.h.b16 %v3703
      %v3893 = vunpack.c.l.b16 %v3704
      %v3894 = vunpack.c.l.b16 %v3705
      %v3895 = vunpack.c.h.b16 %v3705
      %v3896 = vunpack.c.l.b16 %v3706
      %v3897 = vunpack.c.l.b16 %v3707
      %v3898 = vunpack.c.h.b16 %v3707
      %v3899 = vunpack.c.l.b16 %v3708
      %v3900 = vunpack.c.l.b16 %v3709
      %v3901 = vunpack.c.h.b16 %v3709
      %v3902 = vunpack.c.l.b16 %v3710
      %v3903 = vunpack.c.l.b16 %v3711
      %v3904 = vunpack.c.h.b16 %v3711
      %v3905 = vunpack.c.l.b16 %v3712
      %v3906 = vunpack.c.l.b16 %v3713
      %v3907 = vunpack.c.h.b16 %v3713
      %v3908 = vunpack.c.l.b16 %v3714
      %v3909 = vunpack.c.l.b16 %v3715
      %v3910 = vunpack.c.h.b16 %v3715
      %v3911 = vunpack.c.l.b16 %v3716
      %v3912 = vunpack.c.l.b16 %v3717
      %v3913 = vunpack.c.h.b16 %v3717
      %v3914 = vunpack.c.l.b16 %v3718
      %v3915 = vunpack.c.l.b16 %v3719
      %v3916 = vunpack.c.h.b16 %v3719
      %v3917 = vunpack.c.l.b16 %v3720
      %v3918 = vunpack.c.l.b16 %v3721
      %v3919 = vunpack.c.h.b16 %v3721
      %v3920 = vunpack.c.l.b16 %v3722
      %v3921 = vunpack.c.l.b16 %v3723
      %v3922 = vunpack.c.h.b16 %v3723
      %v3923 = vunpack.c.l.b16 %v3724
      %v3924 = vunpack.c.l.b16 %v3725
      %v3925 = vunpack.c.h.b16 %v3725
      %v3926 = vunpack.c.l.b16 %v3726
      %v3927 = vunpack.c.l.b16 %v3727
      %v3928 = vunpack.c.h.b16 %v3727
      %v3929 = vunpack.c.l.b16 %v3728
      %v3930 = vunpack.c.l.b16 %v3729
      %v3931 = vunpack.c.h.b16 %v3729
      %v3932 = vunpack.c.l.b16 %v3730
      %v3933 = vunpack.c.l.b16 %v3731
      %v3934 = vunpack.c.h.b16 %v3731
      %v3935 = vunpack.c.l.b16 %v3732
      %v3936 = vunpack.c.l.b16 %v3733
      %v3937 = vunpack.c.h.b16 %v3733
      %v3938 = vunpack.c.l.b16 %v3734
      %v3939 = vunpack.c.l.b16 %v3735
      %v3940 = vunpack.c.h.b16 %v3735
      %v3941 = vunpack.c.l.b16 %v3736
      %v3942 = vunpack.c.l.b16 %v3737
      %v3943 = vunpack.c.h.b16 %v3737
      %v3944 = vunpack.c.l.b16 %v3738
      %v3945 = vunpack.c.l.b16 %v3739
      %v3946 = vunpack.c.h.b16 %v3739
      %v3947 = vunpack.c.l.b16 %v3740
      %v3948 = vunpack.c.l.b16 %v3741
      %v3949 = vunpack.c.h.b16 %v3741
      %v3950 = vunpack.c.l.b16 %v3742
      %v3951 = vunpack.c.l.b16 %v3743
      %v3952 = vunpack.c.h.b16 %v3743
      %v3953 = vunpack.c.l.b16 %v3744
      %v3954 = vpack.c.b16 %v3861, %v3858
      %v3955 = vpack.c.b16 %v3862, %v3859
      %v3956 = vpack.c.b16 %v3863, %v3860
      %v3957 = vpack.c.b16 %v3867, %v3864
      %v3958 = vpack.c.b16 %v3868, %v3865
      %v3959 = vpack.c.b16 %v3869, %v3866
      %v3960 = vpack.c.b16 %v3873, %v3870
      %v3961 = vpack.c.b16 %v3874, %v3871
      %v3962 = vpack.c.b16 %v3875, %v3872
      %v3963 = vpack.c.b16 %v3879, %v3876
      %v3964 = vpack.c.b16 %v3880, %v3877
      %v3965 = vpack.c.b16 %v3881, %v3878
      %v3966 = vpack.c.b16 %v3885, %v3882
      %v3967 = vpack.c.b16 %v3886, %v3883
      %v3968 = vpack.c.b16 %v3887, %v3884
      %v3969 = vpack.c.b16 %v3891, %v3888
      %v3970 = vpack.c.b16 %v3892, %v3889
      %v3971 = vpack.c.b16 %v3893, %v3890
      %v3972 = vpack.c.b16 %v3897, %v3894
      %v3973 = vpack.c.b16 %v3898, %v3895
      %v3974 = vpack.c.b16 %v3899, %v3896
      %v3975 = vpack.c.b16 %v3903, %v3900
      %v3976 = vpack.c.b16 %v3904, %v3901
      %v3977 = vpack.c.b16 %v3905, %v3902
      %v3978 = vpack.c.b16 %v3909, %v3906
      %v3979 = vpack.c.b16 %v3910, %v3907
      %v3980 = vpack.c.b16 %v3911, %v3908
      %v3981 = vpack.c.b16 %v3915, %v3912
      %v3982 = vpack.c.b16 %v3916, %v3913
      %v3983 = vpack.c.b16 %v3917, %v3914
      %v3984 = vpack.c.b16 %v3921, %v3918
      %v3985 = vpack.c.b16 %v3922, %v3919
      %v3986 = vpack.c.b16 %v3923, %v3920
      %v3987 = vpack.c.b16 %v3927, %v3924
      %v3988 = vpack.c.b16 %v3928, %v3925
      %v3989 = vpack.c.b16 %v3929, %v3926
      %v3990 = vpack.c.b16 %v3933, %v3930
      %v3991 = vpack.c.b16 %v3934, %v3931
      %v3992 = vpack.c.b16 %v3935, %v3932
      %v3993 = vpack.c.b16 %v3939, %v3936
      %v3994 = vpack.c.b16 %v3940, %v3937
      %v3995 = vpack.c.b16 %v3941, %v3938
      %v3996 = vpack.c.b16 %v3945, %v3942
      %v3997 = vpack.c.b16 %v3946, %v3943
      %v3998 = vpack.c.b16 %v3947, %v3944
      %v3999 = vpack.c.b16 %v3951, %v3948
      %v4000 = vpack.c.b16 %v3952, %v3949
      %v4001 = vpack.c.b16 %v3953, %v3950
      %v4098 = vunpack.c.l.b16 %v3746
      %v4099 = vunpack.c.l.b16 %v3747
      %v4100 = vunpack.c.l.b16 %v3748
      %v4101 = vunpack.c.l.b16 %v3749
      %v4102 = vunpack.c.l.b16 %v3750
      %v4103 = vunpack.c.l.b16 %v3751
      %v4104 = vunpack.c.l.b16 %v3752
      %v4105 = vunpack.c.l.b16 %v3753
      %v4106 = vunpack.c.l.b16 %v3754
      %v4107 = vunpack.c.l.b16 %v3755
      %v4108 = vunpack.c.l.b16 %v3756
      %v4109 = vunpack.c.l.b16 %v3757
      %v4110 = vunpack.c.l.b16 %v3758
      %v4111 = vunpack.c.l.b16 %v3759
      %v4112 = vunpack.c.l.b16 %v3760
      %v4113 = vunpack.c.l.b16 %v3761
      %v4114 = vunpack.c.l.b16 %v3762
      %v4115 = vunpack.c.l.b16 %v3763
      %v4116 = vunpack.c.l.b16 %v3764
      %v4117 = vunpack.c.l.b16 %v3765
      %v4118 = vunpack.c.l.b16 %v3766
      %v4119 = vunpack.c.l.b16 %v3767
      %v4120 = vunpack.c.l.b16 %v3768
      %v4121 = vunpack.c.l.b16 %v3769
      %v4122 = vunpack.c.l.b16 %v3770
      %v4123 = vunpack.c.l.b16 %v3771
      %v4124 = vunpack.c.l.b16 %v3772
      %v4125 = vunpack.c.l.b16 %v3773
      %v4126 = vunpack.c.l.b16 %v3774
      %v4127 = vunpack.c.l.b16 %v3775
      %v4128 = vunpack.c.l.b16 %v3776
      %v4129 = vunpack.c.l.b16 %v3777
      %v4130 = vunpack.c.l.b16 %v3778
      %v4131 = vunpack.c.l.b16 %v3779
      %v4132 = vunpack.c.l.b16 %v3780
      %v4133 = vunpack.c.l.b16 %v3781
      %v4134 = vunpack.c.l.b16 %v3782
      %v4135 = vunpack.c.l.b16 %v3783
      %v4136 = vunpack.c.l.b16 %v3784
      %v4137 = vunpack.c.l.b16 %v3785
      %v4138 = vunpack.c.l.b16 %v3786
      %v4139 = vunpack.c.l.b16 %v3787
      %v4140 = vunpack.c.l.b16 %v3788
      %v4141 = vunpack.c.l.b16 %v3789
      %v4142 = vunpack.c.l.b16 %v3790
      %v4143 = vunpack.c.l.b16 %v3791
      %v4144 = vunpack.c.l.b16 %v3792
      %v4145 = vunpack.c.l.b16 %v3793
      %v4146 = vpack.c.b16 %v4099, %v4098
      %v4147 = vpack.c.b16 %v4101, %v4100
      %v4148 = vpack.c.b16 %v4103, %v4102
      %v4149 = vpack.c.b16 %v4105, %v4104
      %v4150 = vpack.c.b16 %v4107, %v4106
      %v4151 = vpack.c.b16 %v4109, %v4108
      %v4152 = vpack.c.b16 %v4111, %v4110
      %v4153 = vpack.c.b16 %v4113, %v4112
      %v4154 = vpack.c.b16 %v4115, %v4114
      %v4155 = vpack.c.b16 %v4117, %v4116
      %v4156 = vpack.c.b16 %v4119, %v4118
      %v4157 = vpack.c.b16 %v4121, %v4120
      %v4158 = vpack.c.b16 %v4123, %v4122
      %v4159 = vpack.c.b16 %v4125, %v4124
      %v4160 = vpack.c.b16 %v4127, %v4126
      %v4161 = vpack.c.b16 %v4129, %v4128
      %v4162 = vpack.c.b16 %v4131, %v4130
      %v4163 = vpack.c.b16 %v4133, %v4132
      %v4164 = vpack.c.b16 %v4135, %v4134
      %v4165 = vpack.c.b16 %v4137, %v4136
      %v4166 = vpack.c.b16 %v4139, %v4138
      %v4167 = vpack.c.b16 %v4141, %v4140
      %v4168 = vpack.c.b16 %v4143, %v4142
      %v4169 = vpack.c.b16 %v4145, %v4144
      %4194 = vmatprep.subr.bf16.mxu0 0
      %4195 = vmatpush1.bf16.msra.mxu0 %v4153
      %4196 = vmatprep.subr.bf16.mxu0 0
      %4197 = vmatpush1.bf16.msra.mxu0 %v4152
      %4198 = vmatprep.subr.bf16.mxu0 0
      %4199 = vmatpush1.bf16.msra.mxu0 %v4151
      %4200 = vmatprep.subr.bf16.mxu0 0
      %4201 = vmatpush1.bf16.msra.mxu0 %v4150
      %4202 = vmatprep.subr.bf16.mxu0 0
      %4203 = vmatpush1.bf16.msra.mxu0 %v4149
      %4204 = vmatprep.subr.bf16.mxu0 0
      %4205 = vmatpush1.bf16.msra.mxu0 %v4148
      %4206 = vmatprep.subr.bf16.mxu0 0
      %4207 = vmatpush1.bf16.msra.mxu0 %v4147
      %4208 = vmatprep.subr.bf16.mxu0 0
      %4209 = vmatpush1.bf16.msra.mxu0 %v4146
      %4210 = vmatprep.subr.bf16.mxu0 0
      %4211 = vmatpush2.bf16.msra.mxu0 %v4161
      %4212 = vmatprep.subr.bf16.mxu0 0
      %4213 = vmatpush2.bf16.msra.mxu0 %v4160
      %4214 = vmatprep.subr.bf16.mxu0 0
      %4215 = vmatpush2.bf16.msra.mxu0 %v4159
      %4216 = vmatprep.subr.bf16.mxu0 0
      %4217 = vmatpush2.bf16.msra.mxu0 %v4158
      %4218 = vmatprep.subr.bf16.mxu0 0
      %4219 = vmatpush2.bf16.msra.mxu0 %v4157
      %4220 = vmatprep.subr.bf16.mxu0 0
      %4221 = vmatpush2.bf16.msra.mxu0 %v4156
      %4222 = vmatprep.subr.bf16.mxu0 0
      %4223 = vmatpush2.bf16.msra.mxu0 %v4155
      %4224 = vmatprep.subr.bf16.mxu0 0
      %4225 = vmatpush2.bf16.msra.mxu0 %v4154
      %4226 = vmatprep.mubr.bf16.mxu0 %v3955
      %4227 = vmatmul.mubr.bf16.gmra.mxu0 %v3954
      %v4228 = vpop.f32.mrf.mxu0
      %v4229 = vadd.f32 0.0, %v4228
      %v4230 = vpop.f32.mrf.mxu0
      %v4231 = vpop.f32.mrf.mxu0
      %v4232 = vadd.f32 0.0, %v4231
      %v4233 = vpop.f32.mrf.mxu0
      %4234 = vmatprep.mubr.bf16.mxu0 %v3958
      %4235 = vmatmul.mubr.bf16.gmra.mxu0 %v3957
      %v4236 = vpop.f32.mrf.mxu0
      %v4237 = vadd.f32 0.0, %v4236
      %v4238 = vpop.f32.mrf.mxu0
      %v4239 = vpop.f32.mrf.mxu0
      %v4240 = vadd.f32 0.0, %v4239
      %v4241 = vpop.f32.mrf.mxu0
      %4242 = vmatprep.mubr.bf16.mxu0 %v3961
      %4243 = vmatmul.mubr.bf16.gmra.mxu0 %v3960
      %v4244 = vpop.f32.mrf.mxu0
      %v4245 = vadd.f32 0.0, %v4244
      %v4246 = vpop.f32.mrf.mxu0
      %v4247 = vpop.f32.mrf.mxu0
      %v4248 = vadd.f32 0.0, %v4247
      %v4249 = vpop.f32.mrf.mxu0
      %4250 = vmatprep.mubr.bf16.mxu0 %v3964
      %4251 = vmatmul.mubr.bf16.gmra.mxu0 %v3963
      %v4252 = vpop.f32.mrf.mxu0
      %v4253 = vadd.f32 0.0, %v4252
      %v4254 = vpop.f32.mrf.mxu0
      %v4255 = vpop.f32.mrf.mxu0
      %v4256 = vadd.f32 0.0, %v4255
      %v4257 = vpop.f32.mrf.mxu0
      %4258 = vmatprep.mubr.bf16.mxu0 %v3967
      %4259 = vmatmul.mubr.bf16.gmra.mxu0 %v3966
      %v4260 = vpop.f32.mrf.mxu0
      %v4261 = vadd.f32 0.0, %v4260
      %v4262 = vpop.f32.mrf.mxu0
      %v4263 = vpop.f32.mrf.mxu0
      %v4264 = vadd.f32 0.0, %v4263
      %v4265 = vpop.f32.mrf.mxu0
      %4266 = vmatprep.mubr.bf16.mxu0 %v3970
      %4267 = vmatmul.mubr.bf16.gmra.mxu0 %v3969
      %v4268 = vpop.f32.mrf.mxu0
      %v4269 = vadd.f32 0.0, %v4268
      %v4270 = vpop.f32.mrf.mxu0
      %v4271 = vpop.f32.mrf.mxu0
      %v4272 = vadd.f32 0.0, %v4271
      %v4273 = vpop.f32.mrf.mxu0
      %4274 = vmatprep.mubr.bf16.mxu0 %v3973
      %4275 = vmatmul.mubr.bf16.gmra.mxu0 %v3972
      %v4276 = vpop.f32.mrf.mxu0
      %v4277 = vadd.f32 0.0, %v4276
      %v4278 = vpop.f32.mrf.mxu0
      %v4279 = vpop.f32.mrf.mxu0
      %v4280 = vadd.f32 0.0, %v4279
      %v4281 = vpop.f32.mrf.mxu0
      %4282 = vmatprep.mubr.bf16.mxu0 %v3976
      %4283 = vmatmul.mubr.bf16.gmra.mxu0 %v3975
      %v4284 = vpop.f32.mrf.mxu0
      %v4285 = vadd.f32 0.0, %v4284
      %v4286 = vpop.f32.mrf.mxu0
      %v4287 = vpop.f32.mrf.mxu0
      %v4288 = vadd.f32 0.0, %v4287
      %v4289 = vpop.f32.mrf.mxu0
      %4290 = vmatprep.mubr.bf16.mxu0 %v3979
      %4291 = vmatmul.mubr.bf16.gmra.mxu0 %v3978
      %v4292 = vpop.f32.mrf.mxu0
      %v4293 = vadd.f32 0.0, %v4292
      %v4294 = vpop.f32.mrf.mxu0
      %v4295 = vpop.f32.mrf.mxu0
      %v4296 = vadd.f32 0.0, %v4295
      %v4297 = vpop.f32.mrf.mxu0
      %4298 = vmatprep.mubr.bf16.mxu0 %v3982
      %4299 = vmatmul.mubr.bf16.gmra.mxu0 %v3981
      %v4300 = vpop.f32.mrf.mxu0
      %v4301 = vadd.f32 0.0, %v4300
      %v4302 = vpop.f32.mrf.mxu0
      %v4303 = vpop.f32.mrf.mxu0
      %v4304 = vadd.f32 0.0, %v4303
      %v4305 = vpop.f32.mrf.mxu0
      %4306 = vmatprep.mubr.bf16.mxu0 %v3985
      %4307 = vmatmul.mubr.bf16.gmra.mxu0 %v3984
      %v4308 = vpop.f32.mrf.mxu0
      %v4309 = vadd.f32 0.0, %v4308
      %v4310 = vpop.f32.mrf.mxu0
      %v4311 = vpop.f32.mrf.mxu0
      %v4312 = vadd.f32 0.0, %v4311
      %v4313 = vpop.f32.mrf.mxu0
      %4314 = vmatprep.mubr.bf16.mxu0 %v3988
      %4315 = vmatmul.mubr.bf16.gmra.mxu0 %v3987
      %v4316 = vpop.f32.mrf.mxu0
      %v4317 = vadd.f32 0.0, %v4316
      %v4318 = vpop.f32.mrf.mxu0
      %v4319 = vpop.f32.mrf.mxu0
      %v4320 = vadd.f32 0.0, %v4319
      %v4321 = vpop.f32.mrf.mxu0
      %4322 = vmatprep.mubr.bf16.mxu0 %v3991
      %4323 = vmatmul.mubr.bf16.gmra.mxu0 %v3990
      %v4324 = vpop.f32.mrf.mxu0
      %v4325 = vadd.f32 0.0, %v4324
      %v4326 = vpop.f32.mrf.mxu0
      %v4327 = vpop.f32.mrf.mxu0
      %v4328 = vadd.f32 0.0, %v4327
      %v4329 = vpop.f32.mrf.mxu0
      %4330 = vmatprep.mubr.bf16.mxu0 %v3994
      %4331 = vmatmul.mubr.bf16.gmra.mxu0 %v3993
      %v4332 = vpop.f32.mrf.mxu0
      %v4333 = vadd.f32 0.0, %v4332
      %v4334 = vpop.f32.mrf.mxu0
      %v4335 = vpop.f32.mrf.mxu0
      %v4336 = vadd.f32 0.0, %v4335
      %v4337 = vpop.f32.mrf.mxu0
      %4338 = vmatprep.mubr.bf16.mxu0 %v3997
      %4339 = vmatmul.mubr.bf16.gmra.mxu0 %v3996
      %v4340 = vpop.f32.mrf.mxu0
      %v4341 = vadd.f32 0.0, %v4340
      %v4342 = vpop.f32.mrf.mxu0
      %v4343 = vpop.f32.mrf.mxu0
      %v4344 = vadd.f32 0.0, %v4343
      %v4345 = vpop.f32.mrf.mxu0
      %4346 = vmatprep.mubr.bf16.mxu0 %v4000
      %4347 = vmatmul.mubr.bf16.gmra.mxu0 %v3999
      %v4348 = vpop.f32.mrf.mxu0
      %v4349 = vadd.f32 0.0, %v4348
      %v4350 = vpop.f32.mrf.mxu0
      %v4351 = vpop.f32.mrf.mxu0
      %v4352 = vadd.f32 0.0, %v4351
      %v4353 = vpop.f32.mrf.mxu0
      %4354 = vdwg.mxu0
      %4355 = vmatprep.subr.bf16.mxu0 0
      %4356 = vmatpush1.bf16.msra.mxu0 %v4169
      %4357 = vmatprep.subr.bf16.mxu0 0
      %4358 = vmatpush1.bf16.msra.mxu0 %v4168
      %4359 = vmatprep.subr.bf16.mxu0 0
      %4360 = vmatpush1.bf16.msra.mxu0 %v4167
      %4361 = vmatprep.subr.bf16.mxu0 0
      %4362 = vmatpush1.bf16.msra.mxu0 %v4166
      %4363 = vmatprep.subr.bf16.mxu0 0
      %4364 = vmatpush1.bf16.msra.mxu0 %v4165
      %4365 = vmatprep.subr.bf16.mxu0 0
      %4366 = vmatpush1.bf16.msra.mxu0 %v4164
      %4367 = vmatprep.subr.bf16.mxu0 0
      %4368 = vmatpush1.bf16.msra.mxu0 %v4163
      %4369 = vmatprep.subr.bf16.mxu0 0
      %4370 = vmatpush1.bf16.msra.mxu0 %v4162
      %4371 = vmatprep.subr.bf16.mxu0 0
      %4372 = vmatpush2.bf16.msra.mxu0 0
      %4373 = vmatprep.subr.bf16.mxu0 0
      %4374 = vmatpush2.bf16.msra.mxu0 0
      %4375 = vmatprep.subr.bf16.mxu0 0
      %4376 = vmatpush2.bf16.msra.mxu0 0
      %4377 = vmatprep.subr.bf16.mxu0 0
      %4378 = vmatpush2.bf16.msra.mxu0 0
      %4379 = vmatprep.subr.bf16.mxu0 0
      %4380 = vmatpush2.bf16.msra.mxu0 0
      %4381 = vmatprep.subr.bf16.mxu0 0
      %4382 = vmatpush2.bf16.msra.mxu0 0
      %4383 = vmatprep.subr.bf16.mxu0 0
      %4384 = vmatpush2.bf16.msra.mxu0 0
      %4385 = vmatprep.subr.bf16.mxu0 0
      %4386 = vmatpush2.bf16.msra.mxu0 0
      %4387 = vmatprep.mubr.bf16.mxu0 0
      %4388 = vmatmul.mubr.bf16.gmra.mxu0 %v3956
      %v4389 = vpop.f32.mrf.mxu0
      %v4390 = vadd.f32 %v4229, %v4389
      %v4391 = vpop.f32.mrf.mxu0
      %v4392 = vpop.f32.mrf.mxu0
      %v4393 = vadd.f32 %v4232, %v4392
      %v4394 = vpop.f32.mrf.mxu0
      %4395 = vmatprep.mubr.bf16.mxu0 0
      %4396 = vmatmul.mubr.bf16.gmra.mxu0 %v3959
      %v4397 = vpop.f32.mrf.mxu0
      %v4398 = vadd.f32 %v4237, %v4397
      %v4399 = vpop.f32.mrf.mxu0
      %v4400 = vpop.f32.mrf.mxu0
      %v4401 = vadd.f32 %v4240, %v4400
      %v4402 = vpop.f32.mrf.mxu0
      %4403 = vmatprep.mubr.bf16.mxu0 0
      %4404 = vmatmul.mubr.bf16.gmra.mxu0 %v3962
      %v4405 = vpop.f32.mrf.mxu0
      %v4406 = vadd.f32 %v4245, %v4405
      %v4407 = vpop.f32.mrf.mxu0
      %v4408 = vpop.f32.mrf.mxu0
      %v4409 = vadd.f32 %v4248, %v4408
      %v4410 = vpop.f32.mrf.mxu0
      %4411 = vmatprep.mubr.bf16.mxu0 0
      %4412 = vmatmul.mubr.bf16.gmra.mxu0 %v3965
      %v4413 = vpop.f32.mrf.mxu0
      %v4414 = vadd.f32 %v4253, %v4413
      %v4415 = vpop.f32.mrf.mxu0
      %v4416 = vpop.f32.mrf.mxu0
      %v4417 = vadd.f32 %v4256, %v4416
      %v4418 = vpop.f32.mrf.mxu0
      %4419 = vmatprep.mubr.bf16.mxu0 0
      %4420 = vmatmul.mubr.bf16.gmra.mxu0 %v3968
      %v4421 = vpop.f32.mrf.mxu0
      %v4422 = vadd.f32 %v4261, %v4421
      %v4423 = vpop.f32.mrf.mxu0
      %v4424 = vpop.f32.mrf.mxu0
      %v4425 = vadd.f32 %v4264, %v4424
      %v4426 = vpop.f32.mrf.mxu0
      %4427 = vmatprep.mubr.bf16.mxu0 0
      %4428 = vmatmul.mubr.bf16.gmra.mxu0 %v3971
      %v4429 = vpop.f32.mrf.mxu0
      %v4430 = vadd.f32 %v4269, %v4429
      %v4431 = vpop.f32.mrf.mxu0
      %v4432 = vpop.f32.mrf.mxu0
      %v4433 = vadd.f32 %v4272, %v4432
      %v4434 = vpop.f32.mrf.mxu0
      %4435 = vmatprep.mubr.bf16.mxu0 0
      %4436 = vmatmul.mubr.bf16.gmra.mxu0 %v3974
      %v4437 = vpop.f32.mrf.mxu0
      %v4438 = vadd.f32 %v4277, %v4437
      %v4439 = vpop.f32.mrf.mxu0
      %v4440 = vpop.f32.mrf.mxu0
      %v4441 = vadd.f32 %v4280, %v4440
      %v4442 = vpop.f32.mrf.mxu0
      %4443 = vmatprep.mubr.bf16.mxu0 0
      %4444 = vmatmul.mubr.bf16.gmra.mxu0 %v3977
      %v4445 = vpop.f32.mrf.mxu0
      %v4446 = vadd.f32 %v4285, %v4445
      %v4447 = vpop.f32.mrf.mxu0
      %v4448 = vpop.f32.mrf.mxu0
      %v4449 = vadd.f32 %v4288, %v4448
      %v4450 = vpop.f32.mrf.mxu0
      %4451 = vmatprep.mubr.bf16.mxu0 0
      %4452 = vmatmul.mubr.bf16.gmra.mxu0 %v3980
      %v4453 = vpop.f32.mrf.mxu0
      %v4454 = vadd.f32 %v4293, %v4453
      %v4455 = vpop.f32.mrf.mxu0
      %v4456 = vpop.f32.mrf.mxu0
      %v4457 = vadd.f32 %v4296, %v4456
      %v4458 = vpop.f32.mrf.mxu0
      %4459 = vmatprep.mubr.bf16.mxu0 0
      %4460 = vmatmul.mubr.bf16.gmra.mxu0 %v3983
      %v4461 = vpop.f32.mrf.mxu0
      %v4462 = vadd.f32 %v4301, %v4461
      %v4463 = vpop.f32.mrf.mxu0
      %v4464 = vpop.f32.mrf.mxu0
      %v4465 = vadd.f32 %v4304, %v4464
      %v4466 = vpop.f32.mrf.mxu0
      %4467 = vmatprep.mubr.bf16.mxu0 0
      %4468 = vmatmul.mubr.bf16.gmra.mxu0 %v3986
      %v4469 = vpop.f32.mrf.mxu0
      %v4470 = vadd.f32 %v4309, %v4469
      %v4471 = vpop.f32.mrf.mxu0
      %v4472 = vpop.f32.mrf.mxu0
      %v4473 = vadd.f32 %v4312, %v4472
      %v4474 = vpop.f32.mrf.mxu0
      %4475 = vmatprep.mubr.bf16.mxu0 0
      %4476 = vmatmul.mubr.bf16.gmra.mxu0 %v3989
      %v4477 = vpop.f32.mrf.mxu0
      %v4478 = vadd.f32 %v4317, %v4477
      %v4479 = vpop.f32.mrf.mxu0
      %v4480 = vpop.f32.mrf.mxu0
      %v4481 = vadd.f32 %v4320, %v4480
      %v4482 = vpop.f32.mrf.mxu0
      %4483 = vmatprep.mubr.bf16.mxu0 0
      %4484 = vmatmul.mubr.bf16.gmra.mxu0 %v3992
      %v4485 = vpop.f32.mrf.mxu0
      %v4486 = vadd.f32 %v4325, %v4485
      %v4487 = vpop.f32.mrf.mxu0
      %v4488 = vpop.f32.mrf.mxu0
      %v4489 = vadd.f32 %v4328, %v4488
      %v4490 = vpop.f32.mrf.mxu0
      %4491 = vmatprep.mubr.bf16.mxu0 0
      %4492 = vmatmul.mubr.bf16.gmra.mxu0 %v3995
      %v4493 = vpop.f32.mrf.mxu0
      %v4494 = vadd.f32 %v4333, %v4493
      %v4495 = vpop.f32.mrf.mxu0
      %v4496 = vpop.f32.mrf.mxu0
      %v4497 = vadd.f32 %v4336, %v4496
      %v4498 = vpop.f32.mrf.mxu0
      %4499 = vmatprep.mubr.bf16.mxu0 0
      %4500 = vmatmul.mubr.bf16.gmra.mxu0 %v3998
      %v4501 = vpop.f32.mrf.mxu0
      %v4502 = vadd.f32 %v4341, %v4501
      %v4503 = vpop.f32.mrf.mxu0
      %v4504 = vpop.f32.mrf.mxu0
      %v4505 = vadd.f32 %v4344, %v4504
      %v4506 = vpop.f32.mrf.mxu0
      %4507 = vmatprep.mubr.bf16.mxu0 0
      %4508 = vmatmul.mubr.bf16.gmra.mxu0 %v4001
      %v4509 = vpop.f32.mrf.mxu0
      %v4510 = vadd.f32 %v4349, %v4509
      %v4511 = vpop.f32.mrf.mxu0
      %v4512 = vpop.f32.mrf.mxu0
      %v4513 = vadd.f32 %v4352, %v4512
      %v4514 = vpop.f32.mrf.mxu0
      %4515 = vdwg.mxu0
      %v4516 = vld [vmem:[#allocation4] sm:$0xff]
      %v4517 = vld [vmem:[#allocation4 + $0x8] sm:$0xff]
      %v4518 = vld [vmem:[#allocation4 + $0x10] sm:$0xff]
      %v4519 = vld [vmem:[#allocation4 + $0x18] sm:$0xff]
      %v4520 = vld [vmem:[#allocation4 + $0x20] sm:$0xff]
      %v4521 = vld [vmem:[#allocation4 + $0x28] sm:$0xff]
      %v4522 = vld [vmem:[#allocation4 + $0x30] sm:$0xff]
      %v4523 = vld [vmem:[#allocation4 + $0x38] sm:$0xff]
      %v4524 = vld [vmem:[#allocation4 + $0x40] sm:$0xff]
      %v4525 = vld [vmem:[#allocation4 + $0x48] sm:$0xff]
      %v4526 = vld [vmem:[#allocation4 + $0x50] sm:$0xff]
      %v4527 = vld [vmem:[#allocation4 + $0x58] sm:$0xff]
      %v4528 = vld [vmem:[#allocation4 + $0x60] sm:$0xff]
      %v4529 = vld [vmem:[#allocation4 + $0x68] sm:$0xff]
      %v4530 = vld [vmem:[#allocation4 + $0x70] sm:$0xff]
      %v4531 = vld [vmem:[#allocation4 + $0x78] sm:$0xff]
      %v4532 = vld [vmem:[#allocation4 + $0x80] sm:$0xff]
      %v4533 = vld [vmem:[#allocation4 + $0x88] sm:$0xff]
      %v4534 = vld [vmem:[#allocation4 + $0x90] sm:$0xff]
      %v4535 = vld [vmem:[#allocation4 + $0x98] sm:$0xff]
      %v4536 = vld [vmem:[#allocation4 + $0xa0] sm:$0xff]
      %v4537 = vld [vmem:[#allocation4 + $0xa8] sm:$0xff]
      %v4538 = vld [vmem:[#allocation4 + $0xb0] sm:$0xff]
      %v4539 = vld [vmem:[#allocation4 + $0xb8] sm:$0xff]
      %v4540 = vld [vmem:[#allocation4 + $0xc0] sm:$0xff]
      %v4541 = vld [vmem:[#allocation4 + $0xc8] sm:$0xff]
      %v4542 = vld [vmem:[#allocation4 + $0xd0] sm:$0xff]
      %v4543 = vld [vmem:[#allocation4 + $0xd8] sm:$0xff]
      %v4544 = vld [vmem:[#allocation4 + $0xe0] sm:$0xff]
      %v4545 = vld [vmem:[#allocation4 + $0xe8] sm:$0xff]
      %v4546 = vld [vmem:[#allocation4 + $0xf0] sm:$0xff]
      %v4547 = vld [vmem:[#allocation4 + $0xf8] sm:$0xff]
      %v4548 = vadd.f32 %v4516, %v4390
      %v4549 = vadd.f32 %v4517, %v4393
      %v4550 = vadd.f32 %v4518, %v4398
      %v4551 = vadd.f32 %v4519, %v4401
      %v4552 = vadd.f32 %v4520, %v4406
      %v4553 = vadd.f32 %v4521, %v4409
      %v4554 = vadd.f32 %v4522, %v4414
      %v4555 = vadd.f32 %v4523, %v4417
      %v4556 = vadd.f32 %v4524, %v4422
      %v4557 = vadd.f32 %v4525, %v4425
      %v4558 = vadd.f32 %v4526, %v4430
      %v4559 = vadd.f32 %v4527, %v4433
      %v4560 = vadd.f32 %v4528, %v4438
      %v4561 = vadd.f32 %v4529, %v4441
      %v4562 = vadd.f32 %v4530, %v4446
      %v4563 = vadd.f32 %v4531, %v4449
      %v4564 = vadd.f32 %v4532, %v4454
      %v4565 = vadd.f32 %v4533, %v4457
      %v4566 = vadd.f32 %v4534, %v4462
      %v4567 = vadd.f32 %v4535, %v4465
      %v4568 = vadd.f32 %v4536, %v4470
      %v4569 = vadd.f32 %v4537, %v4473
      %v4570 = vadd.f32 %v4538, %v4478
      %v4571 = vadd.f32 %v4539, %v4481
      %v4572 = vadd.f32 %v4540, %v4486
      %v4573 = vadd.f32 %v4541, %v4489
      %v4574 = vadd.f32 %v4542, %v4494
      %v4575 = vadd.f32 %v4543, %v4497
      %v4576 = vadd.f32 %v4544, %v4502
      %v4577 = vadd.f32 %v4545, %v4505
      %v4578 = vadd.f32 %v4546, %v4510
      %v4579 = vadd.f32 %v4547, %v4513
      %4580 = vst [vmem:[#allocation4] sm:$0xff] %v4548
      %4581 = vst [vmem:[#allocation4 + $0x8] sm:$0xff] %v4549
      %4582 = vst [vmem:[#allocation4 + $0x10] sm:$0xff] %v4550
      %4583 = vst [vmem:[#allocation4 + $0x18] sm:$0xff] %v4551
      %4584 = vst [vmem:[#allocation4 + $0x20] sm:$0xff] %v4552
      %4585 = vst [vmem:[#allocation4 + $0x28] sm:$0xff] %v4553
      %4586 = vst [vmem:[#allocation4 + $0x30] sm:$0xff] %v4554
      %4587 = vst [vmem:[#allocation4 + $0x38] sm:$0xff] %v4555
      %4588 = vst [vmem:[#allocation4 + $0x40] sm:$0xff] %v4556
      %4589 = vst [vmem:[#allocation4 + $0x48] sm:$0xff] %v4557
      %4590 = vst [vmem:[#allocation4 + $0x50] sm:$0xff] %v4558
      %4591 = vst [vmem:[#allocation4 + $0x58] sm:$0xff] %v4559
      %4592 = vst [vmem:[#allocation4 + $0x60] sm:$0xff] %v4560
      %4593 = vst [vmem:[#allocation4 + $0x68] sm:$0xff] %v4561
      %4594 = vst [vmem:[#allocation4 + $0x70] sm:$0xff] %v4562
      %4595 = vst [vmem:[#allocation4 + $0x78] sm:$0xff] %v4563
      %4596 = vst [vmem:[#allocation4 + $0x80] sm:$0xff] %v4564
      %4597 = vst [vmem:[#allocation4 + $0x88] sm:$0xff] %v4565
      %4598 = vst [vmem:[#allocation4 + $0x90] sm:$0xff] %v4566
      %4599 = vst [vmem:[#allocation4 + $0x98] sm:$0xff] %v4567
      %4600 = vst [vmem:[#allocation4 + $0xa0] sm:$0xff] %v4568
      %4601 = vst [vmem:[#allocation4 + $0xa8] sm:$0xff] %v4569
      %4602 = vst [vmem:[#allocation4 + $0xb0] sm:$0xff] %v4570
      %4603 = vst [vmem:[#allocation4 + $0xb8] sm:$0xff] %v4571
      %4604 = vst [vmem:[#allocation4 + $0xc0] sm:$0xff] %v4572
      %4605 = vst [vmem:[#allocation4 + $0xc8] sm:$0xff] %v4573
      %4606 = vst [vmem:[#allocation4 + $0xd0] sm:$0xff] %v4574
      %4607 = vst [vmem:[#allocation4 + $0xd8] sm:$0xff] %v4575
      %4608 = vst [vmem:[#allocation4 + $0xe0] sm:$0xff] %v4576
      %4609 = vst [vmem:[#allocation4 + $0xe8] sm:$0xff] %v4577
      %4610 = vst [vmem:[#allocation4 + $0xf0] sm:$0xff] %v4578
      %4611 = vst [vmem:[#allocation4 + $0xf8] sm:$0xff] %v4579
      %s4612 = scalar_lea.vmem [#allocation3], 48
      %v4613 = vld [vmem:[%s4612] sm:$0xff]
      %v4614 = vld [vmem:[%s4612 + $0x8] sm:$0xf]
      %v4615 = vld [vmem:[%s4612 + $0xc] sm:$0xff]
      %v4616 = vld [vmem:[%s4612 + $0x14] sm:$0xf]
      %v4617 = vld [vmem:[%s4612 + $0x18] sm:$0xff]
      %v4618 = vld [vmem:[%s4612 + $0x20] sm:$0xf]
      %v4619 = vld [vmem:[%s4612 + $0x24] sm:$0xff]
      %v4620 = vld [vmem:[%s4612 + $0x2c] sm:$0xf]
      %v4621 = vld [vmem:[%s4612 + $0x30] sm:$0xff]
      %v4622 = vld [vmem:[%s4612 + $0x38] sm:$0xf]
      %v4623 = vld [vmem:[%s4612 + $0x3c] sm:$0xff]
      %v4624 = vld [vmem:[%s4612 + $0x44] sm:$0xf]
      %v4625 = vld [vmem:[%s4612 + $0x48] sm:$0xff]
      %v4626 = vld [vmem:[%s4612 + $0x50] sm:$0xf]
      %v4627 = vld [vmem:[%s4612 + $0x54] sm:$0xff]
      %v4628 = vld [vmem:[%s4612 + $0x5c] sm:$0xf]
      %v4629 = vld [vmem:[%s4612 + $0x60] sm:$0xff]
      %v4630 = vld [vmem:[%s4612 + $0x68] sm:$0xf]
      %v4631 = vld [vmem:[%s4612 + $0x6c] sm:$0xff]
      %v4632 = vld [vmem:[%s4612 + $0x74] sm:$0xf]
      %v4633 = vld [vmem:[%s4612 + $0x78] sm:$0xff]
      %v4634 = vld [vmem:[%s4612 + $0x80] sm:$0xf]
      %v4635 = vld [vmem:[%s4612 + $0x84] sm:$0xff]
      %v4636 = vld [vmem:[%s4612 + $0x8c] sm:$0xf]
      %v4637 = vld [vmem:[%s4612 + $0x90] sm:$0xff]
      %v4638 = vld [vmem:[%s4612 + $0x98] sm:$0xf]
      %v4639 = vld [vmem:[%s4612 + $0x9c] sm:$0xff]
      %v4640 = vld [vmem:[%s4612 + $0xa4] sm:$0xf]
      %v4641 = vld [vmem:[%s4612 + $0xa8] sm:$0xff]
      %v4642 = vld [vmem:[%s4612 + $0xb0] sm:$0xf]
      %v4643 = vld [vmem:[%s4612 + $0xb4] sm:$0xff]
      %v4644 = vld [vmem:[%s4612 + $0xbc] sm:$0xf]
      %v4645 = vld [vmem:[%s4612 + $0xc0] sm:$0xff]
      %v4646 = vld [vmem:[%s4612 + $0xc8] sm:$0xf]
      %v4647 = vld [vmem:[%s4612 + $0xcc] sm:$0xff]
      %v4648 = vld [vmem:[%s4612 + $0xd4] sm:$0xf]
      %v4649 = vld [vmem:[%s4612 + $0xd8] sm:$0xff]
      %v4650 = vld [vmem:[%s4612 + $0xe0] sm:$0xf]
      %v4651 = vld [vmem:[%s4612 + $0xe4] sm:$0xff]
      %v4652 = vld [vmem:[%s4612 + $0xec] sm:$0xf]
      %v4653 = vld [vmem:[%s4612 + $0xf0] sm:$0xff]
      %v4654 = vld [vmem:[%s4612 + $0xf8] sm:$0xf]
      %v4655 = vld [vmem:[%s4612 + $0xfc] sm:$0xff]
      %v4656 = vld [vmem:[%s4612 + $0x104] sm:$0xf]
      %v4657 = vld [vmem:[%s4612 + $0x108] sm:$0xff]
      %v4658 = vld [vmem:[%s4612 + $0x110] sm:$0xf]
      %v4659 = vld [vmem:[%s4612 + $0x114] sm:$0xff]
      %v4660 = vld [vmem:[%s4612 + $0x11c] sm:$0xf]
      %v4661 = vld [vmem:[%s4612 + $0x120] sm:$0xff]
      %v4662 = vld [vmem:[%s4612 + $0x128] sm:$0xf]
      %v4663 = vld [vmem:[%s4612 + $0x12c] sm:$0xff]
      %v4664 = vld [vmem:[%s4612 + $0x134] sm:$0xf]
      %v4665 = vld [vmem:[%s4612 + $0x138] sm:$0xff]
      %v4666 = vld [vmem:[%s4612 + $0x140] sm:$0xf]
      %v4667 = vld [vmem:[%s4612 + $0x144] sm:$0xff]
      %v4668 = vld [vmem:[%s4612 + $0x14c] sm:$0xf]
      %v4669 = vld [vmem:[%s4612 + $0x150] sm:$0xff]
      %v4670 = vld [vmem:[%s4612 + $0x158] sm:$0xf]
      %v4671 = vld [vmem:[%s4612 + $0x15c] sm:$0xff]
      %v4672 = vld [vmem:[%s4612 + $0x164] sm:$0xf]
      %v4673 = vld [vmem:[%s4612 + $0x168] sm:$0xff]
      %v4674 = vld [vmem:[%s4612 + $0x170] sm:$0xf]
      %v4675 = vld [vmem:[%s4612 + $0x174] sm:$0xff]
      %v4676 = vld [vmem:[%s4612 + $0x17c] sm:$0xf]
      %s4677 = scalar_lea.vmem %s3, 384
      %v4678 = vld [vmem:[%s4677] sm:$0xf]
      %v4679 = vld [vmem:[%s4677 + $0x4] sm:$0xf]
      %v4680 = vld [vmem:[%s4677 + $0x8] sm:$0xf]
      %v4681 = vld [vmem:[%s4677 + $0xc] sm:$0xf]
      %v4682 = vld [vmem:[%s4677 + $0x10] sm:$0xf]
      %v4683 = vld [vmem:[%s4677 + $0x14] sm:$0xf]
      %v4684 = vld [vmem:[%s4677 + $0x18] sm:$0xf]
      %v4685 = vld [vmem:[%s4677 + $0x1c] sm:$0xf]
      %v4686 = vld [vmem:[%s4677 + $0x20] sm:$0xf]
      %v4687 = vld [vmem:[%s4677 + $0x24] sm:$0xf]
      %v4688 = vld [vmem:[%s4677 + $0x28] sm:$0xf]
      %v4689 = vld [vmem:[%s4677 + $0x2c] sm:$0xf]
      %v4690 = vld [vmem:[%s4677 + $0x30] sm:$0xf]
      %v4691 = vld [vmem:[%s4677 + $0x34] sm:$0xf]
      %v4692 = vld [vmem:[%s4677 + $0x38] sm:$0xf]
      %v4693 = vld [vmem:[%s4677 + $0x3c] sm:$0xf]
      %v4694 = vld [vmem:[%s4677 + $0x40] sm:$0xf]
      %v4695 = vld [vmem:[%s4677 + $0x44] sm:$0xf]
      %v4696 = vld [vmem:[%s4677 + $0x48] sm:$0xf]
      %v4697 = vld [vmem:[%s4677 + $0x4c] sm:$0xf]
      %v4698 = vld [vmem:[%s4677 + $0x50] sm:$0xf]
      %v4699 = vld [vmem:[%s4677 + $0x54] sm:$0xf]
      %v4700 = vld [vmem:[%s4677 + $0x58] sm:$0xf]
      %v4701 = vld [vmem:[%s4677 + $0x5c] sm:$0xf]
      %v4702 = vld [vmem:[%s4677 + $0x60] sm:$0xf]
      %v4703 = vld [vmem:[%s4677 + $0x64] sm:$0xf]
      %v4704 = vld [vmem:[%s4677 + $0x68] sm:$0xf]
      %v4705 = vld [vmem:[%s4677 + $0x6c] sm:$0xf]
      %v4706 = vld [vmem:[%s4677 + $0x70] sm:$0xf]
      %v4707 = vld [vmem:[%s4677 + $0x74] sm:$0xf]
      %v4708 = vld [vmem:[%s4677 + $0x78] sm:$0xf]
      %v4709 = vld [vmem:[%s4677 + $0x7c] sm:$0xf]
      %v4710 = vld [vmem:[%s4677 + $0x80] sm:$0xf]
      %v4711 = vld [vmem:[%s4677 + $0x84] sm:$0xf]
      %v4712 = vld [vmem:[%s4677 + $0x88] sm:$0xf]
      %v4713 = vld [vmem:[%s4677 + $0x8c] sm:$0xf]
      %v4714 = vld [vmem:[%s4677 + $0x90] sm:$0xf]
      %v4715 = vld [vmem:[%s4677 + $0x94] sm:$0xf]
      %v4716 = vld [vmem:[%s4677 + $0x98] sm:$0xf]
      %v4717 = vld [vmem:[%s4677 + $0x9c] sm:$0xf]
      %v4718 = vld [vmem:[%s4677 + $0xa0] sm:$0xf]
      %v4719 = vld [vmem:[%s4677 + $0xa4] sm:$0xf]
      %v4720 = vld [vmem:[%s4677 + $0xa8] sm:$0xf]
      %v4721 = vld [vmem:[%s4677 + $0xac] sm:$0xf]
      %v4722 = vld [vmem:[%s4677 + $0xb0] sm:$0xf]
      %v4723 = vld [vmem:[%s4677 + $0xb4] sm:$0xf]
      %v4724 = vld [vmem:[%s4677 + $0xb8] sm:$0xf]
      %v4725 = vld [vmem:[%s4677 + $0xbc] sm:$0xf]
      %v4790 = vunpack.c.l.b16 %v4613
      %v4791 = vunpack.c.h.b16 %v4613
      %v4792 = vunpack.c.l.b16 %v4614
      %v4793 = vunpack.c.l.b16 %v4615
      %v4794 = vunpack.c.h.b16 %v4615
      %v4795 = vunpack.c.l.b16 %v4616
      %v4796 = vunpack.c.l.b16 %v4617
      %v4797 = vunpack.c.h.b16 %v4617
      %v4798 = vunpack.c.l.b16 %v4618
      %v4799 = vunpack.c.l.b16 %v4619
      %v4800 = vunpack.c.h.b16 %v4619
      %v4801 = vunpack.c.l.b16 %v4620
      %v4802 = vunpack.c.l.b16 %v4621
      %v4803 = vunpack.c.h.b16 %v4621
      %v4804 = vunpack.c.l.b16 %v4622
      %v4805 = vunpack.c.l.b16 %v4623
      %v4806 = vunpack.c.h.b16 %v4623
      %v4807 = vunpack.c.l.b16 %v4624
      %v4808 = vunpack.c.l.b16 %v4625
      %v4809 = vunpack.c.h.b16 %v4625
      %v4810 = vunpack.c.l.b16 %v4626
      %v4811 = vunpack.c.l.b16 %v4627
      %v4812 = vunpack.c.h.b16 %v4627
      %v4813 = vunpack.c.l.b16 %v4628
      %v4814 = vunpack.c.l.b16 %v4629
      %v4815 = vunpack.c.h.b16 %v4629
      %v4816 = vunpack.c.l.b16 %v4630
      %v4817 = vunpack.c.l.b16 %v4631
      %v4818 = vunpack.c.h.b16 %v4631
      %v4819 = vunpack.c.l.b16 %v4632
      %v4820 = vunpack.c.l.b16 %v4633
      %v4821 = vunpack.c.h.b16 %v4633
      %v4822 = vunpack.c.l.b16 %v4634
      %v4823 = vunpack.c.l.b16 %v4635
      %v4824 = vunpack.c.h.b16 %v4635
      %v4825 = vunpack.c.l.b16 %v4636
      %v4826 = vunpack.c.l.b16 %v4637
      %v4827 = vunpack.c.h.b16 %v4637
      %v4828 = vunpack.c.l.b16 %v4638
      %v4829 = vunpack.c.l.b16 %v4639
      %v4830 = vunpack.c.h.b16 %v4639
      %v4831 = vunpack.c.l.b16 %v4640
      %v4832 = vunpack.c.l.b16 %v4641
      %v4833 = vunpack.c.h.b16 %v4641
      %v4834 = vunpack.c.l.b16 %v4642
      %v4835 = vunpack.c.l.b16 %v4643
      %v4836 = vunpack.c.h.b16 %v4643
      %v4837 = vunpack.c.l.b16 %v4644
      %v4838 = vunpack.c.l.b16 %v4645
      %v4839 = vunpack.c.h.b16 %v4645
      %v4840 = vunpack.c.l.b16 %v4646
      %v4841 = vunpack.c.l.b16 %v4647
      %v4842 = vunpack.c.h.b16 %v4647
      %v4843 = vunpack.c.l.b16 %v4648
      %v4844 = vunpack.c.l.b16 %v4649
      %v4845 = vunpack.c.h.b16 %v4649
      %v4846 = vunpack.c.l.b16 %v4650
      %v4847 = vunpack.c.l.b16 %v4651
      %v4848 = vunpack.c.h.b16 %v4651
      %v4849 = vunpack.c.l.b16 %v4652
      %v4850 = vunpack.c.l.b16 %v4653
      %v4851 = vunpack.c.h.b16 %v4653
      %v4852 = vunpack.c.l.b16 %v4654
      %v4853 = vunpack.c.l.b16 %v4655
      %v4854 = vunpack.c.h.b16 %v4655
      %v4855 = vunpack.c.l.b16 %v4656
      %v4856 = vunpack.c.l.b16 %v4657
      %v4857 = vunpack.c.h.b16 %v4657
      %v4858 = vunpack.c.l.b16 %v4658
      %v4859 = vunpack.c.l.b16 %v4659
      %v4860 = vunpack.c.h.b16 %v4659
      %v4861 = vunpack.c.l.b16 %v4660
      %v4862 = vunpack.c.l.b16 %v4661
      %v4863 = vunpack.c.h.b16 %v4661
      %v4864 = vunpack.c.l.b16 %v4662
      %v4865 = vunpack.c.l.b16 %v4663
      %v4866 = vunpack.c.h.b16 %v4663
      %v4867 = vunpack.c.l.b16 %v4664
      %v4868 = vunpack.c.l.b16 %v4665
      %v4869 = vunpack.c.h.b16 %v4665
      %v4870 = vunpack.c.l.b16 %v4666
      %v4871 = vunpack.c.l.b16 %v4667
      %v4872 = vunpack.c.h.b16 %v4667
      %v4873 = vunpack.c.l.b16 %v4668
      %v4874 = vunpack.c.l.b16 %v4669
      %v4875 = vunpack.c.h.b16 %v4669
      %v4876 = vunpack.c.l.b16 %v4670
      %v4877 = vunpack.c.l.b16 %v4671
      %v4878 = vunpack.c.h.b16 %v4671
      %v4879 = vunpack.c.l.b16 %v4672
      %v4880 = vunpack.c.l.b16 %v4673
      %v4881 = vunpack.c.h.b16 %v4673
      %v4882 = vunpack.c.l.b16 %v4674
      %v4883 = vunpack.c.l.b16 %v4675
      %v4884 = vunpack.c.h.b16 %v4675
      %v4885 = vunpack.c.l.b16 %v4676
      %v4886 = vpack.c.b16 %v4793, %v4790
      %v4887 = vpack.c.b16 %v4794, %v4791
      %v4888 = vpack.c.b16 %v4795, %v4792
      %v4889 = vpack.c.b16 %v4799, %v4796
      %v4890 = vpack.c.b16 %v4800, %v4797
      %v4891 = vpack.c.b16 %v4801, %v4798
      %v4892 = vpack.c.b16 %v4805, %v4802
      %v4893 = vpack.c.b16 %v4806, %v4803
      %v4894 = vpack.c.b16 %v4807, %v4804
      %v4895 = vpack.c.b16 %v4811, %v4808
      %v4896 = vpack.c.b16 %v4812, %v4809
      %v4897 = vpack.c.b16 %v4813, %v4810
      %v4898 = vpack.c.b16 %v4817, %v4814
      %v4899 = vpack.c.b16 %v4818, %v4815
      %v4900 = vpack.c.b16 %v4819, %v4816
      %v4901 = vpack.c.b16 %v4823, %v4820
      %v4902 = vpack.c.b16 %v4824, %v4821
      %v4903 = vpack.c.b16 %v4825, %v4822
      %v4904 = vpack.c.b16 %v4829, %v4826
      %v4905 = vpack.c.b16 %v4830, %v4827
      %v4906 = vpack.c.b16 %v4831, %v4828
      %v4907 = vpack.c.b16 %v4835, %v4832
      %v4908 = vpack.c.b16 %v4836, %v4833
      %v4909 = vpack.c.b16 %v4837, %v4834
      %v4910 = vpack.c.b16 %v4841, %v4838
      %v4911 = vpack.c.b16 %v4842, %v4839
      %v4912 = vpack.c.b16 %v4843, %v4840
      %v4913 = vpack.c.b16 %v4847, %v4844
      %v4914 = vpack.c.b16 %v4848, %v4845
      %v4915 = vpack.c.b16 %v4849, %v4846
      %v4916 = vpack.c.b16 %v4853, %v4850
      %v4917 = vpack.c.b16 %v4854, %v4851
      %v4918 = vpack.c.b16 %v4855, %v4852
      %v4919 = vpack.c.b16 %v4859, %v4856
      %v4920 = vpack.c.b16 %v4860, %v4857
      %v4921 = vpack.c.b16 %v4861, %v4858
      %v4922 = vpack.c.b16 %v4865, %v4862
      %v4923 = vpack.c.b16 %v4866, %v4863
      %v4924 = vpack.c.b16 %v4867, %v4864
      %v4925 = vpack.c.b16 %v4871, %v4868
      %v4926 = vpack.c.b16 %v4872, %v4869
      %v4927 = vpack.c.b16 %v4873, %v4870
      %v4928 = vpack.c.b16 %v4877, %v4874
      %v4929 = vpack.c.b16 %v4878, %v4875
      %v4930 = vpack.c.b16 %v4879, %v4876
      %v4931 = vpack.c.b16 %v4883, %v4880
      %v4932 = vpack.c.b16 %v4884, %v4881
      %v4933 = vpack.c.b16 %v4885, %v4882
      %v5030 = vunpack.c.l.b16 %v4678
      %v5031 = vunpack.c.l.b16 %v4679
      %v5032 = vunpack.c.l.b16 %v4680
      %v5033 = vunpack.c.l.b16 %v4681
      %v5034 = vunpack.c.l.b16 %v4682
      %v5035 = vunpack.c.l.b16 %v4683
      %v5036 = vunpack.c.l.b16 %v4684
      %v5037 = vunpack.c.l.b16 %v4685
      %v5038 = vunpack.c.l.b16 %v4686
      %v5039 = vunpack.c.l.b16 %v4687
      %v5040 = vunpack.c.l.b16 %v4688
      %v5041 = vunpack.c.l.b16 %v4689
      %v5042 = vunpack.c.l.b16 %v4690
      %v5043 = vunpack.c.l.b16 %v4691
      %v5044 = vunpack.c.l.b16 %v4692
      %v5045 = vunpack.c.l.b16 %v4693
      %v5046 = vunpack.c.l.b16 %v4694
      %v5047 = vunpack.c.l.b16 %v4695
      %v5048 = vunpack.c.l.b16 %v4696
      %v5049 = vunpack.c.l.b16 %v4697
      %v5050 = vunpack.c.l.b16 %v4698
      %v5051 = vunpack.c.l.b16 %v4699
      %v5052 = vunpack.c.l.b16 %v4700
      %v5053 = vunpack.c.l.b16 %v4701
      %v5054 = vunpack.c.l.b16 %v4702
      %v5055 = vunpack.c.l.b16 %v4703
      %v5056 = vunpack.c.l.b16 %v4704
      %v5057 = vunpack.c.l.b16 %v4705
      %v5058 = vunpack.c.l.b16 %v4706
      %v5059 = vunpack.c.l.b16 %v4707
      %v5060 = vunpack.c.l.b16 %v4708
      %v5061 = vunpack.c.l.b16 %v4709
      %v5062 = vunpack.c.l.b16 %v4710
      %v5063 = vunpack.c.l.b16 %v4711
      %v5064 = vunpack.c.l.b16 %v4712
      %v5065 = vunpack.c.l.b16 %v4713
      %v5066 = vunpack.c.l.b16 %v4714
      %v5067 = vunpack.c.l.b16 %v4715
      %v5068 = vunpack.c.l.b16 %v4716
      %v5069 = vunpack.c.l.b16 %v4717
      %v5070 = vunpack.c.l.b16 %v4718
      %v5071 = vunpack.c.l.b16 %v4719
      %v5072 = vunpack.c.l.b16 %v4720
      %v5073 = vunpack.c.l.b16 %v4721
      %v5074 = vunpack.c.l.b16 %v4722
      %v5075 = vunpack.c.l.b16 %v4723
      %v5076 = vunpack.c.l.b16 %v4724
      %v5077 = vunpack.c.l.b16 %v4725
      %v5078 = vpack.c.b16 %v5031, %v5030
      %v5079 = vpack.c.b16 %v5033, %v5032
      %v5080 = vpack.c.b16 %v5035, %v5034
      %v5081 = vpack.c.b16 %v5037, %v5036
      %v5082 = vpack.c.b16 %v5039, %v5038
      %v5083 = vpack.c.b16 %v5041, %v5040
      %v5084 = vpack.c.b16 %v5043, %v5042
      %v5085 = vpack.c.b16 %v5045, %v5044
      %v5086 = vpack.c.b16 %v5047, %v5046
      %v5087 = vpack.c.b16 %v5049, %v5048
      %v5088 = vpack.c.b16 %v5051, %v5050
      %v5089 = vpack.c.b16 %v5053, %v5052
      %v5090 = vpack.c.b16 %v5055, %v5054
      %v5091 = vpack.c.b16 %v5057, %v5056
      %v5092 = vpack.c.b16 %v5059, %v5058
      %v5093 = vpack.c.b16 %v5061, %v5060
      %v5094 = vpack.c.b16 %v5063, %v5062
      %v5095 = vpack.c.b16 %v5065, %v5064
      %v5096 = vpack.c.b16 %v5067, %v5066
      %v5097 = vpack.c.b16 %v5069, %v5068
      %v5098 = vpack.c.b16 %v5071, %v5070
      %v5099 = vpack.c.b16 %v5073, %v5072
      %v5100 = vpack.c.b16 %v5075, %v5074
      %v5101 = vpack.c.b16 %v5077, %v5076
      %5126 = vmatprep.subr.bf16.mxu0 0
      %5127 = vmatpush1.bf16.msra.mxu0 %v5085
      %5128 = vmatprep.subr.bf16.mxu0 0
      %5129 = vmatpush1.bf16.msra.mxu0 %v5084
      %5130 = vmatprep.subr.bf16.mxu0 0
      %5131 = vmatpush1.bf16.msra.mxu0 %v5083
      %5132 = vmatprep.subr.bf16.mxu0 0
      %5133 = vmatpush1.bf16.msra.mxu0 %v5082
      %5134 = vmatprep.subr.bf16.mxu0 0
      %5135 = vmatpush1.bf16.msra.mxu0 %v5081
      %5136 = vmatprep.subr.bf16.mxu0 0
      %5137 = vmatpush1.bf16.msra.mxu0 %v5080
      %5138 = vmatprep.subr.bf16.mxu0 0
      %5139 = vmatpush1.bf16.msra.mxu0 %v5079
      %5140 = vmatprep.subr.bf16.mxu0 0
      %5141 = vmatpush1.bf16.msra.mxu0 %v5078
      %5142 = vmatprep.subr.bf16.mxu0 0
      %5143 = vmatpush2.bf16.msra.mxu0 %v5093
      %5144 = vmatprep.subr.bf16.mxu0 0
      %5145 = vmatpush2.bf16.msra.mxu0 %v5092
      %5146 = vmatprep.subr.bf16.mxu0 0
      %5147 = vmatpush2.bf16.msra.mxu0 %v5091
      %5148 = vmatprep.subr.bf16.mxu0 0
      %5149 = vmatpush2.bf16.msra.mxu0 %v5090
      %5150 = vmatprep.subr.bf16.mxu0 0
      %5151 = vmatpush2.bf16.msra.mxu0 %v5089
      %5152 = vmatprep.subr.bf16.mxu0 0
      %5153 = vmatpush2.bf16.msra.mxu0 %v5088
      %5154 = vmatprep.subr.bf16.mxu0 0
      %5155 = vmatpush2.bf16.msra.mxu0 %v5087
      %5156 = vmatprep.subr.bf16.mxu0 0
      %5157 = vmatpush2.bf16.msra.mxu0 %v5086
      %5158 = vmatprep.mubr.bf16.mxu0 %v4887
      %5159 = vmatmul.mubr.bf16.gmra.mxu0 %v4886
      %v5160 = vpop.f32.mrf.mxu0
      %v5161 = vadd.f32 0.0, %v5160
      %v5162 = vpop.f32.mrf.mxu0
      %v5163 = vpop.f32.mrf.mxu0
      %v5164 = vadd.f32 0.0, %v5163
      %v5165 = vpop.f32.mrf.mxu0
      %5166 = vmatprep.mubr.bf16.mxu0 %v4890
      %5167 = vmatmul.mubr.bf16.gmra.mxu0 %v4889
      %v5168 = vpop.f32.mrf.mxu0
      %v5169 = vadd.f32 0.0, %v5168
      %v5170 = vpop.f32.mrf.mxu0
      %v5171 = vpop.f32.mrf.mxu0
      %v5172 = vadd.f32 0.0, %v5171
      %v5173 = vpop.f32.mrf.mxu0
      %5174 = vmatprep.mubr.bf16.mxu0 %v4893
      %5175 = vmatmul.mubr.bf16.gmra.mxu0 %v4892
      %v5176 = vpop.f32.mrf.mxu0
      %v5177 = vadd.f32 0.0, %v5176
      %v5178 = vpop.f32.mrf.mxu0
      %v5179 = vpop.f32.mrf.mxu0
      %v5180 = vadd.f32 0.0, %v5179
      %v5181 = vpop.f32.mrf.mxu0
      %5182 = vmatprep.mubr.bf16.mxu0 %v4896
      %5183 = vmatmul.mubr.bf16.gmra.mxu0 %v4895
      %v5184 = vpop.f32.mrf.mxu0
      %v5185 = vadd.f32 0.0, %v5184
      %v5186 = vpop.f32.mrf.mxu0
      %v5187 = vpop.f32.mrf.mxu0
      %v5188 = vadd.f32 0.0, %v5187
      %v5189 = vpop.f32.mrf.mxu0
      %5190 = vmatprep.mubr.bf16.mxu0 %v4899
      %5191 = vmatmul.mubr.bf16.gmra.mxu0 %v4898
      %v5192 = vpop.f32.mrf.mxu0
      %v5193 = vadd.f32 0.0, %v5192
      %v5194 = vpop.f32.mrf.mxu0
      %v5195 = vpop.f32.mrf.mxu0
      %v5196 = vadd.f32 0.0, %v5195
      %v5197 = vpop.f32.mrf.mxu0
      %5198 = vmatprep.mubr.bf16.mxu0 %v4902
      %5199 = vmatmul.mubr.bf16.gmra.mxu0 %v4901
      %v5200 = vpop.f32.mrf.mxu0
      %v5201 = vadd.f32 0.0, %v5200
      %v5202 = vpop.f32.mrf.mxu0
      %v5203 = vpop.f32.mrf.mxu0
      %v5204 = vadd.f32 0.0, %v5203
      %v5205 = vpop.f32.mrf.mxu0
      %5206 = vmatprep.mubr.bf16.mxu0 %v4905
      %5207 = vmatmul.mubr.bf16.gmra.mxu0 %v4904
      %v5208 = vpop.f32.mrf.mxu0
      %v5209 = vadd.f32 0.0, %v5208
      %v5210 = vpop.f32.mrf.mxu0
      %v5211 = vpop.f32.mrf.mxu0
      %v5212 = vadd.f32 0.0, %v5211
      %v5213 = vpop.f32.mrf.mxu0
      %5214 = vmatprep.mubr.bf16.mxu0 %v4908
      %5215 = vmatmul.mubr.bf16.gmra.mxu0 %v4907
      %v5216 = vpop.f32.mrf.mxu0
      %v5217 = vadd.f32 0.0, %v5216
      %v5218 = vpop.f32.mrf.mxu0
      %v5219 = vpop.f32.mrf.mxu0
      %v5220 = vadd.f32 0.0, %v5219
      %v5221 = vpop.f32.mrf.mxu0
      %5222 = vmatprep.mubr.bf16.mxu0 %v4911
      %5223 = vmatmul.mubr.bf16.gmra.mxu0 %v4910
      %v5224 = vpop.f32.mrf.mxu0
      %v5225 = vadd.f32 0.0, %v5224
      %v5226 = vpop.f32.mrf.mxu0
      %v5227 = vpop.f32.mrf.mxu0
      %v5228 = vadd.f32 0.0, %v5227
      %v5229 = vpop.f32.mrf.mxu0
      %5230 = vmatprep.mubr.bf16.mxu0 %v4914
      %5231 = vmatmul.mubr.bf16.gmra.mxu0 %v4913
      %v5232 = vpop.f32.mrf.mxu0
      %v5233 = vadd.f32 0.0, %v5232
      %v5234 = vpop.f32.mrf.mxu0
      %v5235 = vpop.f32.mrf.mxu0
      %v5236 = vadd.f32 0.0, %v5235
      %v5237 = vpop.f32.mrf.mxu0
      %5238 = vmatprep.mubr.bf16.mxu0 %v4917
      %5239 = vmatmul.mubr.bf16.gmra.mxu0 %v4916
      %v5240 = vpop.f32.mrf.mxu0
      %v5241 = vadd.f32 0.0, %v5240
      %v5242 = vpop.f32.mrf.mxu0
      %v5243 = vpop.f32.mrf.mxu0
      %v5244 = vadd.f32 0.0, %v5243
      %v5245 = vpop.f32.mrf.mxu0
      %5246 = vmatprep.mubr.bf16.mxu0 %v4920
      %5247 = vmatmul.mubr.bf16.gmra.mxu0 %v4919
      %v5248 = vpop.f32.mrf.mxu0
      %v5249 = vadd.f32 0.0, %v5248
      %v5250 = vpop.f32.mrf.mxu0
      %v5251 = vpop.f32.mrf.mxu0
      %v5252 = vadd.f32 0.0, %v5251
      %v5253 = vpop.f32.mrf.mxu0
      %5254 = vmatprep.mubr.bf16.mxu0 %v4923
      %5255 = vmatmul.mubr.bf16.gmra.mxu0 %v4922
      %v5256 = vpop.f32.mrf.mxu0
      %v5257 = vadd.f32 0.0, %v5256
      %v5258 = vpop.f32.mrf.mxu0
      %v5259 = vpop.f32.mrf.mxu0
      %v5260 = vadd.f32 0.0, %v5259
      %v5261 = vpop.f32.mrf.mxu0
      %5262 = vmatprep.mubr.bf16.mxu0 %v4926
      %5263 = vmatmul.mubr.bf16.gmra.mxu0 %v4925
      %v5264 = vpop.f32.mrf.mxu0
      %v5265 = vadd.f32 0.0, %v5264
      %v5266 = vpop.f32.mrf.mxu0
      %v5267 = vpop.f32.mrf.mxu0
      %v5268 = vadd.f32 0.0, %v5267
      %v5269 = vpop.f32.mrf.mxu0
      %5270 = vmatprep.mubr.bf16.mxu0 %v4929
      %5271 = vmatmul.mubr.bf16.gmra.mxu0 %v4928
      %v5272 = vpop.f32.mrf.mxu0
      %v5273 = vadd.f32 0.0, %v5272
      %v5274 = vpop.f32.mrf.mxu0
      %v5275 = vpop.f32.mrf.mxu0
      %v5276 = vadd.f32 0.0, %v5275
      %v5277 = vpop.f32.mrf.mxu0
      %5278 = vmatprep.mubr.bf16.mxu0 %v4932
      %5279 = vmatmul.mubr.bf16.gmra.mxu0 %v4931
      %v5280 = vpop.f32.mrf.mxu0
      %v5281 = vadd.f32 0.0, %v5280
      %v5282 = vpop.f32.mrf.mxu0
      %v5283 = vpop.f32.mrf.mxu0
      %v5284 = vadd.f32 0.0, %v5283
      %v5285 = vpop.f32.mrf.mxu0
      %5286 = vdwg.mxu0
      %5287 = vmatprep.subr.bf16.mxu0 0
      %5288 = vmatpush1.bf16.msra.mxu0 %v5101
      %5289 = vmatprep.subr.bf16.mxu0 0
      %5290 = vmatpush1.bf16.msra.mxu0 %v5100
      %5291 = vmatprep.subr.bf16.mxu0 0
      %5292 = vmatpush1.bf16.msra.mxu0 %v5099
      %5293 = vmatprep.subr.bf16.mxu0 0
      %5294 = vmatpush1.bf16.msra.mxu0 %v5098
      %5295 = vmatprep.subr.bf16.mxu0 0
      %5296 = vmatpush1.bf16.msra.mxu0 %v5097
      %5297 = vmatprep.subr.bf16.mxu0 0
      %5298 = vmatpush1.bf16.msra.mxu0 %v5096
      %5299 = vmatprep.subr.bf16.mxu0 0
      %5300 = vmatpush1.bf16.msra.mxu0 %v5095
      %5301 = vmatprep.subr.bf16.mxu0 0
      %5302 = vmatpush1.bf16.msra.mxu0 %v5094
      %5303 = vmatprep.subr.bf16.mxu0 0
      %5304 = vmatpush2.bf16.msra.mxu0 0
      %5305 = vmatprep.subr.bf16.mxu0 0
      %5306 = vmatpush2.bf16.msra.mxu0 0
      %5307 = vmatprep.subr.bf16.mxu0 0
      %5308 = vmatpush2.bf16.msra.mxu0 0
      %5309 = vmatprep.subr.bf16.mxu0 0
      %5310 = vmatpush2.bf16.msra.mxu0 0
      %5311 = vmatprep.subr.bf16.mxu0 0
      %5312 = vmatpush2.bf16.msra.mxu0 0
      %5313 = vmatprep.subr.bf16.mxu0 0
      %5314 = vmatpush2.bf16.msra.mxu0 0
      %5315 = vmatprep.subr.bf16.mxu0 0
      %5316 = vmatpush2.bf16.msra.mxu0 0
      %5317 = vmatprep.subr.bf16.mxu0 0
      %5318 = vmatpush2.bf16.msra.mxu0 0
      %5319 = vmatprep.mubr.bf16.mxu0 0
      %5320 = vmatmul.mubr.bf16.gmra.mxu0 %v4888
      %v5321 = vpop.f32.mrf.mxu0
      %v5322 = vadd.f32 %v5161, %v5321
      %v5323 = vpop.f32.mrf.mxu0
      %v5324 = vpop.f32.mrf.mxu0
      %v5325 = vadd.f32 %v5164, %v5324
      %v5326 = vpop.f32.mrf.mxu0
      %5327 = vmatprep.mubr.bf16.mxu0 0
      %5328 = vmatmul.mubr.bf16.gmra.mxu0 %v4891
      %v5329 = vpop.f32.mrf.mxu0
      %v5330 = vadd.f32 %v5169, %v5329
      %v5331 = vpop.f32.mrf.mxu0
      %v5332 = vpop.f32.mrf.mxu0
      %v5333 = vadd.f32 %v5172, %v5332
      %v5334 = vpop.f32.mrf.mxu0
      %5335 = vmatprep.mubr.bf16.mxu0 0
      %5336 = vmatmul.mubr.bf16.gmra.mxu0 %v4894
      %v5337 = vpop.f32.mrf.mxu0
      %v5338 = vadd.f32 %v5177, %v5337
      %v5339 = vpop.f32.mrf.mxu0
      %v5340 = vpop.f32.mrf.mxu0
      %v5341 = vadd.f32 %v5180, %v5340
      %v5342 = vpop.f32.mrf.mxu0
      %5343 = vmatprep.mubr.bf16.mxu0 0
      %5344 = vmatmul.mubr.bf16.gmra.mxu0 %v4897
      %v5345 = vpop.f32.mrf.mxu0
      %v5346 = vadd.f32 %v5185, %v5345
      %v5347 = vpop.f32.mrf.mxu0
      %v5348 = vpop.f32.mrf.mxu0
      %v5349 = vadd.f32 %v5188, %v5348
      %v5350 = vpop.f32.mrf.mxu0
      %5351 = vmatprep.mubr.bf16.mxu0 0
      %5352 = vmatmul.mubr.bf16.gmra.mxu0 %v4900
      %v5353 = vpop.f32.mrf.mxu0
      %v5354 = vadd.f32 %v5193, %v5353
      %v5355 = vpop.f32.mrf.mxu0
      %v5356 = vpop.f32.mrf.mxu0
      %v5357 = vadd.f32 %v5196, %v5356
      %v5358 = vpop.f32.mrf.mxu0
      %5359 = vmatprep.mubr.bf16.mxu0 0
      %5360 = vmatmul.mubr.bf16.gmra.mxu0 %v4903
      %v5361 = vpop.f32.mrf.mxu0
      %v5362 = vadd.f32 %v5201, %v5361
      %v5363 = vpop.f32.mrf.mxu0
      %v5364 = vpop.f32.mrf.mxu0
      %v5365 = vadd.f32 %v5204, %v5364
      %v5366 = vpop.f32.mrf.mxu0
      %5367 = vmatprep.mubr.bf16.mxu0 0
      %5368 = vmatmul.mubr.bf16.gmra.mxu0 %v4906
      %v5369 = vpop.f32.mrf.mxu0
      %v5370 = vadd.f32 %v5209, %v5369
      %v5371 = vpop.f32.mrf.mxu0
      %v5372 = vpop.f32.mrf.mxu0
      %v5373 = vadd.f32 %v5212, %v5372
      %v5374 = vpop.f32.mrf.mxu0
      %5375 = vmatprep.mubr.bf16.mxu0 0
      %5376 = vmatmul.mubr.bf16.gmra.mxu0 %v4909
      %v5377 = vpop.f32.mrf.mxu0
      %v5378 = vadd.f32 %v5217, %v5377
      %v5379 = vpop.f32.mrf.mxu0
      %v5380 = vpop.f32.mrf.mxu0
      %v5381 = vadd.f32 %v5220, %v5380
      %v5382 = vpop.f32.mrf.mxu0
      %5383 = vmatprep.mubr.bf16.mxu0 0
      %5384 = vmatmul.mubr.bf16.gmra.mxu0 %v4912
      %v5385 = vpop.f32.mrf.mxu0
      %v5386 = vadd.f32 %v5225, %v5385
      %v5387 = vpop.f32.mrf.mxu0
      %v5388 = vpop.f32.mrf.mxu0
      %v5389 = vadd.f32 %v5228, %v5388
      %v5390 = vpop.f32.mrf.mxu0
      %5391 = vmatprep.mubr.bf16.mxu0 0
      %5392 = vmatmul.mubr.bf16.gmra.mxu0 %v4915
      %v5393 = vpop.f32.mrf.mxu0
      %v5394 = vadd.f32 %v5233, %v5393
      %v5395 = vpop.f32.mrf.mxu0
      %v5396 = vpop.f32.mrf.mxu0
      %v5397 = vadd.f32 %v5236, %v5396
      %v5398 = vpop.f32.mrf.mxu0
      %5399 = vmatprep.mubr.bf16.mxu0 0
      %5400 = vmatmul.mubr.bf16.gmra.mxu0 %v4918
      %v5401 = vpop.f32.mrf.mxu0
      %v5402 = vadd.f32 %v5241, %v5401
      %v5403 = vpop.f32.mrf.mxu0
      %v5404 = vpop.f32.mrf.mxu0
      %v5405 = vadd.f32 %v5244, %v5404
      %v5406 = vpop.f32.mrf.mxu0
      %5407 = vmatprep.mubr.bf16.mxu0 0
      %5408 = vmatmul.mubr.bf16.gmra.mxu0 %v4921
      %v5409 = vpop.f32.mrf.mxu0
      %v5410 = vadd.f32 %v5249, %v5409
      %v5411 = vpop.f32.mrf.mxu0
      %v5412 = vpop.f32.mrf.mxu0
      %v5413 = vadd.f32 %v5252, %v5412
      %v5414 = vpop.f32.mrf.mxu0
      %5415 = vmatprep.mubr.bf16.mxu0 0
      %5416 = vmatmul.mubr.bf16.gmra.mxu0 %v4924
      %v5417 = vpop.f32.mrf.mxu0
      %v5418 = vadd.f32 %v5257, %v5417
      %v5419 = vpop.f32.mrf.mxu0
      %v5420 = vpop.f32.mrf.mxu0
      %v5421 = vadd.f32 %v5260, %v5420
      %v5422 = vpop.f32.mrf.mxu0
      %5423 = vmatprep.mubr.bf16.mxu0 0
      %5424 = vmatmul.mubr.bf16.gmra.mxu0 %v4927
      %v5425 = vpop.f32.mrf.mxu0
      %v5426 = vadd.f32 %v5265, %v5425
      %v5427 = vpop.f32.mrf.mxu0
      %v5428 = vpop.f32.mrf.mxu0
      %v5429 = vadd.f32 %v5268, %v5428
      %v5430 = vpop.f32.mrf.mxu0
      %5431 = vmatprep.mubr.bf16.mxu0 0
      %5432 = vmatmul.mubr.bf16.gmra.mxu0 %v4930
      %v5433 = vpop.f32.mrf.mxu0
      %v5434 = vadd.f32 %v5273, %v5433
      %v5435 = vpop.f32.mrf.mxu0
      %v5436 = vpop.f32.mrf.mxu0
      %v5437 = vadd.f32 %v5276, %v5436
      %v5438 = vpop.f32.mrf.mxu0
      %5439 = vmatprep.mubr.bf16.mxu0 0
      %5440 = vmatmul.mubr.bf16.gmra.mxu0 %v4933
      %v5441 = vpop.f32.mrf.mxu0
      %v5442 = vadd.f32 %v5281, %v5441
      %v5443 = vpop.f32.mrf.mxu0
      %v5444 = vpop.f32.mrf.mxu0
      %v5445 = vadd.f32 %v5284, %v5444
      %v5446 = vpop.f32.mrf.mxu0
      %5447 = vdwg.mxu0
      %v5448 = vld [vmem:[#allocation4] sm:$0xff]
      %v5449 = vld [vmem:[#allocation4 + $0x8] sm:$0xff]
      %v5450 = vld [vmem:[#allocation4 + $0x10] sm:$0xff]
      %v5451 = vld [vmem:[#allocation4 + $0x18] sm:$0xff]
      %v5452 = vld [vmem:[#allocation4 + $0x20] sm:$0xff]
      %v5453 = vld [vmem:[#allocation4 + $0x28] sm:$0xff]
      %v5454 = vld [vmem:[#allocation4 + $0x30] sm:$0xff]
      %v5455 = vld [vmem:[#allocation4 + $0x38] sm:$0xff]
      %v5456 = vld [vmem:[#allocation4 + $0x40] sm:$0xff]
      %v5457 = vld [vmem:[#allocation4 + $0x48] sm:$0xff]
      %v5458 = vld [vmem:[#allocation4 + $0x50] sm:$0xff]
      %v5459 = vld [vmem:[#allocation4 + $0x58] sm:$0xff]
      %v5460 = vld [vmem:[#allocation4 + $0x60] sm:$0xff]
      %v5461 = vld [vmem:[#allocation4 + $0x68] sm:$0xff]
      %v5462 = vld [vmem:[#allocation4 + $0x70] sm:$0xff]
      %v5463 = vld [vmem:[#allocation4 + $0x78] sm:$0xff]
      %v5464 = vld [vmem:[#allocation4 + $0x80] sm:$0xff]
      %v5465 = vld [vmem:[#allocation4 + $0x88] sm:$0xff]
      %v5466 = vld [vmem:[#allocation4 + $0x90] sm:$0xff]
      %v5467 = vld [vmem:[#allocation4 + $0x98] sm:$0xff]
      %v5468 = vld [vmem:[#allocation4 + $0xa0] sm:$0xff]
      %v5469 = vld [vmem:[#allocation4 + $0xa8] sm:$0xff]
      %v5470 = vld [vmem:[#allocation4 + $0xb0] sm:$0xff]
      %v5471 = vld [vmem:[#allocation4 + $0xb8] sm:$0xff]
      %v5472 = vld [vmem:[#allocation4 + $0xc0] sm:$0xff]
      %v5473 = vld [vmem:[#allocation4 + $0xc8] sm:$0xff]
      %v5474 = vld [vmem:[#allocation4 + $0xd0] sm:$0xff]
      %v5475 = vld [vmem:[#allocation4 + $0xd8] sm:$0xff]
      %v5476 = vld [vmem:[#allocation4 + $0xe0] sm:$0xff]
      %v5477 = vld [vmem:[#allocation4 + $0xe8] sm:$0xff]
      %v5478 = vld [vmem:[#allocation4 + $0xf0] sm:$0xff]
      %v5479 = vld [vmem:[#allocation4 + $0xf8] sm:$0xff]
      %v5480 = vadd.f32 %v5448, %v5322
      %v5481 = vadd.f32 %v5449, %v5325
      %v5482 = vadd.f32 %v5450, %v5330
      %v5483 = vadd.f32 %v5451, %v5333
      %v5484 = vadd.f32 %v5452, %v5338
      %v5485 = vadd.f32 %v5453, %v5341
      %v5486 = vadd.f32 %v5454, %v5346
      %v5487 = vadd.f32 %v5455, %v5349
      %v5488 = vadd.f32 %v5456, %v5354
      %v5489 = vadd.f32 %v5457, %v5357
      %v5490 = vadd.f32 %v5458, %v5362
      %v5491 = vadd.f32 %v5459, %v5365
      %v5492 = vadd.f32 %v5460, %v5370
      %v5493 = vadd.f32 %v5461, %v5373
      %v5494 = vadd.f32 %v5462, %v5378
      %v5495 = vadd.f32 %v5463, %v5381
      %v5496 = vadd.f32 %v5464, %v5386
      %v5497 = vadd.f32 %v5465, %v5389
      %v5498 = vadd.f32 %v5466, %v5394
      %v5499 = vadd.f32 %v5467, %v5397
      %v5500 = vadd.f32 %v5468, %v5402
      %v5501 = vadd.f32 %v5469, %v5405
      %v5502 = vadd.f32 %v5470, %v5410
      %v5503 = vadd.f32 %v5471, %v5413
      %v5504 = vadd.f32 %v5472, %v5418
      %v5505 = vadd.f32 %v5473, %v5421
      %v5506 = vadd.f32 %v5474, %v5426
      %v5507 = vadd.f32 %v5475, %v5429
      %v5508 = vadd.f32 %v5476, %v5434
      %v5509 = vadd.f32 %v5477, %v5437
      %v5510 = vadd.f32 %v5478, %v5442
      %v5511 = vadd.f32 %v5479, %v5445
      %5512 = vst [vmem:[#allocation4] sm:$0xff] %v5480
      %5513 = vst [vmem:[#allocation4 + $0x8] sm:$0xff] %v5481
      %5514 = vst [vmem:[#allocation4 + $0x10] sm:$0xff] %v5482
      %5515 = vst [vmem:[#allocation4 + $0x18] sm:$0xff] %v5483
      %5516 = vst [vmem:[#allocation4 + $0x20] sm:$0xff] %v5484
      %5517 = vst [vmem:[#allocation4 + $0x28] sm:$0xff] %v5485
      %5518 = vst [vmem:[#allocation4 + $0x30] sm:$0xff] %v5486
      %5519 = vst [vmem:[#allocation4 + $0x38] sm:$0xff] %v5487
      %5520 = vst [vmem:[#allocation4 + $0x40] sm:$0xff] %v5488
      %5521 = vst [vmem:[#allocation4 + $0x48] sm:$0xff] %v5489
      %5522 = vst [vmem:[#allocation4 + $0x50] sm:$0xff] %v5490
      %5523 = vst [vmem:[#allocation4 + $0x58] sm:$0xff] %v5491
      %5524 = vst [vmem:[#allocation4 + $0x60] sm:$0xff] %v5492
      %5525 = vst [vmem:[#allocation4 + $0x68] sm:$0xff] %v5493
      %5526 = vst [vmem:[#allocation4 + $0x70] sm:$0xff] %v5494
      %5527 = vst [vmem:[#allocation4 + $0x78] sm:$0xff] %v5495
      %5528 = vst [vmem:[#allocation4 + $0x80] sm:$0xff] %v5496
      %5529 = vst [vmem:[#allocation4 + $0x88] sm:$0xff] %v5497
      %5530 = vst [vmem:[#allocation4 + $0x90] sm:$0xff] %v5498
      %5531 = vst [vmem:[#allocation4 + $0x98] sm:$0xff] %v5499
      %5532 = vst [vmem:[#allocation4 + $0xa0] sm:$0xff] %v5500
      %5533 = vst [vmem:[#allocation4 + $0xa8] sm:$0xff] %v5501
      %5534 = vst [vmem:[#allocation4 + $0xb0] sm:$0xff] %v5502
      %5535 = vst [vmem:[#allocation4 + $0xb8] sm:$0xff] %v5503
      %5536 = vst [vmem:[#allocation4 + $0xc0] sm:$0xff] %v5504
      %5537 = vst [vmem:[#allocation4 + $0xc8] sm:$0xff] %v5505
      %5538 = vst [vmem:[#allocation4 + $0xd0] sm:$0xff] %v5506
      %5539 = vst [vmem:[#allocation4 + $0xd8] sm:$0xff] %v5507
      %5540 = vst [vmem:[#allocation4 + $0xe0] sm:$0xff] %v5508
      %5541 = vst [vmem:[#allocation4 + $0xe8] sm:$0xff] %v5509
      %5542 = vst [vmem:[#allocation4 + $0xf0] sm:$0xff] %v5510
      %5543 = vst [vmem:[#allocation4 + $0xf8] sm:$0xff] %v5511
      %v5544 = vld [vmem:[#allocation4] sm:$0xff]
      %v5545 = vld [vmem:[#allocation4 + $0x8] sm:$0xff]
      %v5546 = vld [vmem:[#allocation4 + $0x10] sm:$0xff]
      %v5547 = vld [vmem:[#allocation4 + $0x18] sm:$0xff]
      %v5548 = vld [vmem:[#allocation4 + $0x20] sm:$0xff]
      %v5549 = vld [vmem:[#allocation4 + $0x28] sm:$0xff]
      %v5550 = vld [vmem:[#allocation4 + $0x30] sm:$0xff]
      %v5551 = vld [vmem:[#allocation4 + $0x38] sm:$0xff]
      %v5552 = vld [vmem:[#allocation4 + $0x40] sm:$0xff]
      %v5553 = vld [vmem:[#allocation4 + $0x48] sm:$0xff]
      %v5554 = vld [vmem:[#allocation4 + $0x50] sm:$0xff]
      %v5555 = vld [vmem:[#allocation4 + $0x58] sm:$0xff]
      %v5556 = vld [vmem:[#allocation4 + $0x60] sm:$0xff]
      %v5557 = vld [vmem:[#allocation4 + $0x68] sm:$0xff]
      %v5558 = vld [vmem:[#allocation4 + $0x70] sm:$0xff]
      %v5559 = vld [vmem:[#allocation4 + $0x78] sm:$0xff]
      %v5560 = vld [vmem:[#allocation4 + $0x80] sm:$0xff]
      %v5561 = vld [vmem:[#allocation4 + $0x88] sm:$0xff]
      %v5562 = vld [vmem:[#allocation4 + $0x90] sm:$0xff]
      %v5563 = vld [vmem:[#allocation4 + $0x98] sm:$0xff]
      %v5564 = vld [vmem:[#allocation4 + $0xa0] sm:$0xff]
      %v5565 = vld [vmem:[#allocation4 + $0xa8] sm:$0xff]
      %v5566 = vld [vmem:[#allocation4 + $0xb0] sm:$0xff]
      %v5567 = vld [vmem:[#allocation4 + $0xb8] sm:$0xff]
      %v5568 = vld [vmem:[#allocation4 + $0xc0] sm:$0xff]
      %v5569 = vld [vmem:[#allocation4 + $0xc8] sm:$0xff]
      %v5570 = vld [vmem:[#allocation4 + $0xd0] sm:$0xff]
      %v5571 = vld [vmem:[#allocation4 + $0xd8] sm:$0xff]
      %v5572 = vld [vmem:[#allocation4 + $0xe0] sm:$0xff]
      %v5573 = vld [vmem:[#allocation4 + $0xe8] sm:$0xff]
      %v5574 = vld [vmem:[#allocation4 + $0xf0] sm:$0xff]
      %v5575 = vld [vmem:[#allocation4 + $0xf8] sm:$0xff]
      %v5576 = vld [vmem:[%s4] sm:$0x1]
      %v5578 = vlaneseq
      %v5579 = vshrl.u32 %v5578, 7
      %v5580 = vsub.s32 0, %v5579
      %v5581 = vrot.slane %v5576, %v5580
      %v5583 = vadd.f32 %v5544, %v5581
      %v5584 = vadd.f32 %v5545, %v5581
      %v5585 = vadd.f32 %v5546, %v5581
      %v5586 = vadd.f32 %v5547, %v5581
      %v5587 = vadd.f32 %v5548, %v5581
      %v5588 = vadd.f32 %v5549, %v5581
      %v5589 = vadd.f32 %v5550, %v5581
      %v5590 = vadd.f32 %v5551, %v5581
      %v5591 = vadd.f32 %v5552, %v5581
      %v5592 = vadd.f32 %v5553, %v5581
      %v5593 = vadd.f32 %v5554, %v5581
      %v5594 = vadd.f32 %v5555, %v5581
      %v5595 = vadd.f32 %v5556, %v5581
      %v5596 = vadd.f32 %v5557, %v5581
      %v5597 = vadd.f32 %v5558, %v5581
      %v5598 = vadd.f32 %v5559, %v5581
      %v5599 = vadd.f32 %v5560, %v5581
      %v5600 = vadd.f32 %v5561, %v5581
      %v5601 = vadd.f32 %v5562, %v5581
      %v5602 = vadd.f32 %v5563, %v5581
      %v5603 = vadd.f32 %v5564, %v5581
      %v5604 = vadd.f32 %v5565, %v5581
      %v5605 = vadd.f32 %v5566, %v5581
      %v5606 = vadd.f32 %v5567, %v5581
      %v5607 = vadd.f32 %v5568, %v5581
      %v5608 = vadd.f32 %v5569, %v5581
      %v5609 = vadd.f32 %v5570, %v5581
      %v5610 = vadd.f32 %v5571, %v5581
      %v5611 = vadd.f32 %v5572, %v5581
      %v5612 = vadd.f32 %v5573, %v5581
      %v5613 = vadd.f32 %v5574, %v5581
      %v5614 = vadd.f32 %v5575, %v5581
      %v5615 = vmax.f32 %v5583, 0.0
      %v5616 = vmax.f32 %v5584, 0.0
      %v5617 = vmax.f32 %v5585, 0.0
      %v5618 = vmax.f32 %v5586, 0.0
      %v5619 = vmax.f32 %v5587, 0.0
      %v5620 = vmax.f32 %v5588, 0.0
      %v5621 = vmax.f32 %v5589, 0.0
      %v5622 = vmax.f32 %v5590, 0.0
      %v5623 = vmax.f32 %v5591, 0.0
      %v5624 = vmax.f32 %v5592, 0.0
      %v5625 = vmax.f32 %v5593, 0.0
      %v5626 = vmax.f32 %v5594, 0.0
      %v5627 = vmax.f32 %v5595, 0.0
      %v5628 = vmax.f32 %v5596, 0.0
      %v5629 = vmax.f32 %v5597, 0.0
      %v5630 = vmax.f32 %v5598, 0.0
      %v5631 = vmax.f32 %v5599, 0.0
      %v5632 = vmax.f32 %v5600, 0.0
      %v5633 = vmax.f32 %v5601, 0.0
      %v5634 = vmax.f32 %v5602, 0.0
      %v5635 = vmax.f32 %v5603, 0.0
      %v5636 = vmax.f32 %v5604, 0.0
      %v5637 = vmax.f32 %v5605, 0.0
      %v5638 = vmax.f32 %v5606, 0.0
      %v5639 = vmax.f32 %v5607, 0.0
      %v5640 = vmax.f32 %v5608, 0.0
      %v5641 = vmax.f32 %v5609, 0.0
      %v5642 = vmax.f32 %v5610, 0.0
      %v5643 = vmax.f32 %v5611, 0.0
      %v5644 = vmax.f32 %v5612, 0.0
      %v5645 = vmax.f32 %v5613, 0.0
      %v5646 = vmax.f32 %v5614, 0.0
      %v5647 = vpack.c.bf16 %v5616, %v5615
      %v5648 = vpack.c.bf16 %v5618, %v5617
      %v5649 = vpack.c.bf16 %v5620, %v5619
      %v5650 = vpack.c.bf16 %v5622, %v5621
      %v5651 = vpack.c.bf16 %v5624, %v5623
      %v5652 = vpack.c.bf16 %v5626, %v5625
      %v5653 = vpack.c.bf16 %v5628, %v5627
      %v5654 = vpack.c.bf16 %v5630, %v5629
      %v5655 = vpack.c.bf16 %v5632, %v5631
      %v5656 = vpack.c.bf16 %v5634, %v5633
      %v5657 = vpack.c.bf16 %v5636, %v5635
      %v5658 = vpack.c.bf16 %v5638, %v5637
      %v5659 = vpack.c.bf16 %v5640, %v5639
      %v5660 = vpack.c.bf16 %v5642, %v5641
      %v5661 = vpack.c.bf16 %v5644, %v5643
      %v5662 = vpack.c.bf16 %v5646, %v5645
      %v5679 = vunpack.c.l.b16 %v5647
      %v5680 = vunpack.c.h.b16 %v5647
      %v5681 = vunpack.c.l.b16 %v5648
      %v5682 = vunpack.c.h.b16 %v5648
      %v5683 = vunpack.c.l.b16 %v5649
      %v5684 = vunpack.c.h.b16 %v5649
      %v5685 = vunpack.c.l.b16 %v5650
      %v5686 = vunpack.c.h.b16 %v5650
      %v5687 = vunpack.c.l.b16 %v5651
      %v5688 = vunpack.c.h.b16 %v5651
      %v5689 = vunpack.c.l.b16 %v5652
      %v5690 = vunpack.c.h.b16 %v5652
      %v5691 = vunpack.c.l.b16 %v5653
      %v5692 = vunpack.c.h.b16 %v5653
      %v5693 = vunpack.c.l.b16 %v5654
      %v5694 = vunpack.c.h.b16 %v5654
      %v5695 = vunpack.c.l.b16 %v5655
      %v5696 = vunpack.c.h.b16 %v5655
      %v5697 = vunpack.c.l.b16 %v5656
      %v5698 = vunpack.c.h.b16 %v5656
      %v5699 = vunpack.c.l.b16 %v5657
      %v5700 = vunpack.c.h.b16 %v5657
      %v5701 = vunpack.c.l.b16 %v5658
      %v5702 = vunpack.c.h.b16 %v5658
      %v5703 = vunpack.c.l.b16 %v5659
      %v5704 = vunpack.c.h.b16 %v5659
      %v5705 = vunpack.c.l.b16 %v5660
      %v5706 = vunpack.c.h.b16 %v5660
      %v5707 = vunpack.c.l.b16 %v5661
      %v5708 = vunpack.c.h.b16 %v5661
      %v5709 = vunpack.c.l.b16 %v5662
      %v5710 = vunpack.c.h.b16 %v5662
      %v5711 = vpack.c.b16 %v5679, %v5679
      %v5712 = vpack.c.b16 %v5680, %v5680
      %v5713 = vpack.c.b16 %v5681, %v5681
      %v5714 = vpack.c.b16 %v5682, %v5682
      %v5715 = vpack.c.b16 %v5683, %v5683
      %v5716 = vpack.c.b16 %v5684, %v5684
      %v5717 = vpack.c.b16 %v5685, %v5685
      %v5718 = vpack.c.b16 %v5686, %v5686
      %v5719 = vpack.c.b16 %v5687, %v5687
      %v5720 = vpack.c.b16 %v5688, %v5688
      %v5721 = vpack.c.b16 %v5689, %v5689
      %v5722 = vpack.c.b16 %v5690, %v5690
      %v5723 = vpack.c.b16 %v5691, %v5691
      %v5724 = vpack.c.b16 %v5692, %v5692
      %v5725 = vpack.c.b16 %v5693, %v5693
      %v5726 = vpack.c.b16 %v5694, %v5694
      %v5727 = vpack.c.b16 %v5695, %v5695
      %v5728 = vpack.c.b16 %v5696, %v5696
      %v5729 = vpack.c.b16 %v5697, %v5697
      %v5730 = vpack.c.b16 %v5698, %v5698
      %v5731 = vpack.c.b16 %v5699, %v5699
      %v5732 = vpack.c.b16 %v5700, %v5700
      %v5733 = vpack.c.b16 %v5701, %v5701
      %v5734 = vpack.c.b16 %v5702, %v5702
      %v5735 = vpack.c.b16 %v5703, %v5703
      %v5736 = vpack.c.b16 %v5704, %v5704
      %v5737 = vpack.c.b16 %v5705, %v5705
      %v5738 = vpack.c.b16 %v5706, %v5706
      %v5739 = vpack.c.b16 %v5707, %v5707
      %v5740 = vpack.c.b16 %v5708, %v5708
      %v5741 = vpack.c.b16 %v5709, %v5709
      %v5742 = vpack.c.b16 %v5710, %v5710
      %5775 = vst [vmem:[%s259] sm:$0xf] %v5711
      %5776 = vst [vmem:[%s259 + $0x4] sm:$0xf] %v5712
      %5777 = vst [vmem:[%s259 + $0x8] sm:$0xf] %v5713
      %5778 = vst [vmem:[%s259 + $0xc] sm:$0xf] %v5714
      %5779 = vst [vmem:[%s259 + $0x10] sm:$0xf] %v5715
      %5780 = vst [vmem:[%s259 + $0x14] sm:$0xf] %v5716
      %5781 = vst [vmem:[%s259 + $0x18] sm:$0xf] %v5717
      %5782 = vst [vmem:[%s259 + $0x1c] sm:$0xf] %v5718
      %5783 = vst [vmem:[%s259 + $0x20] sm:$0xf] %v5719
      %5784 = vst [vmem:[%s259 + $0x24] sm:$0xf] %v5720
      %5785 = vst [vmem:[%s259 + $0x28] sm:$0xf] %v5721
      %5786 = vst [vmem:[%s259 + $0x2c] sm:$0xf] %v5722
      %5787 = vst [vmem:[%s259 + $0x30] sm:$0xf] %v5723
      %5788 = vst [vmem:[%s259 + $0x34] sm:$0xf] %v5724
      %5789 = vst [vmem:[%s259 + $0x38] sm:$0xf] %v5725
      %5790 = vst [vmem:[%s259 + $0x3c] sm:$0xf] %v5726
      %5791 = vst [vmem:[%s259 + $0x40] sm:$0xf] %v5727
      %5792 = vst [vmem:[%s259 + $0x44] sm:$0xf] %v5728
      %5793 = vst [vmem:[%s259 + $0x48] sm:$0xf] %v5729
      %5794 = vst [vmem:[%s259 + $0x4c] sm:$0xf] %v5730
      %5795 = vst [vmem:[%s259 + $0x50] sm:$0xf] %v5731
      %5796 = vst [vmem:[%s259 + $0x54] sm:$0xf] %v5732
      %5797 = vst [vmem:[%s259 + $0x58] sm:$0xf] %v5733
      %5798 = vst [vmem:[%s259 + $0x5c] sm:$0xf] %v5734
      %5799 = vst [vmem:[%s259 + $0x60] sm:$0xf] %v5735
      %5800 = vst [vmem:[%s259 + $0x64] sm:$0xf] %v5736
      %5801 = vst [vmem:[%s259 + $0x68] sm:$0xf] %v5737
      %5802 = vst [vmem:[%s259 + $0x6c] sm:$0xf] %v5738
      %5803 = vst [vmem:[%s259 + $0x70] sm:$0xf] %v5739
      %5804 = vst [vmem:[%s259 + $0x74] sm:$0xf] %v5740
      %5805 = vst [vmem:[%s259 + $0x78] sm:$0xf] %v5741
      %5806 = vst [vmem:[%s259 + $0x7c] sm:$0xf] %v5742
      %v5807 = vunpack.i.l.s16 %v5647
      %v5808 = vunpack.i.h.s16 %v5647
      %v5809 = vpack.c.b16 %v5808, %v5807
      %v5811 = vunpack.i.l.s16 %v5648
      %v5812 = vunpack.i.h.s16 %v5648
      %v5813 = vpack.c.b16 %v5812, %v5811
      %v5815 = vunpack.i.l.s16 %v5649
      %v5816 = vunpack.i.h.s16 %v5649
      %v5817 = vpack.c.b16 %v5816, %v5815
      %v5819 = vunpack.i.l.s16 %v5650
      %v5820 = vunpack.i.h.s16 %v5650
      %v5821 = vpack.c.b16 %v5820, %v5819
      %v5823 = vunpack.i.l.s16 %v5651
      %v5824 = vunpack.i.h.s16 %v5651
      %v5825 = vpack.c.b16 %v5824, %v5823
      %v5827 = vunpack.i.l.s16 %v5652
      %v5828 = vunpack.i.h.s16 %v5652
      %v5829 = vpack.c.b16 %v5828, %v5827
      %v5831 = vunpack.i.l.s16 %v5653
      %v5832 = vunpack.i.h.s16 %v5653
      %v5833 = vpack.c.b16 %v5832, %v5831
      %v5835 = vunpack.i.l.s16 %v5654
      %v5836 = vunpack.i.h.s16 %v5654
      %v5837 = vpack.c.b16 %v5836, %v5835
      %v5839 = vunpack.i.l.s16 %v5655
      %v5840 = vunpack.i.h.s16 %v5655
      %v5841 = vpack.c.b16 %v5840, %v5839
      %v5843 = vunpack.i.l.s16 %v5656
      %v5844 = vunpack.i.h.s16 %v5656
      %v5845 = vpack.c.b16 %v5844, %v5843
      %v5847 = vunpack.i.l.s16 %v5657
      %v5848 = vunpack.i.h.s16 %v5657
      %v5849 = vpack.c.b16 %v5848, %v5847
      %v5851 = vunpack.i.l.s16 %v5658
      %v5852 = vunpack.i.h.s16 %v5658
      %v5853 = vpack.c.b16 %v5852, %v5851
      %v5855 = vunpack.i.l.s16 %v5659
      %v5856 = vunpack.i.h.s16 %v5659
      %v5857 = vpack.c.b16 %v5856, %v5855
      %v5859 = vunpack.i.l.s16 %v5660
      %v5860 = vunpack.i.h.s16 %v5660
      %v5861 = vpack.c.b16 %v5860, %v5859
      %v5863 = vunpack.i.l.s16 %v5661
      %v5864 = vunpack.i.h.s16 %v5661
      %v5865 = vpack.c.b16 %v5864, %v5863
      %v5867 = vunpack.i.l.s16 %v5662
      %v5868 = vunpack.i.h.s16 %v5662
      %v5869 = vpack.c.b16 %v5868, %v5867
      %v5871 = vrot.slane %v5809, 4
      %v5872 = vrot.slane %v5813, 4
      %v5873 = vrot.slane %v5817, 4
      %v5874 = vrot.slane %v5821, 4
      %v5875 = vrot.slane %v5825, 4
      %v5876 = vrot.slane %v5829, 4
      %v5877 = vrot.slane %v5833, 4
      %v5878 = vrot.slane %v5837, 4
      %v5879 = vrot.slane %v5841, 4
      %v5880 = vrot.slane %v5845, 4
      %v5881 = vrot.slane %v5849, 4
      %v5882 = vrot.slane %v5853, 4
      %v5883 = vrot.slane %v5857, 4
      %v5884 = vrot.slane %v5861, 4
      %v5885 = vrot.slane %v5865, 4
      %v5886 = vrot.slane %v5869, 4
      %v5903 = vmax.bf16 %v5809, %v5871
      %v5904 = vmax.bf16 %v5813, %v5872
      %v5905 = vmax.bf16 %v5817, %v5873
      %v5906 = vmax.bf16 %v5821, %v5874
      %v5907 = vmax.bf16 %v5825, %v5875
      %v5908 = vmax.bf16 %v5829, %v5876
      %v5909 = vmax.bf16 %v5833, %v5877
      %v5910 = vmax.bf16 %v5837, %v5878
      %v5911 = vmax.bf16 %v5841, %v5879
      %v5912 = vmax.bf16 %v5845, %v5880
      %v5913 = vmax.bf16 %v5849, %v5881
      %v5914 = vmax.bf16 %v5853, %v5882
      %v5915 = vmax.bf16 %v5857, %v5883
      %v5916 = vmax.bf16 %v5861, %v5884
      %v5917 = vmax.bf16 %v5865, %v5885
      %v5918 = vmax.bf16 %v5869, %v5886
      %v5919 = vmax.bf16 %v5903, %v5904
      %v5920 = vmax.bf16 %v5905, %v5906
      %v5921 = vmax.bf16 %v5907, %v5908
      %v5922 = vmax.bf16 %v5909, %v5910
      %v5923 = vmax.bf16 %v5911, %v5912
      %v5924 = vmax.bf16 %v5913, %v5914
      %v5925 = vmax.bf16 %v5915, %v5916
      %v5926 = vmax.bf16 %v5917, %v5918
      %5927 = vst [vmem:[%s264] sm:$0xf] %v5919
      %5928 = vst [vmem:[%s264 + $0x4] sm:$0xf] %v5920
      %5929 = vst [vmem:[%s264 + $0x8] sm:$0xf] %v5921
      %5930 = vst [vmem:[%s264 + $0xc] sm:$0xf] %v5922
      %5931 = vst [vmem:[%s264 + $0x10] sm:$0xf] %v5923
      %5932 = vst [vmem:[%s264 + $0x14] sm:$0xf] %v5924
      %5933 = vst [vmem:[%s264 + $0x18] sm:$0xf] %v5925
      %5934 = vst [vmem:[%s264 + $0x1c] sm:$0xf] %v5926
      %p5935 = scmp.lt.s32.totalorder %s18, 1
      %s5936 = scalar_select %p5935, %s18, 1
      %s5937 = smul.addr %s5936, 32
      %s5938 = smul.addr %s5937, 4
      %s5939 = scalar_lea.vmem %s5, %s5938
      %p5940 = scmp.lt.s32.totalorder %s18, 1
      %s5941 = scalar_select %p5940, %s18, 1
      %s5942 = smul.addr %s5941, 8
      %s5943 = smul.addr %s5942, 4
      %s5944 = scalar_lea.vmem %s6, %s5943
      // Predicated region
      $region41: #{encoder_apply.2} parent=39 // pred_check
        %p5945 = pneg %p146
      $region42: #{encoder_apply.2} parent=39 // pred_check_branch
        %5947 = sbr.rel (%p5945) target = $region44
      $region43: #{encoder_apply.2} parent=39 // pred_region
        _
      $region44: #{encoder_apply.2} parent=39 // pred_fallthru
        _
      // Predicated region
      $region45: #{encoder_apply.2} parent=39 // pred_check
        %p5948 = pneg %p172
      $region46: #{encoder_apply.2} parent=39 // pred_check_branch
        %5950 = sbr.rel (%p5948) target = $region48
      $region47: #{encoder_apply.2} parent=39 // pred_region
        _
      $region48: #{encoder_apply.2} parent=39 // pred_fallthru
        _
    $region40: #{encoder_apply.2} parent=5 // pred_fallthru
      _
    %p5951 = scmp.le.s32.totalorder 2, %s13
    // Predicated region
    $region49: #{encoder_apply.2} parent=5 // pred_check
      %p5952 = pneg %p5951
    $region50: #{encoder_apply.2} parent=5 // pred_check_branch
      %5954 = sbr.rel (%p5952) target = $region52
    $region51: #{encoder_apply.2} parent=5 // pred_region
      %s5955 = ssub.s32 %s13, 2
      // Predicated region
      $region53: #{encoder_apply.2} parent=51 // pred_check
        %p5956 = pneg %p152
      $region54: #{encoder_apply.2} parent=51 // pred_check_branch
        %5958 = sbr.rel (%p5956) target = $region56
      $region55: #{encoder_apply.2} parent=51 // pred_region
        %p5959 = scmp.lt.s32.totalorder %s19, 1
        %s5960 = scalar_select %p5959, %s19, 1
        %s5961 = smul.addr %s5960, 32
        %s5962 = smul.addr %s5961, 4
        %s5963 = scalar_lea.vmem %s5, %s5962
      $region56: #{encoder_apply.2} parent=51 // pred_fallthru
        _
      // Predicated region
      $region57: #{encoder_apply.2} parent=51 // pred_check
        %p5964 = pneg %p178
      $region58: #{encoder_apply.2} parent=51 // pred_check_branch
        %5966 = sbr.rel (%p5964) target = $region60
      $region59: #{encoder_apply.2} parent=51 // pred_region
        %p5967 = scmp.lt.s32.totalorder %s19, 1
        %s5968 = scalar_select %p5967, %s19, 1
        %s5969 = smul.addr %s5968, 8
        %s5970 = smul.addr %s5969, 4
        %s5971 = scalar_lea.vmem %s6, %s5970
      $region60: #{encoder_apply.2} parent=51 // pred_fallthru
        _
    $region52: #{encoder_apply.2} parent=5 // pred_fallthru
      _
  $region6: #{encoder_apply.2} parent=0 // loop_footer
    %s17 = sadd.s32 1, %s13
  $region7: #{encoder_apply.2} parent=0 // loop_footer_branch
    %12 = sbr.rel target = $region3
  $region8: #{encoder_apply.2} parent=0 // loop_exit
    _

</llo_original>
